<compile_context>
chip_gen: v6e
topology: v6e:2x2x1
jax: 0.10.0
libtpu: 0.0.40
codegen_flags: <defaults>
</compile_context>

<pallas_src>
from functools import partial

import numpy as np
import jax
import jax.numpy as jnp
from jax.experimental import pallas as pl
from jax.experimental.pallas import tpu as pltpu


# ----------------------------------------------------------------------------
# Pallas kernel: whole ResNet forward for one batch element
# ----------------------------------------------------------------------------
def _resnet_kernel(*refs, num_blocks, num_layers, add_residual,
                   out_h, out_w, num_filters):
    """Fully fused ResNet forward (one grid step == one image).

    Ref layout (all VMEM):
      x_ref                              : (1, H, W, Cin)  unpadded input
      per conv layer (blocks*layers)     : w (9*Cin_l, C), scale (1, C), shift (1, C)
      head_w, head_b                     : (C, out_ch), (1, out_ch)
      o_ref                              : (1, H, W, out_ch)
    """
    h, w, c = out_h, out_w, num_filters
    n_conv = num_blocks * num_layers

    x_ref = refs[0]
    layer_refs = refs[1:1 + 3 * n_conv]
    head_w_ref = refs[1 + 3 * n_conv]
    head_b_ref = refs[2 + 3 * n_conv]
    o_ref = refs[3 + 3 * n_conv]

    def pad_hw(y_hwc):
        # Zero-pad a (H, W, Cc) value to (H+2, W+2, Cc) (SAME padding halo).
        cc = y_hwc.shape[-1]
        zrow = jnp.zeros((1, w, cc), jnp.float32)
        zcol = jnp.zeros((h + 2, 1, cc), jnp.float32)
        yp = jnp.concatenate([zrow, y_hwc, zrow], axis=0)      # (H+2, W, Cc)
        return jnp.concatenate([zcol, yp, zcol], axis=1)        # (H+2, W+2, Cc)

    def conv_bn_relu(xpad, w_ref, sc_ref, sh_ref):
        # Build the (H*W, 9*Cin) im2col matrix from 9 statically shifted views
        # and run ONE MXU contraction with K = 9*Cin.
        taps = [xpad[ky:ky + h, kx:kx + w, :]
                for ky in range(3) for kx in range(3)]
        patches = jnp.concatenate(taps, axis=-1)                 # (H, W, 9*Cin)
        patches = patches.reshape(h * w, patches.shape[-1])      # (H*W, 9*Cin)
        y = jnp.dot(patches, w_ref[...],
                    preferred_element_type=jnp.float32)          # single matmul
        y = y * sc_ref[...] + sh_ref[...]                        # conv bias + BN folded
        return jnp.maximum(y, 0.0)                               # ReLU (Dropout2d == id)

    cur = x_ref[0].astype(jnp.float32)                           # (H, W, Cin)
    li = 0
    for _b in range(num_blocks):
        res = cur
        xpad = pad_hw(cur)
        y = None
        for l in range(num_layers):
            w_ref, sc_ref, sh_ref = layer_refs[3 * li: 3 * li + 3]
            li += 1
            if l > 0:
                xpad = pad_hw(y.reshape(h, w, c))
            y = conv_bn_relu(xpad, w_ref, sc_ref, sh_ref)        # (H*W, C)
        cur = y.reshape(h, w, c)
        if add_residual:
            cur = cur + res

    # Fused 1x1 conv head.
    yz = jnp.dot(cur.reshape(h * w, c), head_w_ref[...],
                 preferred_element_type=jnp.float32) + head_b_ref[...]
    o_ref[0] = yz.reshape(h, w, yz.shape[-1]).astype(o_ref.dtype)


# ----------------------------------------------------------------------------
# Wrapper: single pallas_call for the whole network
# ----------------------------------------------------------------------------
def resnet_forward(x_nchw, params, residual=True):
    # NCHW at the boundary (PyTorch), NHWC inside the kernel.
    x = jnp.transpose(x_nchw, (0, 2, 3, 1)).astype(jnp.float32)
    n, h, wdim, cin = x.shape
    blocks = params["blocks"]
    head_w, head_b = params["head_w"], params["head_b"]
    c = head_w.shape[0]            # num_filters
    out_c = head_w.shape[1]
    num_blocks = len(blocks)
    num_layers = len(blocks[0])
    if residual:
        assert cin == c, "residual add requires in_ch == num_filters"

    args = [x]
    in_specs = [pl.BlockSpec((1, h, wdim, cin), lambda i: (i, 0, 0, 0))]
    for block in blocks:
        for layer in block:
            wmat = layer["w"].reshape(-1, c)                     # (9*Cin_l, C)
            kin = wmat.shape[0]
            args += [wmat,
                     layer["scale"].reshape(1, c),
                     layer["shift"].reshape(1, c)]
            in_specs += [
                pl.BlockSpec((kin, c), lambda i: (0, 0)),
                pl.BlockSpec((1, c), lambda i: (0, 0)),
                pl.BlockSpec((1, c), lambda i: (0, 0)),
            ]
    args += [head_w, head_b.reshape(1, out_c)]
    in_specs += [
        pl.BlockSpec((c, out_c), lambda i: (0, 0)),
        pl.BlockSpec((1, out_c), lambda i: (0, 0)),
    ]

    out = pl.pallas_call(
        partial(_resnet_kernel,
                num_blocks=num_blocks,
                num_layers=num_layers,
                add_residual=residual,
                out_h=h, out_w=wdim,
                num_filters=c),
        out_shape=jax.ShapeDtypeStruct((n, h, wdim, out_c), jnp.float32),
        grid=(n,),
        in_specs=in_specs,
        out_specs=pl.BlockSpec((1, h, wdim, out_c), lambda i: (i, 0, 0, 0)),
        compiler_params=pltpu.CompilerParams(dimension_semantics=("parallel",)),
    )(*args)
    return jnp.transpose(out, (0, 3, 1, 2))


# ----------------------------------------------------------------------------
# Parameter init (deterministic; BN folded into scale/shift)
# ----------------------------------------------------------------------------
def init_params(key, in_ch, out_ch, num_blocks, num_layers, num_filters, eps=1e-5):
    blocks = []
    cin = in_ch
    for _ in range(num_blocks):
        layers = []
        for _ in range(num_layers):
            key, kw, kb, kg, kbe, km, kv = jax.random.split(key, 7)
            w = 0.1 * jax.random.normal(kw, (3, 3, cin, num_filters), jnp.float32)
            bias = 0.1 * jax.random.normal(kb, (num_filters,), jnp.float32)
            gamma = 1.0 + 0.1 * jax.random.normal(kg, (num_filters,), jnp.float32)
            beta = 0.1 * jax.random.normal(kbe, (num_filters,), jnp.float32)
            mean = 0.1 * jax.random.normal(km, (num_filters,), jnp.float32)
            var = jax.random.uniform(kv, (num_filters,), jnp.float32, 0.5, 1.5)
            s = gamma / jnp.sqrt(var + eps)
            layers.append({"w": w, "scale": s, "shift": beta + (bias - mean) * s})
            cin = num_filters
        blocks.append(layers)
    key, kw, kb = jax.random.split(key, 3)
    head_w = 0.1 * jax.random.normal(kw, (num_filters, out_ch), jnp.float32)
    head_b = 0.1 * jax.random.normal(kb, (out_ch,), jnp.float32)
    return {"blocks": blocks, "head_w": head_w, "head_b": head_b}


# ----------------------------------------------------------------------------
# Pure-JAX reference (lax.conv) for correctness checking
# ----------------------------------------------------------------------------
def ref_forward(x_nchw, params, residual=True):
    x = jnp.transpose(x_nchw, (0, 2, 3, 1)).astype(jnp.float32)
    for block in params["blocks"]:
        res = x
        for layer in block:
            z = jax.lax.conv_general_dilated(
                x, layer["w"], window_strides=(1, 1), padding="SAME",
                dimension_numbers=("NHWC", "HWIO", "NHWC"))
            x = jnp.maximum(z * layer["scale"] + layer["shift"], 0.0)
        if residual:
            x = x + res
    y = jnp.einsum("nhwc,cf->nhwf", x, params["head_w"]) + params["head_b"]
    return jnp.transpose(y, (0, 3, 1, 2))


# ----------------------------------------------------------------------------
if __name__ == "__main__":
    # Residual add requires in_ch == num_filters (same constraint as PyTorch).
    N, IN_CH, OUT_CH, H, W = 2, 8, 4, 16, 16
    NUM_BLOCKS, NUM_LAYERS, NUM_FILTERS = 2, 2, 8

    key = jax.random.PRNGKey(0)
    kx, kp = jax.random.split(key)
    x = jax.random.normal(kx, (N, IN_CH, H, W), jnp.float32)
    params = init_params(kp, IN_CH, OUT_CH, NUM_BLOCKS, NUM_LAYERS, NUM_FILTERS)

    fwd = jax.jit(resnet_forward)
    out = jax.block_until_ready(fwd(x, params))
    ref = jax.block_until_ready(ref_forward(x, params))

    assert out.shape == (N, OUT_CH, H, W), out.shape
    np.testing.assert_allclose(np.asarray(out), np.asarray(ref),
                               rtol=2e-3, atol=2e-3)
    print("KERNEL_OK")
</pallas_src>

<mosaic_0001>
module attributes {stable_mosaic.version = 11 : i64} {
  func.func @_resnet_kernel(%arg0: i32, %arg1: memref<1x16x16x8xf32, #tpu.memory_space<vmem>>, %arg2: memref<72x8xf32, #tpu.memory_space<vmem>>, %arg3: memref<1x8xf32, #tpu.memory_space<vmem>>, %arg4: memref<1x8xf32, #tpu.memory_space<vmem>>, %arg5: memref<72x8xf32, #tpu.memory_space<vmem>>, %arg6: memref<1x8xf32, #tpu.memory_space<vmem>>, %arg7: memref<1x8xf32, #tpu.memory_space<vmem>>, %arg8: memref<72x8xf32, #tpu.memory_space<vmem>>, %arg9: memref<1x8xf32, #tpu.memory_space<vmem>>, %arg10: memref<1x8xf32, #tpu.memory_space<vmem>>, %arg11: memref<72x8xf32, #tpu.memory_space<vmem>>, %arg12: memref<1x8xf32, #tpu.memory_space<vmem>>, %arg13: memref<1x8xf32, #tpu.memory_space<vmem>>, %arg14: memref<8x4xf32, #tpu.memory_space<vmem>>, %arg15: memref<1x4xf32, #tpu.memory_space<vmem>>, %arg16: memref<1x16x16x4xf32, #tpu.memory_space<vmem>>) attributes {dimension_semantics = [#tpu.dimension_semantics<parallel>], iteration_bounds = array<i64: 2>, scalar_prefetch = 0 : i64, scratch_operands = 0 : i64, tpu.core_type = #tpu.core_type<tc>, window_params = [{transform_indices = @transform_0, window_bounds = array<i64: 1, 16, 16, 8>}, {pipeline_mode = #tpu.pipeline_mode<synchronous>, transform_indices = @transform_1, window_bounds = array<i64: 72, 8>}, {pipeline_mode = #tpu.pipeline_mode<synchronous>, transform_indices = @transform_2, window_bounds = array<i64: 1, 8>}, {pipeline_mode = #tpu.pipeline_mode<synchronous>, transform_indices = @transform_3, window_bounds = array<i64: 1, 8>}, {pipeline_mode = #tpu.pipeline_mode<synchronous>, transform_indices = @transform_4, window_bounds = array<i64: 72, 8>}, {pipeline_mode = #tpu.pipeline_mode<synchronous>, transform_indices = @transform_5, window_bounds = array<i64: 1, 8>}, {pipeline_mode = #tpu.pipeline_mode<synchronous>, transform_indices = @transform_6, window_bounds = array<i64: 1, 8>}, {pipeline_mode = #tpu.pipeline_mode<synchronous>, transform_indices = @transform_7, window_bounds = array<i64: 72, 8>}, {pipeline_mode = #tpu.pipeline_mode<synchronous>, transform_indices = @transform_8, window_bounds = array<i64: 1, 8>}, {pipeline_mode = #tpu.pipeline_mode<synchronous>, transform_indices = @transform_9, window_bounds = array<i64: 1, 8>}, {pipeline_mode = #tpu.pipeline_mode<synchronous>, transform_indices = @transform_10, window_bounds = array<i64: 72, 8>}, {pipeline_mode = #tpu.pipeline_mode<synchronous>, transform_indices = @transform_11, window_bounds = array<i64: 1, 8>}, {pipeline_mode = #tpu.pipeline_mode<synchronous>, transform_indices = @transform_12, window_bounds = array<i64: 1, 8>}, {pipeline_mode = #tpu.pipeline_mode<synchronous>, transform_indices = @transform_13, window_bounds = array<i64: 8, 4>}, {pipeline_mode = #tpu.pipeline_mode<synchronous>, transform_indices = @transform_14, window_bounds = array<i64: 1, 4>}, {transform_indices = @transform_15, window_bounds = array<i64: 1, 16, 16, 4>}]} {
    %c0 = arith.constant 0 : index
    %c0_0 = arith.constant 0 : index
    %c0_1 = arith.constant 0 : index
    %c0_2 = arith.constant 0 : index
    %0 = vector.load %arg1[%c0, %c0_0, %c0_1, %c0_2] : memref<1x16x16x8xf32, #tpu.memory_space<vmem>>, vector<1x16x16x8xf32>
    %1 = vector.shape_cast %0 : vector<1x16x16x8xf32> to vector<16x16x8xf32>
    %cst = arith.constant 0.000000e+00 : f32
    %2 = vector.broadcast %cst : f32 to vector<1x16x8xf32>
    %cst_3 = arith.constant 0.000000e+00 : f32
    %3 = vector.broadcast %cst_3 : f32 to vector<18x1x8xf32>
    %4 = tpu.concatenate %2, %1, %2 in 0 : vector<1x16x8xf32>, vector<16x16x8xf32>, vector<1x16x8xf32> -> vector<18x16x8xf32>
    %5 = tpu.concatenate %3, %4, %3 in 1 : vector<18x1x8xf32>, vector<18x16x8xf32>, vector<18x1x8xf32> -> vector<18x18x8xf32>
    %6 = vector.extract_strided_slice %5 {offsets = [0, 0, 0], sizes = [16, 16, 8], strides = [1, 1, 1]} : vector<18x18x8xf32> to vector<16x16x8xf32>
    %7 = vector.extract_strided_slice %5 {offsets = [0, 1, 0], sizes = [16, 16, 8], strides = [1, 1, 1]} : vector<18x18x8xf32> to vector<16x16x8xf32>
    %8 = vector.extract_strided_slice %5 {offsets = [0, 2, 0], sizes = [16, 16, 8], strides = [1, 1, 1]} : vector<18x18x8xf32> to vector<16x16x8xf32>
    %9 = vector.extract_strided_slice %5 {offsets = [1, 0, 0], sizes = [16, 16, 8], strides = [1, 1, 1]} : vector<18x18x8xf32> to vector<16x16x8xf32>
    %10 = vector.extract_strided_slice %5 {offsets = [1, 1, 0], sizes = [16, 16, 8], strides = [1, 1, 1]} : vector<18x18x8xf32> to vector<16x16x8xf32>
    %11 = vector.extract_strided_slice %5 {offsets = [1, 2, 0], sizes = [16, 16, 8], strides = [1, 1, 1]} : vector<18x18x8xf32> to vector<16x16x8xf32>
    %12 = vector.extract_strided_slice %5 {offsets = [2, 0, 0], sizes = [16, 16, 8], strides = [1, 1, 1]} : vector<18x18x8xf32> to vector<16x16x8xf32>
    %13 = vector.extract_strided_slice %5 {offsets = [2, 1, 0], sizes = [16, 16, 8], strides = [1, 1, 1]} : vector<18x18x8xf32> to vector<16x16x8xf32>
    %14 = vector.extract_strided_slice %5 {offsets = [2, 2, 0], sizes = [16, 16, 8], strides = [1, 1, 1]} : vector<18x18x8xf32> to vector<16x16x8xf32>
    %15 = tpu.concatenate %6, %7, %8, %9, %10, %11, %12, %13, %14 in 2 : vector<16x16x8xf32>, vector<16x16x8xf32>, vector<16x16x8xf32>, vector<16x16x8xf32>, vector<16x16x8xf32>, vector<16x16x8xf32>, vector<16x16x8xf32>, vector<16x16x8xf32>, vector<16x16x8xf32> -> vector<16x16x72xf32>
    %16 = vector.shape_cast %15 : vector<16x16x72xf32> to vector<256x72xf32>
    %c0_4 = arith.constant 0 : index
    %c0_5 = arith.constant 0 : index
    %17 = vector.load %arg2[%c0_4, %c0_5] : memref<72x8xf32, #tpu.memory_space<vmem>>, vector<72x8xf32>
    %cst_6 = arith.constant dense<0.000000e+00> : vector<256x8xf32>
    %18 = tpu.matmul %16, %17, %cst_6 {dimension_numbers = #tpu.dot_dimension_numbers<[1], [0], [0], [1], [0, 0, 1, 1], [], []>} : vector<256x72xf32>, vector<72x8xf32>, vector<256x8xf32> -> vector<256x8xf32>
    %c0_7 = arith.constant 0 : index
    %c0_8 = arith.constant 0 : index
    %19 = vector.load %arg3[%c0_7, %c0_8] : memref<1x8xf32, #tpu.memory_space<vmem>>, vector<1x8xf32>
    %20 = vector.broadcast %19 : vector<1x8xf32> to vector<256x8xf32>
    %21 = arith.mulf %18, %20 : vector<256x8xf32>
    %c0_9 = arith.constant 0 : index
    %c0_10 = arith.constant 0 : index
    %22 = vector.load %arg4[%c0_9, %c0_10] : memref<1x8xf32, #tpu.memory_space<vmem>>, vector<1x8xf32>
    %23 = vector.broadcast %22 : vector<1x8xf32> to vector<256x8xf32>
    %24 = arith.addf %21, %23 : vector<256x8xf32>
    %cst_11 = arith.constant 0.000000e+00 : f32
    %25 = vector.broadcast %cst_11 : f32 to vector<256x8xf32>
    %26 = arith.maximumf %24, %25 : vector<256x8xf32>
    %27 = vector.shape_cast %26 : vector<256x8xf32> to vector<16x16x8xf32>
    %cst_12 = arith.constant 0.000000e+00 : f32
    %28 = vector.broadcast %cst_12 : f32 to vector<1x16x8xf32>
    %cst_13 = arith.constant 0.000000e+00 : f32
    %29 = vector.broadcast %cst_13 : f32 to vector<18x1x8xf32>
    %30 = tpu.concatenate %28, %27, %28 in 0 : vector<1x16x8xf32>, vector<16x16x8xf32>, vector<1x16x8xf32> -> vector<18x16x8xf32>
    %31 = tpu.concatenate %29, %30, %29 in 1 : vector<18x1x8xf32>, vector<18x16x8xf32>, vector<18x1x8xf32> -> vector<18x18x8xf32>
    %32 = vector.extract_strided_slice %31 {offsets = [0, 0, 0], sizes = [16, 16, 8], strides = [1, 1, 1]} : vector<18x18x8xf32> to vector<16x16x8xf32>
    %33 = vector.extract_strided_slice %31 {offsets = [0, 1, 0], sizes = [16, 16, 8], strides = [1, 1, 1]} : vector<18x18x8xf32> to vector<16x16x8xf32>
    %34 = vector.extract_strided_slice %31 {offsets = [0, 2, 0], sizes = [16, 16, 8], strides = [1, 1, 1]} : vector<18x18x8xf32> to vector<16x16x8xf32>
    %35 = vector.extract_strided_slice %31 {offsets = [1, 0, 0], sizes = [16, 16, 8], strides = [1, 1, 1]} : vector<18x18x8xf32> to vector<16x16x8xf32>
    %36 = vector.extract_strided_slice %31 {offsets = [1, 1, 0], sizes = [16, 16, 8], strides = [1, 1, 1]} : vector<18x18x8xf32> to vector<16x16x8xf32>
    %37 = vector.extract_strided_slice %31 {offsets = [1, 2, 0], sizes = [16, 16, 8], strides = [1, 1, 1]} : vector<18x18x8xf32> to vector<16x16x8xf32>
    %38 = vector.extract_strided_slice %31 {offsets = [2, 0, 0], sizes = [16, 16, 8], strides = [1, 1, 1]} : vector<18x18x8xf32> to vector<16x16x8xf32>
    %39 = vector.extract_strided_slice %31 {offsets = [2, 1, 0], sizes = [16, 16, 8], strides = [1, 1, 1]} : vector<18x18x8xf32> to vector<16x16x8xf32>
    %40 = vector.extract_strided_slice %31 {offsets = [2, 2, 0], sizes = [16, 16, 8], strides = [1, 1, 1]} : vector<18x18x8xf32> to vector<16x16x8xf32>
    %41 = tpu.concatenate %32, %33, %34, %35, %36, %37, %38, %39, %40 in 2 : vector<16x16x8xf32>, vector<16x16x8xf32>, vector<16x16x8xf32>, vector<16x16x8xf32>, vector<16x16x8xf32>, vector<16x16x8xf32>, vector<16x16x8xf32>, vector<16x16x8xf32>, vector<16x16x8xf32> -> vector<16x16x72xf32>
    %42 = vector.shape_cast %41 : vector<16x16x72xf32> to vector<256x72xf32>
    %c0_14 = arith.constant 0 : index
    %c0_15 = arith.constant 0 : index
    %43 = vector.load %arg5[%c0_14, %c0_15] : memref<72x8xf32, #tpu.memory_space<vmem>>, vector<72x8xf32>
    %cst_16 = arith.constant dense<0.000000e+00> : vector<256x8xf32>
    %44 = tpu.matmul %42, %43, %cst_16 {dimension_numbers = #tpu.dot_dimension_numbers<[1], [0], [0], [1], [0, 0, 1, 1], [], []>} : vector<256x72xf32>, vector<72x8xf32>, vector<256x8xf32> -> vector<256x8xf32>
    %c0_17 = arith.constant 0 : index
    %c0_18 = arith.constant 0 : index
    %45 = vector.load %arg6[%c0_17, %c0_18] : memref<1x8xf32, #tpu.memory_space<vmem>>, vector<1x8xf32>
    %46 = vector.broadcast %45 : vector<1x8xf32> to vector<256x8xf32>
    %47 = arith.mulf %44, %46 : vector<256x8xf32>
    %c0_19 = arith.constant 0 : index
    %c0_20 = arith.constant 0 : index
    %48 = vector.load %arg7[%c0_19, %c0_20] : memref<1x8xf32, #tpu.memory_space<vmem>>, vector<1x8xf32>
    %49 = vector.broadcast %48 : vector<1x8xf32> to vector<256x8xf32>
    %50 = arith.addf %47, %49 : vector<256x8xf32>
    %cst_21 = arith.constant 0.000000e+00 : f32
    %51 = vector.broadcast %cst_21 : f32 to vector<256x8xf32>
    %52 = arith.maximumf %50, %51 : vector<256x8xf32>
    %53 = vector.shape_cast %52 : vector<256x8xf32> to vector<16x16x8xf32>
    %54 = arith.addf %53, %1 : vector<16x16x8xf32>
    %cst_22 = arith.constant 0.000000e+00 : f32
    %55 = vector.broadcast %cst_22 : f32 to vector<1x16x8xf32>
    %cst_23 = arith.constant 0.000000e+00 : f32
    %56 = vector.broadcast %cst_23 : f32 to vector<18x1x8xf32>
    %57 = tpu.concatenate %55, %54, %55 in 0 : vector<1x16x8xf32>, vector<16x16x8xf32>, vector<1x16x8xf32> -> vector<18x16x8xf32>
    %58 = tpu.concatenate %56, %57, %56 in 1 : vector<18x1x8xf32>, vector<18x16x8xf32>, vector<18x1x8xf32> -> vector<18x18x8xf32>
    %59 = vector.extract_strided_slice %58 {offsets = [0, 0, 0], sizes = [16, 16, 8], strides = [1, 1, 1]} : vector<18x18x8xf32> to vector<16x16x8xf32>
    %60 = vector.extract_strided_slice %58 {offsets = [0, 1, 0], sizes = [16, 16, 8], strides = [1, 1, 1]} : vector<18x18x8xf32> to vector<16x16x8xf32>
    %61 = vector.extract_strided_slice %58 {offsets = [0, 2, 0], sizes = [16, 16, 8], strides = [1, 1, 1]} : vector<18x18x8xf32> to vector<16x16x8xf32>
    %62 = vector.extract_strided_slice %58 {offsets = [1, 0, 0], sizes = [16, 16, 8], strides = [1, 1, 1]} : vector<18x18x8xf32> to vector<16x16x8xf32>
    %63 = vector.extract_strided_slice %58 {offsets = [1, 1, 0], sizes = [16, 16, 8], strides = [1, 1, 1]} : vector<18x18x8xf32> to vector<16x16x8xf32>
    %64 = vector.extract_strided_slice %58 {offsets = [1, 2, 0], sizes = [16, 16, 8], strides = [1, 1, 1]} : vector<18x18x8xf32> to vector<16x16x8xf32>
    %65 = vector.extract_strided_slice %58 {offsets = [2, 0, 0], sizes = [16, 16, 8], strides = [1, 1, 1]} : vector<18x18x8xf32> to vector<16x16x8xf32>
    %66 = vector.extract_strided_slice %58 {offsets = [2, 1, 0], sizes = [16, 16, 8], strides = [1, 1, 1]} : vector<18x18x8xf32> to vector<16x16x8xf32>
    %67 = vector.extract_strided_slice %58 {offsets = [2, 2, 0], sizes = [16, 16, 8], strides = [1, 1, 1]} : vector<18x18x8xf32> to vector<16x16x8xf32>
    %68 = tpu.concatenate %59, %60, %61, %62, %63, %64, %65, %66, %67 in 2 : vector<16x16x8xf32>, vector<16x16x8xf32>, vector<16x16x8xf32>, vector<16x16x8xf32>, vector<16x16x8xf32>, vector<16x16x8xf32>, vector<16x16x8xf32>, vector<16x16x8xf32>, vector<16x16x8xf32> -> vector<16x16x72xf32>
    %69 = vector.shape_cast %68 : vector<16x16x72xf32> to vector<256x72xf32>
    %c0_24 = arith.constant 0 : index
    %c0_25 = arith.constant 0 : index
    %70 = vector.load %arg8[%c0_24, %c0_25] : memref<72x8xf32, #tpu.memory_space<vmem>>, vector<72x8xf32>
    %cst_26 = arith.constant dense<0.000000e+00> : vector<256x8xf32>
    %71 = tpu.matmul %69, %70, %cst_26 {dimension_numbers = #tpu.dot_dimension_numbers<[1], [0], [0], [1], [0, 0, 1, 1], [], []>} : vector<256x72xf32>, vector<72x8xf32>, vector<256x8xf32> -> vector<256x8xf32>
    %c0_27 = arith.constant 0 : index
    %c0_28 = arith.constant 0 : index
    %72 = vector.load %arg9[%c0_27, %c0_28] : memref<1x8xf32, #tpu.memory_space<vmem>>, vector<1x8xf32>
    %73 = vector.broadcast %72 : vector<1x8xf32> to vector<256x8xf32>
    %74 = arith.mulf %71, %73 : vector<256x8xf32>
    %c0_29 = arith.constant 0 : index
    %c0_30 = arith.constant 0 : index
    %75 = vector.load %arg10[%c0_29, %c0_30] : memref<1x8xf32, #tpu.memory_space<vmem>>, vector<1x8xf32>
    %76 = vector.broadcast %75 : vector<1x8xf32> to vector<256x8xf32>
    %77 = arith.addf %74, %76 : vector<256x8xf32>
    %cst_31 = arith.constant 0.000000e+00 : f32
    %78 = vector.broadcast %cst_31 : f32 to vector<256x8xf32>
    %79 = arith.maximumf %77, %78 : vector<256x8xf32>
    %80 = vector.shape_cast %79 : vector<256x8xf32> to vector<16x16x8xf32>
    %cst_32 = arith.constant 0.000000e+00 : f32
    %81 = vector.broadcast %cst_32 : f32 to vector<1x16x8xf32>
    %cst_33 = arith.constant 0.000000e+00 : f32
    %82 = vector.broadcast %cst_33 : f32 to vector<18x1x8xf32>
    %83 = tpu.concatenate %81, %80, %81 in 0 : vector<1x16x8xf32>, vector<16x16x8xf32>, vector<1x16x8xf32> -> vector<18x16x8xf32>
    %84 = tpu.concatenate %82, %83, %82 in 1 : vector<18x1x8xf32>, vector<18x16x8xf32>, vector<18x1x8xf32> -> vector<18x18x8xf32>
    %85 = vector.extract_strided_slice %84 {offsets = [0, 0, 0], sizes = [16, 16, 8], strides = [1, 1, 1]} : vector<18x18x8xf32> to vector<16x16x8xf32>
    %86 = vector.extract_strided_slice %84 {offsets = [0, 1, 0], sizes = [16, 16, 8], strides = [1, 1, 1]} : vector<18x18x8xf32> to vector<16x16x8xf32>
    %87 = vector.extract_strided_slice %84 {offsets = [0, 2, 0], sizes = [16, 16, 8], strides = [1, 1, 1]} : vector<18x18x8xf32> to vector<16x16x8xf32>
    %88 = vector.extract_strided_slice %84 {offsets = [1, 0, 0], sizes = [16, 16, 8], strides = [1, 1, 1]} : vector<18x18x8xf32> to vector<16x16x8xf32>
    %89 = vector.extract_strided_slice %84 {offsets = [1, 1, 0], sizes = [16, 16, 8], strides = [1, 1, 1]} : vector<18x18x8xf32> to vector<16x16x8xf32>
    %90 = vector.extract_strided_slice %84 {offsets = [1, 2, 0], sizes = [16, 16, 8], strides = [1, 1, 1]} : vector<18x18x8xf32> to vector<16x16x8xf32>
    %91 = vector.extract_strided_slice %84 {offsets = [2, 0, 0], sizes = [16, 16, 8], strides = [1, 1, 1]} : vector<18x18x8xf32> to vector<16x16x8xf32>
    %92 = vector.extract_strided_slice %84 {offsets = [2, 1, 0], sizes = [16, 16, 8], strides = [1, 1, 1]} : vector<18x18x8xf32> to vector<16x16x8xf32>
    %93 = vector.extract_strided_slice %84 {offsets = [2, 2, 0], sizes = [16, 16, 8], strides = [1, 1, 1]} : vector<18x18x8xf32> to vector<16x16x8xf32>
    %94 = tpu.concatenate %85, %86, %87, %88, %89, %90, %91, %92, %93 in 2 : vector<16x16x8xf32>, vector<16x16x8xf32>, vector<16x16x8xf32>, vector<16x16x8xf32>, vector<16x16x8xf32>, vector<16x16x8xf32>, vector<16x16x8xf32>, vector<16x16x8xf32>, vector<16x16x8xf32> -> vector<16x16x72xf32>
    %95 = vector.shape_cast %94 : vector<16x16x72xf32> to vector<256x72xf32>
    %c0_34 = arith.constant 0 : index
    %c0_35 = arith.constant 0 : index
    %96 = vector.load %arg11[%c0_34, %c0_35] : memref<72x8xf32, #tpu.memory_space<vmem>>, vector<72x8xf32>
    %cst_36 = arith.constant dense<0.000000e+00> : vector<256x8xf32>
    %97 = tpu.matmul %95, %96, %cst_36 {dimension_numbers = #tpu.dot_dimension_numbers<[1], [0], [0], [1], [0, 0, 1, 1], [], []>} : vector<256x72xf32>, vector<72x8xf32>, vector<256x8xf32> -> vector<256x8xf32>
    %c0_37 = arith.constant 0 : index
    %c0_38 = arith.constant 0 : index
    %98 = vector.load %arg12[%c0_37, %c0_38] : memref<1x8xf32, #tpu.memory_space<vmem>>, vector<1x8xf32>
    %99 = vector.broadcast %98 : vector<1x8xf32> to vector<256x8xf32>
    %100 = arith.mulf %97, %99 : vector<256x8xf32>
    %c0_39 = arith.constant 0 : index
    %c0_40 = arith.constant 0 : index
    %101 = vector.load %arg13[%c0_39, %c0_40] : memref<1x8xf32, #tpu.memory_space<vmem>>, vector<1x8xf32>
    %102 = vector.broadcast %101 : vector<1x8xf32> to vector<256x8xf32>
    %103 = arith.addf %100, %102 : vector<256x8xf32>
    %cst_41 = arith.constant 0.000000e+00 : f32
    %104 = vector.broadcast %cst_41 : f32 to vector<256x8xf32>
    %105 = arith.maximumf %103, %104 : vector<256x8xf32>
    %106 = vector.shape_cast %105 : vector<256x8xf32> to vector<16x16x8xf32>
    %107 = arith.addf %106, %54 : vector<16x16x8xf32>
    %108 = vector.shape_cast %107 : vector<16x16x8xf32> to vector<256x8xf32>
    %c0_42 = arith.constant 0 : index
    %c0_43 = arith.constant 0 : index
    %109 = vector.load %arg14[%c0_42, %c0_43] : memref<8x4xf32, #tpu.memory_space<vmem>>, vector<8x4xf32>
    %cst_44 = arith.constant dense<0.000000e+00> : vector<256x4xf32>
    %110 = tpu.matmul %108, %109, %cst_44 {dimension_numbers = #tpu.dot_dimension_numbers<[1], [0], [0], [1], [0, 0, 1, 1], [], []>} : vector<256x8xf32>, vector<8x4xf32>, vector<256x4xf32> -> vector<256x4xf32>
    %c0_45 = arith.constant 0 : index
    %c0_46 = arith.constant 0 : index
    %111 = vector.load %arg15[%c0_45, %c0_46] : memref<1x4xf32, #tpu.memory_space<vmem>>, vector<1x4xf32>
    %112 = vector.broadcast %111 : vector<1x4xf32> to vector<256x4xf32>
    %113 = arith.addf %110, %112 : vector<256x4xf32>
    %114 = vector.shape_cast %113 : vector<256x4xf32> to vector<16x16x4xf32>
    %c0_47 = arith.constant 0 : index
    %c0_48 = arith.constant 0 : index
    %c0_49 = arith.constant 0 : index
    %c0_50 = arith.constant 0 : index
    %115 = vector.load %arg16[%c0_47, %c0_48, %c0_49, %c0_50] : memref<1x16x16x4xf32, #tpu.memory_space<vmem>>, vector<1x16x16x4xf32>
    %116 = vector.shape_cast %115 : vector<1x16x16x4xf32> to vector<16x16x4xf32>
    %117 = vector.shape_cast %114 : vector<16x16x4xf32> to vector<1x16x16x4xf32>
    tpu.vector_store %arg16[%c0_47, %c0_48, %c0_49, %c0_50], %117 {strides = array<i32>} : memref<1x16x16x4xf32, #tpu.memory_space<vmem>>, vector<1x16x16x4xf32>,
    return
  }
  func.func @transform_0(%arg0: i32) -> (i32, i32, i32, i32) {
    %c0_i32 = arith.constant 0 : i32
    %c0_i32_0 = arith.constant 0 : i32
    %c0_i32_1 = arith.constant 0 : i32
    %c0_i32_2 = arith.constant 0 : i32
    return %arg0, %c0_i32, %c0_i32_0, %c0_i32_1 : i32, i32, i32, i32
  }
  func.func @transform_1(%arg0: i32) -> (i32, i32) {
    %c0_i32 = arith.constant 0 : i32
    %c0_i32_0 = arith.constant 0 : i32
    %c0_i32_1 = arith.constant 0 : i32
    return %c0_i32, %c0_i32_0 : i32, i32
  }
  func.func @transform_2(%arg0: i32) -> (i32, i32) {
    %c0_i32 = arith.constant 0 : i32
    %c0_i32_0 = arith.constant 0 : i32
    %c0_i32_1 = arith.constant 0 : i32
    return %c0_i32, %c0_i32_0 : i32, i32
  }
  func.func @transform_3(%arg0: i32) -> (i32, i32) {
    %c0_i32 = arith.constant 0 : i32
    %c0_i32_0 = arith.constant 0 : i32
    %c0_i32_1 = arith.constant 0 : i32
    return %c0_i32, %c0_i32_0 : i32, i32
  }
  func.func @transform_4(%arg0: i32) -> (i32, i32) {
    %c0_i32 = arith.constant 0 : i32
    %c0_i32_0 = arith.constant 0 : i32
    %c0_i32_1 = arith.constant 0 : i32
    return %c0_i32, %c0_i32_0 : i32, i32
  }
  func.func @transform_5(%arg0: i32) -> (i32, i32) {
    %c0_i32 = arith.constant 0 : i32
    %c0_i32_0 = arith.constant 0 : i32
    %c0_i32_1 = arith.constant 0 : i32
    return %c0_i32, %c0_i32_0 : i32, i32
  }
  func.func @transform_6(%arg0: i32) -> (i32, i32) {
    %c0_i32 = arith.constant 0 : i32
    %c0_i32_0 = arith.constant 0 : i32
    %c0_i32_1 = arith.constant 0 : i32
    return %c0_i32, %c0_i32_0 : i32, i32
  }
  func.func @transform_7(%arg0: i32) -> (i32, i32) {
    %c0_i32 = arith.constant 0 : i32
    %c0_i32_0 = arith.constant 0 : i32
    %c0_i32_1 = arith.constant 0 : i32
    return %c0_i32, %c0_i32_0 : i32, i32
  }
  func.func @transform_8(%arg0: i32) -> (i32, i32) {
    %c0_i32 = arith.constant 0 : i32
    %c0_i32_0 = arith.constant 0 : i32
    %c0_i32_1 = arith.constant 0 : i32
    return %c0_i32, %c0_i32_0 : i32, i32
  }
  func.func @transform_9(%arg0: i32) -> (i32, i32) {
    %c0_i32 = arith.constant 0 : i32
    %c0_i32_0 = arith.constant 0 : i32
    %c0_i32_1 = arith.constant 0 : i32
    return %c0_i32, %c0_i32_0 : i32, i32
  }
  func.func @transform_10(%arg0: i32) -> (i32, i32) {
    %c0_i32 = arith.constant 0 : i32
    %c0_i32_0 = arith.constant 0 : i32
    %c0_i32_1 = arith.constant 0 : i32
    return %c0_i32, %c0_i32_0 : i32, i32
  }
  func.func @transform_11(%arg0: i32) -> (i32, i32) {
    %c0_i32 = arith.constant 0 : i32
    %c0_i32_0 = arith.constant 0 : i32
    %c0_i32_1 = arith.constant 0 : i32
    return %c0_i32, %c0_i32_0 : i32, i32
  }
  func.func @transform_12(%arg0: i32) -> (i32, i32) {
    %c0_i32 = arith.constant 0 : i32
    %c0_i32_0 = arith.constant 0 : i32
    %c0_i32_1 = arith.constant 0 : i32
    return %c0_i32, %c0_i32_0 : i32, i32
  }
  func.func @transform_13(%arg0: i32) -> (i32, i32) {
    %c0_i32 = arith.constant 0 : i32
    %c0_i32_0 = arith.constant 0 : i32
    %c0_i32_1 = arith.constant 0 : i32
    return %c0_i32, %c0_i32_0 : i32, i32
  }
  func.func @transform_14(%arg0: i32) -> (i32, i32) {
    %c0_i32 = arith.constant 0 : i32
    %c0_i32_0 = arith.constant 0 : i32
    %c0_i32_1 = arith.constant 0 : i32
    return %c0_i32, %c0_i32_0 : i32, i32
  }
  func.func @transform_15(%arg0: i32) -> (i32, i32, i32, i32) {
    %c0_i32 = arith.constant 0 : i32
    %c0_i32_0 = arith.constant 0 : i32
    %c0_i32_1 = arith.constant 0 : i32
    %c0_i32_2 = arith.constant 0 : i32
    return %arg0, %c0_i32, %c0_i32_0, %c0_i32_1 : i32, i32, i32, i32
  }
}

</mosaic_0001>

<llo_original>
// kernel: resnet_forward.1
$region0: #{resnet_forward.1}
  #allocation0 [shape = 'u32[]', space=smem, size = 0x4, offset = 0x4, fixed_abs, tag = 'smem constant byte address 0x4 - core index']
  #allocation1 [shape = 'u32[144,128]{1,0:T(1,128)}', space=vmem, size = 0x12000, scoped, tag = 'internal scratch']
  %s0 = inlined_call_operand.vmem [shape: f32[2,16,16,8], index: 0, kind: input, shape index: {}]
  %s1 = inlined_call_operand.vmem [shape: f32[72,8], index: 1, kind: input, shape index: {}]
  %s2 = inlined_call_operand.vmem [shape: f32[1,8], index: 2, kind: input, shape index: {}]
  %s3 = inlined_call_operand.vmem [shape: f32[1,8], index: 3, kind: input, shape index: {}]
  %s4 = inlined_call_operand.vmem [shape: f32[72,8], index: 4, kind: input, shape index: {}]
  %s5 = inlined_call_operand.vmem [shape: f32[1,8], index: 5, kind: input, shape index: {}]
  %s6 = inlined_call_operand.vmem [shape: f32[1,8], index: 6, kind: input, shape index: {}]
  %s7 = inlined_call_operand.vmem [shape: f32[72,8], index: 7, kind: input, shape index: {}]
  %s8 = inlined_call_operand.vmem [shape: f32[1,8], index: 8, kind: input, shape index: {}]
  %s9 = inlined_call_operand.vmem [shape: f32[1,8], index: 9, kind: input, shape index: {}]
  %s10 = inlined_call_operand.vmem [shape: f32[72,8], index: 10, kind: input, shape index: {}]
  %s11 = inlined_call_operand.vmem [shape: f32[1,8], index: 11, kind: input, shape index: {}]
  %s12 = inlined_call_operand.vmem [shape: f32[1,8], index: 12, kind: input, shape index: {}]
  %s13 = inlined_call_operand.vmem [shape: f32[8,4], index: 13, kind: input, shape index: {}]
  %s14 = inlined_call_operand.vmem [shape: f32[1,4], index: 14, kind: input, shape index: {}]
  %s15 = inlined_call_operand.vmem [shape: f32[2,16,16,4], index: 15, kind: output, shape index: {}]
  %s16 = sld [smem:[#allocation0]]
  $region93: #{resnet_forward.1} parent=0
    _
  %s18 = ssub.s32 1, %s16
  %s19 = scalar_select 0, %s18, %s16
  loop: start=0, step=1, limit=4
  $region2: #{resnet_forward.1} parent=0 // loop_pre_header
    _
  $region3: #{resnet_forward.1} parent=0 // loop_header
    %s21 = sphi 0, %s25
    %p22 = scmp.ge.s32.totalorder %s21, 4
    %s31 = sphi 0, %s33
    %s34 = sphi 0, %s31
    %s35 = sphi 0, %s34
    %s51 = sphi 0, %s35
    %s55 = sphi 0, %s55
    %s57 = sphi 0, %s55
    %s58 = sphi 0, %s57
    %s72 = sphi 0, %s58
    %s76 = sphi 0, %s76
    %s78 = sphi 0, %s76
    %s79 = sphi 0, %s78
    %s93 = sphi 0, %s79
    %s97 = sphi 0, %s97
    %s99 = sphi 0, %s97
    %s100 = sphi 0, %s99
    %s114 = sphi 0, %s100
    %s118 = sphi 0, %s118
    %s120 = sphi 0, %s118
    %s121 = sphi 0, %s120
    %s135 = sphi 0, %s121
    %s139 = sphi 0, %s139
    %s141 = sphi 0, %s139
    %s142 = sphi 0, %s141
    %s156 = sphi 0, %s142
    %s160 = sphi 0, %s160
    %s162 = sphi 0, %s160
    %s163 = sphi 0, %s162
    %s177 = sphi 0, %s163
    %s181 = sphi 0, %s181
    %s183 = sphi 0, %s181
    %s184 = sphi 0, %s183
    %s198 = sphi 0, %s184
    %s202 = sphi 0, %s202
    %s204 = sphi 0, %s202
    %s205 = sphi 0, %s204
    %s219 = sphi 0, %s205
    %s223 = sphi 0, %s223
    %s225 = sphi 0, %s223
    %s226 = sphi 0, %s225
    %s240 = sphi 0, %s226
    %s244 = sphi 0, %s244
    %s246 = sphi 0, %s244
    %s247 = sphi 0, %s246
    %s261 = sphi 0, %s247
    %s265 = sphi 0, %s265
    %s267 = sphi 0, %s265
    %s268 = sphi 0, %s267
    %s282 = sphi 0, %s268
    %s286 = sphi 0, %s286
    %s288 = sphi 0, %s286
    %s289 = sphi 0, %s288
    %s303 = sphi 0, %s289
    %s307 = sphi 0, %s307
    %s309 = sphi 0, %s307
    %s310 = sphi 0, %s309
    %s324 = sphi 0, %s310
    %s328 = sphi 0, %s328
    %s330 = sphi 0, %s328
    %s331 = sphi 0, %s330
    %s345 = sphi 0, %s331
    %s351 = sphi 0, %s353
    %s354 = sphi 0, %s351
    %s355 = sphi 0, %s354
    %s371 = sphi 0, %s355
  $region4: #{resnet_forward.1} parent=0 // loop_header_branch
    %24 = sbr.rel (%p22) target = $region8
  $region5: #{resnet_forward.1} parent=0 // loop_body
    %s26 = ssub.s32 %s21, 1
    %s27 = ssub.s32 %s21, 2
    %s28 = sadd.s32 %s21, 1
    %s29 = ssub.s32 %s21, %s28
    %p30 = scmp.eq.s32.totalorder %s29, 0
    %s32 = sadd.s32 %s31, 1
    %s33 = scalar_select %p30, %s31, %s32
    %p36 = pneg %p30
    %p37 = scmp.eq.s32.totalorder %s21, 1
    %p38 = por %p36, %p37
    %p39 = scmp.ne.s32.totalorder %s31, %s34
    %p40 = scmp.eq.s32.totalorder %s21, 0
    %p41 = por %p39, %p40
    %p42 = scmp.ne.s32.totalorder %s31, %s34
    %p43 = scmp.eq.s32.totalorder %s26, 1
    %p44 = por %p42, %p43
    %p45 = scmp.ne.s32.totalorder %s34, %s35
    %p46 = scmp.eq.s32.totalorder %s26, 0
    %p47 = por %p45, %p46
    %p48 = scmp.ne.s32.totalorder %s34, %s35
    %p49 = scmp.eq.s32.totalorder %s27, 1
    %p50 = por %p48, %p49
    %p52 = scmp.ne.s32.totalorder %s35, %s51
    %p53 = scmp.eq.s32.totalorder %s27, 0
    %p54 = por %p52, %p53
    %s56 = sadd.s32 %s55, 1
    %p59 = scmp.eq.s32.totalorder %s21, 1
    %p60 = scmp.ne.s32.totalorder %s55, %s57
    %p61 = scmp.eq.s32.totalorder %s21, 0
    %p62 = por %p60, %p61
    %p63 = scmp.ne.s32.totalorder %s55, %s57
    %p64 = scmp.eq.s32.totalorder %s26, 1
    %p65 = por %p63, %p64
    %p66 = scmp.ne.s32.totalorder %s57, %s58
    %p67 = scmp.eq.s32.totalorder %s26, 0
    %p68 = por %p66, %p67
    %p69 = scmp.ne.s32.totalorder %s57, %s58
    %p70 = scmp.eq.s32.totalorder %s27, 1
    %p71 = por %p69, %p70
    %p73 = scmp.ne.s32.totalorder %s58, %s72
    %p74 = scmp.eq.s32.totalorder %s27, 0
    %p75 = por %p73, %p74
    %s77 = sadd.s32 %s76, 1
    %p80 = scmp.eq.s32.totalorder %s21, 1
    %p81 = scmp.ne.s32.totalorder %s76, %s78
    %p82 = scmp.eq.s32.totalorder %s21, 0
    %p83 = por %p81, %p82
    %p84 = scmp.ne.s32.totalorder %s76, %s78
    %p85 = scmp.eq.s32.totalorder %s26, 1
    %p86 = por %p84, %p85
    %p87 = scmp.ne.s32.totalorder %s78, %s79
    %p88 = scmp.eq.s32.totalorder %s26, 0
    %p89 = por %p87, %p88
    %p90 = scmp.ne.s32.totalorder %s78, %s79
    %p91 = scmp.eq.s32.totalorder %s27, 1
    %p92 = por %p90, %p91
    %p94 = scmp.ne.s32.totalorder %s79, %s93
    %p95 = scmp.eq.s32.totalorder %s27, 0
    %p96 = por %p94, %p95
    %s98 = sadd.s32 %s97, 1
    %p101 = scmp.eq.s32.totalorder %s21, 1
    %p102 = scmp.ne.s32.totalorder %s97, %s99
    %p103 = scmp.eq.s32.totalorder %s21, 0
    %p104 = por %p102, %p103
    %p105 = scmp.ne.s32.totalorder %s97, %s99
    %p106 = scmp.eq.s32.totalorder %s26, 1
    %p107 = por %p105, %p106
    %p108 = scmp.ne.s32.totalorder %s99, %s100
    %p109 = scmp.eq.s32.totalorder %s26, 0
    %p110 = por %p108, %p109
    %p111 = scmp.ne.s32.totalorder %s99, %s100
    %p112 = scmp.eq.s32.totalorder %s27, 1
    %p113 = por %p111, %p112
    %p115 = scmp.ne.s32.totalorder %s100, %s114
    %p116 = scmp.eq.s32.totalorder %s27, 0
    %p117 = por %p115, %p116
    %s119 = sadd.s32 %s118, 1
    %p122 = scmp.eq.s32.totalorder %s21, 1
    %p123 = scmp.ne.s32.totalorder %s118, %s120
    %p124 = scmp.eq.s32.totalorder %s21, 0
    %p125 = por %p123, %p124
    %p126 = scmp.ne.s32.totalorder %s118, %s120
    %p127 = scmp.eq.s32.totalorder %s26, 1
    %p128 = por %p126, %p127
    %p129 = scmp.ne.s32.totalorder %s120, %s121
    %p130 = scmp.eq.s32.totalorder %s26, 0
    %p131 = por %p129, %p130
    %p132 = scmp.ne.s32.totalorder %s120, %s121
    %p133 = scmp.eq.s32.totalorder %s27, 1
    %p134 = por %p132, %p133
    %p136 = scmp.ne.s32.totalorder %s121, %s135
    %p137 = scmp.eq.s32.totalorder %s27, 0
    %p138 = por %p136, %p137
    %s140 = sadd.s32 %s139, 1
    %p143 = scmp.eq.s32.totalorder %s21, 1
    %p144 = scmp.ne.s32.totalorder %s139, %s141
    %p145 = scmp.eq.s32.totalorder %s21, 0
    %p146 = por %p144, %p145
    %p147 = scmp.ne.s32.totalorder %s139, %s141
    %p148 = scmp.eq.s32.totalorder %s26, 1
    %p149 = por %p147, %p148
    %p150 = scmp.ne.s32.totalorder %s141, %s142
    %p151 = scmp.eq.s32.totalorder %s26, 0
    %p152 = por %p150, %p151
    %p153 = scmp.ne.s32.totalorder %s141, %s142
    %p154 = scmp.eq.s32.totalorder %s27, 1
    %p155 = por %p153, %p154
    %p157 = scmp.ne.s32.totalorder %s142, %s156
    %p158 = scmp.eq.s32.totalorder %s27, 0
    %p159 = por %p157, %p158
    %s161 = sadd.s32 %s160, 1
    %p164 = scmp.eq.s32.totalorder %s21, 1
    %p165 = scmp.ne.s32.totalorder %s160, %s162
    %p166 = scmp.eq.s32.totalorder %s21, 0
    %p167 = por %p165, %p166
    %p168 = scmp.ne.s32.totalorder %s160, %s162
    %p169 = scmp.eq.s32.totalorder %s26, 1
    %p170 = por %p168, %p169
    %p171 = scmp.ne.s32.totalorder %s162, %s163
    %p172 = scmp.eq.s32.totalorder %s26, 0
    %p173 = por %p171, %p172
    %p174 = scmp.ne.s32.totalorder %s162, %s163
    %p175 = scmp.eq.s32.totalorder %s27, 1
    %p176 = por %p174, %p175
    %p178 = scmp.ne.s32.totalorder %s163, %s177
    %p179 = scmp.eq.s32.totalorder %s27, 0
    %p180 = por %p178, %p179
    %s182 = sadd.s32 %s181, 1
    %p185 = scmp.eq.s32.totalorder %s21, 1
    %p186 = scmp.ne.s32.totalorder %s181, %s183
    %p187 = scmp.eq.s32.totalorder %s21, 0
    %p188 = por %p186, %p187
    %p189 = scmp.ne.s32.totalorder %s181, %s183
    %p190 = scmp.eq.s32.totalorder %s26, 1
    %p191 = por %p189, %p190
    %p192 = scmp.ne.s32.totalorder %s183, %s184
    %p193 = scmp.eq.s32.totalorder %s26, 0
    %p194 = por %p192, %p193
    %p195 = scmp.ne.s32.totalorder %s183, %s184
    %p196 = scmp.eq.s32.totalorder %s27, 1
    %p197 = por %p195, %p196
    %p199 = scmp.ne.s32.totalorder %s184, %s198
    %p200 = scmp.eq.s32.totalorder %s27, 0
    %p201 = por %p199, %p200
    %s203 = sadd.s32 %s202, 1
    %p206 = scmp.eq.s32.totalorder %s21, 1
    %p207 = scmp.ne.s32.totalorder %s202, %s204
    %p208 = scmp.eq.s32.totalorder %s21, 0
    %p209 = por %p207, %p208
    %p210 = scmp.ne.s32.totalorder %s202, %s204
    %p211 = scmp.eq.s32.totalorder %s26, 1
    %p212 = por %p210, %p211
    %p213 = scmp.ne.s32.totalorder %s204, %s205
    %p214 = scmp.eq.s32.totalorder %s26, 0
    %p215 = por %p213, %p214
    %p216 = scmp.ne.s32.totalorder %s204, %s205
    %p217 = scmp.eq.s32.totalorder %s27, 1
    %p218 = por %p216, %p217
    %p220 = scmp.ne.s32.totalorder %s205, %s219
    %p221 = scmp.eq.s32.totalorder %s27, 0
    %p222 = por %p220, %p221
    %s224 = sadd.s32 %s223, 1
    %p227 = scmp.eq.s32.totalorder %s21, 1
    %p228 = scmp.ne.s32.totalorder %s223, %s225
    %p229 = scmp.eq.s32.totalorder %s21, 0
    %p230 = por %p228, %p229
    %p231 = scmp.ne.s32.totalorder %s223, %s225
    %p232 = scmp.eq.s32.totalorder %s26, 1
    %p233 = por %p231, %p232
    %p234 = scmp.ne.s32.totalorder %s225, %s226
    %p235 = scmp.eq.s32.totalorder %s26, 0
    %p236 = por %p234, %p235
    %p237 = scmp.ne.s32.totalorder %s225, %s226
    %p238 = scmp.eq.s32.totalorder %s27, 1
    %p239 = por %p237, %p238
    %p241 = scmp.ne.s32.totalorder %s226, %s240
    %p242 = scmp.eq.s32.totalorder %s27, 0
    %p243 = por %p241, %p242
    %s245 = sadd.s32 %s244, 1
    %p248 = scmp.eq.s32.totalorder %s21, 1
    %p249 = scmp.ne.s32.totalorder %s244, %s246
    %p250 = scmp.eq.s32.totalorder %s21, 0
    %p251 = por %p249, %p250
    %p252 = scmp.ne.s32.totalorder %s244, %s246
    %p253 = scmp.eq.s32.totalorder %s26, 1
    %p254 = por %p252, %p253
    %p255 = scmp.ne.s32.totalorder %s246, %s247
    %p256 = scmp.eq.s32.totalorder %s26, 0
    %p257 = por %p255, %p256
    %p258 = scmp.ne.s32.totalorder %s246, %s247
    %p259 = scmp.eq.s32.totalorder %s27, 1
    %p260 = por %p258, %p259
    %p262 = scmp.ne.s32.totalorder %s247, %s261
    %p263 = scmp.eq.s32.totalorder %s27, 0
    %p264 = por %p262, %p263
    %s266 = sadd.s32 %s265, 1
    %p269 = scmp.eq.s32.totalorder %s21, 1
    %p270 = scmp.ne.s32.totalorder %s265, %s267
    %p271 = scmp.eq.s32.totalorder %s21, 0
    %p272 = por %p270, %p271
    %p273 = scmp.ne.s32.totalorder %s265, %s267
    %p274 = scmp.eq.s32.totalorder %s26, 1
    %p275 = por %p273, %p274
    %p276 = scmp.ne.s32.totalorder %s267, %s268
    %p277 = scmp.eq.s32.totalorder %s26, 0
    %p278 = por %p276, %p277
    %p279 = scmp.ne.s32.totalorder %s267, %s268
    %p280 = scmp.eq.s32.totalorder %s27, 1
    %p281 = por %p279, %p280
    %p283 = scmp.ne.s32.totalorder %s268, %s282
    %p284 = scmp.eq.s32.totalorder %s27, 0
    %p285 = por %p283, %p284
    %s287 = sadd.s32 %s286, 1
    %p290 = scmp.eq.s32.totalorder %s21, 1
    %p291 = scmp.ne.s32.totalorder %s286, %s288
    %p292 = scmp.eq.s32.totalorder %s21, 0
    %p293 = por %p291, %p292
    %p294 = scmp.ne.s32.totalorder %s286, %s288
    %p295 = scmp.eq.s32.totalorder %s26, 1
    %p296 = por %p294, %p295
    %p297 = scmp.ne.s32.totalorder %s288, %s289
    %p298 = scmp.eq.s32.totalorder %s26, 0
    %p299 = por %p297, %p298
    %p300 = scmp.ne.s32.totalorder %s288, %s289
    %p301 = scmp.eq.s32.totalorder %s27, 1
    %p302 = por %p300, %p301
    %p304 = scmp.ne.s32.totalorder %s289, %s303
    %p305 = scmp.eq.s32.totalorder %s27, 0
    %p306 = por %p304, %p305
    %s308 = sadd.s32 %s307, 1
    %p311 = scmp.eq.s32.totalorder %s21, 1
    %p312 = scmp.ne.s32.totalorder %s307, %s309
    %p313 = scmp.eq.s32.totalorder %s21, 0
    %p314 = por %p312, %p313
    %p315 = scmp.ne.s32.totalorder %s307, %s309
    %p316 = scmp.eq.s32.totalorder %s26, 1
    %p317 = por %p315, %p316
    %p318 = scmp.ne.s32.totalorder %s309, %s310
    %p319 = scmp.eq.s32.totalorder %s26, 0
    %p320 = por %p318, %p319
    %p321 = scmp.ne.s32.totalorder %s309, %s310
    %p322 = scmp.eq.s32.totalorder %s27, 1
    %p323 = por %p321, %p322
    %p325 = scmp.ne.s32.totalorder %s310, %s324
    %p326 = scmp.eq.s32.totalorder %s27, 0
    %p327 = por %p325, %p326
    %s329 = sadd.s32 %s328, 1
    %p332 = scmp.eq.s32.totalorder %s21, 1
    %p333 = scmp.ne.s32.totalorder %s328, %s330
    %p334 = scmp.eq.s32.totalorder %s21, 0
    %p335 = por %p333, %p334
    %p336 = scmp.ne.s32.totalorder %s328, %s330
    %p337 = scmp.eq.s32.totalorder %s26, 1
    %p338 = por %p336, %p337
    %p339 = scmp.ne.s32.totalorder %s330, %s331
    %p340 = scmp.eq.s32.totalorder %s26, 0
    %p341 = por %p339, %p340
    %p342 = scmp.ne.s32.totalorder %s330, %s331
    %p343 = scmp.eq.s32.totalorder %s27, 1
    %p344 = por %p342, %p343
    %p346 = scmp.ne.s32.totalorder %s331, %s345
    %p347 = scmp.eq.s32.totalorder %s27, 0
    %p348 = por %p346, %p347
    %s349 = ssub.s32 %s21, %s28
    %p350 = scmp.eq.s32.totalorder %s349, 0
    %s352 = sadd.s32 %s351, 1
    %s353 = scalar_select %p350, %s351, %s352
    %p356 = pneg %p350
    %p357 = scmp.eq.s32.totalorder %s21, 1
    %p358 = por %p356, %p357
    %p359 = scmp.ne.s32.totalorder %s351, %s354
    %p360 = scmp.eq.s32.totalorder %s21, 0
    %p361 = por %p359, %p360
    %p362 = scmp.ne.s32.totalorder %s351, %s354
    %p363 = scmp.eq.s32.totalorder %s26, 1
    %p364 = por %p362, %p363
    %p365 = scmp.ne.s32.totalorder %s354, %s355
    %p366 = scmp.eq.s32.totalorder %s26, 0
    %p367 = por %p365, %p366
    %p368 = scmp.ne.s32.totalorder %s354, %s355
    %p369 = scmp.eq.s32.totalorder %s27, 1
    %p370 = por %p368, %p369
    %p372 = scmp.ne.s32.totalorder %s355, %s371
    %p373 = scmp.eq.s32.totalorder %s27, 0
    %p374 = por %p372, %p373
    %p375 = scmp.le.s32.totalorder 1, %s21
    %p376 = scmp.lt.s32.totalorder %s21, 3
    %p377 = pnand %p375, %p376
    %p378 = pneg %p377
    // Predicated region
    $region9: #{resnet_forward.1} parent=5 // pred_check
      _
    $region10: #{resnet_forward.1} parent=5 // pred_check_branch
      %380 = sbr.rel (%p377) target = $region12
    $region11: #{resnet_forward.1} parent=5 // pred_region
      %s381 = ssub.s32 %s21, 1
      // Predicated region
      $region13: #{resnet_forward.1} parent=11 // pred_check
        %p382 = pneg %p68
      $region14: #{resnet_forward.1} parent=11 // pred_check_branch
        %384 = sbr.rel (%p382) target = $region16
      $region15: #{resnet_forward.1} parent=11 // pred_region
        _
      $region16: #{resnet_forward.1} parent=11 // pred_fallthru
        _
      // Predicated region
      $region17: #{resnet_forward.1} parent=11 // pred_check
        %p385 = pneg %p89
      $region18: #{resnet_forward.1} parent=11 // pred_check_branch
        %387 = sbr.rel (%p385) target = $region20
      $region19: #{resnet_forward.1} parent=11 // pred_region
        _
      $region20: #{resnet_forward.1} parent=11 // pred_fallthru
        _
      // Predicated region
      $region21: #{resnet_forward.1} parent=11 // pred_check
        %p388 = pneg %p110
      $region22: #{resnet_forward.1} parent=11 // pred_check_branch
        %390 = sbr.rel (%p388) target = $region24
      $region23: #{resnet_forward.1} parent=11 // pred_region
        _
      $region24: #{resnet_forward.1} parent=11 // pred_fallthru
        _
      // Predicated region
      $region25: #{resnet_forward.1} parent=11 // pred_check
        %p391 = pneg %p131
      $region26: #{resnet_forward.1} parent=11 // pred_check_branch
        %393 = sbr.rel (%p391) target = $region28
      $region27: #{resnet_forward.1} parent=11 // pred_region
        _
      $region28: #{resnet_forward.1} parent=11 // pred_fallthru
        _
      // Predicated region
      $region29: #{resnet_forward.1} parent=11 // pred_check
        %p394 = pneg %p152
      $region30: #{resnet_forward.1} parent=11 // pred_check_branch
        %396 = sbr.rel (%p394) target = $region32
      $region31: #{resnet_forward.1} parent=11 // pred_region
        _
      $region32: #{resnet_forward.1} parent=11 // pred_fallthru
        _
      // Predicated region
      $region33: #{resnet_forward.1} parent=11 // pred_check
        %p397 = pneg %p173
      $region34: #{resnet_forward.1} parent=11 // pred_check_branch
        %399 = sbr.rel (%p397) target = $region36
      $region35: #{resnet_forward.1} parent=11 // pred_region
        _
      $region36: #{resnet_forward.1} parent=11 // pred_fallthru
        _
      // Predicated region
      $region37: #{resnet_forward.1} parent=11 // pred_check
        %p400 = pneg %p194
      $region38: #{resnet_forward.1} parent=11 // pred_check_branch
        %402 = sbr.rel (%p400) target = $region40
      $region39: #{resnet_forward.1} parent=11 // pred_region
        _
      $region40: #{resnet_forward.1} parent=11 // pred_fallthru
        _
      // Predicated region
      $region41: #{resnet_forward.1} parent=11 // pred_check
        %p403 = pneg %p215
      $region42: #{resnet_forward.1} parent=11 // pred_check_branch
        %405 = sbr.rel (%p403) target = $region44
      $region43: #{resnet_forward.1} parent=11 // pred_region
        _
      $region44: #{resnet_forward.1} parent=11 // pred_fallthru
        _
      // Predicated region
      $region45: #{resnet_forward.1} parent=11 // pred_check
        %p406 = pneg %p236
      $region46: #{resnet_forward.1} parent=11 // pred_check_branch
        %408 = sbr.rel (%p406) target = $region48
      $region47: #{resnet_forward.1} parent=11 // pred_region
        _
      $region48: #{resnet_forward.1} parent=11 // pred_fallthru
        _
      // Predicated region
      $region49: #{resnet_forward.1} parent=11 // pred_check
        %p409 = pneg %p257
      $region50: #{resnet_forward.1} parent=11 // pred_check_branch
        %411 = sbr.rel (%p409) target = $region52
      $region51: #{resnet_forward.1} parent=11 // pred_region
        _
      $region52: #{resnet_forward.1} parent=11 // pred_fallthru
        _
      // Predicated region
      $region53: #{resnet_forward.1} parent=11 // pred_check
        %p412 = pneg %p278
      $region54: #{resnet_forward.1} parent=11 // pred_check_branch
        %414 = sbr.rel (%p412) target = $region56
      $region55: #{resnet_forward.1} parent=11 // pred_region
        _
      $region56: #{resnet_forward.1} parent=11 // pred_fallthru
        _
      // Predicated region
      $region57: #{resnet_forward.1} parent=11 // pred_check
        %p415 = pneg %p299
      $region58: #{resnet_forward.1} parent=11 // pred_check_branch
        %417 = sbr.rel (%p415) target = $region60
      $region59: #{resnet_forward.1} parent=11 // pred_region
        _
      $region60: #{resnet_forward.1} parent=11 // pred_fallthru
        _
      // Predicated region
      $region61: #{resnet_forward.1} parent=11 // pred_check
        %p418 = pneg %p320
      $region62: #{resnet_forward.1} parent=11 // pred_check_branch
        %420 = sbr.rel (%p418) target = $region64
      $region63: #{resnet_forward.1} parent=11 // pred_region
        _
      $region64: #{resnet_forward.1} parent=11 // pred_fallthru
        _
      // Predicated region
      $region65: #{resnet_forward.1} parent=11 // pred_check
        %p421 = pneg %p341
      $region66: #{resnet_forward.1} parent=11 // pred_check_branch
        %423 = sbr.rel (%p421) target = $region68
      $region67: #{resnet_forward.1} parent=11 // pred_region
        _
      $region68: #{resnet_forward.1} parent=11 // pred_fallthru
        _
    $region12: #{resnet_forward.1} parent=5 // pred_fallthru
      _
    %p424 = scmp.lt.s32.totalorder %s21, 2
    // Predicated region
    $region69: #{resnet_forward.1} parent=5 // pred_check
      %p425 = pneg %p424
    $region70: #{resnet_forward.1} parent=5 // pred_check_branch
      %427 = sbr.rel (%p425) target = $region72
    $region71: #{resnet_forward.1} parent=5 // pred_region
      // Predicated region
      $region73: #{resnet_forward.1} parent=71 // pred_check
        %p428 = pneg %p41
      $region74: #{resnet_forward.1} parent=71 // pred_check_branch
        %430 = sbr.rel (%p428) target = $region76
      $region75: #{resnet_forward.1} parent=71 // pred_region
        %p431 = scmp.lt.s32.totalorder %s21, 1
        %s432 = scalar_select %p431, %s21, 1
        %s433 = smul.addr %s432, 32
        %s434 = smul.addr %s433, 8
        %s435 = scalar_lea.vmem %s0, %s434
      $region76: #{resnet_forward.1} parent=71 // pred_fallthru
        _
    $region72: #{resnet_forward.1} parent=5 // pred_fallthru
      _
    %p436 = scmp.le.s32.totalorder 1, %s21
    %p437 = scmp.lt.s32.totalorder %s21, 3
    %p438 = pnand %p436, %p437
    %p439 = pneg %p438
    // Predicated region
    $region77: #{resnet_forward.1} parent=5 // pred_check
      _
    $region78: #{resnet_forward.1} parent=5 // pred_check_branch
      %441 = sbr.rel (%p438) target = $region80
    $region79: #{resnet_forward.1} parent=5 // pred_region
      %s442 = ssub.s32 %s21, 1
      %p443 = scmp.lt.s32.totalorder %s26, 1
      %s444 = scalar_select %p443, %s26, 1
      %s445 = smul.addr %s444, 32
      %s446 = smul.addr %s445, 8
      %s447 = scalar_lea.vmem %s0, %s446
      %p448 = pneg %p47
      %p449 = pneg %p44
      %p450 = pneg %p68
      %p451 = pneg %p65
      %p452 = pneg %p89
      %p453 = pneg %p86
      %p454 = pneg %p110
      %p455 = pneg %p107
      %p456 = pneg %p131
      %p457 = pneg %p128
      %p458 = pneg %p152
      %p459 = pneg %p149
      %p460 = pneg %p173
      %p461 = pneg %p170
      %p462 = pneg %p194
      %p463 = pneg %p191
      %p464 = pneg %p215
      %p465 = pneg %p212
      %p466 = pneg %p236
      %p467 = pneg %p233
      %p468 = pneg %p257
      %p469 = pneg %p254
      %p470 = pneg %p278
      %p471 = pneg %p275
      %p472 = pneg %p299
      %p473 = pneg %p296
      %p474 = pneg %p320
      %p475 = pneg %p317
      %p476 = pneg %p341
      %p477 = pneg %p338
      %p478 = pneg %p367
      %p479 = pneg %p364
      %p480 = scmp.lt.s32.totalorder %s26, 1
      %s481 = scalar_select %p480, %s26, 1
      %s482 = smul.addr %s481, 32
      %s483 = smul.addr %s482, 8
      %s484 = scalar_lea.vmem %s15, %s483
      %p485 = scmp.lt.s32.totalorder %s26, 1
      %s486 = scalar_select %p485, %s26, 1
      %s487 = smul.addr %s486, 32
      %s488 = smul.addr %s487, 8
      %s489 = scalar_lea.vmem %s0, %s488
      %p490 = scmp.lt.s32.totalorder %s26, 1
      %s491 = scalar_select %p490, %s26, 1
      %s492 = smul.addr %s491, 32
      %s493 = smul.addr %s492, 8
      %s494 = scalar_lea.vmem %s15, %s493
      %v495 = vld [vmem:[%s489] sm:$0xff]
      %v496 = vld [vmem:[%s489 + $0x8] sm:$0xff]
      %v497 = vld [vmem:[%s489 + $0x10] sm:$0xff]
      %v498 = vld [vmem:[%s489 + $0x18] sm:$0xff]
      %v499 = vld [vmem:[%s489 + $0x20] sm:$0xff]
      %v500 = vld [vmem:[%s489 + $0x28] sm:$0xff]
      %v501 = vld [vmem:[%s489 + $0x30] sm:$0xff]
      %v502 = vld [vmem:[%s489 + $0x38] sm:$0xff]
      %v503 = vld [vmem:[%s489 + $0x40] sm:$0xff]
      %v504 = vld [vmem:[%s489 + $0x48] sm:$0xff]
      %v505 = vld [vmem:[%s489 + $0x50] sm:$0xff]
      %v506 = vld [vmem:[%s489 + $0x58] sm:$0xff]
      %v507 = vld [vmem:[%s489 + $0x60] sm:$0xff]
      %v508 = vld [vmem:[%s489 + $0x68] sm:$0xff]
      %v509 = vld [vmem:[%s489 + $0x70] sm:$0xff]
      %v510 = vld [vmem:[%s489 + $0x78] sm:$0xff]
      %v511 = vld [vmem:[%s489 + $0x80] sm:$0xff]
      %v512 = vld [vmem:[%s489 + $0x88] sm:$0xff]
      %v513 = vld [vmem:[%s489 + $0x90] sm:$0xff]
      %v514 = vld [vmem:[%s489 + $0x98] sm:$0xff]
      %v515 = vld [vmem:[%s489 + $0xa0] sm:$0xff]
      %v516 = vld [vmem:[%s489 + $0xa8] sm:$0xff]
      %v517 = vld [vmem:[%s489 + $0xb0] sm:$0xff]
      %v518 = vld [vmem:[%s489 + $0xb8] sm:$0xff]
      %v519 = vld [vmem:[%s489 + $0xc0] sm:$0xff]
      %v520 = vld [vmem:[%s489 + $0xc8] sm:$0xff]
      %v521 = vld [vmem:[%s489 + $0xd0] sm:$0xff]
      %v522 = vld [vmem:[%s489 + $0xd8] sm:$0xff]
      %v523 = vld [vmem:[%s489 + $0xe0] sm:$0xff]
      %v524 = vld [vmem:[%s489 + $0xe8] sm:$0xff]
      %v525 = vld [vmem:[%s489 + $0xf0] sm:$0xff]
      %v526 = vld [vmem:[%s489 + $0xf8] sm:$0xff]
      %vm560 = vcmask 1040384
      %v561 = vrot.slane 0.0, 7
      %v562 = vsel %vm560, %v561, %v561
      %v563 = vrot.slane %v495, 7
      %v564 = vrot.slane %v496, 7
      %v565 = vsel %vm560, %v563, %v564
      %v566 = vrot.slane %v497, 7
      %v567 = vrot.slane %v498, 7
      %v568 = vsel %vm560, %v566, %v567
      %v569 = vrot.slane %v499, 7
      %v570 = vrot.slane %v500, 7
      %v571 = vsel %vm560, %v569, %v570
      %v572 = vrot.slane %v501, 7
      %v573 = vrot.slane %v502, 7
      %v574 = vsel %vm560, %v572, %v573
      %v575 = vrot.slane %v503, 7
      %v576 = vrot.slane %v504, 7
      %v577 = vsel %vm560, %v575, %v576
      %v578 = vrot.slane %v505, 7
      %v579 = vrot.slane %v506, 7
      %v580 = vsel %vm560, %v578, %v579
      %v581 = vrot.slane %v507, 7
      %v582 = vrot.slane %v508, 7
      %v583 = vsel %vm560, %v581, %v582
      %v584 = vrot.slane %v509, 7
      %v585 = vrot.slane %v510, 7
      %v586 = vsel %vm560, %v584, %v585
      %v587 = vrot.slane %v511, 7
      %v588 = vrot.slane %v512, 7
      %v589 = vsel %vm560, %v587, %v588
      %v590 = vrot.slane %v513, 7
      %v591 = vrot.slane %v514, 7
      %v592 = vsel %vm560, %v590, %v591
      %v593 = vrot.slane %v515, 7
      %v594 = vrot.slane %v516, 7
      %v595 = vsel %vm560, %v593, %v594
      %v596 = vrot.slane %v517, 7
      %v597 = vrot.slane %v518, 7
      %v598 = vsel %vm560, %v596, %v597
      %v599 = vrot.slane %v519, 7
      %v600 = vrot.slane %v520, 7
      %v601 = vsel %vm560, %v599, %v600
      %v602 = vrot.slane %v521, 7
      %v603 = vrot.slane %v522, 7
      %v604 = vsel %vm560, %v602, %v603
      %v605 = vrot.slane %v523, 7
      %v606 = vrot.slane %v524, 7
      %v607 = vsel %vm560, %v605, %v606
      %v608 = vrot.slane %v525, 7
      %v609 = vrot.slane %v526, 7
      %v610 = vsel %vm560, %v608, %v609
      %v660 = vsel %vm560, 0.0, %v561
      %v661 = vsel %vm560, 0.0, %v563
      %v662 = vsel %vm560, 0.0, %v566
      %v663 = vsel %vm560, 0.0, %v569
      %v664 = vsel %vm560, 0.0, %v572
      %v665 = vsel %vm560, 0.0, %v575
      %v666 = vsel %vm560, 0.0, %v578
      %v667 = vsel %vm560, 0.0, %v581
      %v668 = vsel %vm560, 0.0, %v584
      %v669 = vsel %vm560, 0.0, %v587
      %v670 = vsel %vm560, 0.0, %v590
      %v671 = vsel %vm560, 0.0, %v593
      %v672 = vsel %vm560, 0.0, %v596
      %v673 = vsel %vm560, 0.0, %v599
      %v674 = vsel %vm560, 0.0, %v602
      %v675 = vsel %vm560, 0.0, %v605
      %v676 = vsel %vm560, 0.0, %v608
      %v677 = vsel %vm560, %v561, 0.0
      %v678 = vsel %vm560, %v564, 0.0
      %v679 = vsel %vm560, %v567, 0.0
      %v680 = vsel %vm560, %v570, 0.0
      %v681 = vsel %vm560, %v573, 0.0
      %v682 = vsel %vm560, %v576, 0.0
      %v683 = vsel %vm560, %v579, 0.0
      %v684 = vsel %vm560, %v582, 0.0
      %v685 = vsel %vm560, %v585, 0.0
      %v686 = vsel %vm560, %v588, 0.0
      %v687 = vsel %vm560, %v591, 0.0
      %v688 = vsel %vm560, %v594, 0.0
      %v689 = vsel %vm560, %v597, 0.0
      %v690 = vsel %vm560, %v600, 0.0
      %v691 = vsel %vm560, %v603, 0.0
      %v692 = vsel %vm560, %v606, 0.0
      %v693 = vsel %vm560, %v609, 0.0
      %vm726 = vcmask 1046528
      %v727 = vrot.slane %v660, 1
      %v728 = vrot.slane %v562, 1
      %v729 = vsel %vm726, %v727, %v728
      %v730 = vrot.slane %v677, 1
      %v731 = vsel %vm726, %v728, %v730
      %v732 = vrot.slane %v661, 1
      %v733 = vrot.slane %v565, 1
      %v734 = vsel %vm726, %v732, %v733
      %v735 = vrot.slane %v678, 1
      %v736 = vsel %vm726, %v733, %v735
      %v737 = vrot.slane %v662, 1
      %v738 = vrot.slane %v568, 1
      %v739 = vsel %vm726, %v737, %v738
      %v740 = vrot.slane %v679, 1
      %v741 = vsel %vm726, %v738, %v740
      %v742 = vrot.slane %v663, 1
      %v743 = vrot.slane %v571, 1
      %v744 = vsel %vm726, %v742, %v743
      %v745 = vrot.slane %v680, 1
      %v746 = vsel %vm726, %v743, %v745
      %v747 = vrot.slane %v664, 1
      %v748 = vrot.slane %v574, 1
      %v749 = vsel %vm726, %v747, %v748
      %v750 = vrot.slane %v681, 1
      %v751 = vsel %vm726, %v748, %v750
      %v752 = vrot.slane %v665, 1
      %v753 = vrot.slane %v577, 1
      %v754 = vsel %vm726, %v752, %v753
      %v755 = vrot.slane %v682, 1
      %v756 = vsel %vm726, %v753, %v755
      %v757 = vrot.slane %v666, 1
      %v758 = vrot.slane %v580, 1
      %v759 = vsel %vm726, %v757, %v758
      %v760 = vrot.slane %v683, 1
      %v761 = vsel %vm726, %v758, %v760
      %v762 = vrot.slane %v667, 1
      %v763 = vrot.slane %v583, 1
      %v764 = vsel %vm726, %v762, %v763
      %v765 = vrot.slane %v684, 1
      %v766 = vsel %vm726, %v763, %v765
      %v767 = vrot.slane %v668, 1
      %v768 = vrot.slane %v586, 1
      %v769 = vsel %vm726, %v767, %v768
      %v770 = vrot.slane %v685, 1
      %v771 = vsel %vm726, %v768, %v770
      %v772 = vrot.slane %v669, 1
      %v773 = vrot.slane %v589, 1
      %v774 = vsel %vm726, %v772, %v773
      %v775 = vrot.slane %v686, 1
      %v776 = vsel %vm726, %v773, %v775
      %v777 = vrot.slane %v670, 1
      %v778 = vrot.slane %v592, 1
      %v779 = vsel %vm726, %v777, %v778
      %v780 = vrot.slane %v687, 1
      %v781 = vsel %vm726, %v778, %v780
      %v782 = vrot.slane %v671, 1
      %v783 = vrot.slane %v595, 1
      %v784 = vsel %vm726, %v782, %v783
      %v785 = vrot.slane %v688, 1
      %v786 = vsel %vm726, %v783, %v785
      %v787 = vrot.slane %v672, 1
      %v788 = vrot.slane %v598, 1
      %v789 = vsel %vm726, %v787, %v788
      %v790 = vrot.slane %v689, 1
      %v791 = vsel %vm726, %v788, %v790
      %v792 = vrot.slane %v673, 1
      %v793 = vrot.slane %v601, 1
      %v794 = vsel %vm726, %v792, %v793
      %v795 = vrot.slane %v690, 1
      %v796 = vsel %vm726, %v793, %v795
      %v797 = vrot.slane %v674, 1
      %v798 = vrot.slane %v604, 1
      %v799 = vsel %vm726, %v797, %v798
      %v800 = vrot.slane %v691, 1
      %v801 = vsel %vm726, %v798, %v800
      %v802 = vrot.slane %v675, 1
      %v803 = vrot.slane %v607, 1
      %v804 = vsel %vm726, %v802, %v803
      %v805 = vrot.slane %v692, 1
      %v806 = vsel %vm726, %v803, %v805
      %807 = vrot.lane.b32.xlu0 %v729, 8
      %v808 = vpop.permute.xlu0 %807
      %809 = vrot.lane.b32.xlu0 %v731, 8
      %v810 = vpop.permute.xlu0 %809
      %811 = vrot.lane.b32.xlu0 %v734, 8
      %v812 = vpop.permute.xlu0 %811
      %813 = vrot.lane.b32.xlu0 %v736, 8
      %v814 = vpop.permute.xlu0 %813
      %815 = vrot.lane.b32.xlu0 %v739, 8
      %v816 = vpop.permute.xlu0 %815
      %817 = vrot.lane.b32.xlu0 %v741, 8
      %v818 = vpop.permute.xlu0 %817
      %819 = vrot.lane.b32.xlu0 %v744, 8
      %v820 = vpop.permute.xlu0 %819
      %821 = vrot.lane.b32.xlu0 %v746, 8
      %v822 = vpop.permute.xlu0 %821
      %823 = vrot.lane.b32.xlu0 %v749, 8
      %v824 = vpop.permute.xlu0 %823
      %825 = vrot.lane.b32.xlu0 %v751, 8
      %v826 = vpop.permute.xlu0 %825
      %827 = vrot.lane.b32.xlu0 %v754, 8
      %v828 = vpop.permute.xlu0 %827
      %829 = vrot.lane.b32.xlu0 %v756, 8
      %v830 = vpop.permute.xlu0 %829
      %831 = vrot.lane.b32.xlu0 %v759, 8
      %v832 = vpop.permute.xlu0 %831
      %833 = vrot.lane.b32.xlu0 %v761, 8
      %v834 = vpop.permute.xlu0 %833
      %835 = vrot.lane.b32.xlu0 %v764, 8
      %v836 = vpop.permute.xlu0 %835
      %837 = vrot.lane.b32.xlu0 %v766, 8
      %v838 = vpop.permute.xlu0 %837
      %839 = vrot.lane.b32.xlu0 %v769, 8
      %v840 = vpop.permute.xlu0 %839
      %841 = vrot.lane.b32.xlu0 %v771, 8
      %v842 = vpop.permute.xlu0 %841
      %843 = vrot.lane.b32.xlu0 %v774, 8
      %v844 = vpop.permute.xlu0 %843
      %845 = vrot.lane.b32.xlu0 %v776, 8
      %v846 = vpop.permute.xlu0 %845
      %847 = vrot.lane.b32.xlu0 %v779, 8
      %v848 = vpop.permute.xlu0 %847
      %849 = vrot.lane.b32.xlu0 %v781, 8
      %v850 = vpop.permute.xlu0 %849
      %851 = vrot.lane.b32.xlu0 %v784, 8
      %v852 = vpop.permute.xlu0 %851
      %853 = vrot.lane.b32.xlu0 %v786, 8
      %v854 = vpop.permute.xlu0 %853
      %855 = vrot.lane.b32.xlu0 %v789, 8
      %v856 = vpop.permute.xlu0 %855
      %857 = vrot.lane.b32.xlu0 %v791, 8
      %v858 = vpop.permute.xlu0 %857
      %859 = vrot.lane.b32.xlu0 %v794, 8
      %v860 = vpop.permute.xlu0 %859
      %861 = vrot.lane.b32.xlu0 %v796, 8
      %v862 = vpop.permute.xlu0 %861
      %863 = vrot.lane.b32.xlu0 %v799, 8
      %v864 = vpop.permute.xlu0 %863
      %865 = vrot.lane.b32.xlu0 %v801, 8
      %v866 = vpop.permute.xlu0 %865
      %867 = vrot.lane.b32.xlu0 %v804, 8
      %v868 = vpop.permute.xlu0 %867
      %869 = vrot.lane.b32.xlu0 %v806, 8
      %v870 = vpop.permute.xlu0 %869
      %vm903 = vcmask 1045504
      %v904 = vrot.slane %v660, 2
      %v905 = vrot.slane %v562, 2
      %v906 = vsel %vm903, %v904, %v905
      %v907 = vrot.slane %v677, 2
      %v908 = vsel %vm903, %v905, %v907
      %v909 = vrot.slane %v661, 2
      %v910 = vrot.slane %v565, 2
      %v911 = vsel %vm903, %v909, %v910
      %v912 = vrot.slane %v678, 2
      %v913 = vsel %vm903, %v910, %v912
      %v914 = vrot.slane %v662, 2
      %v915 = vrot.slane %v568, 2
      %v916 = vsel %vm903, %v914, %v915
      %v917 = vrot.slane %v679, 2
      %v918 = vsel %vm903, %v915, %v917
      %v919 = vrot.slane %v663, 2
      %v920 = vrot.slane %v571, 2
      %v921 = vsel %vm903, %v919, %v920
      %v922 = vrot.slane %v680, 2
      %v923 = vsel %vm903, %v920, %v922
      %v924 = vrot.slane %v664, 2
      %v925 = vrot.slane %v574, 2
      %v926 = vsel %vm903, %v924, %v925
      %v927 = vrot.slane %v681, 2
      %v928 = vsel %vm903, %v925, %v927
      %v929 = vrot.slane %v665, 2
      %v930 = vrot.slane %v577, 2
      %v931 = vsel %vm903, %v929, %v930
      %v932 = vrot.slane %v682, 2
      %v933 = vsel %vm903, %v930, %v932
      %v934 = vrot.slane %v666, 2
      %v935 = vrot.slane %v580, 2
      %v936 = vsel %vm903, %v934, %v935
      %v937 = vrot.slane %v683, 2
      %v938 = vsel %vm903, %v935, %v937
      %v939 = vrot.slane %v667, 2
      %v940 = vrot.slane %v583, 2
      %v941 = vsel %vm903, %v939, %v940
      %v942 = vrot.slane %v684, 2
      %v943 = vsel %vm903, %v940, %v942
      %v944 = vrot.slane %v668, 2
      %v945 = vrot.slane %v586, 2
      %v946 = vsel %vm903, %v944, %v945
      %v947 = vrot.slane %v685, 2
      %v948 = vsel %vm903, %v945, %v947
      %v949 = vrot.slane %v669, 2
      %v950 = vrot.slane %v589, 2
      %v951 = vsel %vm903, %v949, %v950
      %v952 = vrot.slane %v686, 2
      %v953 = vsel %vm903, %v950, %v952
      %v954 = vrot.slane %v670, 2
      %v955 = vrot.slane %v592, 2
      %v956 = vsel %vm903, %v954, %v955
      %v957 = vrot.slane %v687, 2
      %v958 = vsel %vm903, %v955, %v957
      %v959 = vrot.slane %v671, 2
      %v960 = vrot.slane %v595, 2
      %v961 = vsel %vm903, %v959, %v960
      %v962 = vrot.slane %v688, 2
      %v963 = vsel %vm903, %v960, %v962
      %v964 = vrot.slane %v672, 2
      %v965 = vrot.slane %v598, 2
      %v966 = vsel %vm903, %v964, %v965
      %v967 = vrot.slane %v689, 2
      %v968 = vsel %vm903, %v965, %v967
      %v969 = vrot.slane %v673, 2
      %v970 = vrot.slane %v601, 2
      %v971 = vsel %vm903, %v969, %v970
      %v972 = vrot.slane %v690, 2
      %v973 = vsel %vm903, %v970, %v972
      %v974 = vrot.slane %v674, 2
      %v975 = vrot.slane %v604, 2
      %v976 = vsel %vm903, %v974, %v975
      %v977 = vrot.slane %v691, 2
      %v978 = vsel %vm903, %v975, %v977
      %v979 = vrot.slane %v675, 2
      %v980 = vrot.slane %v607, 2
      %v981 = vsel %vm903, %v979, %v980
      %v982 = vrot.slane %v692, 2
      %v983 = vsel %vm903, %v980, %v982
      %984 = vrot.lane.b32.xlu0 %v906, 16
      %v985 = vpop.permute.xlu0 %984
      %986 = vrot.lane.b32.xlu0 %v908, 16
      %v987 = vpop.permute.xlu0 %986
      %988 = vrot.lane.b32.xlu0 %v911, 16
      %v989 = vpop.permute.xlu0 %988
      %990 = vrot.lane.b32.xlu0 %v913, 16
      %v991 = vpop.permute.xlu0 %990
      %992 = vrot.lane.b32.xlu0 %v916, 16
      %v993 = vpop.permute.xlu0 %992
      %994 = vrot.lane.b32.xlu0 %v918, 16
      %v995 = vpop.permute.xlu0 %994
      %996 = vrot.lane.b32.xlu0 %v921, 16
      %v997 = vpop.permute.xlu0 %996
      %998 = vrot.lane.b32.xlu0 %v923, 16
      %v999 = vpop.permute.xlu0 %998
      %1000 = vrot.lane.b32.xlu0 %v926, 16
      %v1001 = vpop.permute.xlu0 %1000
      %1002 = vrot.lane.b32.xlu0 %v928, 16
      %v1003 = vpop.permute.xlu0 %1002
      %1004 = vrot.lane.b32.xlu0 %v931, 16
      %v1005 = vpop.permute.xlu0 %1004
      %1006 = vrot.lane.b32.xlu0 %v933, 16
      %v1007 = vpop.permute.xlu0 %1006
      %1008 = vrot.lane.b32.xlu0 %v936, 16
      %v1009 = vpop.permute.xlu0 %1008
      %1010 = vrot.lane.b32.xlu0 %v938, 16
      %v1011 = vpop.permute.xlu0 %1010
      %1012 = vrot.lane.b32.xlu0 %v941, 16
      %v1013 = vpop.permute.xlu0 %1012
      %1014 = vrot.lane.b32.xlu0 %v943, 16
      %v1015 = vpop.permute.xlu0 %1014
      %1016 = vrot.lane.b32.xlu0 %v946, 16
      %v1017 = vpop.permute.xlu0 %1016
      %1018 = vrot.lane.b32.xlu0 %v948, 16
      %v1019 = vpop.permute.xlu0 %1018
      %1020 = vrot.lane.b32.xlu0 %v951, 16
      %v1021 = vpop.permute.xlu0 %1020
      %1022 = vrot.lane.b32.xlu0 %v953, 16
      %v1023 = vpop.permute.xlu0 %1022
      %1024 = vrot.lane.b32.xlu0 %v956, 16
      %v1025 = vpop.permute.xlu0 %1024
      %1026 = vrot.lane.b32.xlu0 %v958, 16
      %v1027 = vpop.permute.xlu0 %1026
      %1028 = vrot.lane.b32.xlu0 %v961, 16
      %v1029 = vpop.permute.xlu0 %1028
      %1030 = vrot.lane.b32.xlu0 %v963, 16
      %v1031 = vpop.permute.xlu0 %1030
      %1032 = vrot.lane.b32.xlu0 %v966, 16
      %v1033 = vpop.permute.xlu0 %1032
      %1034 = vrot.lane.b32.xlu0 %v968, 16
      %v1035 = vpop.permute.xlu0 %1034
      %1036 = vrot.lane.b32.xlu0 %v971, 16
      %v1037 = vpop.permute.xlu0 %1036
      %1038 = vrot.lane.b32.xlu0 %v973, 16
      %v1039 = vpop.permute.xlu0 %1038
      %1040 = vrot.lane.b32.xlu0 %v976, 16
      %v1041 = vpop.permute.xlu0 %1040
      %1042 = vrot.lane.b32.xlu0 %v978, 16
      %v1043 = vpop.permute.xlu0 %1042
      %1044 = vrot.lane.b32.xlu0 %v981, 16
      %v1045 = vpop.permute.xlu0 %1044
      %1046 = vrot.lane.b32.xlu0 %v983, 16
      %v1047 = vpop.permute.xlu0 %1046
      %1081 = vrot.lane.b32.xlu0 %v661, 24
      %v1082 = vpop.permute.xlu0 %1081
      %1083 = vrot.lane.b32.xlu0 %v565, 24
      %v1084 = vpop.permute.xlu0 %1083
      %1085 = vrot.lane.b32.xlu0 %v662, 24
      %v1086 = vpop.permute.xlu0 %1085
      %1087 = vrot.lane.b32.xlu0 %v568, 24
      %v1088 = vpop.permute.xlu0 %1087
      %1089 = vrot.lane.b32.xlu0 %v663, 24
      %v1090 = vpop.permute.xlu0 %1089
      %1091 = vrot.lane.b32.xlu0 %v571, 24
      %v1092 = vpop.permute.xlu0 %1091
      %1093 = vrot.lane.b32.xlu0 %v664, 24
      %v1094 = vpop.permute.xlu0 %1093
      %1095 = vrot.lane.b32.xlu0 %v574, 24
      %v1096 = vpop.permute.xlu0 %1095
      %1097 = vrot.lane.b32.xlu0 %v665, 24
      %v1098 = vpop.permute.xlu0 %1097
      %1099 = vrot.lane.b32.xlu0 %v577, 24
      %v1100 = vpop.permute.xlu0 %1099
      %1101 = vrot.lane.b32.xlu0 %v666, 24
      %v1102 = vpop.permute.xlu0 %1101
      %1103 = vrot.lane.b32.xlu0 %v580, 24
      %v1104 = vpop.permute.xlu0 %1103
      %1105 = vrot.lane.b32.xlu0 %v667, 24
      %v1106 = vpop.permute.xlu0 %1105
      %1107 = vrot.lane.b32.xlu0 %v583, 24
      %v1108 = vpop.permute.xlu0 %1107
      %1109 = vrot.lane.b32.xlu0 %v668, 24
      %v1110 = vpop.permute.xlu0 %1109
      %1111 = vrot.lane.b32.xlu0 %v586, 24
      %v1112 = vpop.permute.xlu0 %1111
      %1113 = vrot.lane.b32.xlu0 %v669, 24
      %v1114 = vpop.permute.xlu0 %1113
      %1115 = vrot.lane.b32.xlu0 %v589, 24
      %v1116 = vpop.permute.xlu0 %1115
      %1117 = vrot.lane.b32.xlu0 %v670, 24
      %v1118 = vpop.permute.xlu0 %1117
      %1119 = vrot.lane.b32.xlu0 %v592, 24
      %v1120 = vpop.permute.xlu0 %1119
      %1121 = vrot.lane.b32.xlu0 %v671, 24
      %v1122 = vpop.permute.xlu0 %1121
      %1123 = vrot.lane.b32.xlu0 %v595, 24
      %v1124 = vpop.permute.xlu0 %1123
      %1125 = vrot.lane.b32.xlu0 %v672, 24
      %v1126 = vpop.permute.xlu0 %1125
      %1127 = vrot.lane.b32.xlu0 %v598, 24
      %v1128 = vpop.permute.xlu0 %1127
      %1129 = vrot.lane.b32.xlu0 %v673, 24
      %v1130 = vpop.permute.xlu0 %1129
      %1131 = vrot.lane.b32.xlu0 %v601, 24
      %v1132 = vpop.permute.xlu0 %1131
      %1133 = vrot.lane.b32.xlu0 %v674, 24
      %v1134 = vpop.permute.xlu0 %1133
      %1135 = vrot.lane.b32.xlu0 %v604, 24
      %v1136 = vpop.permute.xlu0 %1135
      %1137 = vrot.lane.b32.xlu0 %v675, 24
      %v1138 = vpop.permute.xlu0 %1137
      %1139 = vrot.lane.b32.xlu0 %v607, 24
      %v1140 = vpop.permute.xlu0 %1139
      %1141 = vrot.lane.b32.xlu0 %v676, 24
      %v1142 = vpop.permute.xlu0 %1141
      %1143 = vrot.lane.b32.xlu0 %v610, 24
      %v1144 = vpop.permute.xlu0 %1143
      %v1178 = vrot.slane %v676, 1
      %v1179 = vrot.slane %v610, 1
      %v1180 = vsel %vm726, %v1178, %v1179
      %v1181 = vrot.slane %v693, 1
      %v1182 = vsel %vm726, %v1179, %v1181
      %1183 = vrot.lane.b32.xlu0 %v734, 32
      %v1184 = vpop.permute.xlu0 %1183
      %1185 = vrot.lane.b32.xlu0 %v736, 32
      %v1186 = vpop.permute.xlu0 %1185
      %1187 = vrot.lane.b32.xlu0 %v739, 32
      %v1188 = vpop.permute.xlu0 %1187
      %1189 = vrot.lane.b32.xlu0 %v741, 32
      %v1190 = vpop.permute.xlu0 %1189
      %1191 = vrot.lane.b32.xlu0 %v744, 32
      %v1192 = vpop.permute.xlu0 %1191
      %1193 = vrot.lane.b32.xlu0 %v746, 32
      %v1194 = vpop.permute.xlu0 %1193
      %1195 = vrot.lane.b32.xlu0 %v749, 32
      %v1196 = vpop.permute.xlu0 %1195
      %1197 = vrot.lane.b32.xlu0 %v751, 32
      %v1198 = vpop.permute.xlu0 %1197
      %1199 = vrot.lane.b32.xlu0 %v754, 32
      %v1200 = vpop.permute.xlu0 %1199
      %1201 = vrot.lane.b32.xlu0 %v756, 32
      %v1202 = vpop.permute.xlu0 %1201
      %1203 = vrot.lane.b32.xlu0 %v759, 32
      %v1204 = vpop.permute.xlu0 %1203
      %1205 = vrot.lane.b32.xlu0 %v761, 32
      %v1206 = vpop.permute.xlu0 %1205
      %1207 = vrot.lane.b32.xlu0 %v764, 32
      %v1208 = vpop.permute.xlu0 %1207
      %1209 = vrot.lane.b32.xlu0 %v766, 32
      %v1210 = vpop.permute.xlu0 %1209
      %1211 = vrot.lane.b32.xlu0 %v769, 32
      %v1212 = vpop.permute.xlu0 %1211
      %1213 = vrot.lane.b32.xlu0 %v771, 32
      %v1214 = vpop.permute.xlu0 %1213
      %1215 = vrot.lane.b32.xlu0 %v774, 32
      %v1216 = vpop.permute.xlu0 %1215
      %1217 = vrot.lane.b32.xlu0 %v776, 32
      %v1218 = vpop.permute.xlu0 %1217
      %1219 = vrot.lane.b32.xlu0 %v779, 32
      %v1220 = vpop.permute.xlu0 %1219
      %1221 = vrot.lane.b32.xlu0 %v781, 32
      %v1222 = vpop.permute.xlu0 %1221
      %1223 = vrot.lane.b32.xlu0 %v784, 32
      %v1224 = vpop.permute.xlu0 %1223
      %1225 = vrot.lane.b32.xlu0 %v786, 32
      %v1226 = vpop.permute.xlu0 %1225
      %1227 = vrot.lane.b32.xlu0 %v789, 32
      %v1228 = vpop.permute.xlu0 %1227
      %1229 = vrot.lane.b32.xlu0 %v791, 32
      %v1230 = vpop.permute.xlu0 %1229
      %1231 = vrot.lane.b32.xlu0 %v794, 32
      %v1232 = vpop.permute.xlu0 %1231
      %1233 = vrot.lane.b32.xlu0 %v796, 32
      %v1234 = vpop.permute.xlu0 %1233
      %1235 = vrot.lane.b32.xlu0 %v799, 32
      %v1236 = vpop.permute.xlu0 %1235
      %1237 = vrot.lane.b32.xlu0 %v801, 32
      %v1238 = vpop.permute.xlu0 %1237
      %1239 = vrot.lane.b32.xlu0 %v804, 32
      %v1240 = vpop.permute.xlu0 %1239
      %1241 = vrot.lane.b32.xlu0 %v806, 32
      %v1242 = vpop.permute.xlu0 %1241
      %1243 = vrot.lane.b32.xlu0 %v1180, 32
      %v1244 = vpop.permute.xlu0 %1243
      %1245 = vrot.lane.b32.xlu0 %v1182, 32
      %v1246 = vpop.permute.xlu0 %1245
      %v1279 = vrot.slane %v676, 2
      %v1280 = vrot.slane %v610, 2
      %v1281 = vsel %vm903, %v1279, %v1280
      %v1282 = vrot.slane %v693, 2
      %v1283 = vsel %vm903, %v1280, %v1282
      %1284 = vrot.lane.b32.xlu0 %v911, 40
      %v1285 = vpop.permute.xlu0 %1284
      %1286 = vrot.lane.b32.xlu0 %v913, 40
      %v1287 = vpop.permute.xlu0 %1286
      %1288 = vrot.lane.b32.xlu0 %v916, 40
      %v1289 = vpop.permute.xlu0 %1288
      %1290 = vrot.lane.b32.xlu0 %v918, 40
      %v1291 = vpop.permute.xlu0 %1290
      %1292 = vrot.lane.b32.xlu0 %v921, 40
      %v1293 = vpop.permute.xlu0 %1292
      %1294 = vrot.lane.b32.xlu0 %v923, 40
      %v1295 = vpop.permute.xlu0 %1294
      %1296 = vrot.lane.b32.xlu0 %v926, 40
      %v1297 = vpop.permute.xlu0 %1296
      %1298 = vrot.lane.b32.xlu0 %v928, 40
      %v1299 = vpop.permute.xlu0 %1298
      %1300 = vrot.lane.b32.xlu0 %v931, 40
      %v1301 = vpop.permute.xlu0 %1300
      %1302 = vrot.lane.b32.xlu0 %v933, 40
      %v1303 = vpop.permute.xlu0 %1302
      %1304 = vrot.lane.b32.xlu0 %v936, 40
      %v1305 = vpop.permute.xlu0 %1304
      %1306 = vrot.lane.b32.xlu0 %v938, 40
      %v1307 = vpop.permute.xlu0 %1306
      %1308 = vrot.lane.b32.xlu0 %v941, 40
      %v1309 = vpop.permute.xlu0 %1308
      %1310 = vrot.lane.b32.xlu0 %v943, 40
      %v1311 = vpop.permute.xlu0 %1310
      %1312 = vrot.lane.b32.xlu0 %v946, 40
      %v1313 = vpop.permute.xlu0 %1312
      %1314 = vrot.lane.b32.xlu0 %v948, 40
      %v1315 = vpop.permute.xlu0 %1314
      %1316 = vrot.lane.b32.xlu0 %v951, 40
      %v1317 = vpop.permute.xlu0 %1316
      %1318 = vrot.lane.b32.xlu0 %v953, 40
      %v1319 = vpop.permute.xlu0 %1318
      %1320 = vrot.lane.b32.xlu0 %v956, 40
      %v1321 = vpop.permute.xlu0 %1320
      %1322 = vrot.lane.b32.xlu0 %v958, 40
      %v1323 = vpop.permute.xlu0 %1322
      %1324 = vrot.lane.b32.xlu0 %v961, 40
      %v1325 = vpop.permute.xlu0 %1324
      %1326 = vrot.lane.b32.xlu0 %v963, 40
      %v1327 = vpop.permute.xlu0 %1326
      %1328 = vrot.lane.b32.xlu0 %v966, 40
      %v1329 = vpop.permute.xlu0 %1328
      %1330 = vrot.lane.b32.xlu0 %v968, 40
      %v1331 = vpop.permute.xlu0 %1330
      %1332 = vrot.lane.b32.xlu0 %v971, 40
      %v1333 = vpop.permute.xlu0 %1332
      %1334 = vrot.lane.b32.xlu0 %v973, 40
      %v1335 = vpop.permute.xlu0 %1334
      %1336 = vrot.lane.b32.xlu0 %v976, 40
      %v1337 = vpop.permute.xlu0 %1336
      %1338 = vrot.lane.b32.xlu0 %v978, 40
      %v1339 = vpop.permute.xlu0 %1338
      %1340 = vrot.lane.b32.xlu0 %v981, 40
      %v1341 = vpop.permute.xlu0 %1340
      %1342 = vrot.lane.b32.xlu0 %v983, 40
      %v1343 = vpop.permute.xlu0 %1342
      %1344 = vrot.lane.b32.xlu0 %v1281, 40
      %v1345 = vpop.permute.xlu0 %1344
      %1346 = vrot.lane.b32.xlu0 %v1283, 40
      %v1347 = vpop.permute.xlu0 %1346
      %1380 = vrot.lane.b32.xlu0 %v662, 48
      %v1381 = vpop.permute.xlu0 %1380
      %1382 = vrot.lane.b32.xlu0 %v568, 48
      %v1383 = vpop.permute.xlu0 %1382
      %1384 = vrot.lane.b32.xlu0 %v663, 48
      %v1385 = vpop.permute.xlu0 %1384
      %1386 = vrot.lane.b32.xlu0 %v571, 48
      %v1387 = vpop.permute.xlu0 %1386
      %1388 = vrot.lane.b32.xlu0 %v664, 48
      %v1389 = vpop.permute.xlu0 %1388
      %1390 = vrot.lane.b32.xlu0 %v574, 48
      %v1391 = vpop.permute.xlu0 %1390
      %1392 = vrot.lane.b32.xlu0 %v665, 48
      %v1393 = vpop.permute.xlu0 %1392
      %1394 = vrot.lane.b32.xlu0 %v577, 48
      %v1395 = vpop.permute.xlu0 %1394
      %1396 = vrot.lane.b32.xlu0 %v666, 48
      %v1397 = vpop.permute.xlu0 %1396
      %1398 = vrot.lane.b32.xlu0 %v580, 48
      %v1399 = vpop.permute.xlu0 %1398
      %1400 = vrot.lane.b32.xlu0 %v667, 48
      %v1401 = vpop.permute.xlu0 %1400
      %1402 = vrot.lane.b32.xlu0 %v583, 48
      %v1403 = vpop.permute.xlu0 %1402
      %1404 = vrot.lane.b32.xlu0 %v668, 48
      %v1405 = vpop.permute.xlu0 %1404
      %1406 = vrot.lane.b32.xlu0 %v586, 48
      %v1407 = vpop.permute.xlu0 %1406
      %1408 = vrot.lane.b32.xlu0 %v669, 48
      %v1409 = vpop.permute.xlu0 %1408
      %1410 = vrot.lane.b32.xlu0 %v589, 48
      %v1411 = vpop.permute.xlu0 %1410
      %1412 = vrot.lane.b32.xlu0 %v670, 48
      %v1413 = vpop.permute.xlu0 %1412
      %1414 = vrot.lane.b32.xlu0 %v592, 48
      %v1415 = vpop.permute.xlu0 %1414
      %1416 = vrot.lane.b32.xlu0 %v671, 48
      %v1417 = vpop.permute.xlu0 %1416
      %1418 = vrot.lane.b32.xlu0 %v595, 48
      %v1419 = vpop.permute.xlu0 %1418
      %1420 = vrot.lane.b32.xlu0 %v672, 48
      %v1421 = vpop.permute.xlu0 %1420
      %1422 = vrot.lane.b32.xlu0 %v598, 48
      %v1423 = vpop.permute.xlu0 %1422
      %1424 = vrot.lane.b32.xlu0 %v673, 48
      %v1425 = vpop.permute.xlu0 %1424
      %1426 = vrot.lane.b32.xlu0 %v601, 48
      %v1427 = vpop.permute.xlu0 %1426
      %1428 = vrot.lane.b32.xlu0 %v674, 48
      %v1429 = vpop.permute.xlu0 %1428
      %1430 = vrot.lane.b32.xlu0 %v604, 48
      %v1431 = vpop.permute.xlu0 %1430
      %1432 = vrot.lane.b32.xlu0 %v675, 48
      %v1433 = vpop.permute.xlu0 %1432
      %1434 = vrot.lane.b32.xlu0 %v607, 48
      %v1435 = vpop.permute.xlu0 %1434
      %1436 = vrot.lane.b32.xlu0 %v676, 48
      %v1437 = vpop.permute.xlu0 %1436
      %1438 = vrot.lane.b32.xlu0 %v610, 48
      %v1439 = vpop.permute.xlu0 %1438
      %1440 = vrot.lane.b32.xlu0 %v660, 48
      %v1441 = vpop.permute.xlu0 %1440
      %1442 = vrot.lane.b32.xlu0 %v562, 48
      %v1443 = vpop.permute.xlu0 %1442
      %1476 = vrot.lane.b32.xlu0 %v739, 56
      %v1477 = vpop.permute.xlu0 %1476
      %1478 = vrot.lane.b32.xlu0 %v741, 56
      %v1479 = vpop.permute.xlu0 %1478
      %1480 = vrot.lane.b32.xlu0 %v744, 56
      %v1481 = vpop.permute.xlu0 %1480
      %1482 = vrot.lane.b32.xlu0 %v746, 56
      %v1483 = vpop.permute.xlu0 %1482
      %1484 = vrot.lane.b32.xlu0 %v749, 56
      %v1485 = vpop.permute.xlu0 %1484
      %1486 = vrot.lane.b32.xlu0 %v751, 56
      %v1487 = vpop.permute.xlu0 %1486
      %1488 = vrot.lane.b32.xlu0 %v754, 56
      %v1489 = vpop.permute.xlu0 %1488
      %1490 = vrot.lane.b32.xlu0 %v756, 56
      %v1491 = vpop.permute.xlu0 %1490
      %1492 = vrot.lane.b32.xlu0 %v759, 56
      %v1493 = vpop.permute.xlu0 %1492
      %1494 = vrot.lane.b32.xlu0 %v761, 56
      %v1495 = vpop.permute.xlu0 %1494
      %1496 = vrot.lane.b32.xlu0 %v764, 56
      %v1497 = vpop.permute.xlu0 %1496
      %1498 = vrot.lane.b32.xlu0 %v766, 56
      %v1499 = vpop.permute.xlu0 %1498
      %1500 = vrot.lane.b32.xlu0 %v769, 56
      %v1501 = vpop.permute.xlu0 %1500
      %1502 = vrot.lane.b32.xlu0 %v771, 56
      %v1503 = vpop.permute.xlu0 %1502
      %1504 = vrot.lane.b32.xlu0 %v774, 56
      %v1505 = vpop.permute.xlu0 %1504
      %1506 = vrot.lane.b32.xlu0 %v776, 56
      %v1507 = vpop.permute.xlu0 %1506
      %1508 = vrot.lane.b32.xlu0 %v779, 56
      %v1509 = vpop.permute.xlu0 %1508
      %1510 = vrot.lane.b32.xlu0 %v781, 56
      %v1511 = vpop.permute.xlu0 %1510
      %1512 = vrot.lane.b32.xlu0 %v784, 56
      %v1513 = vpop.permute.xlu0 %1512
      %1514 = vrot.lane.b32.xlu0 %v786, 56
      %v1515 = vpop.permute.xlu0 %1514
      %1516 = vrot.lane.b32.xlu0 %v789, 56
      %v1517 = vpop.permute.xlu0 %1516
      %1518 = vrot.lane.b32.xlu0 %v791, 56
      %v1519 = vpop.permute.xlu0 %1518
      %1520 = vrot.lane.b32.xlu0 %v794, 56
      %v1521 = vpop.permute.xlu0 %1520
      %1522 = vrot.lane.b32.xlu0 %v796, 56
      %v1523 = vpop.permute.xlu0 %1522
      %1524 = vrot.lane.b32.xlu0 %v799, 56
      %v1525 = vpop.permute.xlu0 %1524
      %1526 = vrot.lane.b32.xlu0 %v801, 56
      %v1527 = vpop.permute.xlu0 %1526
      %1528 = vrot.lane.b32.xlu0 %v804, 56
      %v1529 = vpop.permute.xlu0 %1528
      %1530 = vrot.lane.b32.xlu0 %v806, 56
      %v1531 = vpop.permute.xlu0 %1530
      %1532 = vrot.lane.b32.xlu0 %v1180, 56
      %v1533 = vpop.permute.xlu0 %1532
      %1534 = vrot.lane.b32.xlu0 %v1182, 56
      %v1535 = vpop.permute.xlu0 %1534
      %1536 = vrot.lane.b32.xlu0 %v729, 56
      %v1537 = vpop.permute.xlu0 %1536
      %1538 = vrot.lane.b32.xlu0 %v731, 56
      %v1539 = vpop.permute.xlu0 %1538
      %1572 = vrot.lane.b32.xlu0 %v916, 64
      %v1573 = vpop.permute.xlu0 %1572
      %1574 = vrot.lane.b32.xlu0 %v918, 64
      %v1575 = vpop.permute.xlu0 %1574
      %1576 = vrot.lane.b32.xlu0 %v921, 64
      %v1577 = vpop.permute.xlu0 %1576
      %1578 = vrot.lane.b32.xlu0 %v923, 64
      %v1579 = vpop.permute.xlu0 %1578
      %1580 = vrot.lane.b32.xlu0 %v926, 64
      %v1581 = vpop.permute.xlu0 %1580
      %1582 = vrot.lane.b32.xlu0 %v928, 64
      %v1583 = vpop.permute.xlu0 %1582
      %1584 = vrot.lane.b32.xlu0 %v931, 64
      %v1585 = vpop.permute.xlu0 %1584
      %1586 = vrot.lane.b32.xlu0 %v933, 64
      %v1587 = vpop.permute.xlu0 %1586
      %1588 = vrot.lane.b32.xlu0 %v936, 64
      %v1589 = vpop.permute.xlu0 %1588
      %1590 = vrot.lane.b32.xlu0 %v938, 64
      %v1591 = vpop.permute.xlu0 %1590
      %1592 = vrot.lane.b32.xlu0 %v941, 64
      %v1593 = vpop.permute.xlu0 %1592
      %1594 = vrot.lane.b32.xlu0 %v943, 64
      %v1595 = vpop.permute.xlu0 %1594
      %1596 = vrot.lane.b32.xlu0 %v946, 64
      %v1597 = vpop.permute.xlu0 %1596
      %1598 = vrot.lane.b32.xlu0 %v948, 64
      %v1599 = vpop.permute.xlu0 %1598
      %1600 = vrot.lane.b32.xlu0 %v951, 64
      %v1601 = vpop.permute.xlu0 %1600
      %1602 = vrot.lane.b32.xlu0 %v953, 64
      %v1603 = vpop.permute.xlu0 %1602
      %1604 = vrot.lane.b32.xlu0 %v956, 64
      %v1605 = vpop.permute.xlu0 %1604
      %1606 = vrot.lane.b32.xlu0 %v958, 64
      %v1607 = vpop.permute.xlu0 %1606
      %1608 = vrot.lane.b32.xlu0 %v961, 64
      %v1609 = vpop.permute.xlu0 %1608
      %1610 = vrot.lane.b32.xlu0 %v963, 64
      %v1611 = vpop.permute.xlu0 %1610
      %1612 = vrot.lane.b32.xlu0 %v966, 64
      %v1613 = vpop.permute.xlu0 %1612
      %1614 = vrot.lane.b32.xlu0 %v968, 64
      %v1615 = vpop.permute.xlu0 %1614
      %1616 = vrot.lane.b32.xlu0 %v971, 64
      %v1617 = vpop.permute.xlu0 %1616
      %1618 = vrot.lane.b32.xlu0 %v973, 64
      %v1619 = vpop.permute.xlu0 %1618
      %1620 = vrot.lane.b32.xlu0 %v976, 64
      %v1621 = vpop.permute.xlu0 %1620
      %1622 = vrot.lane.b32.xlu0 %v978, 64
      %v1623 = vpop.permute.xlu0 %1622
      %1624 = vrot.lane.b32.xlu0 %v981, 64
      %v1625 = vpop.permute.xlu0 %1624
      %1626 = vrot.lane.b32.xlu0 %v983, 64
      %v1627 = vpop.permute.xlu0 %1626
      %1628 = vrot.lane.b32.xlu0 %v1281, 64
      %v1629 = vpop.permute.xlu0 %1628
      %1630 = vrot.lane.b32.xlu0 %v1283, 64
      %v1631 = vpop.permute.xlu0 %1630
      %1632 = vrot.lane.b32.xlu0 %v906, 64
      %v1633 = vpop.permute.xlu0 %1632
      %1634 = vrot.lane.b32.xlu0 %v908, 64
      %v1635 = vpop.permute.xlu0 %1634
      %vm1668 = vcmask 64512
      %v1669 = vsel %vm1668, %v660, %v808
      %v1670 = vsel %vm1668, %v562, %v810
      %v1671 = vsel %vm1668, %v661, %v812
      %v1672 = vsel %vm1668, %v565, %v814
      %v1673 = vsel %vm1668, %v662, %v816
      %v1674 = vsel %vm1668, %v568, %v818
      %v1675 = vsel %vm1668, %v663, %v820
      %v1676 = vsel %vm1668, %v571, %v822
      %v1677 = vsel %vm1668, %v664, %v824
      %v1678 = vsel %vm1668, %v574, %v826
      %v1679 = vsel %vm1668, %v665, %v828
      %v1680 = vsel %vm1668, %v577, %v830
      %v1681 = vsel %vm1668, %v666, %v832
      %v1682 = vsel %vm1668, %v580, %v834
      %v1683 = vsel %vm1668, %v667, %v836
      %v1684 = vsel %vm1668, %v583, %v838
      %v1685 = vsel %vm1668, %v668, %v840
      %v1686 = vsel %vm1668, %v586, %v842
      %v1687 = vsel %vm1668, %v669, %v844
      %v1688 = vsel %vm1668, %v589, %v846
      %v1689 = vsel %vm1668, %v670, %v848
      %v1690 = vsel %vm1668, %v592, %v850
      %v1691 = vsel %vm1668, %v671, %v852
      %v1692 = vsel %vm1668, %v595, %v854
      %v1693 = vsel %vm1668, %v672, %v856
      %v1694 = vsel %vm1668, %v598, %v858
      %v1695 = vsel %vm1668, %v673, %v860
      %v1696 = vsel %vm1668, %v601, %v862
      %v1697 = vsel %vm1668, %v674, %v864
      %v1698 = vsel %vm1668, %v604, %v866
      %v1699 = vsel %vm1668, %v675, %v868
      %v1700 = vsel %vm1668, %v607, %v870
      %vm1701 = vcmask 130048
      %v1702 = vsel %vm1701, %v1669, %v985
      %v1703 = vsel %vm1701, %v1670, %v987
      %v1704 = vsel %vm1701, %v1671, %v989
      %v1705 = vsel %vm1701, %v1672, %v991
      %v1706 = vsel %vm1701, %v1673, %v993
      %v1707 = vsel %vm1701, %v1674, %v995
      %v1708 = vsel %vm1701, %v1675, %v997
      %v1709 = vsel %vm1701, %v1676, %v999
      %v1710 = vsel %vm1701, %v1677, %v1001
      %v1711 = vsel %vm1701, %v1678, %v1003
      %v1712 = vsel %vm1701, %v1679, %v1005
      %v1713 = vsel %vm1701, %v1680, %v1007
      %v1714 = vsel %vm1701, %v1681, %v1009
      %v1715 = vsel %vm1701, %v1682, %v1011
      %v1716 = vsel %vm1701, %v1683, %v1013
      %v1717 = vsel %vm1701, %v1684, %v1015
      %v1718 = vsel %vm1701, %v1685, %v1017
      %v1719 = vsel %vm1701, %v1686, %v1019
      %v1720 = vsel %vm1701, %v1687, %v1021
      %v1721 = vsel %vm1701, %v1688, %v1023
      %v1722 = vsel %vm1701, %v1689, %v1025
      %v1723 = vsel %vm1701, %v1690, %v1027
      %v1724 = vsel %vm1701, %v1691, %v1029
      %v1725 = vsel %vm1701, %v1692, %v1031
      %v1726 = vsel %vm1701, %v1693, %v1033
      %v1727 = vsel %vm1701, %v1694, %v1035
      %v1728 = vsel %vm1701, %v1695, %v1037
      %v1729 = vsel %vm1701, %v1696, %v1039
      %v1730 = vsel %vm1701, %v1697, %v1041
      %v1731 = vsel %vm1701, %v1698, %v1043
      %v1732 = vsel %vm1701, %v1699, %v1045
      %v1733 = vsel %vm1701, %v1700, %v1047
      %vm1734 = vcmask 195584
      %v1735 = vsel %vm1734, %v1702, %v1082
      %v1736 = vsel %vm1734, %v1703, %v1084
      %v1737 = vsel %vm1734, %v1704, %v1086
      %v1738 = vsel %vm1734, %v1705, %v1088
      %v1739 = vsel %vm1734, %v1706, %v1090
      %v1740 = vsel %vm1734, %v1707, %v1092
      %v1741 = vsel %vm1734, %v1708, %v1094
      %v1742 = vsel %vm1734, %v1709, %v1096
      %v1743 = vsel %vm1734, %v1710, %v1098
      %v1744 = vsel %vm1734, %v1711, %v1100
      %v1745 = vsel %vm1734, %v1712, %v1102
      %v1746 = vsel %vm1734, %v1713, %v1104
      %v1747 = vsel %vm1734, %v1714, %v1106
      %v1748 = vsel %vm1734, %v1715, %v1108
      %v1749 = vsel %vm1734, %v1716, %v1110
      %v1750 = vsel %vm1734, %v1717, %v1112
      %v1751 = vsel %vm1734, %v1718, %v1114
      %v1752 = vsel %vm1734, %v1719, %v1116
      %v1753 = vsel %vm1734, %v1720, %v1118
      %v1754 = vsel %vm1734, %v1721, %v1120
      %v1755 = vsel %vm1734, %v1722, %v1122
      %v1756 = vsel %vm1734, %v1723, %v1124
      %v1757 = vsel %vm1734, %v1724, %v1126
      %v1758 = vsel %vm1734, %v1725, %v1128
      %v1759 = vsel %vm1734, %v1726, %v1130
      %v1760 = vsel %vm1734, %v1727, %v1132
      %v1761 = vsel %vm1734, %v1728, %v1134
      %v1762 = vsel %vm1734, %v1729, %v1136
      %v1763 = vsel %vm1734, %v1730, %v1138
      %v1764 = vsel %vm1734, %v1731, %v1140
      %v1765 = vsel %vm1734, %v1732, %v1142
      %v1766 = vsel %vm1734, %v1733, %v1144
      %vm1767 = vcmask 261120
      %v1768 = vsel %vm1767, %v1735, %v1184
      %v1769 = vsel %vm1767, %v1736, %v1186
      %v1770 = vsel %vm1767, %v1737, %v1188
      %v1771 = vsel %vm1767, %v1738, %v1190
      %v1772 = vsel %vm1767, %v1739, %v1192
      %v1773 = vsel %vm1767, %v1740, %v1194
      %v1774 = vsel %vm1767, %v1741, %v1196
      %v1775 = vsel %vm1767, %v1742, %v1198
      %v1776 = vsel %vm1767, %v1743, %v1200
      %v1777 = vsel %vm1767, %v1744, %v1202
      %v1778 = vsel %vm1767, %v1745, %v1204
      %v1779 = vsel %vm1767, %v1746, %v1206
      %v1780 = vsel %vm1767, %v1747, %v1208
      %v1781 = vsel %vm1767, %v1748, %v1210
      %v1782 = vsel %vm1767, %v1749, %v1212
      %v1783 = vsel %vm1767, %v1750, %v1214
      %v1784 = vsel %vm1767, %v1751, %v1216
      %v1785 = vsel %vm1767, %v1752, %v1218
      %v1786 = vsel %vm1767, %v1753, %v1220
      %v1787 = vsel %vm1767, %v1754, %v1222
      %v1788 = vsel %vm1767, %v1755, %v1224
      %v1789 = vsel %vm1767, %v1756, %v1226
      %v1790 = vsel %vm1767, %v1757, %v1228
      %v1791 = vsel %vm1767, %v1758, %v1230
      %v1792 = vsel %vm1767, %v1759, %v1232
      %v1793 = vsel %vm1767, %v1760, %v1234
      %v1794 = vsel %vm1767, %v1761, %v1236
      %v1795 = vsel %vm1767, %v1762, %v1238
      %v1796 = vsel %vm1767, %v1763, %v1240
      %v1797 = vsel %vm1767, %v1764, %v1242
      %v1798 = vsel %vm1767, %v1765, %v1244
      %v1799 = vsel %vm1767, %v1766, %v1246
      %vm1800 = vcmask 326656
      %v1801 = vsel %vm1800, %v1768, %v1285
      %v1802 = vsel %vm1800, %v1769, %v1287
      %v1803 = vsel %vm1800, %v1770, %v1289
      %v1804 = vsel %vm1800, %v1771, %v1291
      %v1805 = vsel %vm1800, %v1772, %v1293
      %v1806 = vsel %vm1800, %v1773, %v1295
      %v1807 = vsel %vm1800, %v1774, %v1297
      %v1808 = vsel %vm1800, %v1775, %v1299
      %v1809 = vsel %vm1800, %v1776, %v1301
      %v1810 = vsel %vm1800, %v1777, %v1303
      %v1811 = vsel %vm1800, %v1778, %v1305
      %v1812 = vsel %vm1800, %v1779, %v1307
      %v1813 = vsel %vm1800, %v1780, %v1309
      %v1814 = vsel %vm1800, %v1781, %v1311
      %v1815 = vsel %vm1800, %v1782, %v1313
      %v1816 = vsel %vm1800, %v1783, %v1315
      %v1817 = vsel %vm1800, %v1784, %v1317
      %v1818 = vsel %vm1800, %v1785, %v1319
      %v1819 = vsel %vm1800, %v1786, %v1321
      %v1820 = vsel %vm1800, %v1787, %v1323
      %v1821 = vsel %vm1800, %v1788, %v1325
      %v1822 = vsel %vm1800, %v1789, %v1327
      %v1823 = vsel %vm1800, %v1790, %v1329
      %v1824 = vsel %vm1800, %v1791, %v1331
      %v1825 = vsel %vm1800, %v1792, %v1333
      %v1826 = vsel %vm1800, %v1793, %v1335
      %v1827 = vsel %vm1800, %v1794, %v1337
      %v1828 = vsel %vm1800, %v1795, %v1339
      %v1829 = vsel %vm1800, %v1796, %v1341
      %v1830 = vsel %vm1800, %v1797, %v1343
      %v1831 = vsel %vm1800, %v1798, %v1345
      %v1832 = vsel %vm1800, %v1799, %v1347
      %vm1833 = vcmask 392192
      %v1834 = vsel %vm1833, %v1801, %v1381
      %v1835 = vsel %vm1833, %v1802, %v1383
      %v1836 = vsel %vm1833, %v1803, %v1385
      %v1837 = vsel %vm1833, %v1804, %v1387
      %v1838 = vsel %vm1833, %v1805, %v1389
      %v1839 = vsel %vm1833, %v1806, %v1391
      %v1840 = vsel %vm1833, %v1807, %v1393
      %v1841 = vsel %vm1833, %v1808, %v1395
      %v1842 = vsel %vm1833, %v1809, %v1397
      %v1843 = vsel %vm1833, %v1810, %v1399
      %v1844 = vsel %vm1833, %v1811, %v1401
      %v1845 = vsel %vm1833, %v1812, %v1403
      %v1846 = vsel %vm1833, %v1813, %v1405
      %v1847 = vsel %vm1833, %v1814, %v1407
      %v1848 = vsel %vm1833, %v1815, %v1409
      %v1849 = vsel %vm1833, %v1816, %v1411
      %v1850 = vsel %vm1833, %v1817, %v1413
      %v1851 = vsel %vm1833, %v1818, %v1415
      %v1852 = vsel %vm1833, %v1819, %v1417
      %v1853 = vsel %vm1833, %v1820, %v1419
      %v1854 = vsel %vm1833, %v1821, %v1421
      %v1855 = vsel %vm1833, %v1822, %v1423
      %v1856 = vsel %vm1833, %v1823, %v1425
      %v1857 = vsel %vm1833, %v1824, %v1427
      %v1858 = vsel %vm1833, %v1825, %v1429
      %v1859 = vsel %vm1833, %v1826, %v1431
      %v1860 = vsel %vm1833, %v1827, %v1433
      %v1861 = vsel %vm1833, %v1828, %v1435
      %v1862 = vsel %vm1833, %v1829, %v1437
      %v1863 = vsel %vm1833, %v1830, %v1439
      %v1864 = vsel %vm1833, %v1831, %v1441
      %v1865 = vsel %vm1833, %v1832, %v1443
      %vm1866 = vcmask 457728
      %v1867 = vsel %vm1866, %v1834, %v1477
      %v1868 = vsel %vm1866, %v1835, %v1479
      %v1869 = vsel %vm1866, %v1836, %v1481
      %v1870 = vsel %vm1866, %v1837, %v1483
      %v1871 = vsel %vm1866, %v1838, %v1485
      %v1872 = vsel %vm1866, %v1839, %v1487
      %v1873 = vsel %vm1866, %v1840, %v1489
      %v1874 = vsel %vm1866, %v1841, %v1491
      %v1875 = vsel %vm1866, %v1842, %v1493
      %v1876 = vsel %vm1866, %v1843, %v1495
      %v1877 = vsel %vm1866, %v1844, %v1497
      %v1878 = vsel %vm1866, %v1845, %v1499
      %v1879 = vsel %vm1866, %v1846, %v1501
      %v1880 = vsel %vm1866, %v1847, %v1503
      %v1881 = vsel %vm1866, %v1848, %v1505
      %v1882 = vsel %vm1866, %v1849, %v1507
      %v1883 = vsel %vm1866, %v1850, %v1509
      %v1884 = vsel %vm1866, %v1851, %v1511
      %v1885 = vsel %vm1866, %v1852, %v1513
      %v1886 = vsel %vm1866, %v1853, %v1515
      %v1887 = vsel %vm1866, %v1854, %v1517
      %v1888 = vsel %vm1866, %v1855, %v1519
      %v1889 = vsel %vm1866, %v1856, %v1521
      %v1890 = vsel %vm1866, %v1857, %v1523
      %v1891 = vsel %vm1866, %v1858, %v1525
      %v1892 = vsel %vm1866, %v1859, %v1527
      %v1893 = vsel %vm1866, %v1860, %v1529
      %v1894 = vsel %vm1866, %v1861, %v1531
      %v1895 = vsel %vm1866, %v1862, %v1533
      %v1896 = vsel %vm1866, %v1863, %v1535
      %v1897 = vsel %vm1866, %v1864, %v1537
      %v1898 = vsel %vm1866, %v1865, %v1539
      %vm1899 = vcmask 523264
      %v1900 = vsel %vm1899, %v1867, %v1573
      %v1901 = vsel %vm1899, %v1868, %v1575
      %v1902 = vsel %vm1899, %v1869, %v1577
      %v1903 = vsel %vm1899, %v1870, %v1579
      %v1904 = vsel %vm1899, %v1871, %v1581
      %v1905 = vsel %vm1899, %v1872, %v1583
      %v1906 = vsel %vm1899, %v1873, %v1585
      %v1907 = vsel %vm1899, %v1874, %v1587
      %v1908 = vsel %vm1899, %v1875, %v1589
      %v1909 = vsel %vm1899, %v1876, %v1591
      %v1910 = vsel %vm1899, %v1877, %v1593
      %v1911 = vsel %vm1899, %v1878, %v1595
      %v1912 = vsel %vm1899, %v1879, %v1597
      %v1913 = vsel %vm1899, %v1880, %v1599
      %v1914 = vsel %vm1899, %v1881, %v1601
      %v1915 = vsel %vm1899, %v1882, %v1603
      %v1916 = vsel %vm1899, %v1883, %v1605
      %v1917 = vsel %vm1899, %v1884, %v1607
      %v1918 = vsel %vm1899, %v1885, %v1609
      %v1919 = vsel %vm1899, %v1886, %v1611
      %v1920 = vsel %vm1899, %v1887, %v1613
      %v1921 = vsel %vm1899, %v1888, %v1615
      %v1922 = vsel %vm1899, %v1889, %v1617
      %v1923 = vsel %vm1899, %v1890, %v1619
      %v1924 = vsel %vm1899, %v1891, %v1621
      %v1925 = vsel %vm1899, %v1892, %v1623
      %v1926 = vsel %vm1899, %v1893, %v1625
      %v1927 = vsel %vm1899, %v1894, %v1627
      %v1928 = vsel %vm1899, %v1895, %v1629
      %v1929 = vsel %vm1899, %v1896, %v1631
      %v1930 = vsel %vm1899, %v1897, %v1633
      %v1931 = vsel %vm1899, %v1898, %v1635
      %v1932 = vld [vmem:[%s1] sm:$0xff]
      %v1933 = vld [vmem:[%s1 + $0x8] sm:$0xff]
      %v1934 = vld [vmem:[%s1 + $0x10] sm:$0xff]
      %v1935 = vld [vmem:[%s1 + $0x18] sm:$0xff]
      %v1936 = vld [vmem:[%s1 + $0x20] sm:$0xff]
      %v1937 = vld [vmem:[%s1 + $0x28] sm:$0xff]
      %v1938 = vld [vmem:[%s1 + $0x30] sm:$0xff]
      %v1939 = vld [vmem:[%s1 + $0x38] sm:$0xff]
      %v1940 = vld [vmem:[%s1 + $0x40] sm:$0xff]
      %vm1941 = vcmask 588800
      %v1943 = vsel %vm1941, %v1900, 0
      %v1946 = vsel %vm1941, %v1901, 0
      %v1949 = vsel %vm1941, %v1902, 0
      %v1952 = vsel %vm1941, %v1903, 0
      %v1955 = vsel %vm1941, %v1904, 0
      %v1958 = vsel %vm1941, %v1905, 0
      %v1961 = vsel %vm1941, %v1906, 0
      %v1964 = vsel %vm1941, %v1907, 0
      %v1967 = vsel %vm1941, %v1908, 0
      %v1970 = vsel %vm1941, %v1909, 0
      %v1973 = vsel %vm1941, %v1910, 0
      %v1976 = vsel %vm1941, %v1911, 0
      %v1979 = vsel %vm1941, %v1912, 0
      %v1982 = vsel %vm1941, %v1913, 0
      %v1985 = vsel %vm1941, %v1914, 0
      %v1988 = vsel %vm1941, %v1915, 0
      %v1991 = vsel %vm1941, %v1916, 0
      %v1994 = vsel %vm1941, %v1917, 0
      %v1997 = vsel %vm1941, %v1918, 0
      %v2000 = vsel %vm1941, %v1919, 0
      %v2003 = vsel %vm1941, %v1920, 0
      %v2006 = vsel %vm1941, %v1921, 0
      %v2009 = vsel %vm1941, %v1922, 0
      %v2012 = vsel %vm1941, %v1923, 0
      %v2015 = vsel %vm1941, %v1924, 0
      %v2018 = vsel %vm1941, %v1925, 0
      %v2021 = vsel %vm1941, %v1926, 0
      %v2024 = vsel %vm1941, %v1927, 0
      %v2027 = vsel %vm1941, %v1928, 0
      %v2030 = vsel %vm1941, %v1929, 0
      %v2033 = vsel %vm1941, %v1930, 0
      %v2036 = vsel %vm1941, %v1931, 0
      %2038 = vmatprep.subr.mxu0 0.0
      %2039 = vmatpush1.msra.mxu0 0.0
      %2040 = vmatprep.subr.mxu0 0.0
      %2041 = vmatpush1.msra.mxu0 0.0
      %2042 = vmatprep.subr.mxu0 0.0
      %2043 = vmatpush1.msra.mxu0 0.0
      %2044 = vmatprep.subr.mxu0 0.0
      %2045 = vmatpush1.msra.mxu0 0.0
      %2046 = vmatprep.subr.mxu0 0.0
      %2047 = vmatpush1.msra.mxu0 0.0
      %2048 = vmatprep.subr.mxu0 0.0
      %2049 = vmatpush1.msra.mxu0 0.0
      %2050 = vmatprep.subr.mxu0 0.0
      %2051 = vmatpush1.msra.mxu0 0.0
      %2052 = vmatprep.subr.mxu0 0.0
      %2053 = vmatpush1.msra.mxu0 %v1940
      %2054 = vmatprep.subr.mxu0 0.0
      %2055 = vmatpush1.msra.mxu0 %v1939
      %2056 = vmatprep.subr.mxu0 0.0
      %2057 = vmatpush1.msra.mxu0 %v1938
      %2058 = vmatprep.subr.mxu0 0.0
      %2059 = vmatpush1.msra.mxu0 %v1937
      %2060 = vmatprep.subr.mxu0 0.0
      %2061 = vmatpush1.msra.mxu0 %v1936
      %2062 = vmatprep.subr.mxu0 0.0
      %2063 = vmatpush1.msra.mxu0 %v1935
      %2064 = vmatprep.subr.mxu0 0.0
      %2065 = vmatpush1.msra.mxu0 %v1934
      %2066 = vmatprep.subr.mxu0 0.0
      %2067 = vmatpush1.msra.mxu0 %v1933
      %2068 = vmatprep.subr.mxu0 0.0
      %2069 = vmatpush1.msra.mxu0 %v1932
      %2070 = vmatprep.subr.mxu0 0.0
      %2071 = vmatpush2.msra.mxu0 0.0
      %2072 = vmatprep.subr.mxu0 0.0
      %2073 = vmatpush2.msra.mxu0 0.0
      %2074 = vmatprep.subr.mxu0 0.0
      %2075 = vmatpush2.msra.mxu0 0.0
      %2076 = vmatprep.subr.mxu0 0.0
      %2077 = vmatpush2.msra.mxu0 0.0
      %2078 = vmatprep.subr.mxu0 0.0
      %2079 = vmatpush2.msra.mxu0 0.0
      %2080 = vmatprep.subr.mxu0 0.0
      %2081 = vmatpush2.msra.mxu0 0.0
      %2082 = vmatprep.subr.mxu0 0.0
      %2083 = vmatpush2.msra.mxu0 0.0
      %2084 = vmatprep.subr.mxu0 0.0
      %2085 = vmatpush2.msra.mxu0 0.0
      %2086 = vmatprep.subr.mxu0 0.0
      %2087 = vmatpush2.msra.mxu0 0.0
      %2088 = vmatprep.subr.mxu0 0.0
      %2089 = vmatpush2.msra.mxu0 0.0
      %2090 = vmatprep.subr.mxu0 0.0
      %2091 = vmatpush2.msra.mxu0 0.0
      %2092 = vmatprep.subr.mxu0 0.0
      %2093 = vmatpush2.msra.mxu0 0.0
      %2094 = vmatprep.subr.mxu0 0.0
      %2095 = vmatpush2.msra.mxu0 0.0
      %2096 = vmatprep.subr.mxu0 0.0
      %2097 = vmatpush2.msra.mxu0 0.0
      %2098 = vmatprep.subr.mxu0 0.0
      %2099 = vmatpush2.msra.mxu0 0.0
      %2100 = vmatprep.subr.mxu0 0.0
      %2101 = vmatpush2.msra.mxu0 0.0
      %2102 = vmatprep.mubr.f32.mxu0 0.0
      %2103 = vmatmul.mubr.f32.gmra.mxu0 %v1943
      %v2104 = vpop.f32.mrf.mxu0
      %v2105 = vadd.f32 0.0, %v2104
      %v2106 = vpop.f32.mrf.mxu0
      %2107 = vmatprep.mubr.f32.mxu0 0.0
      %2108 = vmatmul.mubr.f32.gmra.mxu0 %v1946
      %v2109 = vpop.f32.mrf.mxu0
      %v2110 = vadd.f32 0.0, %v2109
      %v2111 = vpop.f32.mrf.mxu0
      %2112 = vmatprep.mubr.f32.mxu0 0.0
      %2113 = vmatmul.mubr.f32.gmra.mxu0 %v1949
      %v2114 = vpop.f32.mrf.mxu0
      %v2115 = vadd.f32 0.0, %v2114
      %v2116 = vpop.f32.mrf.mxu0
      %2117 = vmatprep.mubr.f32.mxu0 0.0
      %2118 = vmatmul.mubr.f32.gmra.mxu0 %v1952
      %v2119 = vpop.f32.mrf.mxu0
      %v2120 = vadd.f32 0.0, %v2119
      %v2121 = vpop.f32.mrf.mxu0
      %2122 = vmatprep.mubr.f32.mxu0 0.0
      %2123 = vmatmul.mubr.f32.gmra.mxu0 %v1955
      %v2124 = vpop.f32.mrf.mxu0
      %v2125 = vadd.f32 0.0, %v2124
      %v2126 = vpop.f32.mrf.mxu0
      %2127 = vmatprep.mubr.f32.mxu0 0.0
      %2128 = vmatmul.mubr.f32.gmra.mxu0 %v1958
      %v2129 = vpop.f32.mrf.mxu0
      %v2130 = vadd.f32 0.0, %v2129
      %v2131 = vpop.f32.mrf.mxu0
      %2132 = vmatprep.mubr.f32.mxu0 0.0
      %2133 = vmatmul.mubr.f32.gmra.mxu0 %v1961
      %v2134 = vpop.f32.mrf.mxu0
      %v2135 = vadd.f32 0.0, %v2134
      %v2136 = vpop.f32.mrf.mxu0
      %2137 = vmatprep.mubr.f32.mxu0 0.0
      %2138 = vmatmul.mubr.f32.gmra.mxu0 %v1964
      %v2139 = vpop.f32.mrf.mxu0
      %v2140 = vadd.f32 0.0, %v2139
      %v2141 = vpop.f32.mrf.mxu0
      %2142 = vmatprep.mubr.f32.mxu0 0.0
      %2143 = vmatmul.mubr.f32.gmra.mxu0 %v1967
      %v2144 = vpop.f32.mrf.mxu0
      %v2145 = vadd.f32 0.0, %v2144
      %v2146 = vpop.f32.mrf.mxu0
      %2147 = vmatprep.mubr.f32.mxu0 0.0
      %2148 = vmatmul.mubr.f32.gmra.mxu0 %v1970
      %v2149 = vpop.f32.mrf.mxu0
      %v2150 = vadd.f32 0.0, %v2149
      %v2151 = vpop.f32.mrf.mxu0
      %2152 = vmatprep.mubr.f32.mxu0 0.0
      %2153 = vmatmul.mubr.f32.gmra.mxu0 %v1973
      %v2154 = vpop.f32.mrf.mxu0
      %v2155 = vadd.f32 0.0, %v2154
      %v2156 = vpop.f32.mrf.mxu0
      %2157 = vmatprep.mubr.f32.mxu0 0.0
      %2158 = vmatmul.mubr.f32.gmra.mxu0 %v1976
      %v2159 = vpop.f32.mrf.mxu0
      %v2160 = vadd.f32 0.0, %v2159
      %v2161 = vpop.f32.mrf.mxu0
      %2162 = vmatprep.mubr.f32.mxu0 0.0
      %2163 = vmatmul.mubr.f32.gmra.mxu0 %v1979
      %v2164 = vpop.f32.mrf.mxu0
      %v2165 = vadd.f32 0.0, %v2164
      %v2166 = vpop.f32.mrf.mxu0
      %2167 = vmatprep.mubr.f32.mxu0 0.0
      %2168 = vmatmul.mubr.f32.gmra.mxu0 %v1982
      %v2169 = vpop.f32.mrf.mxu0
      %v2170 = vadd.f32 0.0, %v2169
      %v2171 = vpop.f32.mrf.mxu0
      %2172 = vmatprep.mubr.f32.mxu0 0.0
      %2173 = vmatmul.mubr.f32.gmra.mxu0 %v1985
      %v2174 = vpop.f32.mrf.mxu0
      %v2175 = vadd.f32 0.0, %v2174
      %v2176 = vpop.f32.mrf.mxu0
      %2177 = vmatprep.mubr.f32.mxu0 0.0
      %2178 = vmatmul.mubr.f32.gmra.mxu0 %v1988
      %v2179 = vpop.f32.mrf.mxu0
      %v2180 = vadd.f32 0.0, %v2179
      %v2181 = vpop.f32.mrf.mxu0
      %2182 = vmatprep.mubr.f32.mxu0 0.0
      %2183 = vmatmul.mubr.f32.gmra.mxu0 %v1991
      %v2184 = vpop.f32.mrf.mxu0
      %v2185 = vadd.f32 0.0, %v2184
      %v2186 = vpop.f32.mrf.mxu0
      %2187 = vmatprep.mubr.f32.mxu0 0.0
      %2188 = vmatmul.mubr.f32.gmra.mxu0 %v1994
      %v2189 = vpop.f32.mrf.mxu0
      %v2190 = vadd.f32 0.0, %v2189
      %v2191 = vpop.f32.mrf.mxu0
      %2192 = vmatprep.mubr.f32.mxu0 0.0
      %2193 = vmatmul.mubr.f32.gmra.mxu0 %v1997
      %v2194 = vpop.f32.mrf.mxu0
      %v2195 = vadd.f32 0.0, %v2194
      %v2196 = vpop.f32.mrf.mxu0
      %2197 = vmatprep.mubr.f32.mxu0 0.0
      %2198 = vmatmul.mubr.f32.gmra.mxu0 %v2000
      %v2199 = vpop.f32.mrf.mxu0
      %v2200 = vadd.f32 0.0, %v2199
      %v2201 = vpop.f32.mrf.mxu0
      %2202 = vmatprep.mubr.f32.mxu0 0.0
      %2203 = vmatmul.mubr.f32.gmra.mxu0 %v2003
      %v2204 = vpop.f32.mrf.mxu0
      %v2205 = vadd.f32 0.0, %v2204
      %v2206 = vpop.f32.mrf.mxu0
      %2207 = vmatprep.mubr.f32.mxu0 0.0
      %2208 = vmatmul.mubr.f32.gmra.mxu0 %v2006
      %v2209 = vpop.f32.mrf.mxu0
      %v2210 = vadd.f32 0.0, %v2209
      %v2211 = vpop.f32.mrf.mxu0
      %2212 = vmatprep.mubr.f32.mxu0 0.0
      %2213 = vmatmul.mubr.f32.gmra.mxu0 %v2009
      %v2214 = vpop.f32.mrf.mxu0
      %v2215 = vadd.f32 0.0, %v2214
      %v2216 = vpop.f32.mrf.mxu0
      %2217 = vmatprep.mubr.f32.mxu0 0.0
      %2218 = vmatmul.mubr.f32.gmra.mxu0 %v2012
      %v2219 = vpop.f32.mrf.mxu0
      %v2220 = vadd.f32 0.0, %v2219
      %v2221 = vpop.f32.mrf.mxu0
      %2222 = vmatprep.mubr.f32.mxu0 0.0
      %2223 = vmatmul.mubr.f32.gmra.mxu0 %v2015
      %v2224 = vpop.f32.mrf.mxu0
      %v2225 = vadd.f32 0.0, %v2224
      %v2226 = vpop.f32.mrf.mxu0
      %2227 = vmatprep.mubr.f32.mxu0 0.0
      %2228 = vmatmul.mubr.f32.gmra.mxu0 %v2018
      %v2229 = vpop.f32.mrf.mxu0
      %v2230 = vadd.f32 0.0, %v2229
      %v2231 = vpop.f32.mrf.mxu0
      %2232 = vmatprep.mubr.f32.mxu0 0.0
      %2233 = vmatmul.mubr.f32.gmra.mxu0 %v2021
      %v2234 = vpop.f32.mrf.mxu0
      %v2235 = vadd.f32 0.0, %v2234
      %v2236 = vpop.f32.mrf.mxu0
      %2237 = vmatprep.mubr.f32.mxu0 0.0
      %2238 = vmatmul.mubr.f32.gmra.mxu0 %v2024
      %v2239 = vpop.f32.mrf.mxu0
      %v2240 = vadd.f32 0.0, %v2239
      %v2241 = vpop.f32.mrf.mxu0
      %2242 = vmatprep.mubr.f32.mxu0 0.0
      %2243 = vmatmul.mubr.f32.gmra.mxu0 %v2027
      %v2244 = vpop.f32.mrf.mxu0
      %v2245 = vadd.f32 0.0, %v2244
      %v2246 = vpop.f32.mrf.mxu0
      %2247 = vmatprep.mubr.f32.mxu0 0.0
      %2248 = vmatmul.mubr.f32.gmra.mxu0 %v2030
      %v2249 = vpop.f32.mrf.mxu0
      %v2250 = vadd.f32 0.0, %v2249
      %v2251 = vpop.f32.mrf.mxu0
      %2252 = vmatprep.mubr.f32.mxu0 0.0
      %2253 = vmatmul.mubr.f32.gmra.mxu0 %v2033
      %v2254 = vpop.f32.mrf.mxu0
      %v2255 = vadd.f32 0.0, %v2254
      %v2256 = vpop.f32.mrf.mxu0
      %2257 = vmatprep.mubr.f32.mxu0 0.0
      %2258 = vmatmul.mubr.f32.gmra.mxu0 %v2036
      %v2259 = vpop.f32.mrf.mxu0
      %v2260 = vadd.f32 0.0, %v2259
      %v2261 = vpop.f32.mrf.mxu0
      %2262 = vdwg.mxu0
      %v2263 = vld [vmem:[%s2] sm:$0x1]
      %v2265 = vlaneseq
      %v2266 = vshrl.u32 %v2265, 7
      %v2267 = vsub.s32 0, %v2266
      %v2268 = vrot.slane %v2263, %v2267
      %v2270 = vmul.f32 %v2105, %v2268
      %v2271 = vmul.f32 %v2110, %v2268
      %v2272 = vmul.f32 %v2115, %v2268
      %v2273 = vmul.f32 %v2120, %v2268
      %v2274 = vmul.f32 %v2125, %v2268
      %v2275 = vmul.f32 %v2130, %v2268
      %v2276 = vmul.f32 %v2135, %v2268
      %v2277 = vmul.f32 %v2140, %v2268
      %v2278 = vmul.f32 %v2145, %v2268
      %v2279 = vmul.f32 %v2150, %v2268
      %v2280 = vmul.f32 %v2155, %v2268
      %v2281 = vmul.f32 %v2160, %v2268
      %v2282 = vmul.f32 %v2165, %v2268
      %v2283 = vmul.f32 %v2170, %v2268
      %v2284 = vmul.f32 %v2175, %v2268
      %v2285 = vmul.f32 %v2180, %v2268
      %v2286 = vmul.f32 %v2185, %v2268
      %v2287 = vmul.f32 %v2190, %v2268
      %v2288 = vmul.f32 %v2195, %v2268
      %v2289 = vmul.f32 %v2200, %v2268
      %v2290 = vmul.f32 %v2205, %v2268
      %v2291 = vmul.f32 %v2210, %v2268
      %v2292 = vmul.f32 %v2215, %v2268
      %v2293 = vmul.f32 %v2220, %v2268
      %v2294 = vmul.f32 %v2225, %v2268
      %v2295 = vmul.f32 %v2230, %v2268
      %v2296 = vmul.f32 %v2235, %v2268
      %v2297 = vmul.f32 %v2240, %v2268
      %v2298 = vmul.f32 %v2245, %v2268
      %v2299 = vmul.f32 %v2250, %v2268
      %v2300 = vmul.f32 %v2255, %v2268
      %v2301 = vmul.f32 %v2260, %v2268
      %v2302 = vld [vmem:[%s3] sm:$0x1]
      %v2304 = vlaneseq
      %v2305 = vshrl.u32 %v2304, 7
      %v2306 = vsub.s32 0, %v2305
      %v2307 = vrot.slane %v2302, %v2306
      %v2309 = vadd.f32 %v2270, %v2307
      %v2310 = vadd.f32 %v2271, %v2307
      %v2311 = vadd.f32 %v2272, %v2307
      %v2312 = vadd.f32 %v2273, %v2307
      %v2313 = vadd.f32 %v2274, %v2307
      %v2314 = vadd.f32 %v2275, %v2307
      %v2315 = vadd.f32 %v2276, %v2307
      %v2316 = vadd.f32 %v2277, %v2307
      %v2317 = vadd.f32 %v2278, %v2307
      %v2318 = vadd.f32 %v2279, %v2307
      %v2319 = vadd.f32 %v2280, %v2307
      %v2320 = vadd.f32 %v2281, %v2307
      %v2321 = vadd.f32 %v2282, %v2307
      %v2322 = vadd.f32 %v2283, %v2307
      %v2323 = vadd.f32 %v2284, %v2307
      %v2324 = vadd.f32 %v2285, %v2307
      %v2325 = vadd.f32 %v2286, %v2307
      %v2326 = vadd.f32 %v2287, %v2307
      %v2327 = vadd.f32 %v2288, %v2307
      %v2328 = vadd.f32 %v2289, %v2307
      %v2329 = vadd.f32 %v2290, %v2307
      %v2330 = vadd.f32 %v2291, %v2307
      %v2331 = vadd.f32 %v2292, %v2307
      %v2332 = vadd.f32 %v2293, %v2307
      %v2333 = vadd.f32 %v2294, %v2307
      %v2334 = vadd.f32 %v2295, %v2307
      %v2335 = vadd.f32 %v2296, %v2307
      %v2336 = vadd.f32 %v2297, %v2307
      %v2337 = vadd.f32 %v2298, %v2307
      %v2338 = vadd.f32 %v2299, %v2307
      %v2339 = vadd.f32 %v2300, %v2307
      %v2340 = vadd.f32 %v2301, %v2307
      %v2341 = vmax.f32 %v2309, 0.0
      %v2342 = vmax.f32 %v2310, 0.0
      %v2343 = vmax.f32 %v2311, 0.0
      %v2344 = vmax.f32 %v2312, 0.0
      %v2345 = vmax.f32 %v2313, 0.0
      %v2346 = vmax.f32 %v2314, 0.0
      %v2347 = vmax.f32 %v2315, 0.0
      %v2348 = vmax.f32 %v2316, 0.0
      %v2349 = vmax.f32 %v2317, 0.0
      %v2350 = vmax.f32 %v2318, 0.0
      %v2351 = vmax.f32 %v2319, 0.0
      %v2352 = vmax.f32 %v2320, 0.0
      %v2353 = vmax.f32 %v2321, 0.0
      %v2354 = vmax.f32 %v2322, 0.0
      %v2355 = vmax.f32 %v2323, 0.0
      %v2356 = vmax.f32 %v2324, 0.0
      %v2357 = vmax.f32 %v2325, 0.0
      %v2358 = vmax.f32 %v2326, 0.0
      %v2359 = vmax.f32 %v2327, 0.0
      %v2360 = vmax.f32 %v2328, 0.0
      %v2361 = vmax.f32 %v2329, 0.0
      %v2362 = vmax.f32 %v2330, 0.0
      %v2363 = vmax.f32 %v2331, 0.0
      %v2364 = vmax.f32 %v2332, 0.0
      %v2365 = vmax.f32 %v2333, 0.0
      %v2366 = vmax.f32 %v2334, 0.0
      %v2367 = vmax.f32 %v2335, 0.0
      %v2368 = vmax.f32 %v2336, 0.0
      %v2369 = vmax.f32 %v2337, 0.0
      %v2370 = vmax.f32 %v2338, 0.0
      %v2371 = vmax.f32 %v2339, 0.0
      %v2372 = vmax.f32 %v2340, 0.0
      %v2405 = vrot.slane %v2341, 7
      %v2406 = vrot.slane %v2342, 7
      %v2407 = vsel %vm560, %v2405, %v2406
      %v2408 = vrot.slane %v2343, 7
      %v2409 = vrot.slane %v2344, 7
      %v2410 = vsel %vm560, %v2408, %v2409
      %v2411 = vrot.slane %v2345, 7
      %v2412 = vrot.slane %v2346, 7
      %v2413 = vsel %vm560, %v2411, %v2412
      %v2414 = vrot.slane %v2347, 7
      %v2415 = vrot.slane %v2348, 7
      %v2416 = vsel %vm560, %v2414, %v2415
      %v2417 = vrot.slane %v2349, 7
      %v2418 = vrot.slane %v2350, 7
      %v2419 = vsel %vm560, %v2417, %v2418
      %v2420 = vrot.slane %v2351, 7
      %v2421 = vrot.slane %v2352, 7
      %v2422 = vsel %vm560, %v2420, %v2421
      %v2423 = vrot.slane %v2353, 7
      %v2424 = vrot.slane %v2354, 7
      %v2425 = vsel %vm560, %v2423, %v2424
      %v2426 = vrot.slane %v2355, 7
      %v2427 = vrot.slane %v2356, 7
      %v2428 = vsel %vm560, %v2426, %v2427
      %v2429 = vrot.slane %v2357, 7
      %v2430 = vrot.slane %v2358, 7
      %v2431 = vsel %vm560, %v2429, %v2430
      %v2432 = vrot.slane %v2359, 7
      %v2433 = vrot.slane %v2360, 7
      %v2434 = vsel %vm560, %v2432, %v2433
      %v2435 = vrot.slane %v2361, 7
      %v2436 = vrot.slane %v2362, 7
      %v2437 = vsel %vm560, %v2435, %v2436
      %v2438 = vrot.slane %v2363, 7
      %v2439 = vrot.slane %v2364, 7
      %v2440 = vsel %vm560, %v2438, %v2439
      %v2441 = vrot.slane %v2365, 7
      %v2442 = vrot.slane %v2366, 7
      %v2443 = vsel %vm560, %v2441, %v2442
      %v2444 = vrot.slane %v2367, 7
      %v2445 = vrot.slane %v2368, 7
      %v2446 = vsel %vm560, %v2444, %v2445
      %v2447 = vrot.slane %v2369, 7
      %v2448 = vrot.slane %v2370, 7
      %v2449 = vsel %vm560, %v2447, %v2448
      %v2450 = vrot.slane %v2371, 7
      %v2451 = vrot.slane %v2372, 7
      %v2452 = vsel %vm560, %v2450, %v2451
      %v2500 = vsel %vm560, 0.0, %v2405
      %v2501 = vsel %vm560, 0.0, %v2408
      %v2502 = vsel %vm560, 0.0, %v2411
      %v2503 = vsel %vm560, 0.0, %v2414
      %v2504 = vsel %vm560, 0.0, %v2417
      %v2505 = vsel %vm560, 0.0, %v2420
      %v2506 = vsel %vm560, 0.0, %v2423
      %v2507 = vsel %vm560, 0.0, %v2426
      %v2508 = vsel %vm560, 0.0, %v2429
      %v2509 = vsel %vm560, 0.0, %v2432
      %v2510 = vsel %vm560, 0.0, %v2435
      %v2511 = vsel %vm560, 0.0, %v2438
      %v2512 = vsel %vm560, 0.0, %v2441
      %v2513 = vsel %vm560, 0.0, %v2444
      %v2514 = vsel %vm560, 0.0, %v2447
      %v2515 = vsel %vm560, 0.0, %v2450
      %v2516 = vsel %vm560, %v2406, 0.0
      %v2517 = vsel %vm560, %v2409, 0.0
      %v2518 = vsel %vm560, %v2412, 0.0
      %v2519 = vsel %vm560, %v2415, 0.0
      %v2520 = vsel %vm560, %v2418, 0.0
      %v2521 = vsel %vm560, %v2421, 0.0
      %v2522 = vsel %vm560, %v2424, 0.0
      %v2523 = vsel %vm560, %v2427, 0.0
      %v2524 = vsel %vm560, %v2430, 0.0
      %v2525 = vsel %vm560, %v2433, 0.0
      %v2526 = vsel %vm560, %v2436, 0.0
      %v2527 = vsel %vm560, %v2439, 0.0
      %v2528 = vsel %vm560, %v2442, 0.0
      %v2529 = vsel %vm560, %v2445, 0.0
      %v2530 = vsel %vm560, %v2448, 0.0
      %v2531 = vsel %vm560, %v2451, 0.0
      %v2562 = vrot.slane %v2500, 1
      %v2563 = vrot.slane %v2407, 1
      %v2564 = vsel %vm726, %v2562, %v2563
      %v2565 = vrot.slane %v2516, 1
      %v2566 = vsel %vm726, %v2563, %v2565
      %v2567 = vrot.slane %v2501, 1
      %v2568 = vrot.slane %v2410, 1
      %v2569 = vsel %vm726, %v2567, %v2568
      %v2570 = vrot.slane %v2517, 1
      %v2571 = vsel %vm726, %v2568, %v2570
      %v2572 = vrot.slane %v2502, 1
      %v2573 = vrot.slane %v2413, 1
      %v2574 = vsel %vm726, %v2572, %v2573
      %v2575 = vrot.slane %v2518, 1
      %v2576 = vsel %vm726, %v2573, %v2575
      %v2577 = vrot.slane %v2503, 1
      %v2578 = vrot.slane %v2416, 1
      %v2579 = vsel %vm726, %v2577, %v2578
      %v2580 = vrot.slane %v2519, 1
      %v2581 = vsel %vm726, %v2578, %v2580
      %v2582 = vrot.slane %v2504, 1
      %v2583 = vrot.slane %v2419, 1
      %v2584 = vsel %vm726, %v2582, %v2583
      %v2585 = vrot.slane %v2520, 1
      %v2586 = vsel %vm726, %v2583, %v2585
      %v2587 = vrot.slane %v2505, 1
      %v2588 = vrot.slane %v2422, 1
      %v2589 = vsel %vm726, %v2587, %v2588
      %v2590 = vrot.slane %v2521, 1
      %v2591 = vsel %vm726, %v2588, %v2590
      %v2592 = vrot.slane %v2506, 1
      %v2593 = vrot.slane %v2425, 1
      %v2594 = vsel %vm726, %v2592, %v2593
      %v2595 = vrot.slane %v2522, 1
      %v2596 = vsel %vm726, %v2593, %v2595
      %v2597 = vrot.slane %v2507, 1
      %v2598 = vrot.slane %v2428, 1
      %v2599 = vsel %vm726, %v2597, %v2598
      %v2600 = vrot.slane %v2523, 1
      %v2601 = vsel %vm726, %v2598, %v2600
      %v2602 = vrot.slane %v2508, 1
      %v2603 = vrot.slane %v2431, 1
      %v2604 = vsel %vm726, %v2602, %v2603
      %v2605 = vrot.slane %v2524, 1
      %v2606 = vsel %vm726, %v2603, %v2605
      %v2607 = vrot.slane %v2509, 1
      %v2608 = vrot.slane %v2434, 1
      %v2609 = vsel %vm726, %v2607, %v2608
      %v2610 = vrot.slane %v2525, 1
      %v2611 = vsel %vm726, %v2608, %v2610
      %v2612 = vrot.slane %v2510, 1
      %v2613 = vrot.slane %v2437, 1
      %v2614 = vsel %vm726, %v2612, %v2613
      %v2615 = vrot.slane %v2526, 1
      %v2616 = vsel %vm726, %v2613, %v2615
      %v2617 = vrot.slane %v2511, 1
      %v2618 = vrot.slane %v2440, 1
      %v2619 = vsel %vm726, %v2617, %v2618
      %v2620 = vrot.slane %v2527, 1
      %v2621 = vsel %vm726, %v2618, %v2620
      %v2622 = vrot.slane %v2512, 1
      %v2623 = vrot.slane %v2443, 1
      %v2624 = vsel %vm726, %v2622, %v2623
      %v2625 = vrot.slane %v2528, 1
      %v2626 = vsel %vm726, %v2623, %v2625
      %v2627 = vrot.slane %v2513, 1
      %v2628 = vrot.slane %v2446, 1
      %v2629 = vsel %vm726, %v2627, %v2628
      %v2630 = vrot.slane %v2529, 1
      %v2631 = vsel %vm726, %v2628, %v2630
      %v2632 = vrot.slane %v2514, 1
      %v2633 = vrot.slane %v2449, 1
      %v2634 = vsel %vm726, %v2632, %v2633
      %v2635 = vrot.slane %v2530, 1
      %v2636 = vsel %vm726, %v2633, %v2635
      %2637 = vrot.lane.b32.xlu0 %v2564, 8
      %v2638 = vpop.permute.xlu0 %2637
      %2639 = vrot.lane.b32.xlu0 %v2566, 8
      %v2640 = vpop.permute.xlu0 %2639
      %2641 = vrot.lane.b32.xlu0 %v2569, 8
      %v2642 = vpop.permute.xlu0 %2641
      %2643 = vrot.lane.b32.xlu0 %v2571, 8
      %v2644 = vpop.permute.xlu0 %2643
      %2645 = vrot.lane.b32.xlu0 %v2574, 8
      %v2646 = vpop.permute.xlu0 %2645
      %2647 = vrot.lane.b32.xlu0 %v2576, 8
      %v2648 = vpop.permute.xlu0 %2647
      %2649 = vrot.lane.b32.xlu0 %v2579, 8
      %v2650 = vpop.permute.xlu0 %2649
      %2651 = vrot.lane.b32.xlu0 %v2581, 8
      %v2652 = vpop.permute.xlu0 %2651
      %2653 = vrot.lane.b32.xlu0 %v2584, 8
      %v2654 = vpop.permute.xlu0 %2653
      %2655 = vrot.lane.b32.xlu0 %v2586, 8
      %v2656 = vpop.permute.xlu0 %2655
      %2657 = vrot.lane.b32.xlu0 %v2589, 8
      %v2658 = vpop.permute.xlu0 %2657
      %2659 = vrot.lane.b32.xlu0 %v2591, 8
      %v2660 = vpop.permute.xlu0 %2659
      %2661 = vrot.lane.b32.xlu0 %v2594, 8
      %v2662 = vpop.permute.xlu0 %2661
      %2663 = vrot.lane.b32.xlu0 %v2596, 8
      %v2664 = vpop.permute.xlu0 %2663
      %2665 = vrot.lane.b32.xlu0 %v2599, 8
      %v2666 = vpop.permute.xlu0 %2665
      %2667 = vrot.lane.b32.xlu0 %v2601, 8
      %v2668 = vpop.permute.xlu0 %2667
      %2669 = vrot.lane.b32.xlu0 %v2604, 8
      %v2670 = vpop.permute.xlu0 %2669
      %2671 = vrot.lane.b32.xlu0 %v2606, 8
      %v2672 = vpop.permute.xlu0 %2671
      %2673 = vrot.lane.b32.xlu0 %v2609, 8
      %v2674 = vpop.permute.xlu0 %2673
      %2675 = vrot.lane.b32.xlu0 %v2611, 8
      %v2676 = vpop.permute.xlu0 %2675
      %2677 = vrot.lane.b32.xlu0 %v2614, 8
      %v2678 = vpop.permute.xlu0 %2677
      %2679 = vrot.lane.b32.xlu0 %v2616, 8
      %v2680 = vpop.permute.xlu0 %2679
      %2681 = vrot.lane.b32.xlu0 %v2619, 8
      %v2682 = vpop.permute.xlu0 %2681
      %2683 = vrot.lane.b32.xlu0 %v2621, 8
      %v2684 = vpop.permute.xlu0 %2683
      %2685 = vrot.lane.b32.xlu0 %v2624, 8
      %v2686 = vpop.permute.xlu0 %2685
      %2687 = vrot.lane.b32.xlu0 %v2626, 8
      %v2688 = vpop.permute.xlu0 %2687
      %2689 = vrot.lane.b32.xlu0 %v2629, 8
      %v2690 = vpop.permute.xlu0 %2689
      %2691 = vrot.lane.b32.xlu0 %v2631, 8
      %v2692 = vpop.permute.xlu0 %2691
      %2693 = vrot.lane.b32.xlu0 %v2634, 8
      %v2694 = vpop.permute.xlu0 %2693
      %2695 = vrot.lane.b32.xlu0 %v2636, 8
      %v2696 = vpop.permute.xlu0 %2695
      %v2727 = vrot.slane %v2500, 2
      %v2728 = vrot.slane %v2407, 2
      %v2729 = vsel %vm903, %v2727, %v2728
      %v2730 = vrot.slane %v2516, 2
      %v2731 = vsel %vm903, %v2728, %v2730
      %v2732 = vrot.slane %v2501, 2
      %v2733 = vrot.slane %v2410, 2
      %v2734 = vsel %vm903, %v2732, %v2733
      %v2735 = vrot.slane %v2517, 2
      %v2736 = vsel %vm903, %v2733, %v2735
      %v2737 = vrot.slane %v2502, 2
      %v2738 = vrot.slane %v2413, 2
      %v2739 = vsel %vm903, %v2737, %v2738
      %v2740 = vrot.slane %v2518, 2
      %v2741 = vsel %vm903, %v2738, %v2740
      %v2742 = vrot.slane %v2503, 2
      %v2743 = vrot.slane %v2416, 2
      %v2744 = vsel %vm903, %v2742, %v2743
      %v2745 = vrot.slane %v2519, 2
      %v2746 = vsel %vm903, %v2743, %v2745
      %v2747 = vrot.slane %v2504, 2
      %v2748 = vrot.slane %v2419, 2
      %v2749 = vsel %vm903, %v2747, %v2748
      %v2750 = vrot.slane %v2520, 2
      %v2751 = vsel %vm903, %v2748, %v2750
      %v2752 = vrot.slane %v2505, 2
      %v2753 = vrot.slane %v2422, 2
      %v2754 = vsel %vm903, %v2752, %v2753
      %v2755 = vrot.slane %v2521, 2
      %v2756 = vsel %vm903, %v2753, %v2755
      %v2757 = vrot.slane %v2506, 2
      %v2758 = vrot.slane %v2425, 2
      %v2759 = vsel %vm903, %v2757, %v2758
      %v2760 = vrot.slane %v2522, 2
      %v2761 = vsel %vm903, %v2758, %v2760
      %v2762 = vrot.slane %v2507, 2
      %v2763 = vrot.slane %v2428, 2
      %v2764 = vsel %vm903, %v2762, %v2763
      %v2765 = vrot.slane %v2523, 2
      %v2766 = vsel %vm903, %v2763, %v2765
      %v2767 = vrot.slane %v2508, 2
      %v2768 = vrot.slane %v2431, 2
      %v2769 = vsel %vm903, %v2767, %v2768
      %v2770 = vrot.slane %v2524, 2
      %v2771 = vsel %vm903, %v2768, %v2770
      %v2772 = vrot.slane %v2509, 2
      %v2773 = vrot.slane %v2434, 2
      %v2774 = vsel %vm903, %v2772, %v2773
      %v2775 = vrot.slane %v2525, 2
      %v2776 = vsel %vm903, %v2773, %v2775
      %v2777 = vrot.slane %v2510, 2
      %v2778 = vrot.slane %v2437, 2
      %v2779 = vsel %vm903, %v2777, %v2778
      %v2780 = vrot.slane %v2526, 2
      %v2781 = vsel %vm903, %v2778, %v2780
      %v2782 = vrot.slane %v2511, 2
      %v2783 = vrot.slane %v2440, 2
      %v2784 = vsel %vm903, %v2782, %v2783
      %v2785 = vrot.slane %v2527, 2
      %v2786 = vsel %vm903, %v2783, %v2785
      %v2787 = vrot.slane %v2512, 2
      %v2788 = vrot.slane %v2443, 2
      %v2789 = vsel %vm903, %v2787, %v2788
      %v2790 = vrot.slane %v2528, 2
      %v2791 = vsel %vm903, %v2788, %v2790
      %v2792 = vrot.slane %v2513, 2
      %v2793 = vrot.slane %v2446, 2
      %v2794 = vsel %vm903, %v2792, %v2793
      %v2795 = vrot.slane %v2529, 2
      %v2796 = vsel %vm903, %v2793, %v2795
      %v2797 = vrot.slane %v2514, 2
      %v2798 = vrot.slane %v2449, 2
      %v2799 = vsel %vm903, %v2797, %v2798
      %v2800 = vrot.slane %v2530, 2
      %v2801 = vsel %vm903, %v2798, %v2800
      %2802 = vrot.lane.b32.xlu0 %v2729, 16
      %v2803 = vpop.permute.xlu0 %2802
      %2804 = vrot.lane.b32.xlu0 %v2731, 16
      %v2805 = vpop.permute.xlu0 %2804
      %2806 = vrot.lane.b32.xlu0 %v2734, 16
      %v2807 = vpop.permute.xlu0 %2806
      %2808 = vrot.lane.b32.xlu0 %v2736, 16
      %v2809 = vpop.permute.xlu0 %2808
      %2810 = vrot.lane.b32.xlu0 %v2739, 16
      %v2811 = vpop.permute.xlu0 %2810
      %2812 = vrot.lane.b32.xlu0 %v2741, 16
      %v2813 = vpop.permute.xlu0 %2812
      %2814 = vrot.lane.b32.xlu0 %v2744, 16
      %v2815 = vpop.permute.xlu0 %2814
      %2816 = vrot.lane.b32.xlu0 %v2746, 16
      %v2817 = vpop.permute.xlu0 %2816
      %2818 = vrot.lane.b32.xlu0 %v2749, 16
      %v2819 = vpop.permute.xlu0 %2818
      %2820 = vrot.lane.b32.xlu0 %v2751, 16
      %v2821 = vpop.permute.xlu0 %2820
      %2822 = vrot.lane.b32.xlu0 %v2754, 16
      %v2823 = vpop.permute.xlu0 %2822
      %2824 = vrot.lane.b32.xlu0 %v2756, 16
      %v2825 = vpop.permute.xlu0 %2824
      %2826 = vrot.lane.b32.xlu0 %v2759, 16
      %v2827 = vpop.permute.xlu0 %2826
      %2828 = vrot.lane.b32.xlu0 %v2761, 16
      %v2829 = vpop.permute.xlu0 %2828
      %2830 = vrot.lane.b32.xlu0 %v2764, 16
      %v2831 = vpop.permute.xlu0 %2830
      %2832 = vrot.lane.b32.xlu0 %v2766, 16
      %v2833 = vpop.permute.xlu0 %2832
      %2834 = vrot.lane.b32.xlu0 %v2769, 16
      %v2835 = vpop.permute.xlu0 %2834
      %2836 = vrot.lane.b32.xlu0 %v2771, 16
      %v2837 = vpop.permute.xlu0 %2836
      %2838 = vrot.lane.b32.xlu0 %v2774, 16
      %v2839 = vpop.permute.xlu0 %2838
      %2840 = vrot.lane.b32.xlu0 %v2776, 16
      %v2841 = vpop.permute.xlu0 %2840
      %2842 = vrot.lane.b32.xlu0 %v2779, 16
      %v2843 = vpop.permute.xlu0 %2842
      %2844 = vrot.lane.b32.xlu0 %v2781, 16
      %v2845 = vpop.permute.xlu0 %2844
      %2846 = vrot.lane.b32.xlu0 %v2784, 16
      %v2847 = vpop.permute.xlu0 %2846
      %2848 = vrot.lane.b32.xlu0 %v2786, 16
      %v2849 = vpop.permute.xlu0 %2848
      %2850 = vrot.lane.b32.xlu0 %v2789, 16
      %v2851 = vpop.permute.xlu0 %2850
      %2852 = vrot.lane.b32.xlu0 %v2791, 16
      %v2853 = vpop.permute.xlu0 %2852
      %2854 = vrot.lane.b32.xlu0 %v2794, 16
      %v2855 = vpop.permute.xlu0 %2854
      %2856 = vrot.lane.b32.xlu0 %v2796, 16
      %v2857 = vpop.permute.xlu0 %2856
      %2858 = vrot.lane.b32.xlu0 %v2799, 16
      %v2859 = vpop.permute.xlu0 %2858
      %2860 = vrot.lane.b32.xlu0 %v2801, 16
      %v2861 = vpop.permute.xlu0 %2860
      %2893 = vrot.lane.b32.xlu0 %v2500, 24
      %v2894 = vpop.permute.xlu0 %2893
      %2895 = vrot.lane.b32.xlu0 %v2407, 24
      %v2896 = vpop.permute.xlu0 %2895
      %2897 = vrot.lane.b32.xlu0 %v2501, 24
      %v2898 = vpop.permute.xlu0 %2897
      %2899 = vrot.lane.b32.xlu0 %v2410, 24
      %v2900 = vpop.permute.xlu0 %2899
      %2901 = vrot.lane.b32.xlu0 %v2502, 24
      %v2902 = vpop.permute.xlu0 %2901
      %2903 = vrot.lane.b32.xlu0 %v2413, 24
      %v2904 = vpop.permute.xlu0 %2903
      %2905 = vrot.lane.b32.xlu0 %v2503, 24
      %v2906 = vpop.permute.xlu0 %2905
      %2907 = vrot.lane.b32.xlu0 %v2416, 24
      %v2908 = vpop.permute.xlu0 %2907
      %2909 = vrot.lane.b32.xlu0 %v2504, 24
      %v2910 = vpop.permute.xlu0 %2909
      %2911 = vrot.lane.b32.xlu0 %v2419, 24
      %v2912 = vpop.permute.xlu0 %2911
      %2913 = vrot.lane.b32.xlu0 %v2505, 24
      %v2914 = vpop.permute.xlu0 %2913
      %2915 = vrot.lane.b32.xlu0 %v2422, 24
      %v2916 = vpop.permute.xlu0 %2915
      %2917 = vrot.lane.b32.xlu0 %v2506, 24
      %v2918 = vpop.permute.xlu0 %2917
      %2919 = vrot.lane.b32.xlu0 %v2425, 24
      %v2920 = vpop.permute.xlu0 %2919
      %2921 = vrot.lane.b32.xlu0 %v2507, 24
      %v2922 = vpop.permute.xlu0 %2921
      %2923 = vrot.lane.b32.xlu0 %v2428, 24
      %v2924 = vpop.permute.xlu0 %2923
      %2925 = vrot.lane.b32.xlu0 %v2508, 24
      %v2926 = vpop.permute.xlu0 %2925
      %2927 = vrot.lane.b32.xlu0 %v2431, 24
      %v2928 = vpop.permute.xlu0 %2927
      %2929 = vrot.lane.b32.xlu0 %v2509, 24
      %v2930 = vpop.permute.xlu0 %2929
      %2931 = vrot.lane.b32.xlu0 %v2434, 24
      %v2932 = vpop.permute.xlu0 %2931
      %2933 = vrot.lane.b32.xlu0 %v2510, 24
      %v2934 = vpop.permute.xlu0 %2933
      %2935 = vrot.lane.b32.xlu0 %v2437, 24
      %v2936 = vpop.permute.xlu0 %2935
      %2937 = vrot.lane.b32.xlu0 %v2511, 24
      %v2938 = vpop.permute.xlu0 %2937
      %2939 = vrot.lane.b32.xlu0 %v2440, 24
      %v2940 = vpop.permute.xlu0 %2939
      %2941 = vrot.lane.b32.xlu0 %v2512, 24
      %v2942 = vpop.permute.xlu0 %2941
      %2943 = vrot.lane.b32.xlu0 %v2443, 24
      %v2944 = vpop.permute.xlu0 %2943
      %2945 = vrot.lane.b32.xlu0 %v2513, 24
      %v2946 = vpop.permute.xlu0 %2945
      %2947 = vrot.lane.b32.xlu0 %v2446, 24
      %v2948 = vpop.permute.xlu0 %2947
      %2949 = vrot.lane.b32.xlu0 %v2514, 24
      %v2950 = vpop.permute.xlu0 %2949
      %2951 = vrot.lane.b32.xlu0 %v2449, 24
      %v2952 = vpop.permute.xlu0 %2951
      %2953 = vrot.lane.b32.xlu0 %v2515, 24
      %v2954 = vpop.permute.xlu0 %2953
      %2955 = vrot.lane.b32.xlu0 %v2452, 24
      %v2956 = vpop.permute.xlu0 %2955
      %v2990 = vrot.slane %v2515, 1
      %v2991 = vrot.slane %v2452, 1
      %v2992 = vsel %vm726, %v2990, %v2991
      %v2993 = vrot.slane %v2531, 1
      %v2994 = vsel %vm726, %v2991, %v2993
      %2995 = vrot.lane.b32.xlu0 %v2564, 32
      %v2996 = vpop.permute.xlu0 %2995
      %2997 = vrot.lane.b32.xlu0 %v2566, 32
      %v2998 = vpop.permute.xlu0 %2997
      %2999 = vrot.lane.b32.xlu0 %v2569, 32
      %v3000 = vpop.permute.xlu0 %2999
      %3001 = vrot.lane.b32.xlu0 %v2571, 32
      %v3002 = vpop.permute.xlu0 %3001
      %3003 = vrot.lane.b32.xlu0 %v2574, 32
      %v3004 = vpop.permute.xlu0 %3003
      %3005 = vrot.lane.b32.xlu0 %v2576, 32
      %v3006 = vpop.permute.xlu0 %3005
      %3007 = vrot.lane.b32.xlu0 %v2579, 32
      %v3008 = vpop.permute.xlu0 %3007
      %3009 = vrot.lane.b32.xlu0 %v2581, 32
      %v3010 = vpop.permute.xlu0 %3009
      %3011 = vrot.lane.b32.xlu0 %v2584, 32
      %v3012 = vpop.permute.xlu0 %3011
      %3013 = vrot.lane.b32.xlu0 %v2586, 32
      %v3014 = vpop.permute.xlu0 %3013
      %3015 = vrot.lane.b32.xlu0 %v2589, 32
      %v3016 = vpop.permute.xlu0 %3015
      %3017 = vrot.lane.b32.xlu0 %v2591, 32
      %v3018 = vpop.permute.xlu0 %3017
      %3019 = vrot.lane.b32.xlu0 %v2594, 32
      %v3020 = vpop.permute.xlu0 %3019
      %3021 = vrot.lane.b32.xlu0 %v2596, 32
      %v3022 = vpop.permute.xlu0 %3021
      %3023 = vrot.lane.b32.xlu0 %v2599, 32
      %v3024 = vpop.permute.xlu0 %3023
      %3025 = vrot.lane.b32.xlu0 %v2601, 32
      %v3026 = vpop.permute.xlu0 %3025
      %3027 = vrot.lane.b32.xlu0 %v2604, 32
      %v3028 = vpop.permute.xlu0 %3027
      %3029 = vrot.lane.b32.xlu0 %v2606, 32
      %v3030 = vpop.permute.xlu0 %3029
      %3031 = vrot.lane.b32.xlu0 %v2609, 32
      %v3032 = vpop.permute.xlu0 %3031
      %3033 = vrot.lane.b32.xlu0 %v2611, 32
      %v3034 = vpop.permute.xlu0 %3033
      %3035 = vrot.lane.b32.xlu0 %v2614, 32
      %v3036 = vpop.permute.xlu0 %3035
      %3037 = vrot.lane.b32.xlu0 %v2616, 32
      %v3038 = vpop.permute.xlu0 %3037
      %3039 = vrot.lane.b32.xlu0 %v2619, 32
      %v3040 = vpop.permute.xlu0 %3039
      %3041 = vrot.lane.b32.xlu0 %v2621, 32
      %v3042 = vpop.permute.xlu0 %3041
      %3043 = vrot.lane.b32.xlu0 %v2624, 32
      %v3044 = vpop.permute.xlu0 %3043
      %3045 = vrot.lane.b32.xlu0 %v2626, 32
      %v3046 = vpop.permute.xlu0 %3045
      %3047 = vrot.lane.b32.xlu0 %v2629, 32
      %v3048 = vpop.permute.xlu0 %3047
      %3049 = vrot.lane.b32.xlu0 %v2631, 32
      %v3050 = vpop.permute.xlu0 %3049
      %3051 = vrot.lane.b32.xlu0 %v2634, 32
      %v3052 = vpop.permute.xlu0 %3051
      %3053 = vrot.lane.b32.xlu0 %v2636, 32
      %v3054 = vpop.permute.xlu0 %3053
      %3055 = vrot.lane.b32.xlu0 %v2992, 32
      %v3056 = vpop.permute.xlu0 %3055
      %3057 = vrot.lane.b32.xlu0 %v2994, 32
      %v3058 = vpop.permute.xlu0 %3057
      %v3091 = vrot.slane %v2515, 2
      %v3092 = vrot.slane %v2452, 2
      %v3093 = vsel %vm903, %v3091, %v3092
      %v3094 = vrot.slane %v2531, 2
      %v3095 = vsel %vm903, %v3092, %v3094
      %3096 = vrot.lane.b32.xlu0 %v2729, 40
      %v3097 = vpop.permute.xlu0 %3096
      %3098 = vrot.lane.b32.xlu0 %v2731, 40
      %v3099 = vpop.permute.xlu0 %3098
      %3100 = vrot.lane.b32.xlu0 %v2734, 40
      %v3101 = vpop.permute.xlu0 %3100
      %3102 = vrot.lane.b32.xlu0 %v2736, 40
      %v3103 = vpop.permute.xlu0 %3102
      %3104 = vrot.lane.b32.xlu0 %v2739, 40
      %v3105 = vpop.permute.xlu0 %3104
      %3106 = vrot.lane.b32.xlu0 %v2741, 40
      %v3107 = vpop.permute.xlu0 %3106
      %3108 = vrot.lane.b32.xlu0 %v2744, 40
      %v3109 = vpop.permute.xlu0 %3108
      %3110 = vrot.lane.b32.xlu0 %v2746, 40
      %v3111 = vpop.permute.xlu0 %3110
      %3112 = vrot.lane.b32.xlu0 %v2749, 40
      %v3113 = vpop.permute.xlu0 %3112
      %3114 = vrot.lane.b32.xlu0 %v2751, 40
      %v3115 = vpop.permute.xlu0 %3114
      %3116 = vrot.lane.b32.xlu0 %v2754, 40
      %v3117 = vpop.permute.xlu0 %3116
      %3118 = vrot.lane.b32.xlu0 %v2756, 40
      %v3119 = vpop.permute.xlu0 %3118
      %3120 = vrot.lane.b32.xlu0 %v2759, 40
      %v3121 = vpop.permute.xlu0 %3120
      %3122 = vrot.lane.b32.xlu0 %v2761, 40
      %v3123 = vpop.permute.xlu0 %3122
      %3124 = vrot.lane.b32.xlu0 %v2764, 40
      %v3125 = vpop.permute.xlu0 %3124
      %3126 = vrot.lane.b32.xlu0 %v2766, 40
      %v3127 = vpop.permute.xlu0 %3126
      %3128 = vrot.lane.b32.xlu0 %v2769, 40
      %v3129 = vpop.permute.xlu0 %3128
      %3130 = vrot.lane.b32.xlu0 %v2771, 40
      %v3131 = vpop.permute.xlu0 %3130
      %3132 = vrot.lane.b32.xlu0 %v2774, 40
      %v3133 = vpop.permute.xlu0 %3132
      %3134 = vrot.lane.b32.xlu0 %v2776, 40
      %v3135 = vpop.permute.xlu0 %3134
      %3136 = vrot.lane.b32.xlu0 %v2779, 40
      %v3137 = vpop.permute.xlu0 %3136
      %3138 = vrot.lane.b32.xlu0 %v2781, 40
      %v3139 = vpop.permute.xlu0 %3138
      %3140 = vrot.lane.b32.xlu0 %v2784, 40
      %v3141 = vpop.permute.xlu0 %3140
      %3142 = vrot.lane.b32.xlu0 %v2786, 40
      %v3143 = vpop.permute.xlu0 %3142
      %3144 = vrot.lane.b32.xlu0 %v2789, 40
      %v3145 = vpop.permute.xlu0 %3144
      %3146 = vrot.lane.b32.xlu0 %v2791, 40
      %v3147 = vpop.permute.xlu0 %3146
      %3148 = vrot.lane.b32.xlu0 %v2794, 40
      %v3149 = vpop.permute.xlu0 %3148
      %3150 = vrot.lane.b32.xlu0 %v2796, 40
      %v3151 = vpop.permute.xlu0 %3150
      %3152 = vrot.lane.b32.xlu0 %v2799, 40
      %v3153 = vpop.permute.xlu0 %3152
      %3154 = vrot.lane.b32.xlu0 %v2801, 40
      %v3155 = vpop.permute.xlu0 %3154
      %3156 = vrot.lane.b32.xlu0 %v3093, 40
      %v3157 = vpop.permute.xlu0 %3156
      %3158 = vrot.lane.b32.xlu0 %v3095, 40
      %v3159 = vpop.permute.xlu0 %3158
      %3192 = vrot.lane.b32.xlu0 %v2501, 48
      %v3193 = vpop.permute.xlu0 %3192
      %3194 = vrot.lane.b32.xlu0 %v2410, 48
      %v3195 = vpop.permute.xlu0 %3194
      %3196 = vrot.lane.b32.xlu0 %v2502, 48
      %v3197 = vpop.permute.xlu0 %3196
      %3198 = vrot.lane.b32.xlu0 %v2413, 48
      %v3199 = vpop.permute.xlu0 %3198
      %3200 = vrot.lane.b32.xlu0 %v2503, 48
      %v3201 = vpop.permute.xlu0 %3200
      %3202 = vrot.lane.b32.xlu0 %v2416, 48
      %v3203 = vpop.permute.xlu0 %3202
      %3204 = vrot.lane.b32.xlu0 %v2504, 48
      %v3205 = vpop.permute.xlu0 %3204
      %3206 = vrot.lane.b32.xlu0 %v2419, 48
      %v3207 = vpop.permute.xlu0 %3206
      %3208 = vrot.lane.b32.xlu0 %v2505, 48
      %v3209 = vpop.permute.xlu0 %3208
      %3210 = vrot.lane.b32.xlu0 %v2422, 48
      %v3211 = vpop.permute.xlu0 %3210
      %3212 = vrot.lane.b32.xlu0 %v2506, 48
      %v3213 = vpop.permute.xlu0 %3212
      %3214 = vrot.lane.b32.xlu0 %v2425, 48
      %v3215 = vpop.permute.xlu0 %3214
      %3216 = vrot.lane.b32.xlu0 %v2507, 48
      %v3217 = vpop.permute.xlu0 %3216
      %3218 = vrot.lane.b32.xlu0 %v2428, 48
      %v3219 = vpop.permute.xlu0 %3218
      %3220 = vrot.lane.b32.xlu0 %v2508, 48
      %v3221 = vpop.permute.xlu0 %3220
      %3222 = vrot.lane.b32.xlu0 %v2431, 48
      %v3223 = vpop.permute.xlu0 %3222
      %3224 = vrot.lane.b32.xlu0 %v2509, 48
      %v3225 = vpop.permute.xlu0 %3224
      %3226 = vrot.lane.b32.xlu0 %v2434, 48
      %v3227 = vpop.permute.xlu0 %3226
      %3228 = vrot.lane.b32.xlu0 %v2510, 48
      %v3229 = vpop.permute.xlu0 %3228
      %3230 = vrot.lane.b32.xlu0 %v2437, 48
      %v3231 = vpop.permute.xlu0 %3230
      %3232 = vrot.lane.b32.xlu0 %v2511, 48
      %v3233 = vpop.permute.xlu0 %3232
      %3234 = vrot.lane.b32.xlu0 %v2440, 48
      %v3235 = vpop.permute.xlu0 %3234
      %3236 = vrot.lane.b32.xlu0 %v2512, 48
      %v3237 = vpop.permute.xlu0 %3236
      %3238 = vrot.lane.b32.xlu0 %v2443, 48
      %v3239 = vpop.permute.xlu0 %3238
      %3240 = vrot.lane.b32.xlu0 %v2513, 48
      %v3241 = vpop.permute.xlu0 %3240
      %3242 = vrot.lane.b32.xlu0 %v2446, 48
      %v3243 = vpop.permute.xlu0 %3242
      %3244 = vrot.lane.b32.xlu0 %v2514, 48
      %v3245 = vpop.permute.xlu0 %3244
      %3246 = vrot.lane.b32.xlu0 %v2449, 48
      %v3247 = vpop.permute.xlu0 %3246
      %3248 = vrot.lane.b32.xlu0 %v2515, 48
      %v3249 = vpop.permute.xlu0 %3248
      %3250 = vrot.lane.b32.xlu0 %v2452, 48
      %v3251 = vpop.permute.xlu0 %3250
      %3282 = vrot.lane.b32.xlu0 %v2569, 56
      %v3283 = vpop.permute.xlu0 %3282
      %3284 = vrot.lane.b32.xlu0 %v2571, 56
      %v3285 = vpop.permute.xlu0 %3284
      %3286 = vrot.lane.b32.xlu0 %v2574, 56
      %v3287 = vpop.permute.xlu0 %3286
      %3288 = vrot.lane.b32.xlu0 %v2576, 56
      %v3289 = vpop.permute.xlu0 %3288
      %3290 = vrot.lane.b32.xlu0 %v2579, 56
      %v3291 = vpop.permute.xlu0 %3290
      %3292 = vrot.lane.b32.xlu0 %v2581, 56
      %v3293 = vpop.permute.xlu0 %3292
      %3294 = vrot.lane.b32.xlu0 %v2584, 56
      %v3295 = vpop.permute.xlu0 %3294
      %3296 = vrot.lane.b32.xlu0 %v2586, 56
      %v3297 = vpop.permute.xlu0 %3296
      %3298 = vrot.lane.b32.xlu0 %v2589, 56
      %v3299 = vpop.permute.xlu0 %3298
      %3300 = vrot.lane.b32.xlu0 %v2591, 56
      %v3301 = vpop.permute.xlu0 %3300
      %3302 = vrot.lane.b32.xlu0 %v2594, 56
      %v3303 = vpop.permute.xlu0 %3302
      %3304 = vrot.lane.b32.xlu0 %v2596, 56
      %v3305 = vpop.permute.xlu0 %3304
      %3306 = vrot.lane.b32.xlu0 %v2599, 56
      %v3307 = vpop.permute.xlu0 %3306
      %3308 = vrot.lane.b32.xlu0 %v2601, 56
      %v3309 = vpop.permute.xlu0 %3308
      %3310 = vrot.lane.b32.xlu0 %v2604, 56
      %v3311 = vpop.permute.xlu0 %3310
      %3312 = vrot.lane.b32.xlu0 %v2606, 56
      %v3313 = vpop.permute.xlu0 %3312
      %3314 = vrot.lane.b32.xlu0 %v2609, 56
      %v3315 = vpop.permute.xlu0 %3314
      %3316 = vrot.lane.b32.xlu0 %v2611, 56
      %v3317 = vpop.permute.xlu0 %3316
      %3318 = vrot.lane.b32.xlu0 %v2614, 56
      %v3319 = vpop.permute.xlu0 %3318
      %3320 = vrot.lane.b32.xlu0 %v2616, 56
      %v3321 = vpop.permute.xlu0 %3320
      %3322 = vrot.lane.b32.xlu0 %v2619, 56
      %v3323 = vpop.permute.xlu0 %3322
      %3324 = vrot.lane.b32.xlu0 %v2621, 56
      %v3325 = vpop.permute.xlu0 %3324
      %3326 = vrot.lane.b32.xlu0 %v2624, 56
      %v3327 = vpop.permute.xlu0 %3326
      %3328 = vrot.lane.b32.xlu0 %v2626, 56
      %v3329 = vpop.permute.xlu0 %3328
      %3330 = vrot.lane.b32.xlu0 %v2629, 56
      %v3331 = vpop.permute.xlu0 %3330
      %3332 = vrot.lane.b32.xlu0 %v2631, 56
      %v3333 = vpop.permute.xlu0 %3332
      %3334 = vrot.lane.b32.xlu0 %v2634, 56
      %v3335 = vpop.permute.xlu0 %3334
      %3336 = vrot.lane.b32.xlu0 %v2636, 56
      %v3337 = vpop.permute.xlu0 %3336
      %3338 = vrot.lane.b32.xlu0 %v2992, 56
      %v3339 = vpop.permute.xlu0 %3338
      %3340 = vrot.lane.b32.xlu0 %v2994, 56
      %v3341 = vpop.permute.xlu0 %3340
      %3372 = vrot.lane.b32.xlu0 %v2734, 64
      %v3373 = vpop.permute.xlu0 %3372
      %3374 = vrot.lane.b32.xlu0 %v2736, 64
      %v3375 = vpop.permute.xlu0 %3374
      %3376 = vrot.lane.b32.xlu0 %v2739, 64
      %v3377 = vpop.permute.xlu0 %3376
      %3378 = vrot.lane.b32.xlu0 %v2741, 64
      %v3379 = vpop.permute.xlu0 %3378
      %3380 = vrot.lane.b32.xlu0 %v2744, 64
      %v3381 = vpop.permute.xlu0 %3380
      %3382 = vrot.lane.b32.xlu0 %v2746, 64
      %v3383 = vpop.permute.xlu0 %3382
      %3384 = vrot.lane.b32.xlu0 %v2749, 64
      %v3385 = vpop.permute.xlu0 %3384
      %3386 = vrot.lane.b32.xlu0 %v2751, 64
      %v3387 = vpop.permute.xlu0 %3386
      %3388 = vrot.lane.b32.xlu0 %v2754, 64
      %v3389 = vpop.permute.xlu0 %3388
      %3390 = vrot.lane.b32.xlu0 %v2756, 64
      %v3391 = vpop.permute.xlu0 %3390
      %3392 = vrot.lane.b32.xlu0 %v2759, 64
      %v3393 = vpop.permute.xlu0 %3392
      %3394 = vrot.lane.b32.xlu0 %v2761, 64
      %v3395 = vpop.permute.xlu0 %3394
      %3396 = vrot.lane.b32.xlu0 %v2764, 64
      %v3397 = vpop.permute.xlu0 %3396
      %3398 = vrot.lane.b32.xlu0 %v2766, 64
      %v3399 = vpop.permute.xlu0 %3398
      %3400 = vrot.lane.b32.xlu0 %v2769, 64
      %v3401 = vpop.permute.xlu0 %3400
      %3402 = vrot.lane.b32.xlu0 %v2771, 64
      %v3403 = vpop.permute.xlu0 %3402
      %3404 = vrot.lane.b32.xlu0 %v2774, 64
      %v3405 = vpop.permute.xlu0 %3404
      %3406 = vrot.lane.b32.xlu0 %v2776, 64
      %v3407 = vpop.permute.xlu0 %3406
      %3408 = vrot.lane.b32.xlu0 %v2779, 64
      %v3409 = vpop.permute.xlu0 %3408
      %3410 = vrot.lane.b32.xlu0 %v2781, 64
      %v3411 = vpop.permute.xlu0 %3410
      %3412 = vrot.lane.b32.xlu0 %v2784, 64
      %v3413 = vpop.permute.xlu0 %3412
      %3414 = vrot.lane.b32.xlu0 %v2786, 64
      %v3415 = vpop.permute.xlu0 %3414
      %3416 = vrot.lane.b32.xlu0 %v2789, 64
      %v3417 = vpop.permute.xlu0 %3416
      %3418 = vrot.lane.b32.xlu0 %v2791, 64
      %v3419 = vpop.permute.xlu0 %3418
      %3420 = vrot.lane.b32.xlu0 %v2794, 64
      %v3421 = vpop.permute.xlu0 %3420
      %3422 = vrot.lane.b32.xlu0 %v2796, 64
      %v3423 = vpop.permute.xlu0 %3422
      %3424 = vrot.lane.b32.xlu0 %v2799, 64
      %v3425 = vpop.permute.xlu0 %3424
      %3426 = vrot.lane.b32.xlu0 %v2801, 64
      %v3427 = vpop.permute.xlu0 %3426
      %3428 = vrot.lane.b32.xlu0 %v3093, 64
      %v3429 = vpop.permute.xlu0 %3428
      %3430 = vrot.lane.b32.xlu0 %v3095, 64
      %v3431 = vpop.permute.xlu0 %3430
      %v3462 = vsel %vm1668, %v2500, %v2638
      %v3463 = vsel %vm1668, %v2407, %v2640
      %v3464 = vsel %vm1668, %v2501, %v2642
      %v3465 = vsel %vm1668, %v2410, %v2644
      %v3466 = vsel %vm1668, %v2502, %v2646
      %v3467 = vsel %vm1668, %v2413, %v2648
      %v3468 = vsel %vm1668, %v2503, %v2650
      %v3469 = vsel %vm1668, %v2416, %v2652
      %v3470 = vsel %vm1668, %v2504, %v2654
      %v3471 = vsel %vm1668, %v2419, %v2656
      %v3472 = vsel %vm1668, %v2505, %v2658
      %v3473 = vsel %vm1668, %v2422, %v2660
      %v3474 = vsel %vm1668, %v2506, %v2662
      %v3475 = vsel %vm1668, %v2425, %v2664
      %v3476 = vsel %vm1668, %v2507, %v2666
      %v3477 = vsel %vm1668, %v2428, %v2668
      %v3478 = vsel %vm1668, %v2508, %v2670
      %v3479 = vsel %vm1668, %v2431, %v2672
      %v3480 = vsel %vm1668, %v2509, %v2674
      %v3481 = vsel %vm1668, %v2434, %v2676
      %v3482 = vsel %vm1668, %v2510, %v2678
      %v3483 = vsel %vm1668, %v2437, %v2680
      %v3484 = vsel %vm1668, %v2511, %v2682
      %v3485 = vsel %vm1668, %v2440, %v2684
      %v3486 = vsel %vm1668, %v2512, %v2686
      %v3487 = vsel %vm1668, %v2443, %v2688
      %v3488 = vsel %vm1668, %v2513, %v2690
      %v3489 = vsel %vm1668, %v2446, %v2692
      %v3490 = vsel %vm1668, %v2514, %v2694
      %v3491 = vsel %vm1668, %v2449, %v2696
      %v3492 = vsel %vm1701, %v3462, %v2803
      %v3493 = vsel %vm1701, %v3463, %v2805
      %v3494 = vsel %vm1701, %v3464, %v2807
      %v3495 = vsel %vm1701, %v3465, %v2809
      %v3496 = vsel %vm1701, %v3466, %v2811
      %v3497 = vsel %vm1701, %v3467, %v2813
      %v3498 = vsel %vm1701, %v3468, %v2815
      %v3499 = vsel %vm1701, %v3469, %v2817
      %v3500 = vsel %vm1701, %v3470, %v2819
      %v3501 = vsel %vm1701, %v3471, %v2821
      %v3502 = vsel %vm1701, %v3472, %v2823
      %v3503 = vsel %vm1701, %v3473, %v2825
      %v3504 = vsel %vm1701, %v3474, %v2827
      %v3505 = vsel %vm1701, %v3475, %v2829
      %v3506 = vsel %vm1701, %v3476, %v2831
      %v3507 = vsel %vm1701, %v3477, %v2833
      %v3508 = vsel %vm1701, %v3478, %v2835
      %v3509 = vsel %vm1701, %v3479, %v2837
      %v3510 = vsel %vm1701, %v3480, %v2839
      %v3511 = vsel %vm1701, %v3481, %v2841
      %v3512 = vsel %vm1701, %v3482, %v2843
      %v3513 = vsel %vm1701, %v3483, %v2845
      %v3514 = vsel %vm1701, %v3484, %v2847
      %v3515 = vsel %vm1701, %v3485, %v2849
      %v3516 = vsel %vm1701, %v3486, %v2851
      %v3517 = vsel %vm1701, %v3487, %v2853
      %v3518 = vsel %vm1701, %v3488, %v2855
      %v3519 = vsel %vm1701, %v3489, %v2857
      %v3520 = vsel %vm1701, %v3490, %v2859
      %v3521 = vsel %vm1701, %v3491, %v2861
      %v3522 = vsel %vm1734, %v1702, %v2894
      %v3523 = vsel %vm1734, %v1703, %v2896
      %v3524 = vsel %vm1734, %v3492, %v2898
      %v3525 = vsel %vm1734, %v3493, %v2900
      %v3526 = vsel %vm1734, %v3494, %v2902
      %v3527 = vsel %vm1734, %v3495, %v2904
      %v3528 = vsel %vm1734, %v3496, %v2906
      %v3529 = vsel %vm1734, %v3497, %v2908
      %v3530 = vsel %vm1734, %v3498, %v2910
      %v3531 = vsel %vm1734, %v3499, %v2912
      %v3532 = vsel %vm1734, %v3500, %v2914
      %v3533 = vsel %vm1734, %v3501, %v2916
      %v3534 = vsel %vm1734, %v3502, %v2918
      %v3535 = vsel %vm1734, %v3503, %v2920
      %v3536 = vsel %vm1734, %v3504, %v2922
      %v3537 = vsel %vm1734, %v3505, %v2924
      %v3538 = vsel %vm1734, %v3506, %v2926
      %v3539 = vsel %vm1734, %v3507, %v2928
      %v3540 = vsel %vm1734, %v3508, %v2930
      %v3541 = vsel %vm1734, %v3509, %v2932
      %v3542 = vsel %vm1734, %v3510, %v2934
      %v3543 = vsel %vm1734, %v3511, %v2936
      %v3544 = vsel %vm1734, %v3512, %v2938
      %v3545 = vsel %vm1734, %v3513, %v2940
      %v3546 = vsel %vm1734, %v3514, %v2942
      %v3547 = vsel %vm1734, %v3515, %v2944
      %v3548 = vsel %vm1734, %v3516, %v2946
      %v3549 = vsel %vm1734, %v3517, %v2948
      %v3550 = vsel %vm1734, %v3518, %v2950
      %v3551 = vsel %vm1734, %v3519, %v2952
      %v3552 = vsel %vm1734, %v3520, %v2954
      %v3553 = vsel %vm1734, %v3521, %v2956
      %v3554 = vsel %vm1767, %v3522, %v2996
      %v3555 = vsel %vm1767, %v3523, %v2998
      %v3556 = vsel %vm1767, %v3524, %v3000
      %v3557 = vsel %vm1767, %v3525, %v3002
      %v3558 = vsel %vm1767, %v3526, %v3004
      %v3559 = vsel %vm1767, %v3527, %v3006
      %v3560 = vsel %vm1767, %v3528, %v3008
      %v3561 = vsel %vm1767, %v3529, %v3010
      %v3562 = vsel %vm1767, %v3530, %v3012
      %v3563 = vsel %vm1767, %v3531, %v3014
      %v3564 = vsel %vm1767, %v3532, %v3016
      %v3565 = vsel %vm1767, %v3533, %v3018
      %v3566 = vsel %vm1767, %v3534, %v3020
      %v3567 = vsel %vm1767, %v3535, %v3022
      %v3568 = vsel %vm1767, %v3536, %v3024
      %v3569 = vsel %vm1767, %v3537, %v3026
      %v3570 = vsel %vm1767, %v3538, %v3028
      %v3571 = vsel %vm1767, %v3539, %v3030
      %v3572 = vsel %vm1767, %v3540, %v3032
      %v3573 = vsel %vm1767, %v3541, %v3034
      %v3574 = vsel %vm1767, %v3542, %v3036
      %v3575 = vsel %vm1767, %v3543, %v3038
      %v3576 = vsel %vm1767, %v3544, %v3040
      %v3577 = vsel %vm1767, %v3545, %v3042
      %v3578 = vsel %vm1767, %v3546, %v3044
      %v3579 = vsel %vm1767, %v3547, %v3046
      %v3580 = vsel %vm1767, %v3548, %v3048
      %v3581 = vsel %vm1767, %v3549, %v3050
      %v3582 = vsel %vm1767, %v3550, %v3052
      %v3583 = vsel %vm1767, %v3551, %v3054
      %v3584 = vsel %vm1767, %v3552, %v3056
      %v3585 = vsel %vm1767, %v3553, %v3058
      %v3586 = vsel %vm1800, %v3554, %v3097
      %v3587 = vsel %vm1800, %v3555, %v3099
      %v3588 = vsel %vm1800, %v3556, %v3101
      %v3589 = vsel %vm1800, %v3557, %v3103
      %v3590 = vsel %vm1800, %v3558, %v3105
      %v3591 = vsel %vm1800, %v3559, %v3107
      %v3592 = vsel %vm1800, %v3560, %v3109
      %v3593 = vsel %vm1800, %v3561, %v3111
      %v3594 = vsel %vm1800, %v3562, %v3113
      %v3595 = vsel %vm1800, %v3563, %v3115
      %v3596 = vsel %vm1800, %v3564, %v3117
      %v3597 = vsel %vm1800, %v3565, %v3119
      %v3598 = vsel %vm1800, %v3566, %v3121
      %v3599 = vsel %vm1800, %v3567, %v3123
      %v3600 = vsel %vm1800, %v3568, %v3125
      %v3601 = vsel %vm1800, %v3569, %v3127
      %v3602 = vsel %vm1800, %v3570, %v3129
      %v3603 = vsel %vm1800, %v3571, %v3131
      %v3604 = vsel %vm1800, %v3572, %v3133
      %v3605 = vsel %vm1800, %v3573, %v3135
      %v3606 = vsel %vm1800, %v3574, %v3137
      %v3607 = vsel %vm1800, %v3575, %v3139
      %v3608 = vsel %vm1800, %v3576, %v3141
      %v3609 = vsel %vm1800, %v3577, %v3143
      %v3610 = vsel %vm1800, %v3578, %v3145
      %v3611 = vsel %vm1800, %v3579, %v3147
      %v3612 = vsel %vm1800, %v3580, %v3149
      %v3613 = vsel %vm1800, %v3581, %v3151
      %v3614 = vsel %vm1800, %v3582, %v3153
      %v3615 = vsel %vm1800, %v3583, %v3155
      %v3616 = vsel %vm1800, %v3584, %v3157
      %v3617 = vsel %vm1800, %v3585, %v3159
      %v3618 = vsel %vm1833, %v3586, %v3193
      %v3619 = vsel %vm1833, %v3587, %v3195
      %v3620 = vsel %vm1833, %v3588, %v3197
      %v3621 = vsel %vm1833, %v3589, %v3199
      %v3622 = vsel %vm1833, %v3590, %v3201
      %v3623 = vsel %vm1833, %v3591, %v3203
      %v3624 = vsel %vm1833, %v3592, %v3205
      %v3625 = vsel %vm1833, %v3593, %v3207
      %v3626 = vsel %vm1833, %v3594, %v3209
      %v3627 = vsel %vm1833, %v3595, %v3211
      %v3628 = vsel %vm1833, %v3596, %v3213
      %v3629 = vsel %vm1833, %v3597, %v3215
      %v3630 = vsel %vm1833, %v3598, %v3217
      %v3631 = vsel %vm1833, %v3599, %v3219
      %v3632 = vsel %vm1833, %v3600, %v3221
      %v3633 = vsel %vm1833, %v3601, %v3223
      %v3634 = vsel %vm1833, %v3602, %v3225
      %v3635 = vsel %vm1833, %v3603, %v3227
      %v3636 = vsel %vm1833, %v3604, %v3229
      %v3637 = vsel %vm1833, %v3605, %v3231
      %v3638 = vsel %vm1833, %v3606, %v3233
      %v3639 = vsel %vm1833, %v3607, %v3235
      %v3640 = vsel %vm1833, %v3608, %v3237
      %v3641 = vsel %vm1833, %v3609, %v3239
      %v3642 = vsel %vm1833, %v3610, %v3241
      %v3643 = vsel %vm1833, %v3611, %v3243
      %v3644 = vsel %vm1833, %v3612, %v3245
      %v3645 = vsel %vm1833, %v3613, %v3247
      %v3646 = vsel %vm1833, %v3614, %v3249
      %v3647 = vsel %vm1833, %v3615, %v3251
      %v3648 = vsel %vm1833, %v3616, %v1441
      %v3649 = vsel %vm1833, %v3617, %v1443
      %v3650 = vsel %vm1866, %v3618, %v3283
      %v3651 = vsel %vm1866, %v3619, %v3285
      %v3652 = vsel %vm1866, %v3620, %v3287
      %v3653 = vsel %vm1866, %v3621, %v3289
      %v3654 = vsel %vm1866, %v3622, %v3291
      %v3655 = vsel %vm1866, %v3623, %v3293
      %v3656 = vsel %vm1866, %v3624, %v3295
      %v3657 = vsel %vm1866, %v3625, %v3297
      %v3658 = vsel %vm1866, %v3626, %v3299
      %v3659 = vsel %vm1866, %v3627, %v3301
      %v3660 = vsel %vm1866, %v3628, %v3303
      %v3661 = vsel %vm1866, %v3629, %v3305
      %v3662 = vsel %vm1866, %v3630, %v3307
      %v3663 = vsel %vm1866, %v3631, %v3309
      %v3664 = vsel %vm1866, %v3632, %v3311
      %v3665 = vsel %vm1866, %v3633, %v3313
      %v3666 = vsel %vm1866, %v3634, %v3315
      %v3667 = vsel %vm1866, %v3635, %v3317
      %v3668 = vsel %vm1866, %v3636, %v3319
      %v3669 = vsel %vm1866, %v3637, %v3321
      %v3670 = vsel %vm1866, %v3638, %v3323
      %v3671 = vsel %vm1866, %v3639, %v3325
      %v3672 = vsel %vm1866, %v3640, %v3327
      %v3673 = vsel %vm1866, %v3641, %v3329
      %v3674 = vsel %vm1866, %v3642, %v3331
      %v3675 = vsel %vm1866, %v3643, %v3333
      %v3676 = vsel %vm1866, %v3644, %v3335
      %v3677 = vsel %vm1866, %v3645, %v3337
      %v3678 = vsel %vm1866, %v3646, %v3339
      %v3679 = vsel %vm1866, %v3647, %v3341
      %v3680 = vsel %vm1866, %v3648, %v1537
      %v3681 = vsel %vm1866, %v3649, %v1539
      %v3682 = vsel %vm1899, %v3650, %v3373
      %v3683 = vsel %vm1899, %v3651, %v3375
      %v3684 = vsel %vm1899, %v3652, %v3377
      %v3685 = vsel %vm1899, %v3653, %v3379
      %v3686 = vsel %vm1899, %v3654, %v3381
      %v3687 = vsel %vm1899, %v3655, %v3383
      %v3688 = vsel %vm1899, %v3656, %v3385
      %v3689 = vsel %vm1899, %v3657, %v3387
      %v3690 = vsel %vm1899, %v3658, %v3389
      %v3691 = vsel %vm1899, %v3659, %v3391
      %v3692 = vsel %vm1899, %v3660, %v3393
      %v3693 = vsel %vm1899, %v3661, %v3395
      %v3694 = vsel %vm1899, %v3662, %v3397
      %v3695 = vsel %vm1899, %v3663, %v3399
      %v3696 = vsel %vm1899, %v3664, %v3401
      %v3697 = vsel %vm1899, %v3665, %v3403
      %v3698 = vsel %vm1899, %v3666, %v3405
      %v3699 = vsel %vm1899, %v3667, %v3407
      %v3700 = vsel %vm1899, %v3668, %v3409
      %v3701 = vsel %vm1899, %v3669, %v3411
      %v3702 = vsel %vm1899, %v3670, %v3413
      %v3703 = vsel %vm1899, %v3671, %v3415
      %v3704 = vsel %vm1899, %v3672, %v3417
      %v3705 = vsel %vm1899, %v3673, %v3419
      %v3706 = vsel %vm1899, %v3674, %v3421
      %v3707 = vsel %vm1899, %v3675, %v3423
      %v3708 = vsel %vm1899, %v3676, %v3425
      %v3709 = vsel %vm1899, %v3677, %v3427
      %v3710 = vsel %vm1899, %v3678, %v3429
      %v3711 = vsel %vm1899, %v3679, %v3431
      %v3712 = vsel %vm1899, %v3680, %v1633
      %v3713 = vsel %vm1899, %v3681, %v1635
      %v3714 = vld [vmem:[%s4] sm:$0xff]
      %v3715 = vld [vmem:[%s4 + $0x8] sm:$0xff]
      %v3716 = vld [vmem:[%s4 + $0x10] sm:$0xff]
      %v3717 = vld [vmem:[%s4 + $0x18] sm:$0xff]
      %v3718 = vld [vmem:[%s4 + $0x20] sm:$0xff]
      %v3719 = vld [vmem:[%s4 + $0x28] sm:$0xff]
      %v3720 = vld [vmem:[%s4 + $0x30] sm:$0xff]
      %v3721 = vld [vmem:[%s4 + $0x38] sm:$0xff]
      %v3722 = vld [vmem:[%s4 + $0x40] sm:$0xff]
      %v3724 = vsel %vm1941, %v3682, 0
      %v3727 = vsel %vm1941, %v3683, 0
      %v3730 = vsel %vm1941, %v3684, 0
      %v3733 = vsel %vm1941, %v3685, 0
      %v3736 = vsel %vm1941, %v3686, 0
      %v3739 = vsel %vm1941, %v3687, 0
      %v3742 = vsel %vm1941, %v3688, 0
      %v3745 = vsel %vm1941, %v3689, 0
      %v3748 = vsel %vm1941, %v3690, 0
      %v3751 = vsel %vm1941, %v3691, 0
      %v3754 = vsel %vm1941, %v3692, 0
      %v3757 = vsel %vm1941, %v3693, 0
      %v3760 = vsel %vm1941, %v3694, 0
      %v3763 = vsel %vm1941, %v3695, 0
      %v3766 = vsel %vm1941, %v3696, 0
      %v3769 = vsel %vm1941, %v3697, 0
      %v3772 = vsel %vm1941, %v3698, 0
      %v3775 = vsel %vm1941, %v3699, 0
      %v3778 = vsel %vm1941, %v3700, 0
      %v3781 = vsel %vm1941, %v3701, 0
      %v3784 = vsel %vm1941, %v3702, 0
      %v3787 = vsel %vm1941, %v3703, 0
      %v3790 = vsel %vm1941, %v3704, 0
      %v3793 = vsel %vm1941, %v3705, 0
      %v3796 = vsel %vm1941, %v3706, 0
      %v3799 = vsel %vm1941, %v3707, 0
      %v3802 = vsel %vm1941, %v3708, 0
      %v3805 = vsel %vm1941, %v3709, 0
      %v3808 = vsel %vm1941, %v3710, 0
      %v3811 = vsel %vm1941, %v3711, 0
      %v3814 = vsel %vm1941, %v3712, 0
      %v3817 = vsel %vm1941, %v3713, 0
      %3819 = vmatprep.subr.mxu0 0.0
      %3820 = vmatpush1.msra.mxu0 0.0
      %3821 = vmatprep.subr.mxu0 0.0
      %3822 = vmatpush1.msra.mxu0 0.0
      %3823 = vmatprep.subr.mxu0 0.0
      %3824 = vmatpush1.msra.mxu0 0.0
      %3825 = vmatprep.subr.mxu0 0.0
      %3826 = vmatpush1.msra.mxu0 0.0
      %3827 = vmatprep.subr.mxu0 0.0
      %3828 = vmatpush1.msra.mxu0 0.0
      %3829 = vmatprep.subr.mxu0 0.0
      %3830 = vmatpush1.msra.mxu0 0.0
      %3831 = vmatprep.subr.mxu0 0.0
      %3832 = vmatpush1.msra.mxu0 0.0
      %3833 = vmatprep.subr.mxu0 0.0
      %3834 = vmatpush1.msra.mxu0 %v3722
      %3835 = vmatprep.subr.mxu0 0.0
      %3836 = vmatpush1.msra.mxu0 %v3721
      %3837 = vmatprep.subr.mxu0 0.0
      %3838 = vmatpush1.msra.mxu0 %v3720
      %3839 = vmatprep.subr.mxu0 0.0
      %3840 = vmatpush1.msra.mxu0 %v3719
      %3841 = vmatprep.subr.mxu0 0.0
      %3842 = vmatpush1.msra.mxu0 %v3718
      %3843 = vmatprep.subr.mxu0 0.0
      %3844 = vmatpush1.msra.mxu0 %v3717
      %3845 = vmatprep.subr.mxu0 0.0
      %3846 = vmatpush1.msra.mxu0 %v3716
      %3847 = vmatprep.subr.mxu0 0.0
      %3848 = vmatpush1.msra.mxu0 %v3715
      %3849 = vmatprep.subr.mxu0 0.0
      %3850 = vmatpush1.msra.mxu0 %v3714
      %3851 = vmatprep.subr.mxu0 0.0
      %3852 = vmatpush2.msra.mxu0 0.0
      %3853 = vmatprep.subr.mxu0 0.0
      %3854 = vmatpush2.msra.mxu0 0.0
      %3855 = vmatprep.subr.mxu0 0.0
      %3856 = vmatpush2.msra.mxu0 0.0
      %3857 = vmatprep.subr.mxu0 0.0
      %3858 = vmatpush2.msra.mxu0 0.0
      %3859 = vmatprep.subr.mxu0 0.0
      %3860 = vmatpush2.msra.mxu0 0.0
      %3861 = vmatprep.subr.mxu0 0.0
      %3862 = vmatpush2.msra.mxu0 0.0
      %3863 = vmatprep.subr.mxu0 0.0
      %3864 = vmatpush2.msra.mxu0 0.0
      %3865 = vmatprep.subr.mxu0 0.0
      %3866 = vmatpush2.msra.mxu0 0.0
      %3867 = vmatprep.subr.mxu0 0.0
      %3868 = vmatpush2.msra.mxu0 0.0
      %3869 = vmatprep.subr.mxu0 0.0
      %3870 = vmatpush2.msra.mxu0 0.0
      %3871 = vmatprep.subr.mxu0 0.0
      %3872 = vmatpush2.msra.mxu0 0.0
      %3873 = vmatprep.subr.mxu0 0.0
      %3874 = vmatpush2.msra.mxu0 0.0
      %3875 = vmatprep.subr.mxu0 0.0
      %3876 = vmatpush2.msra.mxu0 0.0
      %3877 = vmatprep.subr.mxu0 0.0
      %3878 = vmatpush2.msra.mxu0 0.0
      %3879 = vmatprep.subr.mxu0 0.0
      %3880 = vmatpush2.msra.mxu0 0.0
      %3881 = vmatprep.subr.mxu0 0.0
      %3882 = vmatpush2.msra.mxu0 0.0
      %3883 = vmatprep.mubr.f32.mxu0 0.0
      %3884 = vmatmul.mubr.f32.gmra.mxu0 %v3724
      %v3885 = vpop.f32.mrf.mxu0
      %v3886 = vadd.f32 0.0, %v3885
      %v3887 = vpop.f32.mrf.mxu0
      %3888 = vmatprep.mubr.f32.mxu0 0.0
      %3889 = vmatmul.mubr.f32.gmra.mxu0 %v3727
      %v3890 = vpop.f32.mrf.mxu0
      %v3891 = vadd.f32 0.0, %v3890
      %v3892 = vpop.f32.mrf.mxu0
      %3893 = vmatprep.mubr.f32.mxu0 0.0
      %3894 = vmatmul.mubr.f32.gmra.mxu0 %v3730
      %v3895 = vpop.f32.mrf.mxu0
      %v3896 = vadd.f32 0.0, %v3895
      %v3897 = vpop.f32.mrf.mxu0
      %3898 = vmatprep.mubr.f32.mxu0 0.0
      %3899 = vmatmul.mubr.f32.gmra.mxu0 %v3733
      %v3900 = vpop.f32.mrf.mxu0
      %v3901 = vadd.f32 0.0, %v3900
      %v3902 = vpop.f32.mrf.mxu0
      %3903 = vmatprep.mubr.f32.mxu0 0.0
      %3904 = vmatmul.mubr.f32.gmra.mxu0 %v3736
      %v3905 = vpop.f32.mrf.mxu0
      %v3906 = vadd.f32 0.0, %v3905
      %v3907 = vpop.f32.mrf.mxu0
      %3908 = vmatprep.mubr.f32.mxu0 0.0
      %3909 = vmatmul.mubr.f32.gmra.mxu0 %v3739
      %v3910 = vpop.f32.mrf.mxu0
      %v3911 = vadd.f32 0.0, %v3910
      %v3912 = vpop.f32.mrf.mxu0
      %3913 = vmatprep.mubr.f32.mxu0 0.0
      %3914 = vmatmul.mubr.f32.gmra.mxu0 %v3742
      %v3915 = vpop.f32.mrf.mxu0
      %v3916 = vadd.f32 0.0, %v3915
      %v3917 = vpop.f32.mrf.mxu0
      %3918 = vmatprep.mubr.f32.mxu0 0.0
      %3919 = vmatmul.mubr.f32.gmra.mxu0 %v3745
      %v3920 = vpop.f32.mrf.mxu0
      %v3921 = vadd.f32 0.0, %v3920
      %v3922 = vpop.f32.mrf.mxu0
      %3923 = vmatprep.mubr.f32.mxu0 0.0
      %3924 = vmatmul.mubr.f32.gmra.mxu0 %v3748
      %v3925 = vpop.f32.mrf.mxu0
      %v3926 = vadd.f32 0.0, %v3925
      %v3927 = vpop.f32.mrf.mxu0
      %3928 = vmatprep.mubr.f32.mxu0 0.0
      %3929 = vmatmul.mubr.f32.gmra.mxu0 %v3751
      %v3930 = vpop.f32.mrf.mxu0
      %v3931 = vadd.f32 0.0, %v3930
      %v3932 = vpop.f32.mrf.mxu0
      %3933 = vmatprep.mubr.f32.mxu0 0.0
      %3934 = vmatmul.mubr.f32.gmra.mxu0 %v3754
      %v3935 = vpop.f32.mrf.mxu0
      %v3936 = vadd.f32 0.0, %v3935
      %v3937 = vpop.f32.mrf.mxu0
      %3938 = vmatprep.mubr.f32.mxu0 0.0
      %3939 = vmatmul.mubr.f32.gmra.mxu0 %v3757
      %v3940 = vpop.f32.mrf.mxu0
      %v3941 = vadd.f32 0.0, %v3940
      %v3942 = vpop.f32.mrf.mxu0
      %3943 = vmatprep.mubr.f32.mxu0 0.0
      %3944 = vmatmul.mubr.f32.gmra.mxu0 %v3760
      %v3945 = vpop.f32.mrf.mxu0
      %v3946 = vadd.f32 0.0, %v3945
      %v3947 = vpop.f32.mrf.mxu0
      %3948 = vmatprep.mubr.f32.mxu0 0.0
      %3949 = vmatmul.mubr.f32.gmra.mxu0 %v3763
      %v3950 = vpop.f32.mrf.mxu0
      %v3951 = vadd.f32 0.0, %v3950
      %v3952 = vpop.f32.mrf.mxu0
      %3953 = vmatprep.mubr.f32.mxu0 0.0
      %3954 = vmatmul.mubr.f32.gmra.mxu0 %v3766
      %v3955 = vpop.f32.mrf.mxu0
      %v3956 = vadd.f32 0.0, %v3955
      %v3957 = vpop.f32.mrf.mxu0
      %3958 = vmatprep.mubr.f32.mxu0 0.0
      %3959 = vmatmul.mubr.f32.gmra.mxu0 %v3769
      %v3960 = vpop.f32.mrf.mxu0
      %v3961 = vadd.f32 0.0, %v3960
      %v3962 = vpop.f32.mrf.mxu0
      %3963 = vmatprep.mubr.f32.mxu0 0.0
      %3964 = vmatmul.mubr.f32.gmra.mxu0 %v3772
      %v3965 = vpop.f32.mrf.mxu0
      %v3966 = vadd.f32 0.0, %v3965
      %v3967 = vpop.f32.mrf.mxu0
      %3968 = vmatprep.mubr.f32.mxu0 0.0
      %3969 = vmatmul.mubr.f32.gmra.mxu0 %v3775
      %v3970 = vpop.f32.mrf.mxu0
      %v3971 = vadd.f32 0.0, %v3970
      %v3972 = vpop.f32.mrf.mxu0
      %3973 = vmatprep.mubr.f32.mxu0 0.0
      %3974 = vmatmul.mubr.f32.gmra.mxu0 %v3778
      %v3975 = vpop.f32.mrf.mxu0
      %v3976 = vadd.f32 0.0, %v3975
      %v3977 = vpop.f32.mrf.mxu0
      %3978 = vmatprep.mubr.f32.mxu0 0.0
      %3979 = vmatmul.mubr.f32.gmra.mxu0 %v3781
      %v3980 = vpop.f32.mrf.mxu0
      %v3981 = vadd.f32 0.0, %v3980
      %v3982 = vpop.f32.mrf.mxu0
      %3983 = vmatprep.mubr.f32.mxu0 0.0
      %3984 = vmatmul.mubr.f32.gmra.mxu0 %v3784
      %v3985 = vpop.f32.mrf.mxu0
      %v3986 = vadd.f32 0.0, %v3985
      %v3987 = vpop.f32.mrf.mxu0
      %3988 = vmatprep.mubr.f32.mxu0 0.0
      %3989 = vmatmul.mubr.f32.gmra.mxu0 %v3787
      %v3990 = vpop.f32.mrf.mxu0
      %v3991 = vadd.f32 0.0, %v3990
      %v3992 = vpop.f32.mrf.mxu0
      %3993 = vmatprep.mubr.f32.mxu0 0.0
      %3994 = vmatmul.mubr.f32.gmra.mxu0 %v3790
      %v3995 = vpop.f32.mrf.mxu0
      %v3996 = vadd.f32 0.0, %v3995
      %v3997 = vpop.f32.mrf.mxu0
      %3998 = vmatprep.mubr.f32.mxu0 0.0
      %3999 = vmatmul.mubr.f32.gmra.mxu0 %v3793
      %v4000 = vpop.f32.mrf.mxu0
      %v4001 = vadd.f32 0.0, %v4000
      %v4002 = vpop.f32.mrf.mxu0
      %4003 = vmatprep.mubr.f32.mxu0 0.0
      %4004 = vmatmul.mubr.f32.gmra.mxu0 %v3796
      %v4005 = vpop.f32.mrf.mxu0
      %v4006 = vadd.f32 0.0, %v4005
      %v4007 = vpop.f32.mrf.mxu0
      %4008 = vmatprep.mubr.f32.mxu0 0.0
      %4009 = vmatmul.mubr.f32.gmra.mxu0 %v3799
      %v4010 = vpop.f32.mrf.mxu0
      %v4011 = vadd.f32 0.0, %v4010
      %v4012 = vpop.f32.mrf.mxu0
      %4013 = vmatprep.mubr.f32.mxu0 0.0
      %4014 = vmatmul.mubr.f32.gmra.mxu0 %v3802
      %v4015 = vpop.f32.mrf.mxu0
      %v4016 = vadd.f32 0.0, %v4015
      %v4017 = vpop.f32.mrf.mxu0
      %4018 = vmatprep.mubr.f32.mxu0 0.0
      %4019 = vmatmul.mubr.f32.gmra.mxu0 %v3805
      %v4020 = vpop.f32.mrf.mxu0
      %v4021 = vadd.f32 0.0, %v4020
      %v4022 = vpop.f32.mrf.mxu0
      %4023 = vmatprep.mubr.f32.mxu0 0.0
      %4024 = vmatmul.mubr.f32.gmra.mxu0 %v3808
      %v4025 = vpop.f32.mrf.mxu0
      %v4026 = vadd.f32 0.0, %v4025
      %v4027 = vpop.f32.mrf.mxu0
      %4028 = vmatprep.mubr.f32.mxu0 0.0
      %4029 = vmatmul.mubr.f32.gmra.mxu0 %v3811
      %v4030 = vpop.f32.mrf.mxu0
      %v4031 = vadd.f32 0.0, %v4030
      %v4032 = vpop.f32.mrf.mxu0
      %4033 = vmatprep.mubr.f32.mxu0 0.0
      %4034 = vmatmul.mubr.f32.gmra.mxu0 %v3814
      %v4035 = vpop.f32.mrf.mxu0
      %v4036 = vadd.f32 0.0, %v4035
      %v4037 = vpop.f32.mrf.mxu0
      %4038 = vmatprep.mubr.f32.mxu0 0.0
      %4039 = vmatmul.mubr.f32.gmra.mxu0 %v3817
      %v4040 = vpop.f32.mrf.mxu0
      %v4041 = vadd.f32 0.0, %v4040
      %v4042 = vpop.f32.mrf.mxu0
      %4043 = vdwg.mxu0
      %v4044 = vld [vmem:[%s5] sm:$0x1]
      %v4046 = vlaneseq
      %v4047 = vshrl.u32 %v4046, 7
      %v4048 = vsub.s32 0, %v4047
      %v4049 = vrot.slane %v4044, %v4048
      %v4051 = vmul.f32 %v3886, %v4049
      %v4052 = vmul.f32 %v3891, %v4049
      %v4053 = vmul.f32 %v3896, %v4049
      %v4054 = vmul.f32 %v3901, %v4049
      %v4055 = vmul.f32 %v3906, %v4049
      %v4056 = vmul.f32 %v3911, %v4049
      %v4057 = vmul.f32 %v3916, %v4049
      %v4058 = vmul.f32 %v3921, %v4049
      %v4059 = vmul.f32 %v3926, %v4049
      %v4060 = vmul.f32 %v3931, %v4049
      %v4061 = vmul.f32 %v3936, %v4049
      %v4062 = vmul.f32 %v3941, %v4049
      %v4063 = vmul.f32 %v3946, %v4049
      %v4064 = vmul.f32 %v3951, %v4049
      %v4065 = vmul.f32 %v3956, %v4049
      %v4066 = vmul.f32 %v3961, %v4049
      %v4067 = vmul.f32 %v3966, %v4049
      %v4068 = vmul.f32 %v3971, %v4049
      %v4069 = vmul.f32 %v3976, %v4049
      %v4070 = vmul.f32 %v3981, %v4049
      %v4071 = vmul.f32 %v3986, %v4049
      %v4072 = vmul.f32 %v3991, %v4049
      %v4073 = vmul.f32 %v3996, %v4049
      %v4074 = vmul.f32 %v4001, %v4049
      %v4075 = vmul.f32 %v4006, %v4049
      %v4076 = vmul.f32 %v4011, %v4049
      %v4077 = vmul.f32 %v4016, %v4049
      %v4078 = vmul.f32 %v4021, %v4049
      %v4079 = vmul.f32 %v4026, %v4049
      %v4080 = vmul.f32 %v4031, %v4049
      %v4081 = vmul.f32 %v4036, %v4049
      %v4082 = vmul.f32 %v4041, %v4049
      %v4083 = vld [vmem:[%s6] sm:$0x1]
      %v4085 = vlaneseq
      %v4086 = vshrl.u32 %v4085, 7
      %v4087 = vsub.s32 0, %v4086
      %v4088 = vrot.slane %v4083, %v4087
      %v4090 = vadd.f32 %v4051, %v4088
      %v4091 = vadd.f32 %v4052, %v4088
      %v4092 = vadd.f32 %v4053, %v4088
      %v4093 = vadd.f32 %v4054, %v4088
      %v4094 = vadd.f32 %v4055, %v4088
      %v4095 = vadd.f32 %v4056, %v4088
      %v4096 = vadd.f32 %v4057, %v4088
      %v4097 = vadd.f32 %v4058, %v4088
      %v4098 = vadd.f32 %v4059, %v4088
      %v4099 = vadd.f32 %v4060, %v4088
      %v4100 = vadd.f32 %v4061, %v4088
      %v4101 = vadd.f32 %v4062, %v4088
      %v4102 = vadd.f32 %v4063, %v4088
      %v4103 = vadd.f32 %v4064, %v4088
      %v4104 = vadd.f32 %v4065, %v4088
      %v4105 = vadd.f32 %v4066, %v4088
      %v4106 = vadd.f32 %v4067, %v4088
      %v4107 = vadd.f32 %v4068, %v4088
      %v4108 = vadd.f32 %v4069, %v4088
      %v4109 = vadd.f32 %v4070, %v4088
      %v4110 = vadd.f32 %v4071, %v4088
      %v4111 = vadd.f32 %v4072, %v4088
      %v4112 = vadd.f32 %v4073, %v4088
      %v4113 = vadd.f32 %v4074, %v4088
      %v4114 = vadd.f32 %v4075, %v4088
      %v4115 = vadd.f32 %v4076, %v4088
      %v4116 = vadd.f32 %v4077, %v4088
      %v4117 = vadd.f32 %v4078, %v4088
      %v4118 = vadd.f32 %v4079, %v4088
      %v4119 = vadd.f32 %v4080, %v4088
      %v4120 = vadd.f32 %v4081, %v4088
      %v4121 = vadd.f32 %v4082, %v4088
      %v4122 = vmax.f32 %v4090, 0.0
      %v4123 = vmax.f32 %v4091, 0.0
      %v4124 = vmax.f32 %v4092, 0.0
      %v4125 = vmax.f32 %v4093, 0.0
      %v4126 = vmax.f32 %v4094, 0.0
      %v4127 = vmax.f32 %v4095, 0.0
      %v4128 = vmax.f32 %v4096, 0.0
      %v4129 = vmax.f32 %v4097, 0.0
      %v4130 = vmax.f32 %v4098, 0.0
      %v4131 = vmax.f32 %v4099, 0.0
      %v4132 = vmax.f32 %v4100, 0.0
      %v4133 = vmax.f32 %v4101, 0.0
      %v4134 = vmax.f32 %v4102, 0.0
      %v4135 = vmax.f32 %v4103, 0.0
      %v4136 = vmax.f32 %v4104, 0.0
      %v4137 = vmax.f32 %v4105, 0.0
      %v4138 = vmax.f32 %v4106, 0.0
      %v4139 = vmax.f32 %v4107, 0.0
      %v4140 = vmax.f32 %v4108, 0.0
      %v4141 = vmax.f32 %v4109, 0.0
      %v4142 = vmax.f32 %v4110, 0.0
      %v4143 = vmax.f32 %v4111, 0.0
      %v4144 = vmax.f32 %v4112, 0.0
      %v4145 = vmax.f32 %v4113, 0.0
      %v4146 = vmax.f32 %v4114, 0.0
      %v4147 = vmax.f32 %v4115, 0.0
      %v4148 = vmax.f32 %v4116, 0.0
      %v4149 = vmax.f32 %v4117, 0.0
      %v4150 = vmax.f32 %v4118, 0.0
      %v4151 = vmax.f32 %v4119, 0.0
      %v4152 = vmax.f32 %v4120, 0.0
      %v4153 = vmax.f32 %v4121, 0.0
      %v4154 = vadd.f32 %v4122, %v495
      %v4155 = vadd.f32 %v4123, %v496
      %v4156 = vadd.f32 %v4124, %v497
      %v4157 = vadd.f32 %v4125, %v498
      %v4158 = vadd.f32 %v4126, %v499
      %v4159 = vadd.f32 %v4127, %v500
      %v4160 = vadd.f32 %v4128, %v501
      %v4161 = vadd.f32 %v4129, %v502
      %v4162 = vadd.f32 %v4130, %v503
      %v4163 = vadd.f32 %v4131, %v504
      %v4164 = vadd.f32 %v4132, %v505
      %v4165 = vadd.f32 %v4133, %v506
      %v4166 = vadd.f32 %v4134, %v507
      %v4167 = vadd.f32 %v4135, %v508
      %v4168 = vadd.f32 %v4136, %v509
      %v4169 = vadd.f32 %v4137, %v510
      %v4170 = vadd.f32 %v4138, %v511
      %v4171 = vadd.f32 %v4139, %v512
      %v4172 = vadd.f32 %v4140, %v513
      %v4173 = vadd.f32 %v4141, %v514
      %v4174 = vadd.f32 %v4142, %v515
      %v4175 = vadd.f32 %v4143, %v516
      %v4176 = vadd.f32 %v4144, %v517
      %v4177 = vadd.f32 %v4145, %v518
      %v4178 = vadd.f32 %v4146, %v519
      %v4179 = vadd.f32 %v4147, %v520
      %v4180 = vadd.f32 %v4148, %v521
      %v4181 = vadd.f32 %v4149, %v522
      %v4182 = vadd.f32 %v4150, %v523
      %v4183 = vadd.f32 %v4151, %v524
      %v4184 = vadd.f32 %v4152, %v525
      %v4185 = vadd.f32 %v4153, %v526
      %v4218 = vrot.slane %v4154, 7
      %v4219 = vrot.slane %v4155, 7
      %v4220 = vsel %vm560, %v4218, %v4219
      %v4221 = vrot.slane %v4156, 7
      %v4222 = vrot.slane %v4157, 7
      %v4223 = vsel %vm560, %v4221, %v4222
      %v4224 = vrot.slane %v4158, 7
      %v4225 = vrot.slane %v4159, 7
      %v4226 = vsel %vm560, %v4224, %v4225
      %v4227 = vrot.slane %v4160, 7
      %v4228 = vrot.slane %v4161, 7
      %v4229 = vsel %vm560, %v4227, %v4228
      %v4230 = vrot.slane %v4162, 7
      %v4231 = vrot.slane %v4163, 7
      %v4232 = vsel %vm560, %v4230, %v4231
      %v4233 = vrot.slane %v4164, 7
      %v4234 = vrot.slane %v4165, 7
      %v4235 = vsel %vm560, %v4233, %v4234
      %v4236 = vrot.slane %v4166, 7
      %v4237 = vrot.slane %v4167, 7
      %v4238 = vsel %vm560, %v4236, %v4237
      %v4239 = vrot.slane %v4168, 7
      %v4240 = vrot.slane %v4169, 7
      %v4241 = vsel %vm560, %v4239, %v4240
      %v4242 = vrot.slane %v4170, 7
      %v4243 = vrot.slane %v4171, 7
      %v4244 = vsel %vm560, %v4242, %v4243
      %v4245 = vrot.slane %v4172, 7
      %v4246 = vrot.slane %v4173, 7
      %v4247 = vsel %vm560, %v4245, %v4246
      %v4248 = vrot.slane %v4174, 7
      %v4249 = vrot.slane %v4175, 7
      %v4250 = vsel %vm560, %v4248, %v4249
      %v4251 = vrot.slane %v4176, 7
      %v4252 = vrot.slane %v4177, 7
      %v4253 = vsel %vm560, %v4251, %v4252
      %v4254 = vrot.slane %v4178, 7
      %v4255 = vrot.slane %v4179, 7
      %v4256 = vsel %vm560, %v4254, %v4255
      %v4257 = vrot.slane %v4180, 7
      %v4258 = vrot.slane %v4181, 7
      %v4259 = vsel %vm560, %v4257, %v4258
      %v4260 = vrot.slane %v4182, 7
      %v4261 = vrot.slane %v4183, 7
      %v4262 = vsel %vm560, %v4260, %v4261
      %v4263 = vrot.slane %v4184, 7
      %v4264 = vrot.slane %v4185, 7
      %v4265 = vsel %vm560, %v4263, %v4264
      %v4313 = vsel %vm560, 0.0, %v4218
      %v4314 = vsel %vm560, 0.0, %v4221
      %v4315 = vsel %vm560, 0.0, %v4224
      %v4316 = vsel %vm560, 0.0, %v4227
      %v4317 = vsel %vm560, 0.0, %v4230
      %v4318 = vsel %vm560, 0.0, %v4233
      %v4319 = vsel %vm560, 0.0, %v4236
      %v4320 = vsel %vm560, 0.0, %v4239
      %v4321 = vsel %vm560, 0.0, %v4242
      %v4322 = vsel %vm560, 0.0, %v4245
      %v4323 = vsel %vm560, 0.0, %v4248
      %v4324 = vsel %vm560, 0.0, %v4251
      %v4325 = vsel %vm560, 0.0, %v4254
      %v4326 = vsel %vm560, 0.0, %v4257
      %v4327 = vsel %vm560, 0.0, %v4260
      %v4328 = vsel %vm560, 0.0, %v4263
      %v4329 = vsel %vm560, %v4219, 0.0
      %v4330 = vsel %vm560, %v4222, 0.0
      %v4331 = vsel %vm560, %v4225, 0.0
      %v4332 = vsel %vm560, %v4228, 0.0
      %v4333 = vsel %vm560, %v4231, 0.0
      %v4334 = vsel %vm560, %v4234, 0.0
      %v4335 = vsel %vm560, %v4237, 0.0
      %v4336 = vsel %vm560, %v4240, 0.0
      %v4337 = vsel %vm560, %v4243, 0.0
      %v4338 = vsel %vm560, %v4246, 0.0
      %v4339 = vsel %vm560, %v4249, 0.0
      %v4340 = vsel %vm560, %v4252, 0.0
      %v4341 = vsel %vm560, %v4255, 0.0
      %v4342 = vsel %vm560, %v4258, 0.0
      %v4343 = vsel %vm560, %v4261, 0.0
      %v4344 = vsel %vm560, %v4264, 0.0
      %v4375 = vrot.slane %v4313, 1
      %v4376 = vrot.slane %v4220, 1
      %v4377 = vsel %vm726, %v4375, %v4376
      %v4378 = vrot.slane %v4329, 1
      %v4379 = vsel %vm726, %v4376, %v4378
      %v4380 = vrot.slane %v4314, 1
      %v4381 = vrot.slane %v4223, 1
      %v4382 = vsel %vm726, %v4380, %v4381
      %v4383 = vrot.slane %v4330, 1
      %v4384 = vsel %vm726, %v4381, %v4383
      %v4385 = vrot.slane %v4315, 1
      %v4386 = vrot.slane %v4226, 1
      %v4387 = vsel %vm726, %v4385, %v4386
      %v4388 = vrot.slane %v4331, 1
      %v4389 = vsel %vm726, %v4386, %v4388
      %v4390 = vrot.slane %v4316, 1
      %v4391 = vrot.slane %v4229, 1
      %v4392 = vsel %vm726, %v4390, %v4391
      %v4393 = vrot.slane %v4332, 1
      %v4394 = vsel %vm726, %v4391, %v4393
      %v4395 = vrot.slane %v4317, 1
      %v4396 = vrot.slane %v4232, 1
      %v4397 = vsel %vm726, %v4395, %v4396
      %v4398 = vrot.slane %v4333, 1
      %v4399 = vsel %vm726, %v4396, %v4398
      %v4400 = vrot.slane %v4318, 1
      %v4401 = vrot.slane %v4235, 1
      %v4402 = vsel %vm726, %v4400, %v4401
      %v4403 = vrot.slane %v4334, 1
      %v4404 = vsel %vm726, %v4401, %v4403
      %v4405 = vrot.slane %v4319, 1
      %v4406 = vrot.slane %v4238, 1
      %v4407 = vsel %vm726, %v4405, %v4406
      %v4408 = vrot.slane %v4335, 1
      %v4409 = vsel %vm726, %v4406, %v4408
      %v4410 = vrot.slane %v4320, 1
      %v4411 = vrot.slane %v4241, 1
      %v4412 = vsel %vm726, %v4410, %v4411
      %v4413 = vrot.slane %v4336, 1
      %v4414 = vsel %vm726, %v4411, %v4413
      %v4415 = vrot.slane %v4321, 1
      %v4416 = vrot.slane %v4244, 1
      %v4417 = vsel %vm726, %v4415, %v4416
      %v4418 = vrot.slane %v4337, 1
      %v4419 = vsel %vm726, %v4416, %v4418
      %v4420 = vrot.slane %v4322, 1
      %v4421 = vrot.slane %v4247, 1
      %v4422 = vsel %vm726, %v4420, %v4421
      %v4423 = vrot.slane %v4338, 1
      %v4424 = vsel %vm726, %v4421, %v4423
      %v4425 = vrot.slane %v4323, 1
      %v4426 = vrot.slane %v4250, 1
      %v4427 = vsel %vm726, %v4425, %v4426
      %v4428 = vrot.slane %v4339, 1
      %v4429 = vsel %vm726, %v4426, %v4428
      %v4430 = vrot.slane %v4324, 1
      %v4431 = vrot.slane %v4253, 1
      %v4432 = vsel %vm726, %v4430, %v4431
      %v4433 = vrot.slane %v4340, 1
      %v4434 = vsel %vm726, %v4431, %v4433
      %v4435 = vrot.slane %v4325, 1
      %v4436 = vrot.slane %v4256, 1
      %v4437 = vsel %vm726, %v4435, %v4436
      %v4438 = vrot.slane %v4341, 1
      %v4439 = vsel %vm726, %v4436, %v4438
      %v4440 = vrot.slane %v4326, 1
      %v4441 = vrot.slane %v4259, 1
      %v4442 = vsel %vm726, %v4440, %v4441
      %v4443 = vrot.slane %v4342, 1
      %v4444 = vsel %vm726, %v4441, %v4443
      %v4445 = vrot.slane %v4327, 1
      %v4446 = vrot.slane %v4262, 1
      %v4447 = vsel %vm726, %v4445, %v4446
      %v4448 = vrot.slane %v4343, 1
      %v4449 = vsel %vm726, %v4446, %v4448
      %4450 = vrot.lane.b32.xlu0 %v4377, 8
      %v4451 = vpop.permute.xlu0 %4450
      %4452 = vrot.lane.b32.xlu0 %v4379, 8
      %v4453 = vpop.permute.xlu0 %4452
      %4454 = vrot.lane.b32.xlu0 %v4382, 8
      %v4455 = vpop.permute.xlu0 %4454
      %4456 = vrot.lane.b32.xlu0 %v4384, 8
      %v4457 = vpop.permute.xlu0 %4456
      %4458 = vrot.lane.b32.xlu0 %v4387, 8
      %v4459 = vpop.permute.xlu0 %4458
      %4460 = vrot.lane.b32.xlu0 %v4389, 8
      %v4461 = vpop.permute.xlu0 %4460
      %4462 = vrot.lane.b32.xlu0 %v4392, 8
      %v4463 = vpop.permute.xlu0 %4462
      %4464 = vrot.lane.b32.xlu0 %v4394, 8
      %v4465 = vpop.permute.xlu0 %4464
      %4466 = vrot.lane.b32.xlu0 %v4397, 8
      %v4467 = vpop.permute.xlu0 %4466
      %4468 = vrot.lane.b32.xlu0 %v4399, 8
      %v4469 = vpop.permute.xlu0 %4468
      %4470 = vrot.lane.b32.xlu0 %v4402, 8
      %v4471 = vpop.permute.xlu0 %4470
      %4472 = vrot.lane.b32.xlu0 %v4404, 8
      %v4473 = vpop.permute.xlu0 %4472
      %4474 = vrot.lane.b32.xlu0 %v4407, 8
      %v4475 = vpop.permute.xlu0 %4474
      %4476 = vrot.lane.b32.xlu0 %v4409, 8
      %v4477 = vpop.permute.xlu0 %4476
      %4478 = vrot.lane.b32.xlu0 %v4412, 8
      %v4479 = vpop.permute.xlu0 %4478
      %4480 = vrot.lane.b32.xlu0 %v4414, 8
      %v4481 = vpop.permute.xlu0 %4480
      %4482 = vrot.lane.b32.xlu0 %v4417, 8
      %v4483 = vpop.permute.xlu0 %4482
      %4484 = vrot.lane.b32.xlu0 %v4419, 8
      %v4485 = vpop.permute.xlu0 %4484
      %4486 = vrot.lane.b32.xlu0 %v4422, 8
      %v4487 = vpop.permute.xlu0 %4486
      %4488 = vrot.lane.b32.xlu0 %v4424, 8
      %v4489 = vpop.permute.xlu0 %4488
      %4490 = vrot.lane.b32.xlu0 %v4427, 8
      %v4491 = vpop.permute.xlu0 %4490
      %4492 = vrot.lane.b32.xlu0 %v4429, 8
      %v4493 = vpop.permute.xlu0 %4492
      %4494 = vrot.lane.b32.xlu0 %v4432, 8
      %v4495 = vpop.permute.xlu0 %4494
      %4496 = vrot.lane.b32.xlu0 %v4434, 8
      %v4497 = vpop.permute.xlu0 %4496
      %4498 = vrot.lane.b32.xlu0 %v4437, 8
      %v4499 = vpop.permute.xlu0 %4498
      %4500 = vrot.lane.b32.xlu0 %v4439, 8
      %v4501 = vpop.permute.xlu0 %4500
      %4502 = vrot.lane.b32.xlu0 %v4442, 8
      %v4503 = vpop.permute.xlu0 %4502
      %4504 = vrot.lane.b32.xlu0 %v4444, 8
      %v4505 = vpop.permute.xlu0 %4504
      %4506 = vrot.lane.b32.xlu0 %v4447, 8
      %v4507 = vpop.permute.xlu0 %4506
      %4508 = vrot.lane.b32.xlu0 %v4449, 8
      %v4509 = vpop.permute.xlu0 %4508
      %v4540 = vrot.slane %v4313, 2
      %v4541 = vrot.slane %v4220, 2
      %v4542 = vsel %vm903, %v4540, %v4541
      %v4543 = vrot.slane %v4329, 2
      %v4544 = vsel %vm903, %v4541, %v4543
      %v4545 = vrot.slane %v4314, 2
      %v4546 = vrot.slane %v4223, 2
      %v4547 = vsel %vm903, %v4545, %v4546
      %v4548 = vrot.slane %v4330, 2
      %v4549 = vsel %vm903, %v4546, %v4548
      %v4550 = vrot.slane %v4315, 2
      %v4551 = vrot.slane %v4226, 2
      %v4552 = vsel %vm903, %v4550, %v4551
      %v4553 = vrot.slane %v4331, 2
      %v4554 = vsel %vm903, %v4551, %v4553
      %v4555 = vrot.slane %v4316, 2
      %v4556 = vrot.slane %v4229, 2
      %v4557 = vsel %vm903, %v4555, %v4556
      %v4558 = vrot.slane %v4332, 2
      %v4559 = vsel %vm903, %v4556, %v4558
      %v4560 = vrot.slane %v4317, 2
      %v4561 = vrot.slane %v4232, 2
      %v4562 = vsel %vm903, %v4560, %v4561
      %v4563 = vrot.slane %v4333, 2
      %v4564 = vsel %vm903, %v4561, %v4563
      %v4565 = vrot.slane %v4318, 2
      %v4566 = vrot.slane %v4235, 2
      %v4567 = vsel %vm903, %v4565, %v4566
      %v4568 = vrot.slane %v4334, 2
      %v4569 = vsel %vm903, %v4566, %v4568
      %v4570 = vrot.slane %v4319, 2
      %v4571 = vrot.slane %v4238, 2
      %v4572 = vsel %vm903, %v4570, %v4571
      %v4573 = vrot.slane %v4335, 2
      %v4574 = vsel %vm903, %v4571, %v4573
      %v4575 = vrot.slane %v4320, 2
      %v4576 = vrot.slane %v4241, 2
      %v4577 = vsel %vm903, %v4575, %v4576
      %v4578 = vrot.slane %v4336, 2
      %v4579 = vsel %vm903, %v4576, %v4578
      %v4580 = vrot.slane %v4321, 2
      %v4581 = vrot.slane %v4244, 2
      %v4582 = vsel %vm903, %v4580, %v4581
      %v4583 = vrot.slane %v4337, 2
      %v4584 = vsel %vm903, %v4581, %v4583
      %v4585 = vrot.slane %v4322, 2
      %v4586 = vrot.slane %v4247, 2
      %v4587 = vsel %vm903, %v4585, %v4586
      %v4588 = vrot.slane %v4338, 2
      %v4589 = vsel %vm903, %v4586, %v4588
      %v4590 = vrot.slane %v4323, 2
      %v4591 = vrot.slane %v4250, 2
      %v4592 = vsel %vm903, %v4590, %v4591
      %v4593 = vrot.slane %v4339, 2
      %v4594 = vsel %vm903, %v4591, %v4593
      %v4595 = vrot.slane %v4324, 2
      %v4596 = vrot.slane %v4253, 2
      %v4597 = vsel %vm903, %v4595, %v4596
      %v4598 = vrot.slane %v4340, 2
      %v4599 = vsel %vm903, %v4596, %v4598
      %v4600 = vrot.slane %v4325, 2
      %v4601 = vrot.slane %v4256, 2
      %v4602 = vsel %vm903, %v4600, %v4601
      %v4603 = vrot.slane %v4341, 2
      %v4604 = vsel %vm903, %v4601, %v4603
      %v4605 = vrot.slane %v4326, 2
      %v4606 = vrot.slane %v4259, 2
      %v4607 = vsel %vm903, %v4605, %v4606
      %v4608 = vrot.slane %v4342, 2
      %v4609 = vsel %vm903, %v4606, %v4608
      %v4610 = vrot.slane %v4327, 2
      %v4611 = vrot.slane %v4262, 2
      %v4612 = vsel %vm903, %v4610, %v4611
      %v4613 = vrot.slane %v4343, 2
      %v4614 = vsel %vm903, %v4611, %v4613
      %4615 = vrot.lane.b32.xlu0 %v4542, 16
      %v4616 = vpop.permute.xlu0 %4615
      %4617 = vrot.lane.b32.xlu0 %v4544, 16
      %v4618 = vpop.permute.xlu0 %4617
      %4619 = vrot.lane.b32.xlu0 %v4547, 16
      %v4620 = vpop.permute.xlu0 %4619
      %4621 = vrot.lane.b32.xlu0 %v4549, 16
      %v4622 = vpop.permute.xlu0 %4621
      %4623 = vrot.lane.b32.xlu0 %v4552, 16
      %v4624 = vpop.permute.xlu0 %4623
      %4625 = vrot.lane.b32.xlu0 %v4554, 16
      %v4626 = vpop.permute.xlu0 %4625
      %4627 = vrot.lane.b32.xlu0 %v4557, 16
      %v4628 = vpop.permute.xlu0 %4627
      %4629 = vrot.lane.b32.xlu0 %v4559, 16
      %v4630 = vpop.permute.xlu0 %4629
      %4631 = vrot.lane.b32.xlu0 %v4562, 16
      %v4632 = vpop.permute.xlu0 %4631
      %4633 = vrot.lane.b32.xlu0 %v4564, 16
      %v4634 = vpop.permute.xlu0 %4633
      %4635 = vrot.lane.b32.xlu0 %v4567, 16
      %v4636 = vpop.permute.xlu0 %4635
      %4637 = vrot.lane.b32.xlu0 %v4569, 16
      %v4638 = vpop.permute.xlu0 %4637
      %4639 = vrot.lane.b32.xlu0 %v4572, 16
      %v4640 = vpop.permute.xlu0 %4639
      %4641 = vrot.lane.b32.xlu0 %v4574, 16
      %v4642 = vpop.permute.xlu0 %4641
      %4643 = vrot.lane.b32.xlu0 %v4577, 16
      %v4644 = vpop.permute.xlu0 %4643
      %4645 = vrot.lane.b32.xlu0 %v4579, 16
      %v4646 = vpop.permute.xlu0 %4645
      %4647 = vrot.lane.b32.xlu0 %v4582, 16
      %v4648 = vpop.permute.xlu0 %4647
      %4649 = vrot.lane.b32.xlu0 %v4584, 16
      %v4650 = vpop.permute.xlu0 %4649
      %4651 = vrot.lane.b32.xlu0 %v4587, 16
      %v4652 = vpop.permute.xlu0 %4651
      %4653 = vrot.lane.b32.xlu0 %v4589, 16
      %v4654 = vpop.permute.xlu0 %4653
      %4655 = vrot.lane.b32.xlu0 %v4592, 16
      %v4656 = vpop.permute.xlu0 %4655
      %4657 = vrot.lane.b32.xlu0 %v4594, 16
      %v4658 = vpop.permute.xlu0 %4657
      %4659 = vrot.lane.b32.xlu0 %v4597, 16
      %v4660 = vpop.permute.xlu0 %4659
      %4661 = vrot.lane.b32.xlu0 %v4599, 16
      %v4662 = vpop.permute.xlu0 %4661
      %4663 = vrot.lane.b32.xlu0 %v4602, 16
      %v4664 = vpop.permute.xlu0 %4663
      %4665 = vrot.lane.b32.xlu0 %v4604, 16
      %v4666 = vpop.permute.xlu0 %4665
      %4667 = vrot.lane.b32.xlu0 %v4607, 16
      %v4668 = vpop.permute.xlu0 %4667
      %4669 = vrot.lane.b32.xlu0 %v4609, 16
      %v4670 = vpop.permute.xlu0 %4669
      %4671 = vrot.lane.b32.xlu0 %v4612, 16
      %v4672 = vpop.permute.xlu0 %4671
      %4673 = vrot.lane.b32.xlu0 %v4614, 16
      %v4674 = vpop.permute.xlu0 %4673
      %4706 = vrot.lane.b32.xlu0 %v4313, 24
      %v4707 = vpop.permute.xlu0 %4706
      %4708 = vrot.lane.b32.xlu0 %v4220, 24
      %v4709 = vpop.permute.xlu0 %4708
      %4710 = vrot.lane.b32.xlu0 %v4314, 24
      %v4711 = vpop.permute.xlu0 %4710
      %4712 = vrot.lane.b32.xlu0 %v4223, 24
      %v4713 = vpop.permute.xlu0 %4712
      %4714 = vrot.lane.b32.xlu0 %v4315, 24
      %v4715 = vpop.permute.xlu0 %4714
      %4716 = vrot.lane.b32.xlu0 %v4226, 24
      %v4717 = vpop.permute.xlu0 %4716
      %4718 = vrot.lane.b32.xlu0 %v4316, 24
      %v4719 = vpop.permute.xlu0 %4718
      %4720 = vrot.lane.b32.xlu0 %v4229, 24
      %v4721 = vpop.permute.xlu0 %4720
      %4722 = vrot.lane.b32.xlu0 %v4317, 24
      %v4723 = vpop.permute.xlu0 %4722
      %4724 = vrot.lane.b32.xlu0 %v4232, 24
      %v4725 = vpop.permute.xlu0 %4724
      %4726 = vrot.lane.b32.xlu0 %v4318, 24
      %v4727 = vpop.permute.xlu0 %4726
      %4728 = vrot.lane.b32.xlu0 %v4235, 24
      %v4729 = vpop.permute.xlu0 %4728
      %4730 = vrot.lane.b32.xlu0 %v4319, 24
      %v4731 = vpop.permute.xlu0 %4730
      %4732 = vrot.lane.b32.xlu0 %v4238, 24
      %v4733 = vpop.permute.xlu0 %4732
      %4734 = vrot.lane.b32.xlu0 %v4320, 24
      %v4735 = vpop.permute.xlu0 %4734
      %4736 = vrot.lane.b32.xlu0 %v4241, 24
      %v4737 = vpop.permute.xlu0 %4736
      %4738 = vrot.lane.b32.xlu0 %v4321, 24
      %v4739 = vpop.permute.xlu0 %4738
      %4740 = vrot.lane.b32.xlu0 %v4244, 24
      %v4741 = vpop.permute.xlu0 %4740
      %4742 = vrot.lane.b32.xlu0 %v4322, 24
      %v4743 = vpop.permute.xlu0 %4742
      %4744 = vrot.lane.b32.xlu0 %v4247, 24
      %v4745 = vpop.permute.xlu0 %4744
      %4746 = vrot.lane.b32.xlu0 %v4323, 24
      %v4747 = vpop.permute.xlu0 %4746
      %4748 = vrot.lane.b32.xlu0 %v4250, 24
      %v4749 = vpop.permute.xlu0 %4748
      %4750 = vrot.lane.b32.xlu0 %v4324, 24
      %v4751 = vpop.permute.xlu0 %4750
      %4752 = vrot.lane.b32.xlu0 %v4253, 24
      %v4753 = vpop.permute.xlu0 %4752
      %4754 = vrot.lane.b32.xlu0 %v4325, 24
      %v4755 = vpop.permute.xlu0 %4754
      %4756 = vrot.lane.b32.xlu0 %v4256, 24
      %v4757 = vpop.permute.xlu0 %4756
      %4758 = vrot.lane.b32.xlu0 %v4326, 24
      %v4759 = vpop.permute.xlu0 %4758
      %4760 = vrot.lane.b32.xlu0 %v4259, 24
      %v4761 = vpop.permute.xlu0 %4760
      %4762 = vrot.lane.b32.xlu0 %v4327, 24
      %v4763 = vpop.permute.xlu0 %4762
      %4764 = vrot.lane.b32.xlu0 %v4262, 24
      %v4765 = vpop.permute.xlu0 %4764
      %4766 = vrot.lane.b32.xlu0 %v4328, 24
      %v4767 = vpop.permute.xlu0 %4766
      %4768 = vrot.lane.b32.xlu0 %v4265, 24
      %v4769 = vpop.permute.xlu0 %4768
      %v4803 = vrot.slane %v4328, 1
      %v4804 = vrot.slane %v4265, 1
      %v4805 = vsel %vm726, %v4803, %v4804
      %v4806 = vrot.slane %v4344, 1
      %v4807 = vsel %vm726, %v4804, %v4806
      %4808 = vrot.lane.b32.xlu0 %v4377, 32
      %v4809 = vpop.permute.xlu0 %4808
      %4810 = vrot.lane.b32.xlu0 %v4379, 32
      %v4811 = vpop.permute.xlu0 %4810
      %4812 = vrot.lane.b32.xlu0 %v4382, 32
      %v4813 = vpop.permute.xlu0 %4812
      %4814 = vrot.lane.b32.xlu0 %v4384, 32
      %v4815 = vpop.permute.xlu0 %4814
      %4816 = vrot.lane.b32.xlu0 %v4387, 32
      %v4817 = vpop.permute.xlu0 %4816
      %4818 = vrot.lane.b32.xlu0 %v4389, 32
      %v4819 = vpop.permute.xlu0 %4818
      %4820 = vrot.lane.b32.xlu0 %v4392, 32
      %v4821 = vpop.permute.xlu0 %4820
      %4822 = vrot.lane.b32.xlu0 %v4394, 32
      %v4823 = vpop.permute.xlu0 %4822
      %4824 = vrot.lane.b32.xlu0 %v4397, 32
      %v4825 = vpop.permute.xlu0 %4824
      %4826 = vrot.lane.b32.xlu0 %v4399, 32
      %v4827 = vpop.permute.xlu0 %4826
      %4828 = vrot.lane.b32.xlu0 %v4402, 32
      %v4829 = vpop.permute.xlu0 %4828
      %4830 = vrot.lane.b32.xlu0 %v4404, 32
      %v4831 = vpop.permute.xlu0 %4830
      %4832 = vrot.lane.b32.xlu0 %v4407, 32
      %v4833 = vpop.permute.xlu0 %4832
      %4834 = vrot.lane.b32.xlu0 %v4409, 32
      %v4835 = vpop.permute.xlu0 %4834
      %4836 = vrot.lane.b32.xlu0 %v4412, 32
      %v4837 = vpop.permute.xlu0 %4836
      %4838 = vrot.lane.b32.xlu0 %v4414, 32
      %v4839 = vpop.permute.xlu0 %4838
      %4840 = vrot.lane.b32.xlu0 %v4417, 32
      %v4841 = vpop.permute.xlu0 %4840
      %4842 = vrot.lane.b32.xlu0 %v4419, 32
      %v4843 = vpop.permute.xlu0 %4842
      %4844 = vrot.lane.b32.xlu0 %v4422, 32
      %v4845 = vpop.permute.xlu0 %4844
      %4846 = vrot.lane.b32.xlu0 %v4424, 32
      %v4847 = vpop.permute.xlu0 %4846
      %4848 = vrot.lane.b32.xlu0 %v4427, 32
      %v4849 = vpop.permute.xlu0 %4848
      %4850 = vrot.lane.b32.xlu0 %v4429, 32
      %v4851 = vpop.permute.xlu0 %4850
      %4852 = vrot.lane.b32.xlu0 %v4432, 32
      %v4853 = vpop.permute.xlu0 %4852
      %4854 = vrot.lane.b32.xlu0 %v4434, 32
      %v4855 = vpop.permute.xlu0 %4854
      %4856 = vrot.lane.b32.xlu0 %v4437, 32
      %v4857 = vpop.permute.xlu0 %4856
      %4858 = vrot.lane.b32.xlu0 %v4439, 32
      %v4859 = vpop.permute.xlu0 %4858
      %4860 = vrot.lane.b32.xlu0 %v4442, 32
      %v4861 = vpop.permute.xlu0 %4860
      %4862 = vrot.lane.b32.xlu0 %v4444, 32
      %v4863 = vpop.permute.xlu0 %4862
      %4864 = vrot.lane.b32.xlu0 %v4447, 32
      %v4865 = vpop.permute.xlu0 %4864
      %4866 = vrot.lane.b32.xlu0 %v4449, 32
      %v4867 = vpop.permute.xlu0 %4866
      %4868 = vrot.lane.b32.xlu0 %v4805, 32
      %v4869 = vpop.permute.xlu0 %4868
      %4870 = vrot.lane.b32.xlu0 %v4807, 32
      %v4871 = vpop.permute.xlu0 %4870
      %v4904 = vrot.slane %v4328, 2
      %v4905 = vrot.slane %v4265, 2
      %v4906 = vsel %vm903, %v4904, %v4905
      %v4907 = vrot.slane %v4344, 2
      %v4908 = vsel %vm903, %v4905, %v4907
      %4909 = vrot.lane.b32.xlu0 %v4542, 40
      %v4910 = vpop.permute.xlu0 %4909
      %4911 = vrot.lane.b32.xlu0 %v4544, 40
      %v4912 = vpop.permute.xlu0 %4911
      %4913 = vrot.lane.b32.xlu0 %v4547, 40
      %v4914 = vpop.permute.xlu0 %4913
      %4915 = vrot.lane.b32.xlu0 %v4549, 40
      %v4916 = vpop.permute.xlu0 %4915
      %4917 = vrot.lane.b32.xlu0 %v4552, 40
      %v4918 = vpop.permute.xlu0 %4917
      %4919 = vrot.lane.b32.xlu0 %v4554, 40
      %v4920 = vpop.permute.xlu0 %4919
      %4921 = vrot.lane.b32.xlu0 %v4557, 40
      %v4922 = vpop.permute.xlu0 %4921
      %4923 = vrot.lane.b32.xlu0 %v4559, 40
      %v4924 = vpop.permute.xlu0 %4923
      %4925 = vrot.lane.b32.xlu0 %v4562, 40
      %v4926 = vpop.permute.xlu0 %4925
      %4927 = vrot.lane.b32.xlu0 %v4564, 40
      %v4928 = vpop.permute.xlu0 %4927
      %4929 = vrot.lane.b32.xlu0 %v4567, 40
      %v4930 = vpop.permute.xlu0 %4929
      %4931 = vrot.lane.b32.xlu0 %v4569, 40
      %v4932 = vpop.permute.xlu0 %4931
      %4933 = vrot.lane.b32.xlu0 %v4572, 40
      %v4934 = vpop.permute.xlu0 %4933
      %4935 = vrot.lane.b32.xlu0 %v4574, 40
      %v4936 = vpop.permute.xlu0 %4935
      %4937 = vrot.lane.b32.xlu0 %v4577, 40
      %v4938 = vpop.permute.xlu0 %4937
      %4939 = vrot.lane.b32.xlu0 %v4579, 40
      %v4940 = vpop.permute.xlu0 %4939
      %4941 = vrot.lane.b32.xlu0 %v4582, 40
      %v4942 = vpop.permute.xlu0 %4941
      %4943 = vrot.lane.b32.xlu0 %v4584, 40
      %v4944 = vpop.permute.xlu0 %4943
      %4945 = vrot.lane.b32.xlu0 %v4587, 40
      %v4946 = vpop.permute.xlu0 %4945
      %4947 = vrot.lane.b32.xlu0 %v4589, 40
      %v4948 = vpop.permute.xlu0 %4947
      %4949 = vrot.lane.b32.xlu0 %v4592, 40
      %v4950 = vpop.permute.xlu0 %4949
      %4951 = vrot.lane.b32.xlu0 %v4594, 40
      %v4952 = vpop.permute.xlu0 %4951
      %4953 = vrot.lane.b32.xlu0 %v4597, 40
      %v4954 = vpop.permute.xlu0 %4953
      %4955 = vrot.lane.b32.xlu0 %v4599, 40
      %v4956 = vpop.permute.xlu0 %4955
      %4957 = vrot.lane.b32.xlu0 %v4602, 40
      %v4958 = vpop.permute.xlu0 %4957
      %4959 = vrot.lane.b32.xlu0 %v4604, 40
      %v4960 = vpop.permute.xlu0 %4959
      %4961 = vrot.lane.b32.xlu0 %v4607, 40
      %v4962 = vpop.permute.xlu0 %4961
      %4963 = vrot.lane.b32.xlu0 %v4609, 40
      %v4964 = vpop.permute.xlu0 %4963
      %4965 = vrot.lane.b32.xlu0 %v4612, 40
      %v4966 = vpop.permute.xlu0 %4965
      %4967 = vrot.lane.b32.xlu0 %v4614, 40
      %v4968 = vpop.permute.xlu0 %4967
      %4969 = vrot.lane.b32.xlu0 %v4906, 40
      %v4970 = vpop.permute.xlu0 %4969
      %4971 = vrot.lane.b32.xlu0 %v4908, 40
      %v4972 = vpop.permute.xlu0 %4971
      %5005 = vrot.lane.b32.xlu0 %v4314, 48
      %v5006 = vpop.permute.xlu0 %5005
      %5007 = vrot.lane.b32.xlu0 %v4223, 48
      %v5008 = vpop.permute.xlu0 %5007
      %5009 = vrot.lane.b32.xlu0 %v4315, 48
      %v5010 = vpop.permute.xlu0 %5009
      %5011 = vrot.lane.b32.xlu0 %v4226, 48
      %v5012 = vpop.permute.xlu0 %5011
      %5013 = vrot.lane.b32.xlu0 %v4316, 48
      %v5014 = vpop.permute.xlu0 %5013
      %5015 = vrot.lane.b32.xlu0 %v4229, 48
      %v5016 = vpop.permute.xlu0 %5015
      %5017 = vrot.lane.b32.xlu0 %v4317, 48
      %v5018 = vpop.permute.xlu0 %5017
      %5019 = vrot.lane.b32.xlu0 %v4232, 48
      %v5020 = vpop.permute.xlu0 %5019
      %5021 = vrot.lane.b32.xlu0 %v4318, 48
      %v5022 = vpop.permute.xlu0 %5021
      %5023 = vrot.lane.b32.xlu0 %v4235, 48
      %v5024 = vpop.permute.xlu0 %5023
      %5025 = vrot.lane.b32.xlu0 %v4319, 48
      %v5026 = vpop.permute.xlu0 %5025
      %5027 = vrot.lane.b32.xlu0 %v4238, 48
      %v5028 = vpop.permute.xlu0 %5027
      %5029 = vrot.lane.b32.xlu0 %v4320, 48
      %v5030 = vpop.permute.xlu0 %5029
      %5031 = vrot.lane.b32.xlu0 %v4241, 48
      %v5032 = vpop.permute.xlu0 %5031
      %5033 = vrot.lane.b32.xlu0 %v4321, 48
      %v5034 = vpop.permute.xlu0 %5033
      %5035 = vrot.lane.b32.xlu0 %v4244, 48
      %v5036 = vpop.permute.xlu0 %5035
      %5037 = vrot.lane.b32.xlu0 %v4322, 48
      %v5038 = vpop.permute.xlu0 %5037
      %5039 = vrot.lane.b32.xlu0 %v4247, 48
      %v5040 = vpop.permute.xlu0 %5039
      %5041 = vrot.lane.b32.xlu0 %v4323, 48
      %v5042 = vpop.permute.xlu0 %5041
      %5043 = vrot.lane.b32.xlu0 %v4250, 48
      %v5044 = vpop.permute.xlu0 %5043
      %5045 = vrot.lane.b32.xlu0 %v4324, 48
      %v5046 = vpop.permute.xlu0 %5045
      %5047 = vrot.lane.b32.xlu0 %v4253, 48
      %v5048 = vpop.permute.xlu0 %5047
      %5049 = vrot.lane.b32.xlu0 %v4325, 48
      %v5050 = vpop.permute.xlu0 %5049
      %5051 = vrot.lane.b32.xlu0 %v4256, 48
      %v5052 = vpop.permute.xlu0 %5051
      %5053 = vrot.lane.b32.xlu0 %v4326, 48
      %v5054 = vpop.permute.xlu0 %5053
      %5055 = vrot.lane.b32.xlu0 %v4259, 48
      %v5056 = vpop.permute.xlu0 %5055
      %5057 = vrot.lane.b32.xlu0 %v4327, 48
      %v5058 = vpop.permute.xlu0 %5057
      %5059 = vrot.lane.b32.xlu0 %v4262, 48
      %v5060 = vpop.permute.xlu0 %5059
      %5061 = vrot.lane.b32.xlu0 %v4328, 48
      %v5062 = vpop.permute.xlu0 %5061
      %5063 = vrot.lane.b32.xlu0 %v4265, 48
      %v5064 = vpop.permute.xlu0 %5063
      %5095 = vrot.lane.b32.xlu0 %v4382, 56
      %v5096 = vpop.permute.xlu0 %5095
      %5097 = vrot.lane.b32.xlu0 %v4384, 56
      %v5098 = vpop.permute.xlu0 %5097
      %5099 = vrot.lane.b32.xlu0 %v4387, 56
      %v5100 = vpop.permute.xlu0 %5099
      %5101 = vrot.lane.b32.xlu0 %v4389, 56
      %v5102 = vpop.permute.xlu0 %5101
      %5103 = vrot.lane.b32.xlu0 %v4392, 56
      %v5104 = vpop.permute.xlu0 %5103
      %5105 = vrot.lane.b32.xlu0 %v4394, 56
      %v5106 = vpop.permute.xlu0 %5105
      %5107 = vrot.lane.b32.xlu0 %v4397, 56
      %v5108 = vpop.permute.xlu0 %5107
      %5109 = vrot.lane.b32.xlu0 %v4399, 56
      %v5110 = vpop.permute.xlu0 %5109
      %5111 = vrot.lane.b32.xlu0 %v4402, 56
      %v5112 = vpop.permute.xlu0 %5111
      %5113 = vrot.lane.b32.xlu0 %v4404, 56
      %v5114 = vpop.permute.xlu0 %5113
      %5115 = vrot.lane.b32.xlu0 %v4407, 56
      %v5116 = vpop.permute.xlu0 %5115
      %5117 = vrot.lane.b32.xlu0 %v4409, 56
      %v5118 = vpop.permute.xlu0 %5117
      %5119 = vrot.lane.b32.xlu0 %v4412, 56
      %v5120 = vpop.permute.xlu0 %5119
      %5121 = vrot.lane.b32.xlu0 %v4414, 56
      %v5122 = vpop.permute.xlu0 %5121
      %5123 = vrot.lane.b32.xlu0 %v4417, 56
      %v5124 = vpop.permute.xlu0 %5123
      %5125 = vrot.lane.b32.xlu0 %v4419, 56
      %v5126 = vpop.permute.xlu0 %5125
      %5127 = vrot.lane.b32.xlu0 %v4422, 56
      %v5128 = vpop.permute.xlu0 %5127
      %5129 = vrot.lane.b32.xlu0 %v4424, 56
      %v5130 = vpop.permute.xlu0 %5129
      %5131 = vrot.lane.b32.xlu0 %v4427, 56
      %v5132 = vpop.permute.xlu0 %5131
      %5133 = vrot.lane.b32.xlu0 %v4429, 56
      %v5134 = vpop.permute.xlu0 %5133
      %5135 = vrot.lane.b32.xlu0 %v4432, 56
      %v5136 = vpop.permute.xlu0 %5135
      %5137 = vrot.lane.b32.xlu0 %v4434, 56
      %v5138 = vpop.permute.xlu0 %5137
      %5139 = vrot.lane.b32.xlu0 %v4437, 56
      %v5140 = vpop.permute.xlu0 %5139
      %5141 = vrot.lane.b32.xlu0 %v4439, 56
      %v5142 = vpop.permute.xlu0 %5141
      %5143 = vrot.lane.b32.xlu0 %v4442, 56
      %v5144 = vpop.permute.xlu0 %5143
      %5145 = vrot.lane.b32.xlu0 %v4444, 56
      %v5146 = vpop.permute.xlu0 %5145
      %5147 = vrot.lane.b32.xlu0 %v4447, 56
      %v5148 = vpop.permute.xlu0 %5147
      %5149 = vrot.lane.b32.xlu0 %v4449, 56
      %v5150 = vpop.permute.xlu0 %5149
      %5151 = vrot.lane.b32.xlu0 %v4805, 56
      %v5152 = vpop.permute.xlu0 %5151
      %5153 = vrot.lane.b32.xlu0 %v4807, 56
      %v5154 = vpop.permute.xlu0 %5153
      %5185 = vrot.lane.b32.xlu0 %v4547, 64
      %v5186 = vpop.permute.xlu0 %5185
      %5187 = vrot.lane.b32.xlu0 %v4549, 64
      %v5188 = vpop.permute.xlu0 %5187
      %5189 = vrot.lane.b32.xlu0 %v4552, 64
      %v5190 = vpop.permute.xlu0 %5189
      %5191 = vrot.lane.b32.xlu0 %v4554, 64
      %v5192 = vpop.permute.xlu0 %5191
      %5193 = vrot.lane.b32.xlu0 %v4557, 64
      %v5194 = vpop.permute.xlu0 %5193
      %5195 = vrot.lane.b32.xlu0 %v4559, 64
      %v5196 = vpop.permute.xlu0 %5195
      %5197 = vrot.lane.b32.xlu0 %v4562, 64
      %v5198 = vpop.permute.xlu0 %5197
      %5199 = vrot.lane.b32.xlu0 %v4564, 64
      %v5200 = vpop.permute.xlu0 %5199
      %5201 = vrot.lane.b32.xlu0 %v4567, 64
      %v5202 = vpop.permute.xlu0 %5201
      %5203 = vrot.lane.b32.xlu0 %v4569, 64
      %v5204 = vpop.permute.xlu0 %5203
      %5205 = vrot.lane.b32.xlu0 %v4572, 64
      %v5206 = vpop.permute.xlu0 %5205
      %5207 = vrot.lane.b32.xlu0 %v4574, 64
      %v5208 = vpop.permute.xlu0 %5207
      %5209 = vrot.lane.b32.xlu0 %v4577, 64
      %v5210 = vpop.permute.xlu0 %5209
      %5211 = vrot.lane.b32.xlu0 %v4579, 64
      %v5212 = vpop.permute.xlu0 %5211
      %5213 = vrot.lane.b32.xlu0 %v4582, 64
      %v5214 = vpop.permute.xlu0 %5213
      %5215 = vrot.lane.b32.xlu0 %v4584, 64
      %v5216 = vpop.permute.xlu0 %5215
      %5217 = vrot.lane.b32.xlu0 %v4587, 64
      %v5218 = vpop.permute.xlu0 %5217
      %5219 = vrot.lane.b32.xlu0 %v4589, 64
      %v5220 = vpop.permute.xlu0 %5219
      %5221 = vrot.lane.b32.xlu0 %v4592, 64
      %v5222 = vpop.permute.xlu0 %5221
      %5223 = vrot.lane.b32.xlu0 %v4594, 64
      %v5224 = vpop.permute.xlu0 %5223
      %5225 = vrot.lane.b32.xlu0 %v4597, 64
      %v5226 = vpop.permute.xlu0 %5225
      %5227 = vrot.lane.b32.xlu0 %v4599, 64
      %v5228 = vpop.permute.xlu0 %5227
      %5229 = vrot.lane.b32.xlu0 %v4602, 64
      %v5230 = vpop.permute.xlu0 %5229
      %5231 = vrot.lane.b32.xlu0 %v4604, 64
      %v5232 = vpop.permute.xlu0 %5231
      %5233 = vrot.lane.b32.xlu0 %v4607, 64
      %v5234 = vpop.permute.xlu0 %5233
      %5235 = vrot.lane.b32.xlu0 %v4609, 64
      %v5236 = vpop.permute.xlu0 %5235
      %5237 = vrot.lane.b32.xlu0 %v4612, 64
      %v5238 = vpop.permute.xlu0 %5237
      %5239 = vrot.lane.b32.xlu0 %v4614, 64
      %v5240 = vpop.permute.xlu0 %5239
      %5241 = vrot.lane.b32.xlu0 %v4906, 64
      %v5242 = vpop.permute.xlu0 %5241
      %5243 = vrot.lane.b32.xlu0 %v4908, 64
      %v5244 = vpop.permute.xlu0 %5243
      %v5275 = vsel %vm1668, %v4313, %v4451
      %v5276 = vsel %vm1668, %v4220, %v4453
      %v5277 = vsel %vm1668, %v4314, %v4455
      %v5278 = vsel %vm1668, %v4223, %v4457
      %v5279 = vsel %vm1668, %v4315, %v4459
      %v5280 = vsel %vm1668, %v4226, %v4461
      %v5281 = vsel %vm1668, %v4316, %v4463
      %v5282 = vsel %vm1668, %v4229, %v4465
      %v5283 = vsel %vm1668, %v4317, %v4467
      %v5284 = vsel %vm1668, %v4232, %v4469
      %v5285 = vsel %vm1668, %v4318, %v4471
      %v5286 = vsel %vm1668, %v4235, %v4473
      %v5287 = vsel %vm1668, %v4319, %v4475
      %v5288 = vsel %vm1668, %v4238, %v4477
      %v5289 = vsel %vm1668, %v4320, %v4479
      %v5290 = vsel %vm1668, %v4241, %v4481
      %v5291 = vsel %vm1668, %v4321, %v4483
      %v5292 = vsel %vm1668, %v4244, %v4485
      %v5293 = vsel %vm1668, %v4322, %v4487
      %v5294 = vsel %vm1668, %v4247, %v4489
      %v5295 = vsel %vm1668, %v4323, %v4491
      %v5296 = vsel %vm1668, %v4250, %v4493
      %v5297 = vsel %vm1668, %v4324, %v4495
      %v5298 = vsel %vm1668, %v4253, %v4497
      %v5299 = vsel %vm1668, %v4325, %v4499
      %v5300 = vsel %vm1668, %v4256, %v4501
      %v5301 = vsel %vm1668, %v4326, %v4503
      %v5302 = vsel %vm1668, %v4259, %v4505
      %v5303 = vsel %vm1668, %v4327, %v4507
      %v5304 = vsel %vm1668, %v4262, %v4509
      %v5305 = vsel %vm1701, %v5275, %v4616
      %v5306 = vsel %vm1701, %v5276, %v4618
      %v5307 = vsel %vm1701, %v5277, %v4620
      %v5308 = vsel %vm1701, %v5278, %v4622
      %v5309 = vsel %vm1701, %v5279, %v4624
      %v5310 = vsel %vm1701, %v5280, %v4626
      %v5311 = vsel %vm1701, %v5281, %v4628
      %v5312 = vsel %vm1701, %v5282, %v4630
      %v5313 = vsel %vm1701, %v5283, %v4632
      %v5314 = vsel %vm1701, %v5284, %v4634
      %v5315 = vsel %vm1701, %v5285, %v4636
      %v5316 = vsel %vm1701, %v5286, %v4638
      %v5317 = vsel %vm1701, %v5287, %v4640
      %v5318 = vsel %vm1701, %v5288, %v4642
      %v5319 = vsel %vm1701, %v5289, %v4644
      %v5320 = vsel %vm1701, %v5290, %v4646
      %v5321 = vsel %vm1701, %v5291, %v4648
      %v5322 = vsel %vm1701, %v5292, %v4650
      %v5323 = vsel %vm1701, %v5293, %v4652
      %v5324 = vsel %vm1701, %v5294, %v4654
      %v5325 = vsel %vm1701, %v5295, %v4656
      %v5326 = vsel %vm1701, %v5296, %v4658
      %v5327 = vsel %vm1701, %v5297, %v4660
      %v5328 = vsel %vm1701, %v5298, %v4662
      %v5329 = vsel %vm1701, %v5299, %v4664
      %v5330 = vsel %vm1701, %v5300, %v4666
      %v5331 = vsel %vm1701, %v5301, %v4668
      %v5332 = vsel %vm1701, %v5302, %v4670
      %v5333 = vsel %vm1701, %v5303, %v4672
      %v5334 = vsel %vm1701, %v5304, %v4674
      %v5335 = vsel %vm1734, %v1702, %v4707
      %v5336 = vsel %vm1734, %v1703, %v4709
      %v5337 = vsel %vm1734, %v5305, %v4711
      %v5338 = vsel %vm1734, %v5306, %v4713
      %v5339 = vsel %vm1734, %v5307, %v4715
      %v5340 = vsel %vm1734, %v5308, %v4717
      %v5341 = vsel %vm1734, %v5309, %v4719
      %v5342 = vsel %vm1734, %v5310, %v4721
      %v5343 = vsel %vm1734, %v5311, %v4723
      %v5344 = vsel %vm1734, %v5312, %v4725
      %v5345 = vsel %vm1734, %v5313, %v4727
      %v5346 = vsel %vm1734, %v5314, %v4729
      %v5347 = vsel %vm1734, %v5315, %v4731
      %v5348 = vsel %vm1734, %v5316, %v4733
      %v5349 = vsel %vm1734, %v5317, %v4735
      %v5350 = vsel %vm1734, %v5318, %v4737
      %v5351 = vsel %vm1734, %v5319, %v4739
      %v5352 = vsel %vm1734, %v5320, %v4741
      %v5353 = vsel %vm1734, %v5321, %v4743
      %v5354 = vsel %vm1734, %v5322, %v4745
      %v5355 = vsel %vm1734, %v5323, %v4747
      %v5356 = vsel %vm1734, %v5324, %v4749
      %v5357 = vsel %vm1734, %v5325, %v4751
      %v5358 = vsel %vm1734, %v5326, %v4753
      %v5359 = vsel %vm1734, %v5327, %v4755
      %v5360 = vsel %vm1734, %v5328, %v4757
      %v5361 = vsel %vm1734, %v5329, %v4759
      %v5362 = vsel %vm1734, %v5330, %v4761
      %v5363 = vsel %vm1734, %v5331, %v4763
      %v5364 = vsel %vm1734, %v5332, %v4765
      %v5365 = vsel %vm1734, %v5333, %v4767
      %v5366 = vsel %vm1734, %v5334, %v4769
      %v5367 = vsel %vm1767, %v5335, %v4809
      %v5368 = vsel %vm1767, %v5336, %v4811
      %v5369 = vsel %vm1767, %v5337, %v4813
      %v5370 = vsel %vm1767, %v5338, %v4815
      %v5371 = vsel %vm1767, %v5339, %v4817
      %v5372 = vsel %vm1767, %v5340, %v4819
      %v5373 = vsel %vm1767, %v5341, %v4821
      %v5374 = vsel %vm1767, %v5342, %v4823
      %v5375 = vsel %vm1767, %v5343, %v4825
      %v5376 = vsel %vm1767, %v5344, %v4827
      %v5377 = vsel %vm1767, %v5345, %v4829
      %v5378 = vsel %vm1767, %v5346, %v4831
      %v5379 = vsel %vm1767, %v5347, %v4833
      %v5380 = vsel %vm1767, %v5348, %v4835
      %v5381 = vsel %vm1767, %v5349, %v4837
      %v5382 = vsel %vm1767, %v5350, %v4839
      %v5383 = vsel %vm1767, %v5351, %v4841
      %v5384 = vsel %vm1767, %v5352, %v4843
      %v5385 = vsel %vm1767, %v5353, %v4845
      %v5386 = vsel %vm1767, %v5354, %v4847
      %v5387 = vsel %vm1767, %v5355, %v4849
      %v5388 = vsel %vm1767, %v5356, %v4851
      %v5389 = vsel %vm1767, %v5357, %v4853
      %v5390 = vsel %vm1767, %v5358, %v4855
      %v5391 = vsel %vm1767, %v5359, %v4857
      %v5392 = vsel %vm1767, %v5360, %v4859
      %v5393 = vsel %vm1767, %v5361, %v4861
      %v5394 = vsel %vm1767, %v5362, %v4863
      %v5395 = vsel %vm1767, %v5363, %v4865
      %v5396 = vsel %vm1767, %v5364, %v4867
      %v5397 = vsel %vm1767, %v5365, %v4869
      %v5398 = vsel %vm1767, %v5366, %v4871
      %v5399 = vsel %vm1800, %v5367, %v4910
      %v5400 = vsel %vm1800, %v5368, %v4912
      %v5401 = vsel %vm1800, %v5369, %v4914
      %v5402 = vsel %vm1800, %v5370, %v4916
      %v5403 = vsel %vm1800, %v5371, %v4918
      %v5404 = vsel %vm1800, %v5372, %v4920
      %v5405 = vsel %vm1800, %v5373, %v4922
      %v5406 = vsel %vm1800, %v5374, %v4924
      %v5407 = vsel %vm1800, %v5375, %v4926
      %v5408 = vsel %vm1800, %v5376, %v4928
      %v5409 = vsel %vm1800, %v5377, %v4930
      %v5410 = vsel %vm1800, %v5378, %v4932
      %v5411 = vsel %vm1800, %v5379, %v4934
      %v5412 = vsel %vm1800, %v5380, %v4936
      %v5413 = vsel %vm1800, %v5381, %v4938
      %v5414 = vsel %vm1800, %v5382, %v4940
      %v5415 = vsel %vm1800, %v5383, %v4942
      %v5416 = vsel %vm1800, %v5384, %v4944
      %v5417 = vsel %vm1800, %v5385, %v4946
      %v5418 = vsel %vm1800, %v5386, %v4948
      %v5419 = vsel %vm1800, %v5387, %v4950
      %v5420 = vsel %vm1800, %v5388, %v4952
      %v5421 = vsel %vm1800, %v5389, %v4954
      %v5422 = vsel %vm1800, %v5390, %v4956
      %v5423 = vsel %vm1800, %v5391, %v4958
      %v5424 = vsel %vm1800, %v5392, %v4960
      %v5425 = vsel %vm1800, %v5393, %v4962
      %v5426 = vsel %vm1800, %v5394, %v4964
      %v5427 = vsel %vm1800, %v5395, %v4966
      %v5428 = vsel %vm1800, %v5396, %v4968
      %v5429 = vsel %vm1800, %v5397, %v4970
      %v5430 = vsel %vm1800, %v5398, %v4972
      %v5431 = vsel %vm1833, %v5399, %v5006
      %v5432 = vsel %vm1833, %v5400, %v5008
      %v5433 = vsel %vm1833, %v5401, %v5010
      %v5434 = vsel %vm1833, %v5402, %v5012
      %v5435 = vsel %vm1833, %v5403, %v5014
      %v5436 = vsel %vm1833, %v5404, %v5016
      %v5437 = vsel %vm1833, %v5405, %v5018
      %v5438 = vsel %vm1833, %v5406, %v5020
      %v5439 = vsel %vm1833, %v5407, %v5022
      %v5440 = vsel %vm1833, %v5408, %v5024
      %v5441 = vsel %vm1833, %v5409, %v5026
      %v5442 = vsel %vm1833, %v5410, %v5028
      %v5443 = vsel %vm1833, %v5411, %v5030
      %v5444 = vsel %vm1833, %v5412, %v5032
      %v5445 = vsel %vm1833, %v5413, %v5034
      %v5446 = vsel %vm1833, %v5414, %v5036
      %v5447 = vsel %vm1833, %v5415, %v5038
      %v5448 = vsel %vm1833, %v5416, %v5040
      %v5449 = vsel %vm1833, %v5417, %v5042
      %v5450 = vsel %vm1833, %v5418, %v5044
      %v5451 = vsel %vm1833, %v5419, %v5046
      %v5452 = vsel %vm1833, %v5420, %v5048
      %v5453 = vsel %vm1833, %v5421, %v5050
      %v5454 = vsel %vm1833, %v5422, %v5052
      %v5455 = vsel %vm1833, %v5423, %v5054
      %v5456 = vsel %vm1833, %v5424, %v5056
      %v5457 = vsel %vm1833, %v5425, %v5058
      %v5458 = vsel %vm1833, %v5426, %v5060
      %v5459 = vsel %vm1833, %v5427, %v5062
      %v5460 = vsel %vm1833, %v5428, %v5064
      %v5461 = vsel %vm1833, %v5429, %v1441
      %v5462 = vsel %vm1833, %v5430, %v1443
      %v5463 = vsel %vm1866, %v5431, %v5096
      %v5464 = vsel %vm1866, %v5432, %v5098
      %v5465 = vsel %vm1866, %v5433, %v5100
      %v5466 = vsel %vm1866, %v5434, %v5102
      %v5467 = vsel %vm1866, %v5435, %v5104
      %v5468 = vsel %vm1866, %v5436, %v5106
      %v5469 = vsel %vm1866, %v5437, %v5108
      %v5470 = vsel %vm1866, %v5438, %v5110
      %v5471 = vsel %vm1866, %v5439, %v5112
      %v5472 = vsel %vm1866, %v5440, %v5114
      %v5473 = vsel %vm1866, %v5441, %v5116
      %v5474 = vsel %vm1866, %v5442, %v5118
      %v5475 = vsel %vm1866, %v5443, %v5120
      %v5476 = vsel %vm1866, %v5444, %v5122
      %v5477 = vsel %vm1866, %v5445, %v5124
      %v5478 = vsel %vm1866, %v5446, %v5126
      %v5479 = vsel %vm1866, %v5447, %v5128
      %v5480 = vsel %vm1866, %v5448, %v5130
      %v5481 = vsel %vm1866, %v5449, %v5132
      %v5482 = vsel %vm1866, %v5450, %v5134
      %v5483 = vsel %vm1866, %v5451, %v5136
      %v5484 = vsel %vm1866, %v5452, %v5138
      %v5485 = vsel %vm1866, %v5453, %v5140
      %v5486 = vsel %vm1866, %v5454, %v5142
      %v5487 = vsel %vm1866, %v5455, %v5144
      %v5488 = vsel %vm1866, %v5456, %v5146
      %v5489 = vsel %vm1866, %v5457, %v5148
      %v5490 = vsel %vm1866, %v5458, %v5150
      %v5491 = vsel %vm1866, %v5459, %v5152
      %v5492 = vsel %vm1866, %v5460, %v5154
      %v5493 = vsel %vm1866, %v5461, %v1537
      %v5494 = vsel %vm1866, %v5462, %v1539
      %v5495 = vsel %vm1899, %v5463, %v5186
      %v5496 = vsel %vm1899, %v5464, %v5188
      %v5497 = vsel %vm1899, %v5465, %v5190
      %v5498 = vsel %vm1899, %v5466, %v5192
      %v5499 = vsel %vm1899, %v5467, %v5194
      %v5500 = vsel %vm1899, %v5468, %v5196
      %v5501 = vsel %vm1899, %v5469, %v5198
      %v5502 = vsel %vm1899, %v5470, %v5200
      %v5503 = vsel %vm1899, %v5471, %v5202
      %v5504 = vsel %vm1899, %v5472, %v5204
      %v5505 = vsel %vm1899, %v5473, %v5206
      %v5506 = vsel %vm1899, %v5474, %v5208
      %v5507 = vsel %vm1899, %v5475, %v5210
      %v5508 = vsel %vm1899, %v5476, %v5212
      %v5509 = vsel %vm1899, %v5477, %v5214
      %v5510 = vsel %vm1899, %v5478, %v5216
      %v5511 = vsel %vm1899, %v5479, %v5218
      %v5512 = vsel %vm1899, %v5480, %v5220
      %v5513 = vsel %vm1899, %v5481, %v5222
      %v5514 = vsel %vm1899, %v5482, %v5224
      %v5515 = vsel %vm1899, %v5483, %v5226
      %v5516 = vsel %vm1899, %v5484, %v5228
      %v5517 = vsel %vm1899, %v5485, %v5230
      %v5518 = vsel %vm1899, %v5486, %v5232
      %v5519 = vsel %vm1899, %v5487, %v5234
      %v5520 = vsel %vm1899, %v5488, %v5236
      %v5521 = vsel %vm1899, %v5489, %v5238
      %v5522 = vsel %vm1899, %v5490, %v5240
      %v5523 = vsel %vm1899, %v5491, %v5242
      %v5524 = vsel %vm1899, %v5492, %v5244
      %v5525 = vsel %vm1899, %v5493, %v1633
      %v5526 = vsel %vm1899, %v5494, %v1635
      %v5527 = vld [vmem:[%s7] sm:$0xff]
      %v5528 = vld [vmem:[%s7 + $0x8] sm:$0xff]
      %v5529 = vld [vmem:[%s7 + $0x10] sm:$0xff]
      %v5530 = vld [vmem:[%s7 + $0x18] sm:$0xff]
      %v5531 = vld [vmem:[%s7 + $0x20] sm:$0xff]
      %v5532 = vld [vmem:[%s7 + $0x28] sm:$0xff]
      %v5533 = vld [vmem:[%s7 + $0x30] sm:$0xff]
      %v5534 = vld [vmem:[%s7 + $0x38] sm:$0xff]
      %v5535 = vld [vmem:[%s7 + $0x40] sm:$0xff]
      %v5537 = vsel %vm1941, %v5495, 0
      %v5540 = vsel %vm1941, %v5496, 0
      %v5543 = vsel %vm1941, %v5497, 0
      %v5546 = vsel %vm1941, %v5498, 0
      %v5549 = vsel %vm1941, %v5499, 0
      %v5552 = vsel %vm1941, %v5500, 0
      %v5555 = vsel %vm1941, %v5501, 0
      %v5558 = vsel %vm1941, %v5502, 0
      %v5561 = vsel %vm1941, %v5503, 0
      %v5564 = vsel %vm1941, %v5504, 0
      %v5567 = vsel %vm1941, %v5505, 0
      %v5570 = vsel %vm1941, %v5506, 0
      %v5573 = vsel %vm1941, %v5507, 0
      %v5576 = vsel %vm1941, %v5508, 0
      %v5579 = vsel %vm1941, %v5509, 0
      %v5582 = vsel %vm1941, %v5510, 0
      %v5585 = vsel %vm1941, %v5511, 0
      %v5588 = vsel %vm1941, %v5512, 0
      %v5591 = vsel %vm1941, %v5513, 0
      %v5594 = vsel %vm1941, %v5514, 0
      %v5597 = vsel %vm1941, %v5515, 0
      %v5600 = vsel %vm1941, %v5516, 0
      %v5603 = vsel %vm1941, %v5517, 0
      %v5606 = vsel %vm1941, %v5518, 0
      %v5609 = vsel %vm1941, %v5519, 0
      %v5612 = vsel %vm1941, %v5520, 0
      %v5615 = vsel %vm1941, %v5521, 0
      %v5618 = vsel %vm1941, %v5522, 0
      %v5621 = vsel %vm1941, %v5523, 0
      %v5624 = vsel %vm1941, %v5524, 0
      %v5627 = vsel %vm1941, %v5525, 0
      %v5630 = vsel %vm1941, %v5526, 0
      %5632 = vmatprep.subr.mxu0 0.0
      %5633 = vmatpush1.msra.mxu0 0.0
      %5634 = vmatprep.subr.mxu0 0.0
      %5635 = vmatpush1.msra.mxu0 0.0
      %5636 = vmatprep.subr.mxu0 0.0
      %5637 = vmatpush1.msra.mxu0 0.0
      %5638 = vmatprep.subr.mxu0 0.0
      %5639 = vmatpush1.msra.mxu0 0.0
      %5640 = vmatprep.subr.mxu0 0.0
      %5641 = vmatpush1.msra.mxu0 0.0
      %5642 = vmatprep.subr.mxu0 0.0
      %5643 = vmatpush1.msra.mxu0 0.0
      %5644 = vmatprep.subr.mxu0 0.0
      %5645 = vmatpush1.msra.mxu0 0.0
      %5646 = vmatprep.subr.mxu0 0.0
      %5647 = vmatpush1.msra.mxu0 %v5535
      %5648 = vmatprep.subr.mxu0 0.0
      %5649 = vmatpush1.msra.mxu0 %v5534
      %5650 = vmatprep.subr.mxu0 0.0
      %5651 = vmatpush1.msra.mxu0 %v5533
      %5652 = vmatprep.subr.mxu0 0.0
      %5653 = vmatpush1.msra.mxu0 %v5532
      %5654 = vmatprep.subr.mxu0 0.0
      %5655 = vmatpush1.msra.mxu0 %v5531
      %5656 = vmatprep.subr.mxu0 0.0
      %5657 = vmatpush1.msra.mxu0 %v5530
      %5658 = vmatprep.subr.mxu0 0.0
      %5659 = vmatpush1.msra.mxu0 %v5529
      %5660 = vmatprep.subr.mxu0 0.0
      %5661 = vmatpush1.msra.mxu0 %v5528
      %5662 = vmatprep.subr.mxu0 0.0
      %5663 = vmatpush1.msra.mxu0 %v5527
      %5664 = vmatprep.subr.mxu0 0.0
      %5665 = vmatpush2.msra.mxu0 0.0
      %5666 = vmatprep.subr.mxu0 0.0
      %5667 = vmatpush2.msra.mxu0 0.0
      %5668 = vmatprep.subr.mxu0 0.0
      %5669 = vmatpush2.msra.mxu0 0.0
      %5670 = vmatprep.subr.mxu0 0.0
      %5671 = vmatpush2.msra.mxu0 0.0
      %5672 = vmatprep.subr.mxu0 0.0
      %5673 = vmatpush2.msra.mxu0 0.0
      %5674 = vmatprep.subr.mxu0 0.0
      %5675 = vmatpush2.msra.mxu0 0.0
      %5676 = vmatprep.subr.mxu0 0.0
      %5677 = vmatpush2.msra.mxu0 0.0
      %5678 = vmatprep.subr.mxu0 0.0
      %5679 = vmatpush2.msra.mxu0 0.0
      %5680 = vmatprep.subr.mxu0 0.0
      %5681 = vmatpush2.msra.mxu0 0.0
      %5682 = vmatprep.subr.mxu0 0.0
      %5683 = vmatpush2.msra.mxu0 0.0
      %5684 = vmatprep.subr.mxu0 0.0
      %5685 = vmatpush2.msra.mxu0 0.0
      %5686 = vmatprep.subr.mxu0 0.0
      %5687 = vmatpush2.msra.mxu0 0.0
      %5688 = vmatprep.subr.mxu0 0.0
      %5689 = vmatpush2.msra.mxu0 0.0
      %5690 = vmatprep.subr.mxu0 0.0
      %5691 = vmatpush2.msra.mxu0 0.0
      %5692 = vmatprep.subr.mxu0 0.0
      %5693 = vmatpush2.msra.mxu0 0.0
      %5694 = vmatprep.subr.mxu0 0.0
      %5695 = vmatpush2.msra.mxu0 0.0
      %5696 = vmatprep.mubr.f32.mxu0 0.0
      %5697 = vmatmul.mubr.f32.gmra.mxu0 %v5537
      %v5698 = vpop.f32.mrf.mxu0
      %v5699 = vadd.f32 0.0, %v5698
      %v5700 = vpop.f32.mrf.mxu0
      %5701 = vmatprep.mubr.f32.mxu0 0.0
      %5702 = vmatmul.mubr.f32.gmra.mxu0 %v5540
      %v5703 = vpop.f32.mrf.mxu0
      %v5704 = vadd.f32 0.0, %v5703
      %v5705 = vpop.f32.mrf.mxu0
      %5706 = vmatprep.mubr.f32.mxu0 0.0
      %5707 = vmatmul.mubr.f32.gmra.mxu0 %v5543
      %v5708 = vpop.f32.mrf.mxu0
      %v5709 = vadd.f32 0.0, %v5708
      %v5710 = vpop.f32.mrf.mxu0
      %5711 = vmatprep.mubr.f32.mxu0 0.0
      %5712 = vmatmul.mubr.f32.gmra.mxu0 %v5546
      %v5713 = vpop.f32.mrf.mxu0
      %v5714 = vadd.f32 0.0, %v5713
      %v5715 = vpop.f32.mrf.mxu0
      %5716 = vmatprep.mubr.f32.mxu0 0.0
      %5717 = vmatmul.mubr.f32.gmra.mxu0 %v5549
      %v5718 = vpop.f32.mrf.mxu0
      %v5719 = vadd.f32 0.0, %v5718
      %v5720 = vpop.f32.mrf.mxu0
      %5721 = vmatprep.mubr.f32.mxu0 0.0
      %5722 = vmatmul.mubr.f32.gmra.mxu0 %v5552
      %v5723 = vpop.f32.mrf.mxu0
      %v5724 = vadd.f32 0.0, %v5723
      %v5725 = vpop.f32.mrf.mxu0
      %5726 = vmatprep.mubr.f32.mxu0 0.0
      %5727 = vmatmul.mubr.f32.gmra.mxu0 %v5555
      %v5728 = vpop.f32.mrf.mxu0
      %v5729 = vadd.f32 0.0, %v5728
      %v5730 = vpop.f32.mrf.mxu0
      %5731 = vmatprep.mubr.f32.mxu0 0.0
      %5732 = vmatmul.mubr.f32.gmra.mxu0 %v5558
      %v5733 = vpop.f32.mrf.mxu0
      %v5734 = vadd.f32 0.0, %v5733
      %v5735 = vpop.f32.mrf.mxu0
      %5736 = vmatprep.mubr.f32.mxu0 0.0
      %5737 = vmatmul.mubr.f32.gmra.mxu0 %v5561
      %v5738 = vpop.f32.mrf.mxu0
      %v5739 = vadd.f32 0.0, %v5738
      %v5740 = vpop.f32.mrf.mxu0
      %5741 = vmatprep.mubr.f32.mxu0 0.0
      %5742 = vmatmul.mubr.f32.gmra.mxu0 %v5564
      %v5743 = vpop.f32.mrf.mxu0
      %v5744 = vadd.f32 0.0, %v5743
      %v5745 = vpop.f32.mrf.mxu0
      %5746 = vmatprep.mubr.f32.mxu0 0.0
      %5747 = vmatmul.mubr.f32.gmra.mxu0 %v5567
      %v5748 = vpop.f32.mrf.mxu0
      %v5749 = vadd.f32 0.0, %v5748
      %v5750 = vpop.f32.mrf.mxu0
      %5751 = vmatprep.mubr.f32.mxu0 0.0
      %5752 = vmatmul.mubr.f32.gmra.mxu0 %v5570
      %v5753 = vpop.f32.mrf.mxu0
      %v5754 = vadd.f32 0.0, %v5753
      %v5755 = vpop.f32.mrf.mxu0
      %5756 = vmatprep.mubr.f32.mxu0 0.0
      %5757 = vmatmul.mubr.f32.gmra.mxu0 %v5573
      %v5758 = vpop.f32.mrf.mxu0
      %v5759 = vadd.f32 0.0, %v5758
      %v5760 = vpop.f32.mrf.mxu0
      %5761 = vmatprep.mubr.f32.mxu0 0.0
      %5762 = vmatmul.mubr.f32.gmra.mxu0 %v5576
      %v5763 = vpop.f32.mrf.mxu0
      %v5764 = vadd.f32 0.0, %v5763
      %v5765 = vpop.f32.mrf.mxu0
      %5766 = vmatprep.mubr.f32.mxu0 0.0
      %5767 = vmatmul.mubr.f32.gmra.mxu0 %v5579
      %v5768 = vpop.f32.mrf.mxu0
      %v5769 = vadd.f32 0.0, %v5768
      %v5770 = vpop.f32.mrf.mxu0
      %5771 = vmatprep.mubr.f32.mxu0 0.0
      %5772 = vmatmul.mubr.f32.gmra.mxu0 %v5582
      %v5773 = vpop.f32.mrf.mxu0
      %v5774 = vadd.f32 0.0, %v5773
      %v5775 = vpop.f32.mrf.mxu0
      %5776 = vmatprep.mubr.f32.mxu0 0.0
      %5777 = vmatmul.mubr.f32.gmra.mxu0 %v5585
      %v5778 = vpop.f32.mrf.mxu0
      %v5779 = vadd.f32 0.0, %v5778
      %v5780 = vpop.f32.mrf.mxu0
      %5781 = vmatprep.mubr.f32.mxu0 0.0
      %5782 = vmatmul.mubr.f32.gmra.mxu0 %v5588
      %v5783 = vpop.f32.mrf.mxu0
      %v5784 = vadd.f32 0.0, %v5783
      %v5785 = vpop.f32.mrf.mxu0
      %5786 = vmatprep.mubr.f32.mxu0 0.0
      %5787 = vmatmul.mubr.f32.gmra.mxu0 %v5591
      %v5788 = vpop.f32.mrf.mxu0
      %v5789 = vadd.f32 0.0, %v5788
      %v5790 = vpop.f32.mrf.mxu0
      %5791 = vmatprep.mubr.f32.mxu0 0.0
      %5792 = vmatmul.mubr.f32.gmra.mxu0 %v5594
      %v5793 = vpop.f32.mrf.mxu0
      %v5794 = vadd.f32 0.0, %v5793
      %v5795 = vpop.f32.mrf.mxu0
      %5796 = vmatprep.mubr.f32.mxu0 0.0
      %5797 = vmatmul.mubr.f32.gmra.mxu0 %v5597
      %v5798 = vpop.f32.mrf.mxu0
      %v5799 = vadd.f32 0.0, %v5798
      %v5800 = vpop.f32.mrf.mxu0
      %5801 = vmatprep.mubr.f32.mxu0 0.0
      %5802 = vmatmul.mubr.f32.gmra.mxu0 %v5600
      %v5803 = vpop.f32.mrf.mxu0
      %v5804 = vadd.f32 0.0, %v5803
      %v5805 = vpop.f32.mrf.mxu0
      %5806 = vmatprep.mubr.f32.mxu0 0.0
      %5807 = vmatmul.mubr.f32.gmra.mxu0 %v5603
      %v5808 = vpop.f32.mrf.mxu0
      %v5809 = vadd.f32 0.0, %v5808
      %v5810 = vpop.f32.mrf.mxu0
      %5811 = vmatprep.mubr.f32.mxu0 0.0
      %5812 = vmatmul.mubr.f32.gmra.mxu0 %v5606
      %v5813 = vpop.f32.mrf.mxu0
      %v5814 = vadd.f32 0.0, %v5813
      %v5815 = vpop.f32.mrf.mxu0
      %5816 = vmatprep.mubr.f32.mxu0 0.0
      %5817 = vmatmul.mubr.f32.gmra.mxu0 %v5609
      %v5818 = vpop.f32.mrf.mxu0
      %v5819 = vadd.f32 0.0, %v5818
      %v5820 = vpop.f32.mrf.mxu0
      %5821 = vmatprep.mubr.f32.mxu0 0.0
      %5822 = vmatmul.mubr.f32.gmra.mxu0 %v5612
      %v5823 = vpop.f32.mrf.mxu0
      %v5824 = vadd.f32 0.0, %v5823
      %v5825 = vpop.f32.mrf.mxu0
      %5826 = vmatprep.mubr.f32.mxu0 0.0
      %5827 = vmatmul.mubr.f32.gmra.mxu0 %v5615
      %v5828 = vpop.f32.mrf.mxu0
      %v5829 = vadd.f32 0.0, %v5828
      %v5830 = vpop.f32.mrf.mxu0
      %5831 = vmatprep.mubr.f32.mxu0 0.0
      %5832 = vmatmul.mubr.f32.gmra.mxu0 %v5618
      %v5833 = vpop.f32.mrf.mxu0
      %v5834 = vadd.f32 0.0, %v5833
      %v5835 = vpop.f32.mrf.mxu0
      %5836 = vmatprep.mubr.f32.mxu0 0.0
      %5837 = vmatmul.mubr.f32.gmra.mxu0 %v5621
      %v5838 = vpop.f32.mrf.mxu0
      %v5839 = vadd.f32 0.0, %v5838
      %v5840 = vpop.f32.mrf.mxu0
      %5841 = vmatprep.mubr.f32.mxu0 0.0
      %5842 = vmatmul.mubr.f32.gmra.mxu0 %v5624
      %v5843 = vpop.f32.mrf.mxu0
      %v5844 = vadd.f32 0.0, %v5843
      %v5845 = vpop.f32.mrf.mxu0
      %5846 = vmatprep.mubr.f32.mxu0 0.0
      %5847 = vmatmul.mubr.f32.gmra.mxu0 %v5627
      %v5848 = vpop.f32.mrf.mxu0
      %v5849 = vadd.f32 0.0, %v5848
      %v5850 = vpop.f32.mrf.mxu0
      %5851 = vmatprep.mubr.f32.mxu0 0.0
      %5852 = vmatmul.mubr.f32.gmra.mxu0 %v5630
      %v5853 = vpop.f32.mrf.mxu0
      %v5854 = vadd.f32 0.0, %v5853
      %v5855 = vpop.f32.mrf.mxu0
      %5856 = vdwg.mxu0
      %v5857 = vld [vmem:[%s8] sm:$0x1]
      %v5859 = vlaneseq
      %v5860 = vshrl.u32 %v5859, 7
      %v5861 = vsub.s32 0, %v5860
      %v5862 = vrot.slane %v5857, %v5861
      %v5864 = vmul.f32 %v5699, %v5862
      %v5865 = vmul.f32 %v5704, %v5862
      %v5866 = vmul.f32 %v5709, %v5862
      %v5867 = vmul.f32 %v5714, %v5862
      %v5868 = vmul.f32 %v5719, %v5862
      %v5869 = vmul.f32 %v5724, %v5862
      %v5870 = vmul.f32 %v5729, %v5862
      %v5871 = vmul.f32 %v5734, %v5862
      %v5872 = vmul.f32 %v5739, %v5862
      %v5873 = vmul.f32 %v5744, %v5862
      %v5874 = vmul.f32 %v5749, %v5862
      %v5875 = vmul.f32 %v5754, %v5862
      %v5876 = vmul.f32 %v5759, %v5862
      %v5877 = vmul.f32 %v5764, %v5862
      %v5878 = vmul.f32 %v5769, %v5862
      %v5879 = vmul.f32 %v5774, %v5862
      %v5880 = vmul.f32 %v5779, %v5862
      %v5881 = vmul.f32 %v5784, %v5862
      %v5882 = vmul.f32 %v5789, %v5862
      %v5883 = vmul.f32 %v5794, %v5862
      %v5884 = vmul.f32 %v5799, %v5862
      %v5885 = vmul.f32 %v5804, %v5862
      %v5886 = vmul.f32 %v5809, %v5862
      %v5887 = vmul.f32 %v5814, %v5862
      %v5888 = vmul.f32 %v5819, %v5862
      %v5889 = vmul.f32 %v5824, %v5862
      %v5890 = vmul.f32 %v5829, %v5862
      %v5891 = vmul.f32 %v5834, %v5862
      %v5892 = vmul.f32 %v5839, %v5862
      %v5893 = vmul.f32 %v5844, %v5862
      %v5894 = vmul.f32 %v5849, %v5862
      %v5895 = vmul.f32 %v5854, %v5862
      %v5896 = vld [vmem:[%s9] sm:$0x1]
      %v5898 = vlaneseq
      %v5899 = vshrl.u32 %v5898, 7
      %v5900 = vsub.s32 0, %v5899
      %v5901 = vrot.slane %v5896, %v5900
      %v5903 = vadd.f32 %v5864, %v5901
      %v5904 = vadd.f32 %v5865, %v5901
      %v5905 = vadd.f32 %v5866, %v5901
      %v5906 = vadd.f32 %v5867, %v5901
      %v5907 = vadd.f32 %v5868, %v5901
      %v5908 = vadd.f32 %v5869, %v5901
      %v5909 = vadd.f32 %v5870, %v5901
      %v5910 = vadd.f32 %v5871, %v5901
      %v5911 = vadd.f32 %v5872, %v5901
      %v5912 = vadd.f32 %v5873, %v5901
      %v5913 = vadd.f32 %v5874, %v5901
      %v5914 = vadd.f32 %v5875, %v5901
      %v5915 = vadd.f32 %v5876, %v5901
      %v5916 = vadd.f32 %v5877, %v5901
      %v5917 = vadd.f32 %v5878, %v5901
      %v5918 = vadd.f32 %v5879, %v5901
      %v5919 = vadd.f32 %v5880, %v5901
      %v5920 = vadd.f32 %v5881, %v5901
      %v5921 = vadd.f32 %v5882, %v5901
      %v5922 = vadd.f32 %v5883, %v5901
      %v5923 = vadd.f32 %v5884, %v5901
      %v5924 = vadd.f32 %v5885, %v5901
      %v5925 = vadd.f32 %v5886, %v5901
      %v5926 = vadd.f32 %v5887, %v5901
      %v5927 = vadd.f32 %v5888, %v5901
      %v5928 = vadd.f32 %v5889, %v5901
      %v5929 = vadd.f32 %v5890, %v5901
      %v5930 = vadd.f32 %v5891, %v5901
      %v5931 = vadd.f32 %v5892, %v5901
      %v5932 = vadd.f32 %v5893, %v5901
      %v5933 = vadd.f32 %v5894, %v5901
      %v5934 = vadd.f32 %v5895, %v5901
      %v5935 = vmax.f32 %v5903, 0.0
      %v5936 = vmax.f32 %v5904, 0.0
      %v5937 = vmax.f32 %v5905, 0.0
      %v5938 = vmax.f32 %v5906, 0.0
      %v5939 = vmax.f32 %v5907, 0.0
      %v5940 = vmax.f32 %v5908, 0.0
      %v5941 = vmax.f32 %v5909, 0.0
      %v5942 = vmax.f32 %v5910, 0.0
      %v5943 = vmax.f32 %v5911, 0.0
      %v5944 = vmax.f32 %v5912, 0.0
      %v5945 = vmax.f32 %v5913, 0.0
      %v5946 = vmax.f32 %v5914, 0.0
      %v5947 = vmax.f32 %v5915, 0.0
      %v5948 = vmax.f32 %v5916, 0.0
      %v5949 = vmax.f32 %v5917, 0.0
      %v5950 = vmax.f32 %v5918, 0.0
      %v5951 = vmax.f32 %v5919, 0.0
      %v5952 = vmax.f32 %v5920, 0.0
      %v5953 = vmax.f32 %v5921, 0.0
      %v5954 = vmax.f32 %v5922, 0.0
      %v5955 = vmax.f32 %v5923, 0.0
      %v5956 = vmax.f32 %v5924, 0.0
      %v5957 = vmax.f32 %v5925, 0.0
      %v5958 = vmax.f32 %v5926, 0.0
      %v5959 = vmax.f32 %v5927, 0.0
      %v5960 = vmax.f32 %v5928, 0.0
      %v5961 = vmax.f32 %v5929, 0.0
      %v5962 = vmax.f32 %v5930, 0.0
      %v5963 = vmax.f32 %v5931, 0.0
      %v5964 = vmax.f32 %v5932, 0.0
      %v5965 = vmax.f32 %v5933, 0.0
      %v5966 = vmax.f32 %v5934, 0.0
      %v5999 = vrot.slane %v5935, 7
      %v6000 = vrot.slane %v5936, 7
      %v6001 = vsel %vm560, %v5999, %v6000
      %v6002 = vrot.slane %v5937, 7
      %v6003 = vrot.slane %v5938, 7
      %v6004 = vsel %vm560, %v6002, %v6003
      %v6005 = vrot.slane %v5939, 7
      %v6006 = vrot.slane %v5940, 7
      %v6007 = vsel %vm560, %v6005, %v6006
      %v6008 = vrot.slane %v5941, 7
      %v6009 = vrot.slane %v5942, 7
      %v6010 = vsel %vm560, %v6008, %v6009
      %v6011 = vrot.slane %v5943, 7
      %v6012 = vrot.slane %v5944, 7
      %v6013 = vsel %vm560, %v6011, %v6012
      %v6014 = vrot.slane %v5945, 7
      %v6015 = vrot.slane %v5946, 7
      %v6016 = vsel %vm560, %v6014, %v6015
      %v6017 = vrot.slane %v5947, 7
      %v6018 = vrot.slane %v5948, 7
      %v6019 = vsel %vm560, %v6017, %v6018
      %v6020 = vrot.slane %v5949, 7
      %v6021 = vrot.slane %v5950, 7
      %v6022 = vsel %vm560, %v6020, %v6021
      %v6023 = vrot.slane %v5951, 7
      %v6024 = vrot.slane %v5952, 7
      %v6025 = vsel %vm560, %v6023, %v6024
      %v6026 = vrot.slane %v5953, 7
      %v6027 = vrot.slane %v5954, 7
      %v6028 = vsel %vm560, %v6026, %v6027
      %v6029 = vrot.slane %v5955, 7
      %v6030 = vrot.slane %v5956, 7
      %v6031 = vsel %vm560, %v6029, %v6030
      %v6032 = vrot.slane %v5957, 7
      %v6033 = vrot.slane %v5958, 7
      %v6034 = vsel %vm560, %v6032, %v6033
      %v6035 = vrot.slane %v5959, 7
      %v6036 = vrot.slane %v5960, 7
      %v6037 = vsel %vm560, %v6035, %v6036
      %v6038 = vrot.slane %v5961, 7
      %v6039 = vrot.slane %v5962, 7
      %v6040 = vsel %vm560, %v6038, %v6039
      %v6041 = vrot.slane %v5963, 7
      %v6042 = vrot.slane %v5964, 7
      %v6043 = vsel %vm560, %v6041, %v6042
      %v6044 = vrot.slane %v5965, 7
      %v6045 = vrot.slane %v5966, 7
      %v6046 = vsel %vm560, %v6044, %v6045
      %v6094 = vsel %vm560, 0.0, %v5999
      %v6095 = vsel %vm560, 0.0, %v6002
      %v6096 = vsel %vm560, 0.0, %v6005
      %v6097 = vsel %vm560, 0.0, %v6008
      %v6098 = vsel %vm560, 0.0, %v6011
      %v6099 = vsel %vm560, 0.0, %v6014
      %v6100 = vsel %vm560, 0.0, %v6017
      %v6101 = vsel %vm560, 0.0, %v6020
      %v6102 = vsel %vm560, 0.0, %v6023
      %v6103 = vsel %vm560, 0.0, %v6026
      %v6104 = vsel %vm560, 0.0, %v6029
      %v6105 = vsel %vm560, 0.0, %v6032
      %v6106 = vsel %vm560, 0.0, %v6035
      %v6107 = vsel %vm560, 0.0, %v6038
      %v6108 = vsel %vm560, 0.0, %v6041
      %v6109 = vsel %vm560, 0.0, %v6044
      %v6110 = vsel %vm560, %v6000, 0.0
      %v6111 = vsel %vm560, %v6003, 0.0
      %v6112 = vsel %vm560, %v6006, 0.0
      %v6113 = vsel %vm560, %v6009, 0.0
      %v6114 = vsel %vm560, %v6012, 0.0
      %v6115 = vsel %vm560, %v6015, 0.0
      %v6116 = vsel %vm560, %v6018, 0.0
      %v6117 = vsel %vm560, %v6021, 0.0
      %v6118 = vsel %vm560, %v6024, 0.0
      %v6119 = vsel %vm560, %v6027, 0.0
      %v6120 = vsel %vm560, %v6030, 0.0
      %v6121 = vsel %vm560, %v6033, 0.0
      %v6122 = vsel %vm560, %v6036, 0.0
      %v6123 = vsel %vm560, %v6039, 0.0
      %v6124 = vsel %vm560, %v6042, 0.0
      %v6125 = vsel %vm560, %v6045, 0.0
      %v6156 = vrot.slane %v6094, 1
      %v6157 = vrot.slane %v6001, 1
      %v6158 = vsel %vm726, %v6156, %v6157
      %v6159 = vrot.slane %v6110, 1
      %v6160 = vsel %vm726, %v6157, %v6159
      %v6161 = vrot.slane %v6095, 1
      %v6162 = vrot.slane %v6004, 1
      %v6163 = vsel %vm726, %v6161, %v6162
      %v6164 = vrot.slane %v6111, 1
      %v6165 = vsel %vm726, %v6162, %v6164
      %v6166 = vrot.slane %v6096, 1
      %v6167 = vrot.slane %v6007, 1
      %v6168 = vsel %vm726, %v6166, %v6167
      %v6169 = vrot.slane %v6112, 1
      %v6170 = vsel %vm726, %v6167, %v6169
      %v6171 = vrot.slane %v6097, 1
      %v6172 = vrot.slane %v6010, 1
      %v6173 = vsel %vm726, %v6171, %v6172
      %v6174 = vrot.slane %v6113, 1
      %v6175 = vsel %vm726, %v6172, %v6174
      %v6176 = vrot.slane %v6098, 1
      %v6177 = vrot.slane %v6013, 1
      %v6178 = vsel %vm726, %v6176, %v6177
      %v6179 = vrot.slane %v6114, 1
      %v6180 = vsel %vm726, %v6177, %v6179
      %v6181 = vrot.slane %v6099, 1
      %v6182 = vrot.slane %v6016, 1
      %v6183 = vsel %vm726, %v6181, %v6182
      %v6184 = vrot.slane %v6115, 1
      %v6185 = vsel %vm726, %v6182, %v6184
      %v6186 = vrot.slane %v6100, 1
      %v6187 = vrot.slane %v6019, 1
      %v6188 = vsel %vm726, %v6186, %v6187
      %v6189 = vrot.slane %v6116, 1
      %v6190 = vsel %vm726, %v6187, %v6189
      %v6191 = vrot.slane %v6101, 1
      %v6192 = vrot.slane %v6022, 1
      %v6193 = vsel %vm726, %v6191, %v6192
      %v6194 = vrot.slane %v6117, 1
      %v6195 = vsel %vm726, %v6192, %v6194
      %v6196 = vrot.slane %v6102, 1
      %v6197 = vrot.slane %v6025, 1
      %v6198 = vsel %vm726, %v6196, %v6197
      %v6199 = vrot.slane %v6118, 1
      %v6200 = vsel %vm726, %v6197, %v6199
      %v6201 = vrot.slane %v6103, 1
      %v6202 = vrot.slane %v6028, 1
      %v6203 = vsel %vm726, %v6201, %v6202
      %v6204 = vrot.slane %v6119, 1
      %v6205 = vsel %vm726, %v6202, %v6204
      %v6206 = vrot.slane %v6104, 1
      %v6207 = vrot.slane %v6031, 1
      %v6208 = vsel %vm726, %v6206, %v6207
      %v6209 = vrot.slane %v6120, 1
      %v6210 = vsel %vm726, %v6207, %v6209
      %v6211 = vrot.slane %v6105, 1
      %v6212 = vrot.slane %v6034, 1
      %v6213 = vsel %vm726, %v6211, %v6212
      %v6214 = vrot.slane %v6121, 1
      %v6215 = vsel %vm726, %v6212, %v6214
      %v6216 = vrot.slane %v6106, 1
      %v6217 = vrot.slane %v6037, 1
      %v6218 = vsel %vm726, %v6216, %v6217
      %v6219 = vrot.slane %v6122, 1
      %v6220 = vsel %vm726, %v6217, %v6219
      %v6221 = vrot.slane %v6107, 1
      %v6222 = vrot.slane %v6040, 1
      %v6223 = vsel %vm726, %v6221, %v6222
      %v6224 = vrot.slane %v6123, 1
      %v6225 = vsel %vm726, %v6222, %v6224
      %v6226 = vrot.slane %v6108, 1
      %v6227 = vrot.slane %v6043, 1
      %v6228 = vsel %vm726, %v6226, %v6227
      %v6229 = vrot.slane %v6124, 1
      %v6230 = vsel %vm726, %v6227, %v6229
      %6231 = vrot.lane.b32.xlu0 %v6158, 8
      %v6232 = vpop.permute.xlu0 %6231
      %6233 = vrot.lane.b32.xlu0 %v6160, 8
      %v6234 = vpop.permute.xlu0 %6233
      %6235 = vrot.lane.b32.xlu0 %v6163, 8
      %v6236 = vpop.permute.xlu0 %6235
      %6237 = vrot.lane.b32.xlu0 %v6165, 8
      %v6238 = vpop.permute.xlu0 %6237
      %6239 = vrot.lane.b32.xlu0 %v6168, 8
      %v6240 = vpop.permute.xlu0 %6239
      %6241 = vrot.lane.b32.xlu0 %v6170, 8
      %v6242 = vpop.permute.xlu0 %6241
      %6243 = vrot.lane.b32.xlu0 %v6173, 8
      %v6244 = vpop.permute.xlu0 %6243
      %6245 = vrot.lane.b32.xlu0 %v6175, 8
      %v6246 = vpop.permute.xlu0 %6245
      %6247 = vrot.lane.b32.xlu0 %v6178, 8
      %v6248 = vpop.permute.xlu0 %6247
      %6249 = vrot.lane.b32.xlu0 %v6180, 8
      %v6250 = vpop.permute.xlu0 %6249
      %6251 = vrot.lane.b32.xlu0 %v6183, 8
      %v6252 = vpop.permute.xlu0 %6251
      %6253 = vrot.lane.b32.xlu0 %v6185, 8
      %v6254 = vpop.permute.xlu0 %6253
      %6255 = vrot.lane.b32.xlu0 %v6188, 8
      %v6256 = vpop.permute.xlu0 %6255
      %6257 = vrot.lane.b32.xlu0 %v6190, 8
      %v6258 = vpop.permute.xlu0 %6257
      %6259 = vrot.lane.b32.xlu0 %v6193, 8
      %v6260 = vpop.permute.xlu0 %6259
      %6261 = vrot.lane.b32.xlu0 %v6195, 8
      %v6262 = vpop.permute.xlu0 %6261
      %6263 = vrot.lane.b32.xlu0 %v6198, 8
      %v6264 = vpop.permute.xlu0 %6263
      %6265 = vrot.lane.b32.xlu0 %v6200, 8
      %v6266 = vpop.permute.xlu0 %6265
      %6267 = vrot.lane.b32.xlu0 %v6203, 8
      %v6268 = vpop.permute.xlu0 %6267
      %6269 = vrot.lane.b32.xlu0 %v6205, 8
      %v6270 = vpop.permute.xlu0 %6269
      %6271 = vrot.lane.b32.xlu0 %v6208, 8
      %v6272 = vpop.permute.xlu0 %6271
      %6273 = vrot.lane.b32.xlu0 %v6210, 8
      %v6274 = vpop.permute.xlu0 %6273
      %6275 = vrot.lane.b32.xlu0 %v6213, 8
      %v6276 = vpop.permute.xlu0 %6275
      %6277 = vrot.lane.b32.xlu0 %v6215, 8
      %v6278 = vpop.permute.xlu0 %6277
      %6279 = vrot.lane.b32.xlu0 %v6218, 8
      %v6280 = vpop.permute.xlu0 %6279
      %6281 = vrot.lane.b32.xlu0 %v6220, 8
      %v6282 = vpop.permute.xlu0 %6281
      %6283 = vrot.lane.b32.xlu0 %v6223, 8
      %v6284 = vpop.permute.xlu0 %6283
      %6285 = vrot.lane.b32.xlu0 %v6225, 8
      %v6286 = vpop.permute.xlu0 %6285
      %6287 = vrot.lane.b32.xlu0 %v6228, 8
      %v6288 = vpop.permute.xlu0 %6287
      %6289 = vrot.lane.b32.xlu0 %v6230, 8
      %v6290 = vpop.permute.xlu0 %6289
      %v6321 = vrot.slane %v6094, 2
      %v6322 = vrot.slane %v6001, 2
      %v6323 = vsel %vm903, %v6321, %v6322
      %v6324 = vrot.slane %v6110, 2
      %v6325 = vsel %vm903, %v6322, %v6324
      %v6326 = vrot.slane %v6095, 2
      %v6327 = vrot.slane %v6004, 2
      %v6328 = vsel %vm903, %v6326, %v6327
      %v6329 = vrot.slane %v6111, 2
      %v6330 = vsel %vm903, %v6327, %v6329
      %v6331 = vrot.slane %v6096, 2
      %v6332 = vrot.slane %v6007, 2
      %v6333 = vsel %vm903, %v6331, %v6332
      %v6334 = vrot.slane %v6112, 2
      %v6335 = vsel %vm903, %v6332, %v6334
      %v6336 = vrot.slane %v6097, 2
      %v6337 = vrot.slane %v6010, 2
      %v6338 = vsel %vm903, %v6336, %v6337
      %v6339 = vrot.slane %v6113, 2
      %v6340 = vsel %vm903, %v6337, %v6339
      %v6341 = vrot.slane %v6098, 2
      %v6342 = vrot.slane %v6013, 2
      %v6343 = vsel %vm903, %v6341, %v6342
      %v6344 = vrot.slane %v6114, 2
      %v6345 = vsel %vm903, %v6342, %v6344
      %v6346 = vrot.slane %v6099, 2
      %v6347 = vrot.slane %v6016, 2
      %v6348 = vsel %vm903, %v6346, %v6347
      %v6349 = vrot.slane %v6115, 2
      %v6350 = vsel %vm903, %v6347, %v6349
      %v6351 = vrot.slane %v6100, 2
      %v6352 = vrot.slane %v6019, 2
      %v6353 = vsel %vm903, %v6351, %v6352
      %v6354 = vrot.slane %v6116, 2
      %v6355 = vsel %vm903, %v6352, %v6354
      %v6356 = vrot.slane %v6101, 2
      %v6357 = vrot.slane %v6022, 2
      %v6358 = vsel %vm903, %v6356, %v6357
      %v6359 = vrot.slane %v6117, 2
      %v6360 = vsel %vm903, %v6357, %v6359
      %v6361 = vrot.slane %v6102, 2
      %v6362 = vrot.slane %v6025, 2
      %v6363 = vsel %vm903, %v6361, %v6362
      %v6364 = vrot.slane %v6118, 2
      %v6365 = vsel %vm903, %v6362, %v6364
      %v6366 = vrot.slane %v6103, 2
      %v6367 = vrot.slane %v6028, 2
      %v6368 = vsel %vm903, %v6366, %v6367
      %v6369 = vrot.slane %v6119, 2
      %v6370 = vsel %vm903, %v6367, %v6369
      %v6371 = vrot.slane %v6104, 2
      %v6372 = vrot.slane %v6031, 2
      %v6373 = vsel %vm903, %v6371, %v6372
      %v6374 = vrot.slane %v6120, 2
      %v6375 = vsel %vm903, %v6372, %v6374
      %v6376 = vrot.slane %v6105, 2
      %v6377 = vrot.slane %v6034, 2
      %v6378 = vsel %vm903, %v6376, %v6377
      %v6379 = vrot.slane %v6121, 2
      %v6380 = vsel %vm903, %v6377, %v6379
      %v6381 = vrot.slane %v6106, 2
      %v6382 = vrot.slane %v6037, 2
      %v6383 = vsel %vm903, %v6381, %v6382
      %v6384 = vrot.slane %v6122, 2
      %v6385 = vsel %vm903, %v6382, %v6384
      %v6386 = vrot.slane %v6107, 2
      %v6387 = vrot.slane %v6040, 2
      %v6388 = vsel %vm903, %v6386, %v6387
      %v6389 = vrot.slane %v6123, 2
      %v6390 = vsel %vm903, %v6387, %v6389
      %v6391 = vrot.slane %v6108, 2
      %v6392 = vrot.slane %v6043, 2
      %v6393 = vsel %vm903, %v6391, %v6392
      %v6394 = vrot.slane %v6124, 2
      %v6395 = vsel %vm903, %v6392, %v6394
      %6396 = vrot.lane.b32.xlu0 %v6323, 16
      %v6397 = vpop.permute.xlu0 %6396
      %6398 = vrot.lane.b32.xlu0 %v6325, 16
      %v6399 = vpop.permute.xlu0 %6398
      %6400 = vrot.lane.b32.xlu0 %v6328, 16
      %v6401 = vpop.permute.xlu0 %6400
      %6402 = vrot.lane.b32.xlu0 %v6330, 16
      %v6403 = vpop.permute.xlu0 %6402
      %6404 = vrot.lane.b32.xlu0 %v6333, 16
      %v6405 = vpop.permute.xlu0 %6404
      %6406 = vrot.lane.b32.xlu0 %v6335, 16
      %v6407 = vpop.permute.xlu0 %6406
      %6408 = vrot.lane.b32.xlu0 %v6338, 16
      %v6409 = vpop.permute.xlu0 %6408
      %6410 = vrot.lane.b32.xlu0 %v6340, 16
      %v6411 = vpop.permute.xlu0 %6410
      %6412 = vrot.lane.b32.xlu0 %v6343, 16
      %v6413 = vpop.permute.xlu0 %6412
      %6414 = vrot.lane.b32.xlu0 %v6345, 16
      %v6415 = vpop.permute.xlu0 %6414
      %6416 = vrot.lane.b32.xlu0 %v6348, 16
      %v6417 = vpop.permute.xlu0 %6416
      %6418 = vrot.lane.b32.xlu0 %v6350, 16
      %v6419 = vpop.permute.xlu0 %6418
      %6420 = vrot.lane.b32.xlu0 %v6353, 16
      %v6421 = vpop.permute.xlu0 %6420
      %6422 = vrot.lane.b32.xlu0 %v6355, 16
      %v6423 = vpop.permute.xlu0 %6422
      %6424 = vrot.lane.b32.xlu0 %v6358, 16
      %v6425 = vpop.permute.xlu0 %6424
      %6426 = vrot.lane.b32.xlu0 %v6360, 16
      %v6427 = vpop.permute.xlu0 %6426
      %6428 = vrot.lane.b32.xlu0 %v6363, 16
      %v6429 = vpop.permute.xlu0 %6428
      %6430 = vrot.lane.b32.xlu0 %v6365, 16
      %v6431 = vpop.permute.xlu0 %6430
      %6432 = vrot.lane.b32.xlu0 %v6368, 16
      %v6433 = vpop.permute.xlu0 %6432
      %6434 = vrot.lane.b32.xlu0 %v6370, 16
      %v6435 = vpop.permute.xlu0 %6434
      %6436 = vrot.lane.b32.xlu0 %v6373, 16
      %v6437 = vpop.permute.xlu0 %6436
      %6438 = vrot.lane.b32.xlu0 %v6375, 16
      %v6439 = vpop.permute.xlu0 %6438
      %6440 = vrot.lane.b32.xlu0 %v6378, 16
      %v6441 = vpop.permute.xlu0 %6440
      %6442 = vrot.lane.b32.xlu0 %v6380, 16
      %v6443 = vpop.permute.xlu0 %6442
      %6444 = vrot.lane.b32.xlu0 %v6383, 16
      %v6445 = vpop.permute.xlu0 %6444
      %6446 = vrot.lane.b32.xlu0 %v6385, 16
      %v6447 = vpop.permute.xlu0 %6446
      %6448 = vrot.lane.b32.xlu0 %v6388, 16
      %v6449 = vpop.permute.xlu0 %6448
      %6450 = vrot.lane.b32.xlu0 %v6390, 16
      %v6451 = vpop.permute.xlu0 %6450
      %6452 = vrot.lane.b32.xlu0 %v6393, 16
      %v6453 = vpop.permute.xlu0 %6452
      %6454 = vrot.lane.b32.xlu0 %v6395, 16
      %v6455 = vpop.permute.xlu0 %6454
      %6487 = vrot.lane.b32.xlu0 %v6094, 24
      %v6488 = vpop.permute.xlu0 %6487
      %6489 = vrot.lane.b32.xlu0 %v6001, 24
      %v6490 = vpop.permute.xlu0 %6489
      %6491 = vrot.lane.b32.xlu0 %v6095, 24
      %v6492 = vpop.permute.xlu0 %6491
      %6493 = vrot.lane.b32.xlu0 %v6004, 24
      %v6494 = vpop.permute.xlu0 %6493
      %6495 = vrot.lane.b32.xlu0 %v6096, 24
      %v6496 = vpop.permute.xlu0 %6495
      %6497 = vrot.lane.b32.xlu0 %v6007, 24
      %v6498 = vpop.permute.xlu0 %6497
      %6499 = vrot.lane.b32.xlu0 %v6097, 24
      %v6500 = vpop.permute.xlu0 %6499
      %6501 = vrot.lane.b32.xlu0 %v6010, 24
      %v6502 = vpop.permute.xlu0 %6501
      %6503 = vrot.lane.b32.xlu0 %v6098, 24
      %v6504 = vpop.permute.xlu0 %6503
      %6505 = vrot.lane.b32.xlu0 %v6013, 24
      %v6506 = vpop.permute.xlu0 %6505
      %6507 = vrot.lane.b32.xlu0 %v6099, 24
      %v6508 = vpop.permute.xlu0 %6507
      %6509 = vrot.lane.b32.xlu0 %v6016, 24
      %v6510 = vpop.permute.xlu0 %6509
      %6511 = vrot.lane.b32.xlu0 %v6100, 24
      %v6512 = vpop.permute.xlu0 %6511
      %6513 = vrot.lane.b32.xlu0 %v6019, 24
      %v6514 = vpop.permute.xlu0 %6513
      %6515 = vrot.lane.b32.xlu0 %v6101, 24
      %v6516 = vpop.permute.xlu0 %6515
      %6517 = vrot.lane.b32.xlu0 %v6022, 24
      %v6518 = vpop.permute.xlu0 %6517
      %6519 = vrot.lane.b32.xlu0 %v6102, 24
      %v6520 = vpop.permute.xlu0 %6519
      %6521 = vrot.lane.b32.xlu0 %v6025, 24
      %v6522 = vpop.permute.xlu0 %6521
      %6523 = vrot.lane.b32.xlu0 %v6103, 24
      %v6524 = vpop.permute.xlu0 %6523
      %6525 = vrot.lane.b32.xlu0 %v6028, 24
      %v6526 = vpop.permute.xlu0 %6525
      %6527 = vrot.lane.b32.xlu0 %v6104, 24
      %v6528 = vpop.permute.xlu0 %6527
      %6529 = vrot.lane.b32.xlu0 %v6031, 24
      %v6530 = vpop.permute.xlu0 %6529
      %6531 = vrot.lane.b32.xlu0 %v6105, 24
      %v6532 = vpop.permute.xlu0 %6531
      %6533 = vrot.lane.b32.xlu0 %v6034, 24
      %v6534 = vpop.permute.xlu0 %6533
      %6535 = vrot.lane.b32.xlu0 %v6106, 24
      %v6536 = vpop.permute.xlu0 %6535
      %6537 = vrot.lane.b32.xlu0 %v6037, 24
      %v6538 = vpop.permute.xlu0 %6537
      %6539 = vrot.lane.b32.xlu0 %v6107, 24
      %v6540 = vpop.permute.xlu0 %6539
      %6541 = vrot.lane.b32.xlu0 %v6040, 24
      %v6542 = vpop.permute.xlu0 %6541
      %6543 = vrot.lane.b32.xlu0 %v6108, 24
      %v6544 = vpop.permute.xlu0 %6543
      %6545 = vrot.lane.b32.xlu0 %v6043, 24
      %v6546 = vpop.permute.xlu0 %6545
      %6547 = vrot.lane.b32.xlu0 %v6109, 24
      %v6548 = vpop.permute.xlu0 %6547
      %6549 = vrot.lane.b32.xlu0 %v6046, 24
      %v6550 = vpop.permute.xlu0 %6549
      %v6584 = vrot.slane %v6109, 1
      %v6585 = vrot.slane %v6046, 1
      %v6586 = vsel %vm726, %v6584, %v6585
      %v6587 = vrot.slane %v6125, 1
      %v6588 = vsel %vm726, %v6585, %v6587
      %6589 = vrot.lane.b32.xlu0 %v6158, 32
      %v6590 = vpop.permute.xlu0 %6589
      %6591 = vrot.lane.b32.xlu0 %v6160, 32
      %v6592 = vpop.permute.xlu0 %6591
      %6593 = vrot.lane.b32.xlu0 %v6163, 32
      %v6594 = vpop.permute.xlu0 %6593
      %6595 = vrot.lane.b32.xlu0 %v6165, 32
      %v6596 = vpop.permute.xlu0 %6595
      %6597 = vrot.lane.b32.xlu0 %v6168, 32
      %v6598 = vpop.permute.xlu0 %6597
      %6599 = vrot.lane.b32.xlu0 %v6170, 32
      %v6600 = vpop.permute.xlu0 %6599
      %6601 = vrot.lane.b32.xlu0 %v6173, 32
      %v6602 = vpop.permute.xlu0 %6601
      %6603 = vrot.lane.b32.xlu0 %v6175, 32
      %v6604 = vpop.permute.xlu0 %6603
      %6605 = vrot.lane.b32.xlu0 %v6178, 32
      %v6606 = vpop.permute.xlu0 %6605
      %6607 = vrot.lane.b32.xlu0 %v6180, 32
      %v6608 = vpop.permute.xlu0 %6607
      %6609 = vrot.lane.b32.xlu0 %v6183, 32
      %v6610 = vpop.permute.xlu0 %6609
      %6611 = vrot.lane.b32.xlu0 %v6185, 32
      %v6612 = vpop.permute.xlu0 %6611
      %6613 = vrot.lane.b32.xlu0 %v6188, 32
      %v6614 = vpop.permute.xlu0 %6613
      %6615 = vrot.lane.b32.xlu0 %v6190, 32
      %v6616 = vpop.permute.xlu0 %6615
      %6617 = vrot.lane.b32.xlu0 %v6193, 32
      %v6618 = vpop.permute.xlu0 %6617
      %6619 = vrot.lane.b32.xlu0 %v6195, 32
      %v6620 = vpop.permute.xlu0 %6619
      %6621 = vrot.lane.b32.xlu0 %v6198, 32
      %v6622 = vpop.permute.xlu0 %6621
      %6623 = vrot.lane.b32.xlu0 %v6200, 32
      %v6624 = vpop.permute.xlu0 %6623
      %6625 = vrot.lane.b32.xlu0 %v6203, 32
      %v6626 = vpop.permute.xlu0 %6625
      %6627 = vrot.lane.b32.xlu0 %v6205, 32
      %v6628 = vpop.permute.xlu0 %6627
      %6629 = vrot.lane.b32.xlu0 %v6208, 32
      %v6630 = vpop.permute.xlu0 %6629
      %6631 = vrot.lane.b32.xlu0 %v6210, 32
      %v6632 = vpop.permute.xlu0 %6631
      %6633 = vrot.lane.b32.xlu0 %v6213, 32
      %v6634 = vpop.permute.xlu0 %6633
      %6635 = vrot.lane.b32.xlu0 %v6215, 32
      %v6636 = vpop.permute.xlu0 %6635
      %6637 = vrot.lane.b32.xlu0 %v6218, 32
      %v6638 = vpop.permute.xlu0 %6637
      %6639 = vrot.lane.b32.xlu0 %v6220, 32
      %v6640 = vpop.permute.xlu0 %6639
      %6641 = vrot.lane.b32.xlu0 %v6223, 32
      %v6642 = vpop.permute.xlu0 %6641
      %6643 = vrot.lane.b32.xlu0 %v6225, 32
      %v6644 = vpop.permute.xlu0 %6643
      %6645 = vrot.lane.b32.xlu0 %v6228, 32
      %v6646 = vpop.permute.xlu0 %6645
      %6647 = vrot.lane.b32.xlu0 %v6230, 32
      %v6648 = vpop.permute.xlu0 %6647
      %6649 = vrot.lane.b32.xlu0 %v6586, 32
      %v6650 = vpop.permute.xlu0 %6649
      %6651 = vrot.lane.b32.xlu0 %v6588, 32
      %v6652 = vpop.permute.xlu0 %6651
      %v6685 = vrot.slane %v6109, 2
      %v6686 = vrot.slane %v6046, 2
      %v6687 = vsel %vm903, %v6685, %v6686
      %v6688 = vrot.slane %v6125, 2
      %v6689 = vsel %vm903, %v6686, %v6688
      %6690 = vrot.lane.b32.xlu0 %v6323, 40
      %v6691 = vpop.permute.xlu0 %6690
      %6692 = vrot.lane.b32.xlu0 %v6325, 40
      %v6693 = vpop.permute.xlu0 %6692
      %6694 = vrot.lane.b32.xlu0 %v6328, 40
      %v6695 = vpop.permute.xlu0 %6694
      %6696 = vrot.lane.b32.xlu0 %v6330, 40
      %v6697 = vpop.permute.xlu0 %6696
      %6698 = vrot.lane.b32.xlu0 %v6333, 40
      %v6699 = vpop.permute.xlu0 %6698
      %6700 = vrot.lane.b32.xlu0 %v6335, 40
      %v6701 = vpop.permute.xlu0 %6700
      %6702 = vrot.lane.b32.xlu0 %v6338, 40
      %v6703 = vpop.permute.xlu0 %6702
      %6704 = vrot.lane.b32.xlu0 %v6340, 40
      %v6705 = vpop.permute.xlu0 %6704
      %6706 = vrot.lane.b32.xlu0 %v6343, 40
      %v6707 = vpop.permute.xlu0 %6706
      %6708 = vrot.lane.b32.xlu0 %v6345, 40
      %v6709 = vpop.permute.xlu0 %6708
      %6710 = vrot.lane.b32.xlu0 %v6348, 40
      %v6711 = vpop.permute.xlu0 %6710
      %6712 = vrot.lane.b32.xlu0 %v6350, 40
      %v6713 = vpop.permute.xlu0 %6712
      %6714 = vrot.lane.b32.xlu0 %v6353, 40
      %v6715 = vpop.permute.xlu0 %6714
      %6716 = vrot.lane.b32.xlu0 %v6355, 40
      %v6717 = vpop.permute.xlu0 %6716
      %6718 = vrot.lane.b32.xlu0 %v6358, 40
      %v6719 = vpop.permute.xlu0 %6718
      %6720 = vrot.lane.b32.xlu0 %v6360, 40
      %v6721 = vpop.permute.xlu0 %6720
      %6722 = vrot.lane.b32.xlu0 %v6363, 40
      %v6723 = vpop.permute.xlu0 %6722
      %6724 = vrot.lane.b32.xlu0 %v6365, 40
      %v6725 = vpop.permute.xlu0 %6724
      %6726 = vrot.lane.b32.xlu0 %v6368, 40
      %v6727 = vpop.permute.xlu0 %6726
      %6728 = vrot.lane.b32.xlu0 %v6370, 40
      %v6729 = vpop.permute.xlu0 %6728
      %6730 = vrot.lane.b32.xlu0 %v6373, 40
      %v6731 = vpop.permute.xlu0 %6730
      %6732 = vrot.lane.b32.xlu0 %v6375, 40
      %v6733 = vpop.permute.xlu0 %6732
      %6734 = vrot.lane.b32.xlu0 %v6378, 40
      %v6735 = vpop.permute.xlu0 %6734
      %6736 = vrot.lane.b32.xlu0 %v6380, 40
      %v6737 = vpop.permute.xlu0 %6736
      %6738 = vrot.lane.b32.xlu0 %v6383, 40
      %v6739 = vpop.permute.xlu0 %6738
      %6740 = vrot.lane.b32.xlu0 %v6385, 40
      %v6741 = vpop.permute.xlu0 %6740
      %6742 = vrot.lane.b32.xlu0 %v6388, 40
      %v6743 = vpop.permute.xlu0 %6742
      %6744 = vrot.lane.b32.xlu0 %v6390, 40
      %v6745 = vpop.permute.xlu0 %6744
      %6746 = vrot.lane.b32.xlu0 %v6393, 40
      %v6747 = vpop.permute.xlu0 %6746
      %6748 = vrot.lane.b32.xlu0 %v6395, 40
      %v6749 = vpop.permute.xlu0 %6748
      %6750 = vrot.lane.b32.xlu0 %v6687, 40
      %v6751 = vpop.permute.xlu0 %6750
      %6752 = vrot.lane.b32.xlu0 %v6689, 40
      %v6753 = vpop.permute.xlu0 %6752
      %6786 = vrot.lane.b32.xlu0 %v6095, 48
      %v6787 = vpop.permute.xlu0 %6786
      %6788 = vrot.lane.b32.xlu0 %v6004, 48
      %v6789 = vpop.permute.xlu0 %6788
      %6790 = vrot.lane.b32.xlu0 %v6096, 48
      %v6791 = vpop.permute.xlu0 %6790
      %6792 = vrot.lane.b32.xlu0 %v6007, 48
      %v6793 = vpop.permute.xlu0 %6792
      %6794 = vrot.lane.b32.xlu0 %v6097, 48
      %v6795 = vpop.permute.xlu0 %6794
      %6796 = vrot.lane.b32.xlu0 %v6010, 48
      %v6797 = vpop.permute.xlu0 %6796
      %6798 = vrot.lane.b32.xlu0 %v6098, 48
      %v6799 = vpop.permute.xlu0 %6798
      %6800 = vrot.lane.b32.xlu0 %v6013, 48
      %v6801 = vpop.permute.xlu0 %6800
      %6802 = vrot.lane.b32.xlu0 %v6099, 48
      %v6803 = vpop.permute.xlu0 %6802
      %6804 = vrot.lane.b32.xlu0 %v6016, 48
      %v6805 = vpop.permute.xlu0 %6804
      %6806 = vrot.lane.b32.xlu0 %v6100, 48
      %v6807 = vpop.permute.xlu0 %6806
      %6808 = vrot.lane.b32.xlu0 %v6019, 48
      %v6809 = vpop.permute.xlu0 %6808
      %6810 = vrot.lane.b32.xlu0 %v6101, 48
      %v6811 = vpop.permute.xlu0 %6810
      %6812 = vrot.lane.b32.xlu0 %v6022, 48
      %v6813 = vpop.permute.xlu0 %6812
      %6814 = vrot.lane.b32.xlu0 %v6102, 48
      %v6815 = vpop.permute.xlu0 %6814
      %6816 = vrot.lane.b32.xlu0 %v6025, 48
      %v6817 = vpop.permute.xlu0 %6816
      %6818 = vrot.lane.b32.xlu0 %v6103, 48
      %v6819 = vpop.permute.xlu0 %6818
      %6820 = vrot.lane.b32.xlu0 %v6028, 48
      %v6821 = vpop.permute.xlu0 %6820
      %6822 = vrot.lane.b32.xlu0 %v6104, 48
      %v6823 = vpop.permute.xlu0 %6822
      %6824 = vrot.lane.b32.xlu0 %v6031, 48
      %v6825 = vpop.permute.xlu0 %6824
      %6826 = vrot.lane.b32.xlu0 %v6105, 48
      %v6827 = vpop.permute.xlu0 %6826
      %6828 = vrot.lane.b32.xlu0 %v6034, 48
      %v6829 = vpop.permute.xlu0 %6828
      %6830 = vrot.lane.b32.xlu0 %v6106, 48
      %v6831 = vpop.permute.xlu0 %6830
      %6832 = vrot.lane.b32.xlu0 %v6037, 48
      %v6833 = vpop.permute.xlu0 %6832
      %6834 = vrot.lane.b32.xlu0 %v6107, 48
      %v6835 = vpop.permute.xlu0 %6834
      %6836 = vrot.lane.b32.xlu0 %v6040, 48
      %v6837 = vpop.permute.xlu0 %6836
      %6838 = vrot.lane.b32.xlu0 %v6108, 48
      %v6839 = vpop.permute.xlu0 %6838
      %6840 = vrot.lane.b32.xlu0 %v6043, 48
      %v6841 = vpop.permute.xlu0 %6840
      %6842 = vrot.lane.b32.xlu0 %v6109, 48
      %v6843 = vpop.permute.xlu0 %6842
      %6844 = vrot.lane.b32.xlu0 %v6046, 48
      %v6845 = vpop.permute.xlu0 %6844
      %6876 = vrot.lane.b32.xlu0 %v6163, 56
      %v6877 = vpop.permute.xlu0 %6876
      %6878 = vrot.lane.b32.xlu0 %v6165, 56
      %v6879 = vpop.permute.xlu0 %6878
      %6880 = vrot.lane.b32.xlu0 %v6168, 56
      %v6881 = vpop.permute.xlu0 %6880
      %6882 = vrot.lane.b32.xlu0 %v6170, 56
      %v6883 = vpop.permute.xlu0 %6882
      %6884 = vrot.lane.b32.xlu0 %v6173, 56
      %v6885 = vpop.permute.xlu0 %6884
      %6886 = vrot.lane.b32.xlu0 %v6175, 56
      %v6887 = vpop.permute.xlu0 %6886
      %6888 = vrot.lane.b32.xlu0 %v6178, 56
      %v6889 = vpop.permute.xlu0 %6888
      %6890 = vrot.lane.b32.xlu0 %v6180, 56
      %v6891 = vpop.permute.xlu0 %6890
      %6892 = vrot.lane.b32.xlu0 %v6183, 56
      %v6893 = vpop.permute.xlu0 %6892
      %6894 = vrot.lane.b32.xlu0 %v6185, 56
      %v6895 = vpop.permute.xlu0 %6894
      %6896 = vrot.lane.b32.xlu0 %v6188, 56
      %v6897 = vpop.permute.xlu0 %6896
      %6898 = vrot.lane.b32.xlu0 %v6190, 56
      %v6899 = vpop.permute.xlu0 %6898
      %6900 = vrot.lane.b32.xlu0 %v6193, 56
      %v6901 = vpop.permute.xlu0 %6900
      %6902 = vrot.lane.b32.xlu0 %v6195, 56
      %v6903 = vpop.permute.xlu0 %6902
      %6904 = vrot.lane.b32.xlu0 %v6198, 56
      %v6905 = vpop.permute.xlu0 %6904
      %6906 = vrot.lane.b32.xlu0 %v6200, 56
      %v6907 = vpop.permute.xlu0 %6906
      %6908 = vrot.lane.b32.xlu0 %v6203, 56
      %v6909 = vpop.permute.xlu0 %6908
      %6910 = vrot.lane.b32.xlu0 %v6205, 56
      %v6911 = vpop.permute.xlu0 %6910
      %6912 = vrot.lane.b32.xlu0 %v6208, 56
      %v6913 = vpop.permute.xlu0 %6912
      %6914 = vrot.lane.b32.xlu0 %v6210, 56
      %v6915 = vpop.permute.xlu0 %6914
      %6916 = vrot.lane.b32.xlu0 %v6213, 56
      %v6917 = vpop.permute.xlu0 %6916
      %6918 = vrot.lane.b32.xlu0 %v6215, 56
      %v6919 = vpop.permute.xlu0 %6918
      %6920 = vrot.lane.b32.xlu0 %v6218, 56
      %v6921 = vpop.permute.xlu0 %6920
      %6922 = vrot.lane.b32.xlu0 %v6220, 56
      %v6923 = vpop.permute.xlu0 %6922
      %6924 = vrot.lane.b32.xlu0 %v6223, 56
      %v6925 = vpop.permute.xlu0 %6924
      %6926 = vrot.lane.b32.xlu0 %v6225, 56
      %v6927 = vpop.permute.xlu0 %6926
      %6928 = vrot.lane.b32.xlu0 %v6228, 56
      %v6929 = vpop.permute.xlu0 %6928
      %6930 = vrot.lane.b32.xlu0 %v6230, 56
      %v6931 = vpop.permute.xlu0 %6930
      %6932 = vrot.lane.b32.xlu0 %v6586, 56
      %v6933 = vpop.permute.xlu0 %6932
      %6934 = vrot.lane.b32.xlu0 %v6588, 56
      %v6935 = vpop.permute.xlu0 %6934
      %6966 = vrot.lane.b32.xlu0 %v6328, 64
      %v6967 = vpop.permute.xlu0 %6966
      %6968 = vrot.lane.b32.xlu0 %v6330, 64
      %v6969 = vpop.permute.xlu0 %6968
      %6970 = vrot.lane.b32.xlu0 %v6333, 64
      %v6971 = vpop.permute.xlu0 %6970
      %6972 = vrot.lane.b32.xlu0 %v6335, 64
      %v6973 = vpop.permute.xlu0 %6972
      %6974 = vrot.lane.b32.xlu0 %v6338, 64
      %v6975 = vpop.permute.xlu0 %6974
      %6976 = vrot.lane.b32.xlu0 %v6340, 64
      %v6977 = vpop.permute.xlu0 %6976
      %6978 = vrot.lane.b32.xlu0 %v6343, 64
      %v6979 = vpop.permute.xlu0 %6978
      %6980 = vrot.lane.b32.xlu0 %v6345, 64
      %v6981 = vpop.permute.xlu0 %6980
      %6982 = vrot.lane.b32.xlu0 %v6348, 64
      %v6983 = vpop.permute.xlu0 %6982
      %6984 = vrot.lane.b32.xlu0 %v6350, 64
      %v6985 = vpop.permute.xlu0 %6984
      %6986 = vrot.lane.b32.xlu0 %v6353, 64
      %v6987 = vpop.permute.xlu0 %6986
      %6988 = vrot.lane.b32.xlu0 %v6355, 64
      %v6989 = vpop.permute.xlu0 %6988
      %6990 = vrot.lane.b32.xlu0 %v6358, 64
      %v6991 = vpop.permute.xlu0 %6990
      %6992 = vrot.lane.b32.xlu0 %v6360, 64
      %v6993 = vpop.permute.xlu0 %6992
      %6994 = vrot.lane.b32.xlu0 %v6363, 64
      %v6995 = vpop.permute.xlu0 %6994
      %6996 = vrot.lane.b32.xlu0 %v6365, 64
      %v6997 = vpop.permute.xlu0 %6996
      %6998 = vrot.lane.b32.xlu0 %v6368, 64
      %v6999 = vpop.permute.xlu0 %6998
      %7000 = vrot.lane.b32.xlu0 %v6370, 64
      %v7001 = vpop.permute.xlu0 %7000
      %7002 = vrot.lane.b32.xlu0 %v6373, 64
      %v7003 = vpop.permute.xlu0 %7002
      %7004 = vrot.lane.b32.xlu0 %v6375, 64
      %v7005 = vpop.permute.xlu0 %7004
      %7006 = vrot.lane.b32.xlu0 %v6378, 64
      %v7007 = vpop.permute.xlu0 %7006
      %7008 = vrot.lane.b32.xlu0 %v6380, 64
      %v7009 = vpop.permute.xlu0 %7008
      %7010 = vrot.lane.b32.xlu0 %v6383, 64
      %v7011 = vpop.permute.xlu0 %7010
      %7012 = vrot.lane.b32.xlu0 %v6385, 64
      %v7013 = vpop.permute.xlu0 %7012
      %7014 = vrot.lane.b32.xlu0 %v6388, 64
      %v7015 = vpop.permute.xlu0 %7014
      %7016 = vrot.lane.b32.xlu0 %v6390, 64
      %v7017 = vpop.permute.xlu0 %7016
      %7018 = vrot.lane.b32.xlu0 %v6393, 64
      %v7019 = vpop.permute.xlu0 %7018
      %7020 = vrot.lane.b32.xlu0 %v6395, 64
      %v7021 = vpop.permute.xlu0 %7020
      %7022 = vrot.lane.b32.xlu0 %v6687, 64
      %v7023 = vpop.permute.xlu0 %7022
      %7024 = vrot.lane.b32.xlu0 %v6689, 64
      %v7025 = vpop.permute.xlu0 %7024
      %v7056 = vsel %vm1668, %v6094, %v6232
      %v7057 = vsel %vm1668, %v6001, %v6234
      %v7058 = vsel %vm1668, %v6095, %v6236
      %v7059 = vsel %vm1668, %v6004, %v6238
      %v7060 = vsel %vm1668, %v6096, %v6240
      %v7061 = vsel %vm1668, %v6007, %v6242
      %v7062 = vsel %vm1668, %v6097, %v6244
      %v7063 = vsel %vm1668, %v6010, %v6246
      %v7064 = vsel %vm1668, %v6098, %v6248
      %v7065 = vsel %vm1668, %v6013, %v6250
      %v7066 = vsel %vm1668, %v6099, %v6252
      %v7067 = vsel %vm1668, %v6016, %v6254
      %v7068 = vsel %vm1668, %v6100, %v6256
      %v7069 = vsel %vm1668, %v6019, %v6258
      %v7070 = vsel %vm1668, %v6101, %v6260
      %v7071 = vsel %vm1668, %v6022, %v6262
      %v7072 = vsel %vm1668, %v6102, %v6264
      %v7073 = vsel %vm1668, %v6025, %v6266
      %v7074 = vsel %vm1668, %v6103, %v6268
      %v7075 = vsel %vm1668, %v6028, %v6270
      %v7076 = vsel %vm1668, %v6104, %v6272
      %v7077 = vsel %vm1668, %v6031, %v6274
      %v7078 = vsel %vm1668, %v6105, %v6276
      %v7079 = vsel %vm1668, %v6034, %v6278
      %v7080 = vsel %vm1668, %v6106, %v6280
      %v7081 = vsel %vm1668, %v6037, %v6282
      %v7082 = vsel %vm1668, %v6107, %v6284
      %v7083 = vsel %vm1668, %v6040, %v6286
      %v7084 = vsel %vm1668, %v6108, %v6288
      %v7085 = vsel %vm1668, %v6043, %v6290
      %v7086 = vsel %vm1701, %v7056, %v6397
      %v7087 = vsel %vm1701, %v7057, %v6399
      %v7088 = vsel %vm1701, %v7058, %v6401
      %v7089 = vsel %vm1701, %v7059, %v6403
      %v7090 = vsel %vm1701, %v7060, %v6405
      %v7091 = vsel %vm1701, %v7061, %v6407
      %v7092 = vsel %vm1701, %v7062, %v6409
      %v7093 = vsel %vm1701, %v7063, %v6411
      %v7094 = vsel %vm1701, %v7064, %v6413
      %v7095 = vsel %vm1701, %v7065, %v6415
      %v7096 = vsel %vm1701, %v7066, %v6417
      %v7097 = vsel %vm1701, %v7067, %v6419
      %v7098 = vsel %vm1701, %v7068, %v6421
      %v7099 = vsel %vm1701, %v7069, %v6423
      %v7100 = vsel %vm1701, %v7070, %v6425
      %v7101 = vsel %vm1701, %v7071, %v6427
      %v7102 = vsel %vm1701, %v7072, %v6429
      %v7103 = vsel %vm1701, %v7073, %v6431
      %v7104 = vsel %vm1701, %v7074, %v6433
      %v7105 = vsel %vm1701, %v7075, %v6435
      %v7106 = vsel %vm1701, %v7076, %v6437
      %v7107 = vsel %vm1701, %v7077, %v6439
      %v7108 = vsel %vm1701, %v7078, %v6441
      %v7109 = vsel %vm1701, %v7079, %v6443
      %v7110 = vsel %vm1701, %v7080, %v6445
      %v7111 = vsel %vm1701, %v7081, %v6447
      %v7112 = vsel %vm1701, %v7082, %v6449
      %v7113 = vsel %vm1701, %v7083, %v6451
      %v7114 = vsel %vm1701, %v7084, %v6453
      %v7115 = vsel %vm1701, %v7085, %v6455
      %v7116 = vsel %vm1734, %v1702, %v6488
      %v7117 = vsel %vm1734, %v1703, %v6490
      %v7118 = vsel %vm1734, %v7086, %v6492
      %v7119 = vsel %vm1734, %v7087, %v6494
      %v7120 = vsel %vm1734, %v7088, %v6496
      %v7121 = vsel %vm1734, %v7089, %v6498
      %v7122 = vsel %vm1734, %v7090, %v6500
      %v7123 = vsel %vm1734, %v7091, %v6502
      %v7124 = vsel %vm1734, %v7092, %v6504
      %v7125 = vsel %vm1734, %v7093, %v6506
      %v7126 = vsel %vm1734, %v7094, %v6508
      %v7127 = vsel %vm1734, %v7095, %v6510
      %v7128 = vsel %vm1734, %v7096, %v6512
      %v7129 = vsel %vm1734, %v7097, %v6514
      %v7130 = vsel %vm1734, %v7098, %v6516
      %v7131 = vsel %vm1734, %v7099, %v6518
      %v7132 = vsel %vm1734, %v7100, %v6520
      %v7133 = vsel %vm1734, %v7101, %v6522
      %v7134 = vsel %vm1734, %v7102, %v6524
      %v7135 = vsel %vm1734, %v7103, %v6526
      %v7136 = vsel %vm1734, %v7104, %v6528
      %v7137 = vsel %vm1734, %v7105, %v6530
      %v7138 = vsel %vm1734, %v7106, %v6532
      %v7139 = vsel %vm1734, %v7107, %v6534
      %v7140 = vsel %vm1734, %v7108, %v6536
      %v7141 = vsel %vm1734, %v7109, %v6538
      %v7142 = vsel %vm1734, %v7110, %v6540
      %v7143 = vsel %vm1734, %v7111, %v6542
      %v7144 = vsel %vm1734, %v7112, %v6544
      %v7145 = vsel %vm1734, %v7113, %v6546
      %v7146 = vsel %vm1734, %v7114, %v6548
      %v7147 = vsel %vm1734, %v7115, %v6550
      %v7148 = vsel %vm1767, %v7116, %v6590
      %v7149 = vsel %vm1767, %v7117, %v6592
      %v7150 = vsel %vm1767, %v7118, %v6594
      %v7151 = vsel %vm1767, %v7119, %v6596
      %v7152 = vsel %vm1767, %v7120, %v6598
      %v7153 = vsel %vm1767, %v7121, %v6600
      %v7154 = vsel %vm1767, %v7122, %v6602
      %v7155 = vsel %vm1767, %v7123, %v6604
      %v7156 = vsel %vm1767, %v7124, %v6606
      %v7157 = vsel %vm1767, %v7125, %v6608
      %v7158 = vsel %vm1767, %v7126, %v6610
      %v7159 = vsel %vm1767, %v7127, %v6612
      %v7160 = vsel %vm1767, %v7128, %v6614
      %v7161 = vsel %vm1767, %v7129, %v6616
      %v7162 = vsel %vm1767, %v7130, %v6618
      %v7163 = vsel %vm1767, %v7131, %v6620
      %v7164 = vsel %vm1767, %v7132, %v6622
      %v7165 = vsel %vm1767, %v7133, %v6624
      %v7166 = vsel %vm1767, %v7134, %v6626
      %v7167 = vsel %vm1767, %v7135, %v6628
      %v7168 = vsel %vm1767, %v7136, %v6630
      %v7169 = vsel %vm1767, %v7137, %v6632
      %v7170 = vsel %vm1767, %v7138, %v6634
      %v7171 = vsel %vm1767, %v7139, %v6636
      %v7172 = vsel %vm1767, %v7140, %v6638
      %v7173 = vsel %vm1767, %v7141, %v6640
      %v7174 = vsel %vm1767, %v7142, %v6642
      %v7175 = vsel %vm1767, %v7143, %v6644
      %v7176 = vsel %vm1767, %v7144, %v6646
      %v7177 = vsel %vm1767, %v7145, %v6648
      %v7178 = vsel %vm1767, %v7146, %v6650
      %v7179 = vsel %vm1767, %v7147, %v6652
      %v7180 = vsel %vm1800, %v7148, %v6691
      %v7181 = vsel %vm1800, %v7149, %v6693
      %v7182 = vsel %vm1800, %v7150, %v6695
      %v7183 = vsel %vm1800, %v7151, %v6697
      %v7184 = vsel %vm1800, %v7152, %v6699
      %v7185 = vsel %vm1800, %v7153, %v6701
      %v7186 = vsel %vm1800, %v7154, %v6703
      %v7187 = vsel %vm1800, %v7155, %v6705
      %v7188 = vsel %vm1800, %v7156, %v6707
      %v7189 = vsel %vm1800, %v7157, %v6709
      %v7190 = vsel %vm1800, %v7158, %v6711
      %v7191 = vsel %vm1800, %v7159, %v6713
      %v7192 = vsel %vm1800, %v7160, %v6715
      %v7193 = vsel %vm1800, %v7161, %v6717
      %v7194 = vsel %vm1800, %v7162, %v6719
      %v7195 = vsel %vm1800, %v7163, %v6721
      %v7196 = vsel %vm1800, %v7164, %v6723
      %v7197 = vsel %vm1800, %v7165, %v6725
      %v7198 = vsel %vm1800, %v7166, %v6727
      %v7199 = vsel %vm1800, %v7167, %v6729
      %v7200 = vsel %vm1800, %v7168, %v6731
      %v7201 = vsel %vm1800, %v7169, %v6733
      %v7202 = vsel %vm1800, %v7170, %v6735
      %v7203 = vsel %vm1800, %v7171, %v6737
      %v7204 = vsel %vm1800, %v7172, %v6739
      %v7205 = vsel %vm1800, %v7173, %v6741
      %v7206 = vsel %vm1800, %v7174, %v6743
      %v7207 = vsel %vm1800, %v7175, %v6745
      %v7208 = vsel %vm1800, %v7176, %v6747
      %v7209 = vsel %vm1800, %v7177, %v6749
      %v7210 = vsel %vm1800, %v7178, %v6751
      %v7211 = vsel %vm1800, %v7179, %v6753
      %v7212 = vsel %vm1833, %v7180, %v6787
      %v7213 = vsel %vm1833, %v7181, %v6789
      %v7214 = vsel %vm1833, %v7182, %v6791
      %v7215 = vsel %vm1833, %v7183, %v6793
      %v7216 = vsel %vm1833, %v7184, %v6795
      %v7217 = vsel %vm1833, %v7185, %v6797
      %v7218 = vsel %vm1833, %v7186, %v6799
      %v7219 = vsel %vm1833, %v7187, %v6801
      %v7220 = vsel %vm1833, %v7188, %v6803
      %v7221 = vsel %vm1833, %v7189, %v6805
      %v7222 = vsel %vm1833, %v7190, %v6807
      %v7223 = vsel %vm1833, %v7191, %v6809
      %v7224 = vsel %vm1833, %v7192, %v6811
      %v7225 = vsel %vm1833, %v7193, %v6813
      %v7226 = vsel %vm1833, %v7194, %v6815
      %v7227 = vsel %vm1833, %v7195, %v6817
      %v7228 = vsel %vm1833, %v7196, %v6819
      %v7229 = vsel %vm1833, %v7197, %v6821
      %v7230 = vsel %vm1833, %v7198, %v6823
      %v7231 = vsel %vm1833, %v7199, %v6825
      %v7232 = vsel %vm1833, %v7200, %v6827
      %v7233 = vsel %vm1833, %v7201, %v6829
      %v7234 = vsel %vm1833, %v7202, %v6831
      %v7235 = vsel %vm1833, %v7203, %v6833
      %v7236 = vsel %vm1833, %v7204, %v6835
      %v7237 = vsel %vm1833, %v7205, %v6837
      %v7238 = vsel %vm1833, %v7206, %v6839
      %v7239 = vsel %vm1833, %v7207, %v6841
      %v7240 = vsel %vm1833, %v7208, %v6843
      %v7241 = vsel %vm1833, %v7209, %v6845
      %v7242 = vsel %vm1833, %v7210, %v1441
      %v7243 = vsel %vm1833, %v7211, %v1443
      %v7244 = vsel %vm1866, %v7212, %v6877
      %v7245 = vsel %vm1866, %v7213, %v6879
      %v7246 = vsel %vm1866, %v7214, %v6881
      %v7247 = vsel %vm1866, %v7215, %v6883
      %v7248 = vsel %vm1866, %v7216, %v6885
      %v7249 = vsel %vm1866, %v7217, %v6887
      %v7250 = vsel %vm1866, %v7218, %v6889
      %v7251 = vsel %vm1866, %v7219, %v6891
      %v7252 = vsel %vm1866, %v7220, %v6893
      %v7253 = vsel %vm1866, %v7221, %v6895
      %v7254 = vsel %vm1866, %v7222, %v6897
      %v7255 = vsel %vm1866, %v7223, %v6899
      %v7256 = vsel %vm1866, %v7224, %v6901
      %v7257 = vsel %vm1866, %v7225, %v6903
      %v7258 = vsel %vm1866, %v7226, %v6905
      %v7259 = vsel %vm1866, %v7227, %v6907
      %v7260 = vsel %vm1866, %v7228, %v6909
      %v7261 = vsel %vm1866, %v7229, %v6911
      %v7262 = vsel %vm1866, %v7230, %v6913
      %v7263 = vsel %vm1866, %v7231, %v6915
      %v7264 = vsel %vm1866, %v7232, %v6917
      %v7265 = vsel %vm1866, %v7233, %v6919
      %v7266 = vsel %vm1866, %v7234, %v6921
      %v7267 = vsel %vm1866, %v7235, %v6923
      %v7268 = vsel %vm1866, %v7236, %v6925
      %v7269 = vsel %vm1866, %v7237, %v6927
      %v7270 = vsel %vm1866, %v7238, %v6929
      %v7271 = vsel %vm1866, %v7239, %v6931
      %v7272 = vsel %vm1866, %v7240, %v6933
      %v7273 = vsel %vm1866, %v7241, %v6935
      %v7274 = vsel %vm1866, %v7242, %v1537
      %v7275 = vsel %vm1866, %v7243, %v1539
      %v7276 = vsel %vm1899, %v7244, %v6967
      %v7277 = vsel %vm1899, %v7245, %v6969
      %v7278 = vsel %vm1899, %v7246, %v6971
      %v7279 = vsel %vm1899, %v7247, %v6973
      %v7280 = vsel %vm1899, %v7248, %v6975
      %v7281 = vsel %vm1899, %v7249, %v6977
      %v7282 = vsel %vm1899, %v7250, %v6979
      %v7283 = vsel %vm1899, %v7251, %v6981
      %v7284 = vsel %vm1899, %v7252, %v6983
      %v7285 = vsel %vm1899, %v7253, %v6985
      %v7286 = vsel %vm1899, %v7254, %v6987
      %v7287 = vsel %vm1899, %v7255, %v6989
      %v7288 = vsel %vm1899, %v7256, %v6991
      %v7289 = vsel %vm1899, %v7257, %v6993
      %v7290 = vsel %vm1899, %v7258, %v6995
      %v7291 = vsel %vm1899, %v7259, %v6997
      %v7292 = vsel %vm1899, %v7260, %v6999
      %v7293 = vsel %vm1899, %v7261, %v7001
      %v7294 = vsel %vm1899, %v7262, %v7003
      %v7295 = vsel %vm1899, %v7263, %v7005
      %v7296 = vsel %vm1899, %v7264, %v7007
      %v7297 = vsel %vm1899, %v7265, %v7009
      %v7298 = vsel %vm1899, %v7266, %v7011
      %v7299 = vsel %vm1899, %v7267, %v7013
      %v7300 = vsel %vm1899, %v7268, %v7015
      %v7301 = vsel %vm1899, %v7269, %v7017
      %v7302 = vsel %vm1899, %v7270, %v7019
      %v7303 = vsel %vm1899, %v7271, %v7021
      %v7304 = vsel %vm1899, %v7272, %v7023
      %v7305 = vsel %vm1899, %v7273, %v7025
      %v7306 = vsel %vm1899, %v7274, %v1633
      %v7307 = vsel %vm1899, %v7275, %v1635
      %v7308 = vld [vmem:[%s10] sm:$0xff]
      %v7309 = vld [vmem:[%s10 + $0x8] sm:$0xff]
      %v7310 = vld [vmem:[%s10 + $0x10] sm:$0xff]
      %v7311 = vld [vmem:[%s10 + $0x18] sm:$0xff]
      %v7312 = vld [vmem:[%s10 + $0x20] sm:$0xff]
      %v7313 = vld [vmem:[%s10 + $0x28] sm:$0xff]
      %v7314 = vld [vmem:[%s10 + $0x30] sm:$0xff]
      %v7315 = vld [vmem:[%s10 + $0x38] sm:$0xff]
      %v7316 = vld [vmem:[%s10 + $0x40] sm:$0xff]
      %v7318 = vsel %vm1941, %v7276, 0
      %v7321 = vsel %vm1941, %v7277, 0
      %v7324 = vsel %vm1941, %v7278, 0
      %v7327 = vsel %vm1941, %v7279, 0
      %v7330 = vsel %vm1941, %v7280, 0
      %v7333 = vsel %vm1941, %v7281, 0
      %v7336 = vsel %vm1941, %v7282, 0
      %v7339 = vsel %vm1941, %v7283, 0
      %v7342 = vsel %vm1941, %v7284, 0
      %v7345 = vsel %vm1941, %v7285, 0
      %v7348 = vsel %vm1941, %v7286, 0
      %v7351 = vsel %vm1941, %v7287, 0
      %v7354 = vsel %vm1941, %v7288, 0
      %v7357 = vsel %vm1941, %v7289, 0
      %v7360 = vsel %vm1941, %v7290, 0
      %v7363 = vsel %vm1941, %v7291, 0
      %v7366 = vsel %vm1941, %v7292, 0
      %v7369 = vsel %vm1941, %v7293, 0
      %v7372 = vsel %vm1941, %v7294, 0
      %v7375 = vsel %vm1941, %v7295, 0
      %v7378 = vsel %vm1941, %v7296, 0
      %v7381 = vsel %vm1941, %v7297, 0
      %v7384 = vsel %vm1941, %v7298, 0
      %v7387 = vsel %vm1941, %v7299, 0
      %v7390 = vsel %vm1941, %v7300, 0
      %v7393 = vsel %vm1941, %v7301, 0
      %v7396 = vsel %vm1941, %v7302, 0
      %v7399 = vsel %vm1941, %v7303, 0
      %v7402 = vsel %vm1941, %v7304, 0
      %v7405 = vsel %vm1941, %v7305, 0
      %v7408 = vsel %vm1941, %v7306, 0
      %v7411 = vsel %vm1941, %v7307, 0
      %7413 = vmatprep.subr.mxu0 0.0
      %7414 = vmatpush1.msra.mxu0 0.0
      %7415 = vmatprep.subr.mxu0 0.0
      %7416 = vmatpush1.msra.mxu0 0.0
      %7417 = vmatprep.subr.mxu0 0.0
      %7418 = vmatpush1.msra.mxu0 0.0
      %7419 = vmatprep.subr.mxu0 0.0
      %7420 = vmatpush1.msra.mxu0 0.0
      %7421 = vmatprep.subr.mxu0 0.0
      %7422 = vmatpush1.msra.mxu0 0.0
      %7423 = vmatprep.subr.mxu0 0.0
      %7424 = vmatpush1.msra.mxu0 0.0
      %7425 = vmatprep.subr.mxu0 0.0
      %7426 = vmatpush1.msra.mxu0 0.0
      %7427 = vmatprep.subr.mxu0 0.0
      %7428 = vmatpush1.msra.mxu0 %v7316
      %7429 = vmatprep.subr.mxu0 0.0
      %7430 = vmatpush1.msra.mxu0 %v7315
      %7431 = vmatprep.subr.mxu0 0.0
      %7432 = vmatpush1.msra.mxu0 %v7314
      %7433 = vmatprep.subr.mxu0 0.0
      %7434 = vmatpush1.msra.mxu0 %v7313
      %7435 = vmatprep.subr.mxu0 0.0
      %7436 = vmatpush1.msra.mxu0 %v7312
      %7437 = vmatprep.subr.mxu0 0.0
      %7438 = vmatpush1.msra.mxu0 %v7311
      %7439 = vmatprep.subr.mxu0 0.0
      %7440 = vmatpush1.msra.mxu0 %v7310
      %7441 = vmatprep.subr.mxu0 0.0
      %7442 = vmatpush1.msra.mxu0 %v7309
      %7443 = vmatprep.subr.mxu0 0.0
      %7444 = vmatpush1.msra.mxu0 %v7308
      %7445 = vmatprep.subr.mxu0 0.0
      %7446 = vmatpush2.msra.mxu0 0.0
      %7447 = vmatprep.subr.mxu0 0.0
      %7448 = vmatpush2.msra.mxu0 0.0
      %7449 = vmatprep.subr.mxu0 0.0
      %7450 = vmatpush2.msra.mxu0 0.0
      %7451 = vmatprep.subr.mxu0 0.0
      %7452 = vmatpush2.msra.mxu0 0.0
      %7453 = vmatprep.subr.mxu0 0.0
      %7454 = vmatpush2.msra.mxu0 0.0
      %7455 = vmatprep.subr.mxu0 0.0
      %7456 = vmatpush2.msra.mxu0 0.0
      %7457 = vmatprep.subr.mxu0 0.0
      %7458 = vmatpush2.msra.mxu0 0.0
      %7459 = vmatprep.subr.mxu0 0.0
      %7460 = vmatpush2.msra.mxu0 0.0
      %7461 = vmatprep.subr.mxu0 0.0
      %7462 = vmatpush2.msra.mxu0 0.0
      %7463 = vmatprep.subr.mxu0 0.0
      %7464 = vmatpush2.msra.mxu0 0.0
      %7465 = vmatprep.subr.mxu0 0.0
      %7466 = vmatpush2.msra.mxu0 0.0
      %7467 = vmatprep.subr.mxu0 0.0
      %7468 = vmatpush2.msra.mxu0 0.0
      %7469 = vmatprep.subr.mxu0 0.0
      %7470 = vmatpush2.msra.mxu0 0.0
      %7471 = vmatprep.subr.mxu0 0.0
      %7472 = vmatpush2.msra.mxu0 0.0
      %7473 = vmatprep.subr.mxu0 0.0
      %7474 = vmatpush2.msra.mxu0 0.0
      %7475 = vmatprep.subr.mxu0 0.0
      %7476 = vmatpush2.msra.mxu0 0.0
      %7477 = vmatprep.mubr.f32.mxu0 0.0
      %7478 = vmatmul.mubr.f32.gmra.mxu0 %v7318
      %v7479 = vpop.f32.mrf.mxu0
      %v7480 = vadd.f32 0.0, %v7479
      %v7481 = vpop.f32.mrf.mxu0
      %7482 = vmatprep.mubr.f32.mxu0 0.0
      %7483 = vmatmul.mubr.f32.gmra.mxu0 %v7321
      %v7484 = vpop.f32.mrf.mxu0
      %v7485 = vadd.f32 0.0, %v7484
      %v7486 = vpop.f32.mrf.mxu0
      %7487 = vmatprep.mubr.f32.mxu0 0.0
      %7488 = vmatmul.mubr.f32.gmra.mxu0 %v7324
      %v7489 = vpop.f32.mrf.mxu0
      %v7490 = vadd.f32 0.0, %v7489
      %v7491 = vpop.f32.mrf.mxu0
      %7492 = vmatprep.mubr.f32.mxu0 0.0
      %7493 = vmatmul.mubr.f32.gmra.mxu0 %v7327
      %v7494 = vpop.f32.mrf.mxu0
      %v7495 = vadd.f32 0.0, %v7494
      %v7496 = vpop.f32.mrf.mxu0
      %7497 = vmatprep.mubr.f32.mxu0 0.0
      %7498 = vmatmul.mubr.f32.gmra.mxu0 %v7330
      %v7499 = vpop.f32.mrf.mxu0
      %v7500 = vadd.f32 0.0, %v7499
      %v7501 = vpop.f32.mrf.mxu0
      %7502 = vmatprep.mubr.f32.mxu0 0.0
      %7503 = vmatmul.mubr.f32.gmra.mxu0 %v7333
      %v7504 = vpop.f32.mrf.mxu0
      %v7505 = vadd.f32 0.0, %v7504
      %v7506 = vpop.f32.mrf.mxu0
      %7507 = vmatprep.mubr.f32.mxu0 0.0
      %7508 = vmatmul.mubr.f32.gmra.mxu0 %v7336
      %v7509 = vpop.f32.mrf.mxu0
      %v7510 = vadd.f32 0.0, %v7509
      %v7511 = vpop.f32.mrf.mxu0
      %7512 = vmatprep.mubr.f32.mxu0 0.0
      %7513 = vmatmul.mubr.f32.gmra.mxu0 %v7339
      %v7514 = vpop.f32.mrf.mxu0
      %v7515 = vadd.f32 0.0, %v7514
      %v7516 = vpop.f32.mrf.mxu0
      %7517 = vmatprep.mubr.f32.mxu0 0.0
      %7518 = vmatmul.mubr.f32.gmra.mxu0 %v7342
      %v7519 = vpop.f32.mrf.mxu0
      %v7520 = vadd.f32 0.0, %v7519
      %v7521 = vpop.f32.mrf.mxu0
      %7522 = vmatprep.mubr.f32.mxu0 0.0
      %7523 = vmatmul.mubr.f32.gmra.mxu0 %v7345
      %v7524 = vpop.f32.mrf.mxu0
      %v7525 = vadd.f32 0.0, %v7524
      %v7526 = vpop.f32.mrf.mxu0
      %7527 = vmatprep.mubr.f32.mxu0 0.0
      %7528 = vmatmul.mubr.f32.gmra.mxu0 %v7348
      %v7529 = vpop.f32.mrf.mxu0
      %v7530 = vadd.f32 0.0, %v7529
      %v7531 = vpop.f32.mrf.mxu0
      %7532 = vmatprep.mubr.f32.mxu0 0.0
      %7533 = vmatmul.mubr.f32.gmra.mxu0 %v7351
      %v7534 = vpop.f32.mrf.mxu0
      %v7535 = vadd.f32 0.0, %v7534
      %v7536 = vpop.f32.mrf.mxu0
      %7537 = vmatprep.mubr.f32.mxu0 0.0
      %7538 = vmatmul.mubr.f32.gmra.mxu0 %v7354
      %v7539 = vpop.f32.mrf.mxu0
      %v7540 = vadd.f32 0.0, %v7539
      %v7541 = vpop.f32.mrf.mxu0
      %7542 = vmatprep.mubr.f32.mxu0 0.0
      %7543 = vmatmul.mubr.f32.gmra.mxu0 %v7357
      %v7544 = vpop.f32.mrf.mxu0
      %v7545 = vadd.f32 0.0, %v7544
      %v7546 = vpop.f32.mrf.mxu0
      %7547 = vmatprep.mubr.f32.mxu0 0.0
      %7548 = vmatmul.mubr.f32.gmra.mxu0 %v7360
      %v7549 = vpop.f32.mrf.mxu0
      %v7550 = vadd.f32 0.0, %v7549
      %v7551 = vpop.f32.mrf.mxu0
      %7552 = vmatprep.mubr.f32.mxu0 0.0
      %7553 = vmatmul.mubr.f32.gmra.mxu0 %v7363
      %v7554 = vpop.f32.mrf.mxu0
      %v7555 = vadd.f32 0.0, %v7554
      %v7556 = vpop.f32.mrf.mxu0
      %7557 = vmatprep.mubr.f32.mxu0 0.0
      %7558 = vmatmul.mubr.f32.gmra.mxu0 %v7366
      %v7559 = vpop.f32.mrf.mxu0
      %v7560 = vadd.f32 0.0, %v7559
      %v7561 = vpop.f32.mrf.mxu0
      %7562 = vmatprep.mubr.f32.mxu0 0.0
      %7563 = vmatmul.mubr.f32.gmra.mxu0 %v7369
      %v7564 = vpop.f32.mrf.mxu0
      %v7565 = vadd.f32 0.0, %v7564
      %v7566 = vpop.f32.mrf.mxu0
      %7567 = vmatprep.mubr.f32.mxu0 0.0
      %7568 = vmatmul.mubr.f32.gmra.mxu0 %v7372
      %v7569 = vpop.f32.mrf.mxu0
      %v7570 = vadd.f32 0.0, %v7569
      %v7571 = vpop.f32.mrf.mxu0
      %7572 = vmatprep.mubr.f32.mxu0 0.0
      %7573 = vmatmul.mubr.f32.gmra.mxu0 %v7375
      %v7574 = vpop.f32.mrf.mxu0
      %v7575 = vadd.f32 0.0, %v7574
      %v7576 = vpop.f32.mrf.mxu0
      %7577 = vmatprep.mubr.f32.mxu0 0.0
      %7578 = vmatmul.mubr.f32.gmra.mxu0 %v7378
      %v7579 = vpop.f32.mrf.mxu0
      %v7580 = vadd.f32 0.0, %v7579
      %v7581 = vpop.f32.mrf.mxu0
      %7582 = vmatprep.mubr.f32.mxu0 0.0
      %7583 = vmatmul.mubr.f32.gmra.mxu0 %v7381
      %v7584 = vpop.f32.mrf.mxu0
      %v7585 = vadd.f32 0.0, %v7584
      %v7586 = vpop.f32.mrf.mxu0
      %7587 = vmatprep.mubr.f32.mxu0 0.0
      %7588 = vmatmul.mubr.f32.gmra.mxu0 %v7384
      %v7589 = vpop.f32.mrf.mxu0
      %v7590 = vadd.f32 0.0, %v7589
      %v7591 = vpop.f32.mrf.mxu0
      %7592 = vmatprep.mubr.f32.mxu0 0.0
      %7593 = vmatmul.mubr.f32.gmra.mxu0 %v7387
      %v7594 = vpop.f32.mrf.mxu0
      %v7595 = vadd.f32 0.0, %v7594
      %v7596 = vpop.f32.mrf.mxu0
      %7597 = vmatprep.mubr.f32.mxu0 0.0
      %7598 = vmatmul.mubr.f32.gmra.mxu0 %v7390
      %v7599 = vpop.f32.mrf.mxu0
      %v7600 = vadd.f32 0.0, %v7599
      %v7601 = vpop.f32.mrf.mxu0
      %7602 = vmatprep.mubr.f32.mxu0 0.0
      %7603 = vmatmul.mubr.f32.gmra.mxu0 %v7393
      %v7604 = vpop.f32.mrf.mxu0
      %v7605 = vadd.f32 0.0, %v7604
      %v7606 = vpop.f32.mrf.mxu0
      %7607 = vmatprep.mubr.f32.mxu0 0.0
      %7608 = vmatmul.mubr.f32.gmra.mxu0 %v7396
      %v7609 = vpop.f32.mrf.mxu0
      %v7610 = vadd.f32 0.0, %v7609
      %v7611 = vpop.f32.mrf.mxu0
      %7612 = vmatprep.mubr.f32.mxu0 0.0
      %7613 = vmatmul.mubr.f32.gmra.mxu0 %v7399
      %v7614 = vpop.f32.mrf.mxu0
      %v7615 = vadd.f32 0.0, %v7614
      %v7616 = vpop.f32.mrf.mxu0
      %7617 = vmatprep.mubr.f32.mxu0 0.0
      %7618 = vmatmul.mubr.f32.gmra.mxu0 %v7402
      %v7619 = vpop.f32.mrf.mxu0
      %v7620 = vadd.f32 0.0, %v7619
      %v7621 = vpop.f32.mrf.mxu0
      %7622 = vmatprep.mubr.f32.mxu0 0.0
      %7623 = vmatmul.mubr.f32.gmra.mxu0 %v7405
      %v7624 = vpop.f32.mrf.mxu0
      %v7625 = vadd.f32 0.0, %v7624
      %v7626 = vpop.f32.mrf.mxu0
      %7627 = vmatprep.mubr.f32.mxu0 0.0
      %7628 = vmatmul.mubr.f32.gmra.mxu0 %v7408
      %v7629 = vpop.f32.mrf.mxu0
      %v7630 = vadd.f32 0.0, %v7629
      %v7631 = vpop.f32.mrf.mxu0
      %7632 = vmatprep.mubr.f32.mxu0 0.0
      %7633 = vmatmul.mubr.f32.gmra.mxu0 %v7411
      %v7634 = vpop.f32.mrf.mxu0
      %v7635 = vadd.f32 0.0, %v7634
      %v7636 = vpop.f32.mrf.mxu0
      %7637 = vdwg.mxu0
      %v7638 = vld [vmem:[%s11] sm:$0x1]
      %v7640 = vlaneseq
      %v7641 = vshrl.u32 %v7640, 7
      %v7642 = vsub.s32 0, %v7641
      %v7643 = vrot.slane %v7638, %v7642
      %v7645 = vmul.f32 %v7480, %v7643
      %v7646 = vmul.f32 %v7485, %v7643
      %v7647 = vmul.f32 %v7490, %v7643
      %v7648 = vmul.f32 %v7495, %v7643
      %v7649 = vmul.f32 %v7500, %v7643
      %v7650 = vmul.f32 %v7505, %v7643
      %v7651 = vmul.f32 %v7510, %v7643
      %v7652 = vmul.f32 %v7515, %v7643
      %v7653 = vmul.f32 %v7520, %v7643
      %v7654 = vmul.f32 %v7525, %v7643
      %v7655 = vmul.f32 %v7530, %v7643
      %v7656 = vmul.f32 %v7535, %v7643
      %v7657 = vmul.f32 %v7540, %v7643
      %v7658 = vmul.f32 %v7545, %v7643
      %v7659 = vmul.f32 %v7550, %v7643
      %v7660 = vmul.f32 %v7555, %v7643
      %v7661 = vmul.f32 %v7560, %v7643
      %v7662 = vmul.f32 %v7565, %v7643
      %v7663 = vmul.f32 %v7570, %v7643
      %v7664 = vmul.f32 %v7575, %v7643
      %v7665 = vmul.f32 %v7580, %v7643
      %v7666 = vmul.f32 %v7585, %v7643
      %v7667 = vmul.f32 %v7590, %v7643
      %v7668 = vmul.f32 %v7595, %v7643
      %v7669 = vmul.f32 %v7600, %v7643
      %v7670 = vmul.f32 %v7605, %v7643
      %v7671 = vmul.f32 %v7610, %v7643
      %v7672 = vmul.f32 %v7615, %v7643
      %v7673 = vmul.f32 %v7620, %v7643
      %v7674 = vmul.f32 %v7625, %v7643
      %v7675 = vmul.f32 %v7630, %v7643
      %v7676 = vmul.f32 %v7635, %v7643
      %v7677 = vld [vmem:[%s12] sm:$0x1]
      %v7679 = vlaneseq
      %v7680 = vshrl.u32 %v7679, 7
      %v7681 = vsub.s32 0, %v7680
      %v7682 = vrot.slane %v7677, %v7681
      %v7684 = vadd.f32 %v7645, %v7682
      %v7685 = vadd.f32 %v7646, %v7682
      %v7686 = vadd.f32 %v7647, %v7682
      %v7687 = vadd.f32 %v7648, %v7682
      %v7688 = vadd.f32 %v7649, %v7682
      %v7689 = vadd.f32 %v7650, %v7682
      %v7690 = vadd.f32 %v7651, %v7682
      %v7691 = vadd.f32 %v7652, %v7682
      %v7692 = vadd.f32 %v7653, %v7682
      %v7693 = vadd.f32 %v7654, %v7682
      %v7694 = vadd.f32 %v7655, %v7682
      %v7695 = vadd.f32 %v7656, %v7682
      %v7696 = vadd.f32 %v7657, %v7682
      %v7697 = vadd.f32 %v7658, %v7682
      %v7698 = vadd.f32 %v7659, %v7682
      %v7699 = vadd.f32 %v7660, %v7682
      %v7700 = vadd.f32 %v7661, %v7682
      %v7701 = vadd.f32 %v7662, %v7682
      %v7702 = vadd.f32 %v7663, %v7682
      %v7703 = vadd.f32 %v7664, %v7682
      %v7704 = vadd.f32 %v7665, %v7682
      %v7705 = vadd.f32 %v7666, %v7682
      %v7706 = vadd.f32 %v7667, %v7682
      %v7707 = vadd.f32 %v7668, %v7682
      %v7708 = vadd.f32 %v7669, %v7682
      %v7709 = vadd.f32 %v7670, %v7682
      %v7710 = vadd.f32 %v7671, %v7682
      %v7711 = vadd.f32 %v7672, %v7682
      %v7712 = vadd.f32 %v7673, %v7682
      %v7713 = vadd.f32 %v7674, %v7682
      %v7714 = vadd.f32 %v7675, %v7682
      %v7715 = vadd.f32 %v7676, %v7682
      %v7716 = vmax.f32 %v7684, 0.0
      %v7717 = vmax.f32 %v7685, 0.0
      %v7718 = vmax.f32 %v7686, 0.0
      %v7719 = vmax.f32 %v7687, 0.0
      %v7720 = vmax.f32 %v7688, 0.0
      %v7721 = vmax.f32 %v7689, 0.0
      %v7722 = vmax.f32 %v7690, 0.0
      %v7723 = vmax.f32 %v7691, 0.0
      %v7724 = vmax.f32 %v7692, 0.0
      %v7725 = vmax.f32 %v7693, 0.0
      %v7726 = vmax.f32 %v7694, 0.0
      %v7727 = vmax.f32 %v7695, 0.0
      %v7728 = vmax.f32 %v7696, 0.0
      %v7729 = vmax.f32 %v7697, 0.0
      %v7730 = vmax.f32 %v7698, 0.0
      %v7731 = vmax.f32 %v7699, 0.0
      %v7732 = vmax.f32 %v7700, 0.0
      %v7733 = vmax.f32 %v7701, 0.0
      %v7734 = vmax.f32 %v7702, 0.0
      %v7735 = vmax.f32 %v7703, 0.0
      %v7736 = vmax.f32 %v7704, 0.0
      %v7737 = vmax.f32 %v7705, 0.0
      %v7738 = vmax.f32 %v7706, 0.0
      %v7739 = vmax.f32 %v7707, 0.0
      %v7740 = vmax.f32 %v7708, 0.0
      %v7741 = vmax.f32 %v7709, 0.0
      %v7742 = vmax.f32 %v7710, 0.0
      %v7743 = vmax.f32 %v7711, 0.0
      %v7744 = vmax.f32 %v7712, 0.0
      %v7745 = vmax.f32 %v7713, 0.0
      %v7746 = vmax.f32 %v7714, 0.0
      %v7747 = vmax.f32 %v7715, 0.0
      %v7748 = vadd.f32 %v7716, %v4154
      %v7749 = vadd.f32 %v7717, %v4155
      %v7750 = vadd.f32 %v7718, %v4156
      %v7751 = vadd.f32 %v7719, %v4157
      %v7752 = vadd.f32 %v7720, %v4158
      %v7753 = vadd.f32 %v7721, %v4159
      %v7754 = vadd.f32 %v7722, %v4160
      %v7755 = vadd.f32 %v7723, %v4161
      %v7756 = vadd.f32 %v7724, %v4162
      %v7757 = vadd.f32 %v7725, %v4163
      %v7758 = vadd.f32 %v7726, %v4164
      %v7759 = vadd.f32 %v7727, %v4165
      %v7760 = vadd.f32 %v7728, %v4166
      %v7761 = vadd.f32 %v7729, %v4167
      %v7762 = vadd.f32 %v7730, %v4168
      %v7763 = vadd.f32 %v7731, %v4169
      %v7764 = vadd.f32 %v7732, %v4170
      %v7765 = vadd.f32 %v7733, %v4171
      %v7766 = vadd.f32 %v7734, %v4172
      %v7767 = vadd.f32 %v7735, %v4173
      %v7768 = vadd.f32 %v7736, %v4174
      %v7769 = vadd.f32 %v7737, %v4175
      %v7770 = vadd.f32 %v7738, %v4176
      %v7771 = vadd.f32 %v7739, %v4177
      %v7772 = vadd.f32 %v7740, %v4178
      %v7773 = vadd.f32 %v7741, %v4179
      %v7774 = vadd.f32 %v7742, %v4180
      %v7775 = vadd.f32 %v7743, %v4181
      %v7776 = vadd.f32 %v7744, %v4182
      %v7777 = vadd.f32 %v7745, %v4183
      %v7778 = vadd.f32 %v7746, %v4184
      %v7779 = vadd.f32 %v7747, %v4185
      %v7780 = vld [vmem:[%s13] sm:$0xff]
      %v7781 = vld [vmem:[%s14] sm:$0x1]
      %v7783 = vlaneseq
      %v7784 = vshrl.u32 %v7783, 7
      %v7785 = vsub.s32 0, %v7784
      %v7786 = vrot.slane %v7781, %v7785
      %v7789 = vsel %vm1668, %v7748, 0
      %v7792 = vsel %vm1668, %v7749, 0
      %v7795 = vsel %vm1668, %v7750, 0
      %v7798 = vsel %vm1668, %v7751, 0
      %v7801 = vsel %vm1668, %v7752, 0
      %v7804 = vsel %vm1668, %v7753, 0
      %v7807 = vsel %vm1668, %v7754, 0
      %v7810 = vsel %vm1668, %v7755, 0
      %v7813 = vsel %vm1668, %v7756, 0
      %v7816 = vsel %vm1668, %v7757, 0
      %v7819 = vsel %vm1668, %v7758, 0
      %v7822 = vsel %vm1668, %v7759, 0
      %v7825 = vsel %vm1668, %v7760, 0
      %v7828 = vsel %vm1668, %v7761, 0
      %v7831 = vsel %vm1668, %v7762, 0
      %v7834 = vsel %vm1668, %v7763, 0
      %v7837 = vsel %vm1668, %v7764, 0
      %v7840 = vsel %vm1668, %v7765, 0
      %v7843 = vsel %vm1668, %v7766, 0
      %v7846 = vsel %vm1668, %v7767, 0
      %v7849 = vsel %vm1668, %v7768, 0
      %v7852 = vsel %vm1668, %v7769, 0
      %v7855 = vsel %vm1668, %v7770, 0
      %v7858 = vsel %vm1668, %v7771, 0
      %v7861 = vsel %vm1668, %v7772, 0
      %v7864 = vsel %vm1668, %v7773, 0
      %v7867 = vsel %vm1668, %v7774, 0
      %v7870 = vsel %vm1668, %v7775, 0
      %v7873 = vsel %vm1668, %v7776, 0
      %v7876 = vsel %vm1668, %v7777, 0
      %v7879 = vsel %vm1668, %v7778, 0
      %v7882 = vsel %vm1668, %v7779, 0
      %7884 = vmatprep.subr.mxu0 0.0
      %7885 = vmatpush1.msra.mxu0 0.0
      %7886 = vmatprep.subr.mxu0 0.0
      %7887 = vmatpush1.msra.mxu0 0.0
      %7888 = vmatprep.subr.mxu0 0.0
      %7889 = vmatpush1.msra.mxu0 0.0
      %7890 = vmatprep.subr.mxu0 0.0
      %7891 = vmatpush1.msra.mxu0 0.0
      %7892 = vmatprep.subr.mxu0 0.0
      %7893 = vmatpush1.msra.mxu0 0.0
      %7894 = vmatprep.subr.mxu0 0.0
      %7895 = vmatpush1.msra.mxu0 0.0
      %7896 = vmatprep.subr.mxu0 0.0
      %7897 = vmatpush1.msra.mxu0 0.0
      %7898 = vmatprep.subr.mxu0 0.0
      %7899 = vmatpush1.msra.mxu0 0.0
      %7900 = vmatprep.subr.mxu0 0.0
      %7901 = vmatpush1.msra.mxu0 0.0
      %7902 = vmatprep.subr.mxu0 0.0
      %7903 = vmatpush1.msra.mxu0 0.0
      %7904 = vmatprep.subr.mxu0 0.0
      %7905 = vmatpush1.msra.mxu0 0.0
      %7906 = vmatprep.subr.mxu0 0.0
      %7907 = vmatpush1.msra.mxu0 0.0
      %7908 = vmatprep.subr.mxu0 0.0
      %7909 = vmatpush1.msra.mxu0 0.0
      %7910 = vmatprep.subr.mxu0 0.0
      %7911 = vmatpush1.msra.mxu0 0.0
      %7912 = vmatprep.subr.mxu0 0.0
      %7913 = vmatpush1.msra.mxu0 0.0
      %7914 = vmatprep.subr.mxu0 0.0
      %7915 = vmatpush1.msra.mxu0 %v7780
      %7916 = vmatprep.subr.mxu0 0.0
      %7917 = vmatpush2.msra.mxu0 0.0
      %7918 = vmatprep.subr.mxu0 0.0
      %7919 = vmatpush2.msra.mxu0 0.0
      %7920 = vmatprep.subr.mxu0 0.0
      %7921 = vmatpush2.msra.mxu0 0.0
      %7922 = vmatprep.subr.mxu0 0.0
      %7923 = vmatpush2.msra.mxu0 0.0
      %7924 = vmatprep.subr.mxu0 0.0
      %7925 = vmatpush2.msra.mxu0 0.0
      %7926 = vmatprep.subr.mxu0 0.0
      %7927 = vmatpush2.msra.mxu0 0.0
      %7928 = vmatprep.subr.mxu0 0.0
      %7929 = vmatpush2.msra.mxu0 0.0
      %7930 = vmatprep.subr.mxu0 0.0
      %7931 = vmatpush2.msra.mxu0 0.0
      %7932 = vmatprep.subr.mxu0 0.0
      %7933 = vmatpush2.msra.mxu0 0.0
      %7934 = vmatprep.subr.mxu0 0.0
      %7935 = vmatpush2.msra.mxu0 0.0
      %7936 = vmatprep.subr.mxu0 0.0
      %7937 = vmatpush2.msra.mxu0 0.0
      %7938 = vmatprep.subr.mxu0 0.0
      %7939 = vmatpush2.msra.mxu0 0.0
      %7940 = vmatprep.subr.mxu0 0.0
      %7941 = vmatpush2.msra.mxu0 0.0
      %7942 = vmatprep.subr.mxu0 0.0
      %7943 = vmatpush2.msra.mxu0 0.0
      %7944 = vmatprep.subr.mxu0 0.0
      %7945 = vmatpush2.msra.mxu0 0.0
      %7946 = vmatprep.subr.mxu0 0.0
      %7947 = vmatpush2.msra.mxu0 0.0
      %7948 = vmatprep.mubr.f32.mxu0 0.0
      %7949 = vmatmul.mubr.f32.gmra.mxu0 %v7789
      %v7950 = vpop.f32.mrf.mxu0
      %v7951 = vadd.f32 %v7786, %v7950
      %v7952 = vpop.f32.mrf.mxu0
      %7953 = vmatprep.mubr.f32.mxu0 0.0
      %7954 = vmatmul.mubr.f32.gmra.mxu0 %v7792
      %v7955 = vpop.f32.mrf.mxu0
      %v7956 = vadd.f32 %v7786, %v7955
      %v7957 = vpop.f32.mrf.mxu0
      %7958 = vmatprep.mubr.f32.mxu0 0.0
      %7959 = vmatmul.mubr.f32.gmra.mxu0 %v7795
      %v7960 = vpop.f32.mrf.mxu0
      %v7961 = vadd.f32 %v7786, %v7960
      %v7962 = vpop.f32.mrf.mxu0
      %7963 = vmatprep.mubr.f32.mxu0 0.0
      %7964 = vmatmul.mubr.f32.gmra.mxu0 %v7798
      %v7965 = vpop.f32.mrf.mxu0
      %v7966 = vadd.f32 %v7786, %v7965
      %v7967 = vpop.f32.mrf.mxu0
      %7968 = vmatprep.mubr.f32.mxu0 0.0
      %7969 = vmatmul.mubr.f32.gmra.mxu0 %v7801
      %v7970 = vpop.f32.mrf.mxu0
      %v7971 = vadd.f32 %v7786, %v7970
      %v7972 = vpop.f32.mrf.mxu0
      %7973 = vmatprep.mubr.f32.mxu0 0.0
      %7974 = vmatmul.mubr.f32.gmra.mxu0 %v7804
      %v7975 = vpop.f32.mrf.mxu0
      %v7976 = vadd.f32 %v7786, %v7975
      %v7977 = vpop.f32.mrf.mxu0
      %7978 = vmatprep.mubr.f32.mxu0 0.0
      %7979 = vmatmul.mubr.f32.gmra.mxu0 %v7807
      %v7980 = vpop.f32.mrf.mxu0
      %v7981 = vadd.f32 %v7786, %v7980
      %v7982 = vpop.f32.mrf.mxu0
      %7983 = vmatprep.mubr.f32.mxu0 0.0
      %7984 = vmatmul.mubr.f32.gmra.mxu0 %v7810
      %v7985 = vpop.f32.mrf.mxu0
      %v7986 = vadd.f32 %v7786, %v7985
      %v7987 = vpop.f32.mrf.mxu0
      %7988 = vmatprep.mubr.f32.mxu0 0.0
      %7989 = vmatmul.mubr.f32.gmra.mxu0 %v7813
      %v7990 = vpop.f32.mrf.mxu0
      %v7991 = vadd.f32 %v7786, %v7990
      %v7992 = vpop.f32.mrf.mxu0
      %7993 = vmatprep.mubr.f32.mxu0 0.0
      %7994 = vmatmul.mubr.f32.gmra.mxu0 %v7816
      %v7995 = vpop.f32.mrf.mxu0
      %v7996 = vadd.f32 %v7786, %v7995
      %v7997 = vpop.f32.mrf.mxu0
      %7998 = vmatprep.mubr.f32.mxu0 0.0
      %7999 = vmatmul.mubr.f32.gmra.mxu0 %v7819
      %v8000 = vpop.f32.mrf.mxu0
      %v8001 = vadd.f32 %v7786, %v8000
      %v8002 = vpop.f32.mrf.mxu0
      %8003 = vmatprep.mubr.f32.mxu0 0.0
      %8004 = vmatmul.mubr.f32.gmra.mxu0 %v7822
      %v8005 = vpop.f32.mrf.mxu0
      %v8006 = vadd.f32 %v7786, %v8005
      %v8007 = vpop.f32.mrf.mxu0
      %8008 = vmatprep.mubr.f32.mxu0 0.0
      %8009 = vmatmul.mubr.f32.gmra.mxu0 %v7825
      %v8010 = vpop.f32.mrf.mxu0
      %v8011 = vadd.f32 %v7786, %v8010
      %v8012 = vpop.f32.mrf.mxu0
      %8013 = vmatprep.mubr.f32.mxu0 0.0
      %8014 = vmatmul.mubr.f32.gmra.mxu0 %v7828
      %v8015 = vpop.f32.mrf.mxu0
      %v8016 = vadd.f32 %v7786, %v8015
      %v8017 = vpop.f32.mrf.mxu0
      %8018 = vmatprep.mubr.f32.mxu0 0.0
      %8019 = vmatmul.mubr.f32.gmra.mxu0 %v7831
      %v8020 = vpop.f32.mrf.mxu0
      %v8021 = vadd.f32 %v7786, %v8020
      %v8022 = vpop.f32.mrf.mxu0
      %8023 = vmatprep.mubr.f32.mxu0 0.0
      %8024 = vmatmul.mubr.f32.gmra.mxu0 %v7834
      %v8025 = vpop.f32.mrf.mxu0
      %v8026 = vadd.f32 %v7786, %v8025
      %v8027 = vpop.f32.mrf.mxu0
      %8028 = vmatprep.mubr.f32.mxu0 0.0
      %8029 = vmatmul.mubr.f32.gmra.mxu0 %v7837
      %v8030 = vpop.f32.mrf.mxu0
      %v8031 = vadd.f32 %v7786, %v8030
      %v8032 = vpop.f32.mrf.mxu0
      %8033 = vmatprep.mubr.f32.mxu0 0.0
      %8034 = vmatmul.mubr.f32.gmra.mxu0 %v7840
      %v8035 = vpop.f32.mrf.mxu0
      %v8036 = vadd.f32 %v7786, %v8035
      %v8037 = vpop.f32.mrf.mxu0
      %8038 = vmatprep.mubr.f32.mxu0 0.0
      %8039 = vmatmul.mubr.f32.gmra.mxu0 %v7843
      %v8040 = vpop.f32.mrf.mxu0
      %v8041 = vadd.f32 %v7786, %v8040
      %v8042 = vpop.f32.mrf.mxu0
      %8043 = vmatprep.mubr.f32.mxu0 0.0
      %8044 = vmatmul.mubr.f32.gmra.mxu0 %v7846
      %v8045 = vpop.f32.mrf.mxu0
      %v8046 = vadd.f32 %v7786, %v8045
      %v8047 = vpop.f32.mrf.mxu0
      %8048 = vmatprep.mubr.f32.mxu0 0.0
      %8049 = vmatmul.mubr.f32.gmra.mxu0 %v7849
      %v8050 = vpop.f32.mrf.mxu0
      %v8051 = vadd.f32 %v7786, %v8050
      %v8052 = vpop.f32.mrf.mxu0
      %8053 = vmatprep.mubr.f32.mxu0 0.0
      %8054 = vmatmul.mubr.f32.gmra.mxu0 %v7852
      %v8055 = vpop.f32.mrf.mxu0
      %v8056 = vadd.f32 %v7786, %v8055
      %v8057 = vpop.f32.mrf.mxu0
      %8058 = vmatprep.mubr.f32.mxu0 0.0
      %8059 = vmatmul.mubr.f32.gmra.mxu0 %v7855
      %v8060 = vpop.f32.mrf.mxu0
      %v8061 = vadd.f32 %v7786, %v8060
      %v8062 = vpop.f32.mrf.mxu0
      %8063 = vmatprep.mubr.f32.mxu0 0.0
      %8064 = vmatmul.mubr.f32.gmra.mxu0 %v7858
      %v8065 = vpop.f32.mrf.mxu0
      %v8066 = vadd.f32 %v7786, %v8065
      %v8067 = vpop.f32.mrf.mxu0
      %8068 = vmatprep.mubr.f32.mxu0 0.0
      %8069 = vmatmul.mubr.f32.gmra.mxu0 %v7861
      %v8070 = vpop.f32.mrf.mxu0
      %v8071 = vadd.f32 %v7786, %v8070
      %v8072 = vpop.f32.mrf.mxu0
      %8073 = vmatprep.mubr.f32.mxu0 0.0
      %8074 = vmatmul.mubr.f32.gmra.mxu0 %v7864
      %v8075 = vpop.f32.mrf.mxu0
      %v8076 = vadd.f32 %v7786, %v8075
      %v8077 = vpop.f32.mrf.mxu0
      %8078 = vmatprep.mubr.f32.mxu0 0.0
      %8079 = vmatmul.mubr.f32.gmra.mxu0 %v7867
      %v8080 = vpop.f32.mrf.mxu0
      %v8081 = vadd.f32 %v7786, %v8080
      %v8082 = vpop.f32.mrf.mxu0
      %8083 = vmatprep.mubr.f32.mxu0 0.0
      %8084 = vmatmul.mubr.f32.gmra.mxu0 %v7870
      %v8085 = vpop.f32.mrf.mxu0
      %v8086 = vadd.f32 %v7786, %v8085
      %v8087 = vpop.f32.mrf.mxu0
      %8088 = vmatprep.mubr.f32.mxu0 0.0
      %8089 = vmatmul.mubr.f32.gmra.mxu0 %v7873
      %v8090 = vpop.f32.mrf.mxu0
      %v8091 = vadd.f32 %v7786, %v8090
      %v8092 = vpop.f32.mrf.mxu0
      %8093 = vmatprep.mubr.f32.mxu0 0.0
      %8094 = vmatmul.mubr.f32.gmra.mxu0 %v7876
      %v8095 = vpop.f32.mrf.mxu0
      %v8096 = vadd.f32 %v7786, %v8095
      %v8097 = vpop.f32.mrf.mxu0
      %8098 = vmatprep.mubr.f32.mxu0 0.0
      %8099 = vmatmul.mubr.f32.gmra.mxu0 %v7879
      %v8100 = vpop.f32.mrf.mxu0
      %v8101 = vadd.f32 %v7786, %v8100
      %v8102 = vpop.f32.mrf.mxu0
      %8103 = vmatprep.mubr.f32.mxu0 0.0
      %8104 = vmatmul.mubr.f32.gmra.mxu0 %v7882
      %v8105 = vpop.f32.mrf.mxu0
      %v8106 = vadd.f32 %v7786, %v8105
      %v8107 = vpop.f32.mrf.mxu0
      %8108 = vdwg.mxu0
      %vm8109 = vcmask 31744
      %8110 = vst.msk [vmem:[%s494] sm:$0xff] %vm8109, %v7951
      %8111 = vst.msk [vmem:[%s494 + $0x8] sm:$0xff] %vm8109, %v7956
      %8112 = vst.msk [vmem:[%s494 + $0x10] sm:$0xff] %vm8109, %v7961
      %8113 = vst.msk [vmem:[%s494 + $0x18] sm:$0xff] %vm8109, %v7966
      %8114 = vst.msk [vmem:[%s494 + $0x20] sm:$0xff] %vm8109, %v7971
      %8115 = vst.msk [vmem:[%s494 + $0x28] sm:$0xff] %vm8109, %v7976
      %8116 = vst.msk [vmem:[%s494 + $0x30] sm:$0xff] %vm8109, %v7981
      %8117 = vst.msk [vmem:[%s494 + $0x38] sm:$0xff] %vm8109, %v7986
      %8118 = vst.msk [vmem:[%s494 + $0x40] sm:$0xff] %vm8109, %v7991
      %8119 = vst.msk [vmem:[%s494 + $0x48] sm:$0xff] %vm8109, %v7996
      %8120 = vst.msk [vmem:[%s494 + $0x50] sm:$0xff] %vm8109, %v8001
      %8121 = vst.msk [vmem:[%s494 + $0x58] sm:$0xff] %vm8109, %v8006
      %8122 = vst.msk [vmem:[%s494 + $0x60] sm:$0xff] %vm8109, %v8011
      %8123 = vst.msk [vmem:[%s494 + $0x68] sm:$0xff] %vm8109, %v8016
      %8124 = vst.msk [vmem:[%s494 + $0x70] sm:$0xff] %vm8109, %v8021
      %8125 = vst.msk [vmem:[%s494 + $0x78] sm:$0xff] %vm8109, %v8026
      %8126 = vst.msk [vmem:[%s494 + $0x80] sm:$0xff] %vm8109, %v8031
      %8127 = vst.msk [vmem:[%s494 + $0x88] sm:$0xff] %vm8109, %v8036
      %8128 = vst.msk [vmem:[%s494 + $0x90] sm:$0xff] %vm8109, %v8041
      %8129 = vst.msk [vmem:[%s494 + $0x98] sm:$0xff] %vm8109, %v8046
      %8130 = vst.msk [vmem:[%s494 + $0xa0] sm:$0xff] %vm8109, %v8051
      %8131 = vst.msk [vmem:[%s494 + $0xa8] sm:$0xff] %vm8109, %v8056
      %8132 = vst.msk [vmem:[%s494 + $0xb0] sm:$0xff] %vm8109, %v8061
      %8133 = vst.msk [vmem:[%s494 + $0xb8] sm:$0xff] %vm8109, %v8066
      %8134 = vst.msk [vmem:[%s494 + $0xc0] sm:$0xff] %vm8109, %v8071
      %8135 = vst.msk [vmem:[%s494 + $0xc8] sm:$0xff] %vm8109, %v8076
      %8136 = vst.msk [vmem:[%s494 + $0xd0] sm:$0xff] %vm8109, %v8081
      %8137 = vst.msk [vmem:[%s494 + $0xd8] sm:$0xff] %vm8109, %v8086
      %8138 = vst.msk [vmem:[%s494 + $0xe0] sm:$0xff] %vm8109, %v8091
      %8139 = vst.msk [vmem:[%s494 + $0xe8] sm:$0xff] %vm8109, %v8096
      %8140 = vst.msk [vmem:[%s494 + $0xf0] sm:$0xff] %vm8109, %v8101
      %8141 = vst.msk [vmem:[%s494 + $0xf8] sm:$0xff] %vm8109, %v8106
      %p8142 = scmp.lt.s32.totalorder %s26, 1
      %s8143 = scalar_select %p8142, %s26, 1
      %s8144 = smul.addr %s8143, 32
      %s8145 = smul.addr %s8144, 8
      %s8146 = scalar_lea.vmem %s15, %s8145
      // Predicated region
      $region81: #{resnet_forward.1} parent=79 // pred_check
        %p8147 = pneg %p364
      $region82: #{resnet_forward.1} parent=79 // pred_check_branch
        %8149 = sbr.rel (%p8147) target = $region84
      $region83: #{resnet_forward.1} parent=79 // pred_region
        _
      $region84: #{resnet_forward.1} parent=79 // pred_fallthru
        _
    $region80: #{resnet_forward.1} parent=5 // pred_fallthru
      _
    %p8150 = scmp.le.s32.totalorder 2, %s21
    // Predicated region
    $region85: #{resnet_forward.1} parent=5 // pred_check
      %p8151 = pneg %p8150
    $region86: #{resnet_forward.1} parent=5 // pred_check_branch
      %8153 = sbr.rel (%p8151) target = $region88
    $region87: #{resnet_forward.1} parent=5 // pred_region
      %s8154 = ssub.s32 %s21, 2
      // Predicated region
      $region89: #{resnet_forward.1} parent=87 // pred_check
        %p8155 = pneg %p370
      $region90: #{resnet_forward.1} parent=87 // pred_check_branch
        %8157 = sbr.rel (%p8155) target = $region92
      $region91: #{resnet_forward.1} parent=87 // pred_region
        %p8158 = scmp.lt.s32.totalorder %s27, 1
        %s8159 = scalar_select %p8158, %s27, 1
        %s8160 = smul.addr %s8159, 32
        %s8161 = smul.addr %s8160, 8
        %s8162 = scalar_lea.vmem %s15, %s8161
      $region92: #{resnet_forward.1} parent=87 // pred_fallthru
        _
    $region88: #{resnet_forward.1} parent=5 // pred_fallthru
      _
  $region6: #{resnet_forward.1} parent=0 // loop_footer
    %s25 = sadd.s32 1, %s21
  $region7: #{resnet_forward.1} parent=0 // loop_footer_branch
    %20 = sbr.rel target = $region3
  $region8: #{resnet_forward.1} parent=0 // loop_exit
    _

</llo_original>
